<compile_context>
chip_gen: v6e
topology: v6e:2x2x1
jax: 0.10.0
libtpu: 0.0.40
codegen_flags: <defaults>
</compile_context>

<pallas_src>
import functools

import jax
import jax.numpy as jnp
from jax.experimental import pallas as pl
from jax.experimental.pallas import tpu as pltpu


# --------------------------------------------------------------------------
# kernel
# --------------------------------------------------------------------------
def _bottleneck_kernel(xm_ref, xt_ref, xb_ref, w1_ref, s1_ref, b1_ref,
                       w2_ref, s2_ref, b2_ref, o_ref, mid_ref, *, add):
    # Shapes (static):
    #   xm_ref : (1, TH, W, C1)   f32   input rows [base, base+TH)
    #   xt_ref : (1, 2,  W, C1)   f32   input rows [base-2, base)        (clamped)
    #   xb_ref : (1, 2,  W, C1)   f32   input rows [base+TH, base+TH+2)  (clamped)
    #   w1_ref : (3, 3, C1, Cmp)  bf16  conv1 weights (HWIO, Cout padded)
    #   s1/b1  : (1, Cmp)         f32   folded BN1
    #   w2_ref : (3, 3, Cmp, C2p) bf16  conv2 weights
    #   s2/b2  : (1, C2p)         f32   folded BN2
    #   o_ref  : (1, TH, W, C2p)  bf16  output rows [base, base+TH)
    #   mid_ref: (TH+2, W, Cmp)   bf16  VMEM scratch (conv1 output incl. row halo)
    _, TH, W, C1 = xm_ref.shape
    Cmp = w1_ref.shape[-1]
    C2p = o_ref.shape[-1]

    rt = pl.program_id(1)
    n_rt = pl.num_programs(1)

    # ---- conv1 input row slab [base-2, base+TH+2), bf16 -------------------
    x_mid_f32 = xm_ref[0]                                    # f32 residual kept exact
    x_mid = x_mid_f32.astype(jnp.bfloat16)
    top = jnp.where(rt > 0, xt_ref[0].astype(jnp.bfloat16), 0)        # tiny (2,W,C1)
    bot = jnp.where(rt < n_rt - 1, xb_ref[0].astype(jnp.bfloat16), 0)
    x4 = jnp.concatenate([top, x_mid, bot], axis=0)          # (TH+4, W, C1)

    # Three dx-shifted slabs -- the only sublane-shift copies of the tile.
    # TODO(synk): pltpu.roll + column mask is an XLU-slot alternative; measure.
    zc1 = jnp.zeros((TH + 4, 1, C1), jnp.bfloat16)
    x4_l = jnp.concatenate([zc1, x4[:, :W - 1, :]], axis=1)  # col x <- input col x-1
    x4_r = jnp.concatenate([x4[:, 1:, :], zc1], axis=1)      # col x <- input col x+1
    slabs1 = [s.reshape((TH + 4) * W, C1) for s in (x4_l, x4, x4_r)]

    def conv3x3(slabs, w_ref, out_h):
        # 9 accumulating MXU matmuls with K = Cin, f32 accumulation.  The dy
        # offsets are free sublane-aligned row slices of the flattened slabs.
        acc = None
        for dy in range(3):
            for dx in range(3):
                a = slabs[dx][dy * W:(dy + out_h) * W]
                t = jnp.dot(a, w_ref[dy, dx], preferred_element_type=jnp.float32)
                acc = t if acc is None else acc + t
        return acc

    # ---- conv1 + BN1 + SiLU -> mid rows [base-1, base+TH+1) ---------------
    z1 = conv3x3(slabs1, w1_ref, TH + 2) * s1_ref[...] + b1_ref[...]
    y1 = z1 * jax.nn.sigmoid(z1)                             # SiLU (f32)
    # TODO(synk): bf16 BN+SiLU on v6e/v7x (bf16 VPU/EUP) once validated.
    mid_ref[...] = y1.reshape(TH + 2, W, Cmp).astype(jnp.bfloat16)

    # conv2 'same' padding: mid rows outside the image must be zero
    # (SiLU(BN1(0)) != 0).  Only boundary tiles pay for it.
    @pl.when(rt == 0)
    def _():
        mid_ref[0] = jnp.zeros((W, Cmp), jnp.bfloat16)

    @pl.when(rt == n_rt - 1)
    def _():
        mid_ref[TH + 1] = jnp.zeros((W, Cmp), jnp.bfloat16)

    # ---- conv2 + BN2 + SiLU -> output rows [base, base+TH) ----------------
    m = mid_ref[...]
    zc2 = jnp.zeros((TH + 2, 1, Cmp), jnp.bfloat16)
    m_l = jnp.concatenate([zc2, m[:, :W - 1, :]], axis=1)
    m_r = jnp.concatenate([m[:, 1:, :], zc2], axis=1)
    slabs2 = [s.reshape((TH + 2) * W, Cmp) for s in (m_l, m, m_r)]

    z2 = conv3x3(slabs2, w2_ref, TH) * s2_ref[...] + b2_ref[...]
    y2 = (z2 * jax.nn.sigmoid(z2)).reshape(TH, W, C2p)

    if add and C1 == C2p:
        # real-model path: channels already lane-aligned, one dense store
        o_ref[0] = (y2 + x_mid_f32).astype(o_ref.dtype)
    elif add:
        # C1 < C2p: dense store, then a small masked store adding the residual
        # to the first C1 lanes (avoids any lane-pad of x inside the kernel).
        o_ref[0] = y2.astype(o_ref.dtype)
        o_ref[0, :, :, :C1] = (y2[:, :, :C1] + x_mid_f32).astype(o_ref.dtype)
    else:
        o_ref[0] = y2.astype(o_ref.dtype)


# --------------------------------------------------------------------------
# wrapper
# --------------------------------------------------------------------------
def _round_up(x, m):
    return (x + m - 1) // m * m


def _vmem_limit_bytes():
    # v5e/v6e: 128 MiB physical VMEM; v7x: 64 MiB.  Raise the scoped default
    # but stay well under physical capacity.
    cap = 64 * 1024 * 1024
    try:
        cap = int(getattr(pltpu.get_tpu_info(), "vmem_capacity_bytes", cap)) or cap
    except Exception:
        pass
    return min(cap * 3 // 4, 96 * 1024 * 1024)


def _estimate_step_bytes(TH, W, C1, Cmp, C2p):
    bf, f4 = 2, 4
    inp = 2 * (TH * W * C1 + 2 * 2 * W * C1) * f4        # double-buffered f32 input blocks
    outp = 2 * TH * W * C2p * bf                         # double-buffered bf16 output
    wgt = (9 * C1 * Cmp + 9 * Cmp * C2p) * bf + 2 * (Cmp + C2p) * f4   # single-buffered
    slab1 = 3 * (TH + 4) * W * C1 * bf                   # x4 + 2 dx-shifted slabs
    acc1 = (TH + 2) * W * Cmp * f4
    mid = (TH + 2) * W * Cmp * bf                        # scratch
    slab2 = 2 * (TH + 2) * W * Cmp * bf                  # 2 dx-shifted mid slabs
    acc2 = 2 * TH * W * C2p * f4                         # acc + y2
    return int(1.3 * (inp + outp + wgt + slab1 + acc1 + mid + slab2 + acc2))


def _pick_tile_h(B, H, W, C1, Cmp, C2p, budget):
    """Largest even row-tile dividing H that fits the budget, preferring >=4
    (else >=2) total grid steps so both v7x TensorCores get work."""
    cands = [th for th in range(2, H + 1, 2)
             if H % th == 0 and _estimate_step_bytes(th, W, C1, Cmp, C2p) <= budget]
    if not cands:
        return 2
    for min_steps in (4, 2, 1):
        ok = [t for t in cands if B * (H // t) >= min_steps]
        if ok:
            return max(ok)
    return max(cands)


def bottleneck_pallas(x_nhwc, w1, s1, b1, w2, s2, b2, *, add, tile_h=None,
                      out_dtype=jnp.bfloat16):
    """x_nhwc (B,H,W,C1) f32; w1 (3,3,C1,C_), w2 (3,3,C_,C2) HWIO; s*/b* (1,C)
    folded BN.  Returns (B,H,W,C2) in out_dtype (bf16 by default)."""
    B, H, W, C1 = x_nhwc.shape
    C_ = w1.shape[-1]
    C2 = w2.shape[-1]
    assert w1.shape[:3] == (3, 3, C1) and w2.shape[:3] == (3, 3, C_)
    assert H % 2 == 0, "H must be even"          # TODO(synk): odd-H halo blocks
    assert W % 8 == 0, "W must be a multiple of 8"  # TODO(synk): pad/mask odd widths
    if add:
        assert C1 == C2

    Cmp = _round_up(C_, 128)     # conv1-out / conv2-in channels (VMEM only): lane-dense MXU
    C2p = _round_up(C2, 128)     # output channels: lane-dense stores

    vmem_limit = _vmem_limit_bytes()
    if tile_h is None:
        tile_h = _pick_tile_h(B, H, W, C1, Cmp, C2p, budget=vmem_limit // 2)
    TH = int(tile_h)
    assert TH >= 2 and TH % 2 == 0 and H % TH == 0
    n_rt = H // TH
    hb = H // 2                  # number of 2-row halo blocks along H

    # Only the weight / BN channel axes are padded; x stays unpadded f32 (no
    # host-side pad/cast round trip) and is cast to bf16 inside the kernel.
    w1p = jnp.pad(w1, ((0, 0), (0, 0), (0, 0), (0, Cmp - C_))).astype(jnp.bfloat16)
    w2p = jnp.pad(w2, ((0, 0), (0, 0), (0, Cmp - C_), (0, C2p - C2))).astype(jnp.bfloat16)
    s1p = jnp.pad(s1.reshape(1, C_).astype(jnp.float32), ((0, 0), (0, Cmp - C_)))
    b1p = jnp.pad(b1.reshape(1, C_).astype(jnp.float32), ((0, 0), (0, Cmp - C_)))
    s2p = jnp.pad(s2.reshape(1, C2).astype(jnp.float32), ((0, 0), (0, C2p - C2)))
    b2p = jnp.pad(b2.reshape(1, C2).astype(jnp.float32), ((0, 0), (0, C2p - C2)))

    xf = x_nhwc.astype(jnp.float32)
    kernel = functools.partial(_bottleneck_kernel, add=add)

    def run(single_buffer_weights):
        const_kw = ({"pipeline_mode": pl.Buffered(1)} if single_buffer_weights else {})

        def cspec(shape):
            n = len(shape)

            def idx(b, r):
                return (0,) * n

            return pl.BlockSpec(shape, idx, **const_kw)

        grid_spec = pltpu.PrefetchScalarGridSpec(
            num_scalar_prefetch=0,
            grid=(B, n_rt),
            in_specs=[
                # main TH input rows (also used for the f32 shortcut residual)
                pl.BlockSpec((1, TH, W, C1), lambda b, r: (b, r, 0, 0)),
                # 2-row top halo: rows [r*TH-2, r*TH)        (clamped; zeroed at r==0)
                pl.BlockSpec((1, 2, W, C1),
                             lambda b, r: (b, jnp.maximum(r * (TH // 2) - 1, 0), 0, 0)),
                # 2-row bottom halo: rows [r*TH+TH, r*TH+TH+2) (clamped; zeroed at last)
                pl.BlockSpec((1, 2, W, C1),
                             lambda b, r: (b, jnp.minimum((r + 1) * (TH // 2), hb - 1), 0, 0)),
                cspec((3, 3, C1, Cmp)),        # conv1 weights   (resident)
                cspec((1, Cmp)),               # BN1 scale
                cspec((1, Cmp)),               # BN1 bias
                cspec((3, 3, Cmp, C2p)),       # conv2 weights   (resident)
                cspec((1, C2p)),               # BN2 scale
                cspec((1, C2p)),               # BN2 bias
            ],
            out_specs=pl.BlockSpec((1, TH, W, C2p), lambda b, r: (b, r, 0, 0)),
            scratch_shapes=[pltpu.VMEM((TH + 2, W, Cmp), jnp.bfloat16)],
        )
        return pl.pallas_call(
            kernel,
            out_shape=jax.ShapeDtypeStruct((B, H, W, C2p), out_dtype),
            grid_spec=grid_spec,
            compiler_params=pltpu.CompilerParams(
                dimension_semantics=("parallel", "parallel"),
                vmem_limit_bytes=vmem_limit),
        )(xf, xf, xf, w1p, s1p, b1p, w2p, s2p, b2p)

    try:
        out = run(True)          # single-buffered resident weights
    except Exception:
        out = run(False)         # fallback: default (double) buffering

    # When C2 is already a multiple of 128 this is a no-op; otherwise a real
    # consumer could take the padded layout directly instead of slicing.
    return out if C2p == C2 else out[..., :C2]


# --------------------------------------------------------------------------
# plain-JAX reference (same bf16-operand / f32-accumulate numerics)
# --------------------------------------------------------------------------
def _conv_same_f32(x_bf16, w_bf16):
    return jax.lax.conv_general_dilated(
        x_bf16, w_bf16, window_strides=(1, 1), padding="SAME",
        dimension_numbers=("NHWC", "HWIO", "NHWC"),
        preferred_element_type=jnp.float32)


def bottleneck_ref(x, w1, s1, b1, w2, s2, b2, *, add):
    xb = x.astype(jnp.bfloat16)
    y = _conv_same_f32(xb, w1.astype(jnp.bfloat16)) * s1 + b1
    y = y * jax.nn.sigmoid(y)
    y = _conv_same_f32(y.astype(jnp.bfloat16), w2.astype(jnp.bfloat16)) * s2 + b2
    y = y * jax.nn.sigmoid(y)
    return x + y if add else y           # exact f32 residual (matches PyTorch)


if __name__ == "__main__":
    key = jax.random.PRNGKey(0)
    B, C1, C2, H, W = 2, 4, 4, 16, 16
    e = 0.5
    C_ = int(C2 * e)
    shortcut = True
    add = shortcut and (C1 == C2)

    ks = jax.random.split(key, 10)
    # input constructed NCHW (PyTorch convention), transposed to NHWC for the kernel
    x_nchw = jax.random.normal(ks[0], (B, C1, H, W), jnp.float32)
    x_nhwc = jnp.transpose(x_nchw, (0, 2, 3, 1))

    # conv weights in HWIO
    w1 = jax.random.normal(ks[1], (3, 3, C1, C_), jnp.float32) * 0.2
    w2 = jax.random.normal(ks[2], (3, 3, C_, C2), jnp.float32) * 0.2

    # BatchNorm params (folded, eval mode): scale = g/sqrt(var+eps), bias = b - mean*scale
    eps = 1e-5
    g1 = jax.random.uniform(ks[3], (C_,), jnp.float32, 0.5, 1.5)
    be1 = jax.random.normal(ks[4], (C_,), jnp.float32) * 0.1
    m1 = jax.random.normal(ks[5], (C_,), jnp.float32) * 0.1
    v1 = jax.random.uniform(ks[6], (C_,), jnp.float32, 0.5, 1.5)
    g2 = jax.random.uniform(ks[7], (C2,), jnp.float32, 0.5, 1.5)
    be2 = jax.random.normal(ks[8], (C2,), jnp.float32) * 0.1
    m2 = jax.random.normal(ks[9], (C2,), jnp.float32) * 0.1
    v2 = jnp.ones((C2,), jnp.float32)

    s1 = (g1 / jnp.sqrt(v1 + eps)).reshape(1, C_)
    b1 = (be1 - m1 * g1 / jnp.sqrt(v1 + eps)).reshape(1, C_)
    s2 = (g2 / jnp.sqrt(v2 + eps)).reshape(1, C2)
    b2 = (be2 - m2 * g2 / jnp.sqrt(v2 + eps)).reshape(1, C2)

    ref = bottleneck_ref(x_nhwc, w1, s1, b1, w2, s2, b2, add=add)

    # tile_h=4 exercises interior tiles + both boundary paths; None auto-picks.
    for th in (4, None):
        out = bottleneck_pallas(x_nhwc, w1, s1, b1, w2, s2, b2, add=add, tile_h=th)
        out = jax.block_until_ready(out)
        assert out.shape == (B, H, W, C2)
        out_f32 = out.astype(jnp.float32)
        err = float(jnp.max(jnp.abs(out_f32 - ref)))
        assert jnp.allclose(out_f32, ref, atol=5e-2, rtol=5e-2), \
            f"tile_h={th}: max err {err}"

    print("KERNEL_OK")
</pallas_src>

<mosaic_0001>
module attributes {stable_mosaic.version = 11 : i64} {
  func.func @_bottleneck_kernel(%arg0: i32, %arg1: i32, %arg2: memref<1x4x16x4xf32, #tpu.memory_space<vmem>>, %arg3: memref<1x2x16x4xf32, #tpu.memory_space<vmem>>, %arg4: memref<1x2x16x4xf32, #tpu.memory_space<vmem>>, %arg5: memref<3x3x4x128xbf16, #tpu.memory_space<vmem>>, %arg6: memref<1x128xf32, #tpu.memory_space<vmem>>, %arg7: memref<1x128xf32, #tpu.memory_space<vmem>>, %arg8: memref<3x3x128x128xbf16, #tpu.memory_space<vmem>>, %arg9: memref<1x128xf32, #tpu.memory_space<vmem>>, %arg10: memref<1x128xf32, #tpu.memory_space<vmem>>, %arg11: memref<1x4x16x128xbf16, #tpu.memory_space<vmem>>, %arg12: memref<6x16x128xbf16, #tpu.memory_space<vmem>>) attributes {dimension_semantics = [#tpu.dimension_semantics<parallel>, #tpu.dimension_semantics<parallel>], iteration_bounds = array<i64: 2, 4>, scalar_prefetch = 0 : i64, scratch_operands = 1 : i64, tpu.core_type = #tpu.core_type<tc>, window_params = [{transform_indices = @transform_0, window_bounds = array<i64: 1, 4, 16, 4>}, {transform_indices = @transform_1, window_bounds = array<i64: 1, 2, 16, 4>}, {transform_indices = @transform_2, window_bounds = array<i64: 1, 2, 16, 4>}, {pipeline_mode = #tpu.pipeline_mode<synchronous>, transform_indices = @transform_3, window_bounds = array<i64: 3, 3, 4, 128>}, {pipeline_mode = #tpu.pipeline_mode<synchronous>, transform_indices = @transform_4, window_bounds = array<i64: 1, 128>}, {pipeline_mode = #tpu.pipeline_mode<synchronous>, transform_indices = @transform_5, window_bounds = array<i64: 1, 128>}, {pipeline_mode = #tpu.pipeline_mode<synchronous>, transform_indices = @transform_6, window_bounds = array<i64: 3, 3, 128, 128>}, {pipeline_mode = #tpu.pipeline_mode<synchronous>, transform_indices = @transform_7, window_bounds = array<i64: 1, 128>}, {pipeline_mode = #tpu.pipeline_mode<synchronous>, transform_indices = @transform_8, window_bounds = array<i64: 1, 128>}, {transform_indices = @transform_9, window_bounds = array<i64: 1, 4, 16, 128>}]} {
    %c0 = arith.constant 0 : index
    %c0_0 = arith.constant 0 : index
    %c0_1 = arith.constant 0 : index
    %c0_2 = arith.constant 0 : index
    %0 = vector.load %arg2[%c0, %c0_0, %c0_1, %c0_2] : memref<1x4x16x4xf32, #tpu.memory_space<vmem>>, vector<1x4x16x4xf32>
    %1 = vector.shape_cast %0 : vector<1x4x16x4xf32> to vector<4x16x4xf32>
    %2 = arith.truncf %1 : vector<4x16x4xf32> to vector<4x16x4xbf16>
    %c0_i32 = arith.constant 0 : i32
    %3 = arith.cmpi sgt, %arg1, %c0_i32 : i32
    %c0_3 = arith.constant 0 : index
    %c0_4 = arith.constant 0 : index
    %c0_5 = arith.constant 0 : index
    %c0_6 = arith.constant 0 : index
    %4 = vector.load %arg3[%c0_3, %c0_4, %c0_5, %c0_6] : memref<1x2x16x4xf32, #tpu.memory_space<vmem>>, vector<1x2x16x4xf32>
    %5 = vector.shape_cast %4 : vector<1x2x16x4xf32> to vector<2x16x4xf32>
    %6 = arith.truncf %5 : vector<2x16x4xf32> to vector<2x16x4xbf16>
    %c0_i32_7 = arith.constant 0 : i32
    %7 = arith.sitofp %c0_i32_7 : i32 to bf16
    %8 = vector.broadcast %7 : bf16 to vector<2x16x4xbf16>
    %9 = arith.select %3, %6, %8 : vector<2x16x4xbf16>
    %c3_i32 = arith.constant 3 : i32
    %10 = arith.cmpi slt, %arg1, %c3_i32 : i32
    %c0_8 = arith.constant 0 : index
    %c0_9 = arith.constant 0 : index
    %c0_10 = arith.constant 0 : index
    %c0_11 = arith.constant 0 : index
    %11 = vector.load %arg4[%c0_8, %c0_9, %c0_10, %c0_11] : memref<1x2x16x4xf32, #tpu.memory_space<vmem>>, vector<1x2x16x4xf32>
    %12 = vector.shape_cast %11 : vector<1x2x16x4xf32> to vector<2x16x4xf32>
    %13 = arith.truncf %12 : vector<2x16x4xf32> to vector<2x16x4xbf16>
    %c0_i32_12 = arith.constant 0 : i32
    %14 = arith.sitofp %c0_i32_12 : i32 to bf16
    %15 = vector.broadcast %14 : bf16 to vector<2x16x4xbf16>
    %16 = arith.select %10, %13, %15 : vector<2x16x4xbf16>
    %17 = tpu.concatenate %9, %2, %16 in 0 : vector<2x16x4xbf16>, vector<4x16x4xbf16>, vector<2x16x4xbf16> -> vector<8x16x4xbf16>
    %cst = arith.constant 0.000000e+00 : bf16
    %18 = vector.broadcast %cst : bf16 to vector<8x1x4xbf16>
    %19 = vector.extract_strided_slice %17 {offsets = [0, 0, 0], sizes = [8, 15, 4], strides = [1, 1, 1]} : vector<8x16x4xbf16> to vector<8x15x4xbf16>
    %20 = tpu.concatenate %18, %19 in 1 : vector<8x1x4xbf16>, vector<8x15x4xbf16> -> vector<8x16x4xbf16>
    %21 = vector.extract_strided_slice %17 {offsets = [0, 1, 0], sizes = [8, 15, 4], strides = [1, 1, 1]} : vector<8x16x4xbf16> to vector<8x15x4xbf16>
    %22 = tpu.concatenate %21, %18 in 1 : vector<8x15x4xbf16>, vector<8x1x4xbf16> -> vector<8x16x4xbf16>
    %23 = vector.shape_cast %20 : vector<8x16x4xbf16> to vector<128x4xbf16>
    %24 = vector.shape_cast %17 : vector<8x16x4xbf16> to vector<128x4xbf16>
    %25 = vector.shape_cast %22 : vector<8x16x4xbf16> to vector<128x4xbf16>
    %26 = vector.extract_strided_slice %23 {offsets = [0, 0], sizes = [96, 4], strides = [1, 1]} : vector<128x4xbf16> to vector<96x4xbf16>
    %c0_13 = arith.constant 0 : index
    %c0_14 = arith.constant 0 : index
    %c0_15 = arith.constant 0 : index
    %c0_16 = arith.constant 0 : index
    %27 = vector.load %arg5[%c0_13, %c0_14, %c0_15, %c0_16] : memref<3x3x4x128xbf16, #tpu.memory_space<vmem>>, vector<1x1x4x128xbf16>
    %28 = vector.shape_cast %27 : vector<1x1x4x128xbf16> to vector<4x128xbf16>
    %cst_17 = arith.constant dense<0.000000e+00> : vector<96x128xf32>
    %29 = tpu.matmul %26, %28, %cst_17 {dimension_numbers = #tpu.dot_dimension_numbers<[1], [0], [0], [1], [0, 0, 1, 1], [], []>} : vector<96x4xbf16>, vector<4x128xbf16>, vector<96x128xf32> -> vector<96x128xf32>
    %30 = vector.extract_strided_slice %24 {offsets = [0, 0], sizes = [96, 4], strides = [1, 1]} : vector<128x4xbf16> to vector<96x4xbf16>
    %c0_18 = arith.constant 0 : index
    %c1 = arith.constant 1 : index
    %c0_19 = arith.constant 0 : index
    %c0_20 = arith.constant 0 : index
    %31 = vector.load %arg5[%c0_18, %c1, %c0_19, %c0_20] : memref<3x3x4x128xbf16, #tpu.memory_space<vmem>>, vector<1x1x4x128xbf16>
    %32 = vector.shape_cast %31 : vector<1x1x4x128xbf16> to vector<4x128xbf16>
    %cst_21 = arith.constant dense<0.000000e+00> : vector<96x128xf32>
    %33 = tpu.matmul %30, %32, %cst_21 {dimension_numbers = #tpu.dot_dimension_numbers<[1], [0], [0], [1], [0, 0, 1, 1], [], []>} : vector<96x4xbf16>, vector<4x128xbf16>, vector<96x128xf32> -> vector<96x128xf32>
    %34 = arith.addf %29, %33 : vector<96x128xf32>
    %35 = vector.extract_strided_slice %25 {offsets = [0, 0], sizes = [96, 4], strides = [1, 1]} : vector<128x4xbf16> to vector<96x4xbf16>
    %c0_22 = arith.constant 0 : index
    %c2 = arith.constant 2 : index
    %c0_23 = arith.constant 0 : index
    %c0_24 = arith.constant 0 : index
    %36 = vector.load %arg5[%c0_22, %c2, %c0_23, %c0_24] : memref<3x3x4x128xbf16, #tpu.memory_space<vmem>>, vector<1x1x4x128xbf16>
    %37 = vector.shape_cast %36 : vector<1x1x4x128xbf16> to vector<4x128xbf16>
    %cst_25 = arith.constant dense<0.000000e+00> : vector<96x128xf32>
    %38 = tpu.matmul %35, %37, %cst_25 {dimension_numbers = #tpu.dot_dimension_numbers<[1], [0], [0], [1], [0, 0, 1, 1], [], []>} : vector<96x4xbf16>, vector<4x128xbf16>, vector<96x128xf32> -> vector<96x128xf32>
    %39 = arith.addf %34, %38 : vector<96x128xf32>
    %40 = vector.extract_strided_slice %23 {offsets = [16, 0], sizes = [96, 4], strides = [1, 1]} : vector<128x4xbf16> to vector<96x4xbf16>
    %c1_26 = arith.constant 1 : index
    %c0_27 = arith.constant 0 : index
    %c0_28 = arith.constant 0 : index
    %c0_29 = arith.constant 0 : index
    %41 = vector.load %arg5[%c1_26, %c0_27, %c0_28, %c0_29] : memref<3x3x4x128xbf16, #tpu.memory_space<vmem>>, vector<1x1x4x128xbf16>
    %42 = vector.shape_cast %41 : vector<1x1x4x128xbf16> to vector<4x128xbf16>
    %cst_30 = arith.constant dense<0.000000e+00> : vector<96x128xf32>
    %43 = tpu.matmul %40, %42, %cst_30 {dimension_numbers = #tpu.dot_dimension_numbers<[1], [0], [0], [1], [0, 0, 1, 1], [], []>} : vector<96x4xbf16>, vector<4x128xbf16>, vector<96x128xf32> -> vector<96x128xf32>
    %44 = arith.addf %39, %43 : vector<96x128xf32>
    %45 = vector.extract_strided_slice %24 {offsets = [16, 0], sizes = [96, 4], strides = [1, 1]} : vector<128x4xbf16> to vector<96x4xbf16>
    %c1_31 = arith.constant 1 : index
    %c1_32 = arith.constant 1 : index
    %c0_33 = arith.constant 0 : index
    %c0_34 = arith.constant 0 : index
    %46 = vector.load %arg5[%c1_31, %c1_32, %c0_33, %c0_34] : memref<3x3x4x128xbf16, #tpu.memory_space<vmem>>, vector<1x1x4x128xbf16>
    %47 = vector.shape_cast %46 : vector<1x1x4x128xbf16> to vector<4x128xbf16>
    %cst_35 = arith.constant dense<0.000000e+00> : vector<96x128xf32>
    %48 = tpu.matmul %45, %47, %cst_35 {dimension_numbers = #tpu.dot_dimension_numbers<[1], [0], [0], [1], [0, 0, 1, 1], [], []>} : vector<96x4xbf16>, vector<4x128xbf16>, vector<96x128xf32> -> vector<96x128xf32>
    %49 = arith.addf %44, %48 : vector<96x128xf32>
    %50 = vector.extract_strided_slice %25 {offsets = [16, 0], sizes = [96, 4], strides = [1, 1]} : vector<128x4xbf16> to vector<96x4xbf16>
    %c1_36 = arith.constant 1 : index
    %c2_37 = arith.constant 2 : index
    %c0_38 = arith.constant 0 : index
    %c0_39 = arith.constant 0 : index
    %51 = vector.load %arg5[%c1_36, %c2_37, %c0_38, %c0_39] : memref<3x3x4x128xbf16, #tpu.memory_space<vmem>>, vector<1x1x4x128xbf16>
    %52 = vector.shape_cast %51 : vector<1x1x4x128xbf16> to vector<4x128xbf16>
    %cst_40 = arith.constant dense<0.000000e+00> : vector<96x128xf32>
    %53 = tpu.matmul %50, %52, %cst_40 {dimension_numbers = #tpu.dot_dimension_numbers<[1], [0], [0], [1], [0, 0, 1, 1], [], []>} : vector<96x4xbf16>, vector<4x128xbf16>, vector<96x128xf32> -> vector<96x128xf32>
    %54 = arith.addf %49, %53 : vector<96x128xf32>
    %55 = vector.extract_strided_slice %23 {offsets = [32, 0], sizes = [96, 4], strides = [1, 1]} : vector<128x4xbf16> to vector<96x4xbf16>
    %c2_41 = arith.constant 2 : index
    %c0_42 = arith.constant 0 : index
    %c0_43 = arith.constant 0 : index
    %c0_44 = arith.constant 0 : index
    %56 = vector.load %arg5[%c2_41, %c0_42, %c0_43, %c0_44] : memref<3x3x4x128xbf16, #tpu.memory_space<vmem>>, vector<1x1x4x128xbf16>
    %57 = vector.shape_cast %56 : vector<1x1x4x128xbf16> to vector<4x128xbf16>
    %cst_45 = arith.constant dense<0.000000e+00> : vector<96x128xf32>
    %58 = tpu.matmul %55, %57, %cst_45 {dimension_numbers = #tpu.dot_dimension_numbers<[1], [0], [0], [1], [0, 0, 1, 1], [], []>} : vector<96x4xbf16>, vector<4x128xbf16>, vector<96x128xf32> -> vector<96x128xf32>
    %59 = arith.addf %54, %58 : vector<96x128xf32>
    %60 = vector.extract_strided_slice %24 {offsets = [32, 0], sizes = [96, 4], strides = [1, 1]} : vector<128x4xbf16> to vector<96x4xbf16>
    %c2_46 = arith.constant 2 : index
    %c1_47 = arith.constant 1 : index
    %c0_48 = arith.constant 0 : index
    %c0_49 = arith.constant 0 : index
    %61 = vector.load %arg5[%c2_46, %c1_47, %c0_48, %c0_49] : memref<3x3x4x128xbf16, #tpu.memory_space<vmem>>, vector<1x1x4x128xbf16>
    %62 = vector.shape_cast %61 : vector<1x1x4x128xbf16> to vector<4x128xbf16>
    %cst_50 = arith.constant dense<0.000000e+00> : vector<96x128xf32>
    %63 = tpu.matmul %60, %62, %cst_50 {dimension_numbers = #tpu.dot_dimension_numbers<[1], [0], [0], [1], [0, 0, 1, 1], [], []>} : vector<96x4xbf16>, vector<4x128xbf16>, vector<96x128xf32> -> vector<96x128xf32>
    %64 = arith.addf %59, %63 : vector<96x128xf32>
    %65 = vector.extract_strided_slice %25 {offsets = [32, 0], sizes = [96, 4], strides = [1, 1]} : vector<128x4xbf16> to vector<96x4xbf16>
    %c2_51 = arith.constant 2 : index
    %c2_52 = arith.constant 2 : index
    %c0_53 = arith.constant 0 : index
    %c0_54 = arith.constant 0 : index
    %66 = vector.load %arg5[%c2_51, %c2_52, %c0_53, %c0_54] : memref<3x3x4x128xbf16, #tpu.memory_space<vmem>>, vector<1x1x4x128xbf16>
    %67 = vector.shape_cast %66 : vector<1x1x4x128xbf16> to vector<4x128xbf16>
    %cst_55 = arith.constant dense<0.000000e+00> : vector<96x128xf32>
    %68 = tpu.matmul %65, %67, %cst_55 {dimension_numbers = #tpu.dot_dimension_numbers<[1], [0], [0], [1], [0, 0, 1, 1], [], []>} : vector<96x4xbf16>, vector<4x128xbf16>, vector<96x128xf32> -> vector<96x128xf32>
    %69 = arith.addf %64, %68 : vector<96x128xf32>
    %c0_56 = arith.constant 0 : index
    %c0_57 = arith.constant 0 : index
    %70 = vector.load %arg6[%c0_56, %c0_57] : memref<1x128xf32, #tpu.memory_space<vmem>>, vector<1x128xf32>
    %71 = vector.broadcast %70 : vector<1x128xf32> to vector<96x128xf32>
    %72 = arith.mulf %69, %71 : vector<96x128xf32>
    %c0_58 = arith.constant 0 : index
    %c0_59 = arith.constant 0 : index
    %73 = vector.load %arg7[%c0_58, %c0_59] : memref<1x128xf32, #tpu.memory_space<vmem>>, vector<1x128xf32>
    %74 = vector.broadcast %73 : vector<1x128xf32> to vector<96x128xf32>
    %75 = arith.addf %72, %74 : vector<96x128xf32>
    %76 = arith.negf %75 : vector<96x128xf32>
    %77 = math.exp %76 : vector<96x128xf32>
    %cst_60 = arith.constant 1.000000e+00 : f32
    %78 = vector.broadcast %cst_60 : f32 to vector<96x128xf32>
    %79 = arith.addf %78, %77 : vector<96x128xf32>
    %80 = arith.divf %78, %79 : vector<96x128xf32>
    %81 = arith.mulf %75, %80 : vector<96x128xf32>
    %82 = vector.shape_cast %81 : vector<96x128xf32> to vector<6x16x128xf32>
    %83 = arith.truncf %82 : vector<6x16x128xf32> to vector<6x16x128xbf16>
    %c0_61 = arith.constant 0 : index
    %c0_62 = arith.constant 0 : index
    %c0_63 = arith.constant 0 : index
    %84 = vector.load %arg12[%c0_61, %c0_62, %c0_63] : memref<6x16x128xbf16, #tpu.memory_space<vmem>>, vector<6x16x128xbf16>
    tpu.vector_store %arg12[%c0_61, %c0_62, %c0_63], %83 {strides = array<i32>} : memref<6x16x128xbf16, #tpu.memory_space<vmem>>, vector<6x16x128xbf16>,
    %c0_i32_64 = arith.constant 0 : i32
    %85 = arith.cmpi eq, %arg1, %c0_i32_64 : i32
    %86 = arith.extui %85 : i1 to i32
    %c0_i32_65 = arith.constant 0 : i32
    %87 = arith.cmpi ne, %86, %c0_i32_65 : i32
    scf.if %87 {
      %cst_130 = arith.constant 0.000000e+00 : bf16
      %167 = vector.broadcast %cst_130 : bf16 to vector<16x128xbf16>
      %c0_131 = arith.constant 0 : index
      %c0_132 = arith.constant 0 : index
      %c0_133 = arith.constant 0 : index
      %168 = vector.load %arg12[%c0_131, %c0_132, %c0_133] : memref<6x16x128xbf16, #tpu.memory_space<vmem>>, vector<1x16x128xbf16>
      %169 = vector.shape_cast %168 : vector<1x16x128xbf16> to vector<16x128xbf16>
      %170 = vector.shape_cast %167 : vector<16x128xbf16> to vector<1x16x128xbf16>
      tpu.vector_store %arg12[%c0_131, %c0_132, %c0_133], %170 {strides = array<i32>} : memref<6x16x128xbf16, #tpu.memory_space<vmem>>, vector<1x16x128xbf16>,
    } else {
    }
    %c3_i32_66 = arith.constant 3 : i32
    %88 = arith.cmpi eq, %arg1, %c3_i32_66 : i32
    %89 = arith.extui %88 : i1 to i32
    %c0_i32_67 = arith.constant 0 : i32
    %90 = arith.cmpi ne, %89, %c0_i32_67 : i32
    scf.if %90 {
      %cst_130 = arith.constant 0.000000e+00 : bf16
      %167 = vector.broadcast %cst_130 : bf16 to vector<16x128xbf16>
      %c5 = arith.constant 5 : index
      %c0_131 = arith.constant 0 : index
      %c0_132 = arith.constant 0 : index
      %168 = vector.load %arg12[%c5, %c0_131, %c0_132] : memref<6x16x128xbf16, #tpu.memory_space<vmem>>, vector<1x16x128xbf16>
      %169 = vector.shape_cast %168 : vector<1x16x128xbf16> to vector<16x128xbf16>
      %170 = vector.shape_cast %167 : vector<16x128xbf16> to vector<1x16x128xbf16>
      tpu.vector_store %arg12[%c5, %c0_131, %c0_132], %170 {strides = array<i32>} : memref<6x16x128xbf16, #tpu.memory_space<vmem>>, vector<1x16x128xbf16>,
    } else {
    }
    %c0_68 = arith.constant 0 : index
    %c0_69 = arith.constant 0 : index
    %c0_70 = arith.constant 0 : index
    %91 = vector.load %arg12[%c0_68, %c0_69, %c0_70] : memref<6x16x128xbf16, #tpu.memory_space<vmem>>, vector<6x16x128xbf16>
    %cst_71 = arith.constant 0.000000e+00 : bf16
    %92 = vector.broadcast %cst_71 : bf16 to vector<6x1x128xbf16>
    %93 = vector.extract_strided_slice %91 {offsets = [0, 0, 0], sizes = [6, 15, 128], strides = [1, 1, 1]} : vector<6x16x128xbf16> to vector<6x15x128xbf16>
    %94 = tpu.concatenate %92, %93 in 1 : vector<6x1x128xbf16>, vector<6x15x128xbf16> -> vector<6x16x128xbf16>
    %95 = vector.extract_strided_slice %91 {offsets = [0, 1, 0], sizes = [6, 15, 128], strides = [1, 1, 1]} : vector<6x16x128xbf16> to vector<6x15x128xbf16>
    %96 = tpu.concatenate %95, %92 in 1 : vector<6x15x128xbf16>, vector<6x1x128xbf16> -> vector<6x16x128xbf16>
    %97 = vector.shape_cast %94 : vector<6x16x128xbf16> to vector<96x128xbf16>
    %98 = vector.shape_cast %91 : vector<6x16x128xbf16> to vector<96x128xbf16>
    %99 = vector.shape_cast %96 : vector<6x16x128xbf16> to vector<96x128xbf16>
    %100 = vector.extract_strided_slice %97 {offsets = [0, 0], sizes = [64, 128], strides = [1, 1]} : vector<96x128xbf16> to vector<64x128xbf16>
    %c0_72 = arith.constant 0 : index
    %c0_73 = arith.constant 0 : index
    %c0_74 = arith.constant 0 : index
    %c0_75 = arith.constant 0 : index
    %101 = vector.load %arg8[%c0_72, %c0_73, %c0_74, %c0_75] : memref<3x3x128x128xbf16, #tpu.memory_space<vmem>>, vector<1x1x128x128xbf16>
    %102 = vector.shape_cast %101 : vector<1x1x128x128xbf16> to vector<128x128xbf16>
    %cst_76 = arith.constant dense<0.000000e+00> : vector<64x128xf32>
    %103 = tpu.matmul %100, %102, %cst_76 {dimension_numbers = #tpu.dot_dimension_numbers<[1], [0], [0], [1], [0, 0, 1, 1], [], []>} : vector<64x128xbf16>, vector<128x128xbf16>, vector<64x128xf32> -> vector<64x128xf32>
    %104 = vector.extract_strided_slice %98 {offsets = [0, 0], sizes = [64, 128], strides = [1, 1]} : vector<96x128xbf16> to vector<64x128xbf16>
    %c0_77 = arith.constant 0 : index
    %c1_78 = arith.constant 1 : index
    %c0_79 = arith.constant 0 : index
    %c0_80 = arith.constant 0 : index
    %105 = vector.load %arg8[%c0_77, %c1_78, %c0_79, %c0_80] : memref<3x3x128x128xbf16, #tpu.memory_space<vmem>>, vector<1x1x128x128xbf16>
    %106 = vector.shape_cast %105 : vector<1x1x128x128xbf16> to vector<128x128xbf16>
    %cst_81 = arith.constant dense<0.000000e+00> : vector<64x128xf32>
    %107 = tpu.matmul %104, %106, %cst_81 {dimension_numbers = #tpu.dot_dimension_numbers<[1], [0], [0], [1], [0, 0, 1, 1], [], []>} : vector<64x128xbf16>, vector<128x128xbf16>, vector<64x128xf32> -> vector<64x128xf32>
    %108 = arith.addf %103, %107 : vector<64x128xf32>
    %109 = vector.extract_strided_slice %99 {offsets = [0, 0], sizes = [64, 128], strides = [1, 1]} : vector<96x128xbf16> to vector<64x128xbf16>
    %c0_82 = arith.constant 0 : index
    %c2_83 = arith.constant 2 : index
    %c0_84 = arith.constant 0 : index
    %c0_85 = arith.constant 0 : index
    %110 = vector.load %arg8[%c0_82, %c2_83, %c0_84, %c0_85] : memref<3x3x128x128xbf16, #tpu.memory_space<vmem>>, vector<1x1x128x128xbf16>
    %111 = vector.shape_cast %110 : vector<1x1x128x128xbf16> to vector<128x128xbf16>
    %cst_86 = arith.constant dense<0.000000e+00> : vector<64x128xf32>
    %112 = tpu.matmul %109, %111, %cst_86 {dimension_numbers = #tpu.dot_dimension_numbers<[1], [0], [0], [1], [0, 0, 1, 1], [], []>} : vector<64x128xbf16>, vector<128x128xbf16>, vector<64x128xf32> -> vector<64x128xf32>
    %113 = arith.addf %108, %112 : vector<64x128xf32>
    %114 = vector.extract_strided_slice %97 {offsets = [16, 0], sizes = [64, 128], strides = [1, 1]} : vector<96x128xbf16> to vector<64x128xbf16>
    %c1_87 = arith.constant 1 : index
    %c0_88 = arith.constant 0 : index
    %c0_89 = arith.constant 0 : index
    %c0_90 = arith.constant 0 : index
    %115 = vector.load %arg8[%c1_87, %c0_88, %c0_89, %c0_90] : memref<3x3x128x128xbf16, #tpu.memory_space<vmem>>, vector<1x1x128x128xbf16>
    %116 = vector.shape_cast %115 : vector<1x1x128x128xbf16> to vector<128x128xbf16>
    %cst_91 = arith.constant dense<0.000000e+00> : vector<64x128xf32>
    %117 = tpu.matmul %114, %116, %cst_91 {dimension_numbers = #tpu.dot_dimension_numbers<[1], [0], [0], [1], [0, 0, 1, 1], [], []>} : vector<64x128xbf16>, vector<128x128xbf16>, vector<64x128xf32> -> vector<64x128xf32>
    %118 = arith.addf %113, %117 : vector<64x128xf32>
    %119 = vector.extract_strided_slice %98 {offsets = [16, 0], sizes = [64, 128], strides = [1, 1]} : vector<96x128xbf16> to vector<64x128xbf16>
    %c1_92 = arith.constant 1 : index
    %c1_93 = arith.constant 1 : index
    %c0_94 = arith.constant 0 : index
    %c0_95 = arith.constant 0 : index
    %120 = vector.load %arg8[%c1_92, %c1_93, %c0_94, %c0_95] : memref<3x3x128x128xbf16, #tpu.memory_space<vmem>>, vector<1x1x128x128xbf16>
    %121 = vector.shape_cast %120 : vector<1x1x128x128xbf16> to vector<128x128xbf16>
    %cst_96 = arith.constant dense<0.000000e+00> : vector<64x128xf32>
    %122 = tpu.matmul %119, %121, %cst_96 {dimension_numbers = #tpu.dot_dimension_numbers<[1], [0], [0], [1], [0, 0, 1, 1], [], []>} : vector<64x128xbf16>, vector<128x128xbf16>, vector<64x128xf32> -> vector<64x128xf32>
    %123 = arith.addf %118, %122 : vector<64x128xf32>
    %124 = vector.extract_strided_slice %99 {offsets = [16, 0], sizes = [64, 128], strides = [1, 1]} : vector<96x128xbf16> to vector<64x128xbf16>
    %c1_97 = arith.constant 1 : index
    %c2_98 = arith.constant 2 : index
    %c0_99 = arith.constant 0 : index
    %c0_100 = arith.constant 0 : index
    %125 = vector.load %arg8[%c1_97, %c2_98, %c0_99, %c0_100] : memref<3x3x128x128xbf16, #tpu.memory_space<vmem>>, vector<1x1x128x128xbf16>
    %126 = vector.shape_cast %125 : vector<1x1x128x128xbf16> to vector<128x128xbf16>
    %cst_101 = arith.constant dense<0.000000e+00> : vector<64x128xf32>
    %127 = tpu.matmul %124, %126, %cst_101 {dimension_numbers = #tpu.dot_dimension_numbers<[1], [0], [0], [1], [0, 0, 1, 1], [], []>} : vector<64x128xbf16>, vector<128x128xbf16>, vector<64x128xf32> -> vector<64x128xf32>
    %128 = arith.addf %123, %127 : vector<64x128xf32>
    %129 = vector.extract_strided_slice %97 {offsets = [32, 0], sizes = [64, 128], strides = [1, 1]} : vector<96x128xbf16> to vector<64x128xbf16>
    %c2_102 = arith.constant 2 : index
    %c0_103 = arith.constant 0 : index
    %c0_104 = arith.constant 0 : index
    %c0_105 = arith.constant 0 : index
    %130 = vector.load %arg8[%c2_102, %c0_103, %c0_104, %c0_105] : memref<3x3x128x128xbf16, #tpu.memory_space<vmem>>, vector<1x1x128x128xbf16>
    %131 = vector.shape_cast %130 : vector<1x1x128x128xbf16> to vector<128x128xbf16>
    %cst_106 = arith.constant dense<0.000000e+00> : vector<64x128xf32>
    %132 = tpu.matmul %129, %131, %cst_106 {dimension_numbers = #tpu.dot_dimension_numbers<[1], [0], [0], [1], [0, 0, 1, 1], [], []>} : vector<64x128xbf16>, vector<128x128xbf16>, vector<64x128xf32> -> vector<64x128xf32>
    %133 = arith.addf %128, %132 : vector<64x128xf32>
    %134 = vector.extract_strided_slice %98 {offsets = [32, 0], sizes = [64, 128], strides = [1, 1]} : vector<96x128xbf16> to vector<64x128xbf16>
    %c2_107 = arith.constant 2 : index
    %c1_108 = arith.constant 1 : index
    %c0_109 = arith.constant 0 : index
    %c0_110 = arith.constant 0 : index
    %135 = vector.load %arg8[%c2_107, %c1_108, %c0_109, %c0_110] : memref<3x3x128x128xbf16, #tpu.memory_space<vmem>>, vector<1x1x128x128xbf16>
    %136 = vector.shape_cast %135 : vector<1x1x128x128xbf16> to vector<128x128xbf16>
    %cst_111 = arith.constant dense<0.000000e+00> : vector<64x128xf32>
    %137 = tpu.matmul %134, %136, %cst_111 {dimension_numbers = #tpu.dot_dimension_numbers<[1], [0], [0], [1], [0, 0, 1, 1], [], []>} : vector<64x128xbf16>, vector<128x128xbf16>, vector<64x128xf32> -> vector<64x128xf32>
    %138 = arith.addf %133, %137 : vector<64x128xf32>
    %139 = vector.extract_strided_slice %99 {offsets = [32, 0], sizes = [64, 128], strides = [1, 1]} : vector<96x128xbf16> to vector<64x128xbf16>
    %c2_112 = arith.constant 2 : index
    %c2_113 = arith.constant 2 : index
    %c0_114 = arith.constant 0 : index
    %c0_115 = arith.constant 0 : index
    %140 = vector.load %arg8[%c2_112, %c2_113, %c0_114, %c0_115] : memref<3x3x128x128xbf16, #tpu.memory_space<vmem>>, vector<1x1x128x128xbf16>
    %141 = vector.shape_cast %140 : vector<1x1x128x128xbf16> to vector<128x128xbf16>
    %cst_116 = arith.constant dense<0.000000e+00> : vector<64x128xf32>
    %142 = tpu.matmul %139, %141, %cst_116 {dimension_numbers = #tpu.dot_dimension_numbers<[1], [0], [0], [1], [0, 0, 1, 1], [], []>} : vector<64x128xbf16>, vector<128x128xbf16>, vector<64x128xf32> -> vector<64x128xf32>
    %143 = arith.addf %138, %142 : vector<64x128xf32>
    %c0_117 = arith.constant 0 : index
    %c0_118 = arith.constant 0 : index
    %144 = vector.load %arg9[%c0_117, %c0_118] : memref<1x128xf32, #tpu.memory_space<vmem>>, vector<1x128xf32>
    %145 = vector.broadcast %144 : vector<1x128xf32> to vector<64x128xf32>
    %146 = arith.mulf %143, %145 : vector<64x128xf32>
    %c0_119 = arith.constant 0 : index
    %c0_120 = arith.constant 0 : index
    %147 = vector.load %arg10[%c0_119, %c0_120] : memref<1x128xf32, #tpu.memory_space<vmem>>, vector<1x128xf32>
    %148 = vector.broadcast %147 : vector<1x128xf32> to vector<64x128xf32>
    %149 = arith.addf %146, %148 : vector<64x128xf32>
    %150 = arith.negf %149 : vector<64x128xf32>
    %151 = math.exp %150 : vector<64x128xf32>
    %cst_121 = arith.constant 1.000000e+00 : f32
    %152 = vector.broadcast %cst_121 : f32 to vector<64x128xf32>
    %153 = arith.addf %152, %151 : vector<64x128xf32>
    %154 = arith.divf %152, %153 : vector<64x128xf32>
    %155 = arith.mulf %149, %154 : vector<64x128xf32>
    %156 = vector.shape_cast %155 : vector<64x128xf32> to vector<4x16x128xf32>
    %157 = arith.truncf %156 : vector<4x16x128xf32> to vector<4x16x128xbf16>
    %c0_122 = arith.constant 0 : index
    %c0_123 = arith.constant 0 : index
    %c0_124 = arith.constant 0 : index
    %c0_125 = arith.constant 0 : index
    %158 = vector.load %arg11[%c0_122, %c0_123, %c0_124, %c0_125] : memref<1x4x16x128xbf16, #tpu.memory_space<vmem>>, vector<1x4x16x128xbf16>
    %159 = vector.shape_cast %158 : vector<1x4x16x128xbf16> to vector<4x16x128xbf16>
    %160 = vector.shape_cast %157 : vector<4x16x128xbf16> to vector<1x4x16x128xbf16>
    tpu.vector_store %arg11[%c0_122, %c0_123, %c0_124, %c0_125], %160 {strides = array<i32>} : memref<1x4x16x128xbf16, #tpu.memory_space<vmem>>, vector<1x4x16x128xbf16>,
    %161 = vector.extract_strided_slice %156 {offsets = [0, 0, 0], sizes = [4, 16, 4], strides = [1, 1, 1]} : vector<4x16x128xf32> to vector<4x16x4xf32>
    %162 = arith.addf %161, %1 : vector<4x16x4xf32>
    %163 = arith.truncf %162 : vector<4x16x4xf32> to vector<4x16x4xbf16>
    %c0_126 = arith.constant 0 : index
    %c0_127 = arith.constant 0 : index
    %c0_128 = arith.constant 0 : index
    %c0_129 = arith.constant 0 : index
    %164 = vector.load %arg11[%c0_126, %c0_127, %c0_128, %c0_129] : memref<1x4x16x128xbf16, #tpu.memory_space<vmem>>, vector<1x4x16x4xbf16>
    %165 = vector.shape_cast %164 : vector<1x4x16x4xbf16> to vector<4x16x4xbf16>
    %166 = vector.shape_cast %163 : vector<4x16x4xbf16> to vector<1x4x16x4xbf16>
    tpu.vector_store %arg11[%c0_126, %c0_127, %c0_128, %c0_129], %166 {strides = array<i32>} : memref<1x4x16x128xbf16, #tpu.memory_space<vmem>>, vector<1x4x16x4xbf16>,
    return
  }
  func.func @transform_0(%arg0: i32, %arg1: i32) -> (i32, i32, i32, i32) {
    %c0_i32 = arith.constant 0 : i32
    %c0_i32_0 = arith.constant 0 : i32
    %c0_i32_1 = arith.constant 0 : i32
    return %arg0, %arg1, %c0_i32, %c0_i32_0 : i32, i32, i32, i32
  }
  func.func @transform_1(%arg0: i32, %arg1: i32) -> (i32, i32, i32, i32) {
    %c2_i32 = arith.constant 2 : i32
    %0 = arith.muli %arg1, %c2_i32 : i32
    %c1_i32 = arith.constant 1 : i32
    %1 = arith.subi %0, %c1_i32 : i32
    %c0_i32 = arith.constant 0 : i32
    %2 = arith.maxsi %1, %c0_i32 : i32
    %c0_i32_0 = arith.constant 0 : i32
    %c0_i32_1 = arith.constant 0 : i32
    %c0_i32_2 = arith.constant 0 : i32
    return %arg0, %2, %c0_i32_0, %c0_i32_1 : i32, i32, i32, i32
  }
  func.func @transform_2(%arg0: i32, %arg1: i32) -> (i32, i32, i32, i32) {
    %c1_i32 = arith.constant 1 : i32
    %0 = arith.addi %arg1, %c1_i32 : i32
    %c2_i32 = arith.constant 2 : i32
    %1 = arith.muli %0, %c2_i32 : i32
    %c7_i32 = arith.constant 7 : i32
    %2 = arith.minsi %1, %c7_i32 : i32
    %c0_i32 = arith.constant 0 : i32
    %c0_i32_0 = arith.constant 0 : i32
    %c0_i32_1 = arith.constant 0 : i32
    return %arg0, %2, %c0_i32, %c0_i32_0 : i32, i32, i32, i32
  }
  func.func @transform_3(%arg0: i32, %arg1: i32) -> (i32, i32, i32, i32) {
    %c0_i32 = arith.constant 0 : i32
    %c0_i32_0 = arith.constant 0 : i32
    %c0_i32_1 = arith.constant 0 : i32
    %c0_i32_2 = arith.constant 0 : i32
    %c0_i32_3 = arith.constant 0 : i32
    return %c0_i32, %c0_i32_0, %c0_i32_1, %c0_i32_2 : i32, i32, i32, i32
  }
  func.func @transform_4(%arg0: i32, %arg1: i32) -> (i32, i32) {
    %c0_i32 = arith.constant 0 : i32
    %c0_i32_0 = arith.constant 0 : i32
    %c0_i32_1 = arith.constant 0 : i32
    return %c0_i32, %c0_i32_0 : i32, i32
  }
  func.func @transform_5(%arg0: i32, %arg1: i32) -> (i32, i32) {
    %c0_i32 = arith.constant 0 : i32
    %c0_i32_0 = arith.constant 0 : i32
    %c0_i32_1 = arith.constant 0 : i32
    return %c0_i32, %c0_i32_0 : i32, i32
  }
  func.func @transform_6(%arg0: i32, %arg1: i32) -> (i32, i32, i32, i32) {
    %c0_i32 = arith.constant 0 : i32
    %c0_i32_0 = arith.constant 0 : i32
    %c0_i32_1 = arith.constant 0 : i32
    %c0_i32_2 = arith.constant 0 : i32
    %c0_i32_3 = arith.constant 0 : i32
    return %c0_i32, %c0_i32_0, %c0_i32_1, %c0_i32_2 : i32, i32, i32, i32
  }
  func.func @transform_7(%arg0: i32, %arg1: i32) -> (i32, i32) {
    %c0_i32 = arith.constant 0 : i32
    %c0_i32_0 = arith.constant 0 : i32
    %c0_i32_1 = arith.constant 0 : i32
    return %c0_i32, %c0_i32_0 : i32, i32
  }
  func.func @transform_8(%arg0: i32, %arg1: i32) -> (i32, i32) {
    %c0_i32 = arith.constant 0 : i32
    %c0_i32_0 = arith.constant 0 : i32
    %c0_i32_1 = arith.constant 0 : i32
    return %c0_i32, %c0_i32_0 : i32, i32
  }
  func.func @transform_9(%arg0: i32, %arg1: i32) -> (i32, i32, i32, i32) {
    %c0_i32 = arith.constant 0 : i32
    %c0_i32_0 = arith.constant 0 : i32
    %c0_i32_1 = arith.constant 0 : i32
    return %arg0, %arg1, %c0_i32, %c0_i32_0 : i32, i32, i32, i32
  }
}

module attributes {stable_mosaic.version = 11 : i64} {
  func.func @_bottleneck_kernel(%arg0: i32, %arg1: i32, %arg2: memref<1x4x16x4xf32, #tpu.memory_space<vmem>>, %arg3: memref<1x2x16x4xf32, #tpu.memory_space<vmem>>, %arg4: memref<1x2x16x4xf32, #tpu.memory_space<vmem>>, %arg5: memref<3x3x4x128xbf16, #tpu.memory_space<vmem>>, %arg6: memref<1x128xf32, #tpu.memory_space<vmem>>, %arg7: memref<1x128xf32, #tpu.memory_space<vmem>>, %arg8: memref<3x3x128x128xbf16, #tpu.memory_space<vmem>>, %arg9: memref<1x128xf32, #tpu.memory_space<vmem>>, %arg10: memref<1x128xf32, #tpu.memory_space<vmem>>, %arg11: memref<1x4x16x128xbf16, #tpu.memory_space<vmem>>, %arg12: memref<6x16x128xbf16, #tpu.memory_space<vmem>>) attributes {dimension_semantics = [#tpu.dimension_semantics<parallel>, #tpu.dimension_semantics<parallel>], iteration_bounds = array<i64: 2, 4>, scalar_prefetch = 0 : i64, scratch_operands = 1 : i64, tpu.core_type = #tpu.core_type<tc>, window_params = [{transform_indices = @transform_0, window_bounds = array<i64: 1, 4, 16, 4>}, {transform_indices = @transform_1, window_bounds = array<i64: 1, 2, 16, 4>}, {transform_indices = @transform_2, window_bounds = array<i64: 1, 2, 16, 4>}, {pipeline_mode = #tpu.pipeline_mode<synchronous>, transform_indices = @transform_3, window_bounds = array<i64: 3, 3, 4, 128>}, {pipeline_mode = #tpu.pipeline_mode<synchronous>, transform_indices = @transform_4, window_bounds = array<i64: 1, 128>}, {pipeline_mode = #tpu.pipeline_mode<synchronous>, transform_indices = @transform_5, window_bounds = array<i64: 1, 128>}, {pipeline_mode = #tpu.pipeline_mode<synchronous>, transform_indices = @transform_6, window_bounds = array<i64: 3, 3, 128, 128>}, {pipeline_mode = #tpu.pipeline_mode<synchronous>, transform_indices = @transform_7, window_bounds = array<i64: 1, 128>}, {pipeline_mode = #tpu.pipeline_mode<synchronous>, transform_indices = @transform_8, window_bounds = array<i64: 1, 128>}, {transform_indices = @transform_9, window_bounds = array<i64: 1, 4, 16, 128>}]} {
    %c0 = arith.constant 0 : index
    %c0_0 = arith.constant 0 : index
    %c0_1 = arith.constant 0 : index
    %c0_2 = arith.constant 0 : index
    %0 = vector.load %arg2[%c0, %c0_0, %c0_1, %c0_2] : memref<1x4x16x4xf32, #tpu.memory_space<vmem>>, vector<1x4x16x4xf32>
    %1 = vector.shape_cast %0 : vector<1x4x16x4xf32> to vector<4x16x4xf32>
    %2 = arith.truncf %1 : vector<4x16x4xf32> to vector<4x16x4xbf16>
    %c0_i32 = arith.constant 0 : i32
    %3 = arith.cmpi sgt, %arg1, %c0_i32 : i32
    %c0_3 = arith.constant 0 : index
    %c0_4 = arith.constant 0 : index
    %c0_5 = arith.constant 0 : index
    %c0_6 = arith.constant 0 : index
    %4 = vector.load %arg3[%c0_3, %c0_4, %c0_5, %c0_6] : memref<1x2x16x4xf32, #tpu.memory_space<vmem>>, vector<1x2x16x4xf32>
    %5 = vector.shape_cast %4 : vector<1x2x16x4xf32> to vector<2x16x4xf32>
    %6 = arith.truncf %5 : vector<2x16x4xf32> to vector<2x16x4xbf16>
    %c0_i32_7 = arith.constant 0 : i32
    %7 = arith.sitofp %c0_i32_7 : i32 to bf16
    %8 = vector.broadcast %7 : bf16 to vector<2x16x4xbf16>
    %9 = arith.select %3, %6, %8 : vector<2x16x4xbf16>
    %c3_i32 = arith.constant 3 : i32
    %10 = arith.cmpi slt, %arg1, %c3_i32 : i32
    %c0_8 = arith.constant 0 : index
    %c0_9 = arith.constant 0 : index
    %c0_10 = arith.constant 0 : index
    %c0_11 = arith.constant 0 : index
    %11 = vector.load %arg4[%c0_8, %c0_9, %c0_10, %c0_11] : memref<1x2x16x4xf32, #tpu.memory_space<vmem>>, vector<1x2x16x4xf32>
    %12 = vector.shape_cast %11 : vector<1x2x16x4xf32> to vector<2x16x4xf32>
    %13 = arith.truncf %12 : vector<2x16x4xf32> to vector<2x16x4xbf16>
    %c0_i32_12 = arith.constant 0 : i32
    %14 = arith.sitofp %c0_i32_12 : i32 to bf16
    %15 = vector.broadcast %14 : bf16 to vector<2x16x4xbf16>
    %16 = arith.select %10, %13, %15 : vector<2x16x4xbf16>
    %17 = tpu.concatenate %9, %2, %16 in 0 : vector<2x16x4xbf16>, vector<4x16x4xbf16>, vector<2x16x4xbf16> -> vector<8x16x4xbf16>
    %cst = arith.constant 0.000000e+00 : bf16
    %18 = vector.broadcast %cst : bf16 to vector<8x1x4xbf16>
    %19 = vector.extract_strided_slice %17 {offsets = [0, 0, 0], sizes = [8, 15, 4], strides = [1, 1, 1]} : vector<8x16x4xbf16> to vector<8x15x4xbf16>
    %20 = tpu.concatenate %18, %19 in 1 : vector<8x1x4xbf16>, vector<8x15x4xbf16> -> vector<8x16x4xbf16>
    %21 = vector.extract_strided_slice %17 {offsets = [0, 1, 0], sizes = [8, 15, 4], strides = [1, 1, 1]} : vector<8x16x4xbf16> to vector<8x15x4xbf16>
    %22 = tpu.concatenate %21, %18 in 1 : vector<8x15x4xbf16>, vector<8x1x4xbf16> -> vector<8x16x4xbf16>
    %23 = vector.shape_cast %20 : vector<8x16x4xbf16> to vector<128x4xbf16>
    %24 = vector.shape_cast %17 : vector<8x16x4xbf16> to vector<128x4xbf16>
    %25 = vector.shape_cast %22 : vector<8x16x4xbf16> to vector<128x4xbf16>
    %26 = vector.extract_strided_slice %23 {offsets = [0, 0], sizes = [96, 4], strides = [1, 1]} : vector<128x4xbf16> to vector<96x4xbf16>
    %c0_13 = arith.constant 0 : index
    %c0_14 = arith.constant 0 : index
    %c0_15 = arith.constant 0 : index
    %c0_16 = arith.constant 0 : index
    %27 = vector.load %arg5[%c0_13, %c0_14, %c0_15, %c0_16] : memref<3x3x4x128xbf16, #tpu.memory_space<vmem>>, vector<1x1x4x128xbf16>
    %28 = vector.shape_cast %27 : vector<1x1x4x128xbf16> to vector<4x128xbf16>
    %cst_17 = arith.constant dense<0.000000e+00> : vector<96x128xf32>
    %29 = tpu.matmul %26, %28, %cst_17 {dimension_numbers = #tpu.dot_dimension_numbers<[1], [0], [0], [1], [0, 0, 1, 1], [], []>} : vector<96x4xbf16>, vector<4x128xbf16>, vector<96x128xf32> -> vector<96x128xf32>
    %30 = vector.extract_strided_slice %24 {offsets = [0, 0], sizes = [96, 4], strides = [1, 1]} : vector<128x4xbf16> to vector<96x4xbf16>
    %c0_18 = arith.constant 0 : index
    %c1 = arith.constant 1 : index
    %c0_19 = arith.constant 0 : index
    %c0_20 = arith.constant 0 : index
    %31 = vector.load %arg5[%c0_18, %c1, %c0_19, %c0_20] : memref<3x3x4x128xbf16, #tpu.memory_space<vmem>>, vector<1x1x4x128xbf16>
    %32 = vector.shape_cast %31 : vector<1x1x4x128xbf16> to vector<4x128xbf16>
    %cst_21 = arith.constant dense<0.000000e+00> : vector<96x128xf32>
    %33 = tpu.matmul %30, %32, %cst_21 {dimension_numbers = #tpu.dot_dimension_numbers<[1], [0], [0], [1], [0, 0, 1, 1], [], []>} : vector<96x4xbf16>, vector<4x128xbf16>, vector<96x128xf32> -> vector<96x128xf32>
    %34 = arith.addf %29, %33 : vector<96x128xf32>
    %35 = vector.extract_strided_slice %25 {offsets = [0, 0], sizes = [96, 4], strides = [1, 1]} : vector<128x4xbf16> to vector<96x4xbf16>
    %c0_22 = arith.constant 0 : index
    %c2 = arith.constant 2 : index
    %c0_23 = arith.constant 0 : index
    %c0_24 = arith.constant 0 : index
    %36 = vector.load %arg5[%c0_22, %c2, %c0_23, %c0_24] : memref<3x3x4x128xbf16, #tpu.memory_space<vmem>>, vector<1x1x4x128xbf16>
    %37 = vector.shape_cast %36 : vector<1x1x4x128xbf16> to vector<4x128xbf16>
    %cst_25 = arith.constant dense<0.000000e+00> : vector<96x128xf32>
    %38 = tpu.matmul %35, %37, %cst_25 {dimension_numbers = #tpu.dot_dimension_numbers<[1], [0], [0], [1], [0, 0, 1, 1], [], []>} : vector<96x4xbf16>, vector<4x128xbf16>, vector<96x128xf32> -> vector<96x128xf32>
    %39 = arith.addf %34, %38 : vector<96x128xf32>
    %40 = vector.extract_strided_slice %23 {offsets = [16, 0], sizes = [96, 4], strides = [1, 1]} : vector<128x4xbf16> to vector<96x4xbf16>
    %c1_26 = arith.constant 1 : index
    %c0_27 = arith.constant 0 : index
    %c0_28 = arith.constant 0 : index
    %c0_29 = arith.constant 0 : index
    %41 = vector.load %arg5[%c1_26, %c0_27, %c0_28, %c0_29] : memref<3x3x4x128xbf16, #tpu.memory_space<vmem>>, vector<1x1x4x128xbf16>
    %42 = vector.shape_cast %41 : vector<1x1x4x128xbf16> to vector<4x128xbf16>
    %cst_30 = arith.constant dense<0.000000e+00> : vector<96x128xf32>
    %43 = tpu.matmul %40, %42, %cst_30 {dimension_numbers = #tpu.dot_dimension_numbers<[1], [0], [0], [1], [0, 0, 1, 1], [], []>} : vector<96x4xbf16>, vector<4x128xbf16>, vector<96x128xf32> -> vector<96x128xf32>
    %44 = arith.addf %39, %43 : vector<96x128xf32>
    %45 = vector.extract_strided_slice %24 {offsets = [16, 0], sizes = [96, 4], strides = [1, 1]} : vector<128x4xbf16> to vector<96x4xbf16>
    %c1_31 = arith.constant 1 : index
    %c1_32 = arith.constant 1 : index
    %c0_33 = arith.constant 0 : index
    %c0_34 = arith.constant 0 : index
    %46 = vector.load %arg5[%c1_31, %c1_32, %c0_33, %c0_34] : memref<3x3x4x128xbf16, #tpu.memory_space<vmem>>, vector<1x1x4x128xbf16>
    %47 = vector.shape_cast %46 : vector<1x1x4x128xbf16> to vector<4x128xbf16>
    %cst_35 = arith.constant dense<0.000000e+00> : vector<96x128xf32>
    %48 = tpu.matmul %45, %47, %cst_35 {dimension_numbers = #tpu.dot_dimension_numbers<[1], [0], [0], [1], [0, 0, 1, 1], [], []>} : vector<96x4xbf16>, vector<4x128xbf16>, vector<96x128xf32> -> vector<96x128xf32>
    %49 = arith.addf %44, %48 : vector<96x128xf32>
    %50 = vector.extract_strided_slice %25 {offsets = [16, 0], sizes = [96, 4], strides = [1, 1]} : vector<128x4xbf16> to vector<96x4xbf16>
    %c1_36 = arith.constant 1 : index
    %c2_37 = arith.constant 2 : index
    %c0_38 = arith.constant 0 : index
    %c0_39 = arith.constant 0 : index
    %51 = vector.load %arg5[%c1_36, %c2_37, %c0_38, %c0_39] : memref<3x3x4x128xbf16, #tpu.memory_space<vmem>>, vector<1x1x4x128xbf16>
    %52 = vector.shape_cast %51 : vector<1x1x4x128xbf16> to vector<4x128xbf16>
    %cst_40 = arith.constant dense<0.000000e+00> : vector<96x128xf32>
    %53 = tpu.matmul %50, %52, %cst_40 {dimension_numbers = #tpu.dot_dimension_numbers<[1], [0], [0], [1], [0, 0, 1, 1], [], []>} : vector<96x4xbf16>, vector<4x128xbf16>, vector<96x128xf32> -> vector<96x128xf32>
    %54 = arith.addf %49, %53 : vector<96x128xf32>
    %55 = vector.extract_strided_slice %23 {offsets = [32, 0], sizes = [96, 4], strides = [1, 1]} : vector<128x4xbf16> to vector<96x4xbf16>
    %c2_41 = arith.constant 2 : index
    %c0_42 = arith.constant 0 : index
    %c0_43 = arith.constant 0 : index
    %c0_44 = arith.constant 0 : index
    %56 = vector.load %arg5[%c2_41, %c0_42, %c0_43, %c0_44] : memref<3x3x4x128xbf16, #tpu.memory_space<vmem>>, vector<1x1x4x128xbf16>
    %57 = vector.shape_cast %56 : vector<1x1x4x128xbf16> to vector<4x128xbf16>
    %cst_45 = arith.constant dense<0.000000e+00> : vector<96x128xf32>
    %58 = tpu.matmul %55, %57, %cst_45 {dimension_numbers = #tpu.dot_dimension_numbers<[1], [0], [0], [1], [0, 0, 1, 1], [], []>} : vector<96x4xbf16>, vector<4x128xbf16>, vector<96x128xf32> -> vector<96x128xf32>
    %59 = arith.addf %54, %58 : vector<96x128xf32>
    %60 = vector.extract_strided_slice %24 {offsets = [32, 0], sizes = [96, 4], strides = [1, 1]} : vector<128x4xbf16> to vector<96x4xbf16>
    %c2_46 = arith.constant 2 : index
    %c1_47 = arith.constant 1 : index
    %c0_48 = arith.constant 0 : index
    %c0_49 = arith.constant 0 : index
    %61 = vector.load %arg5[%c2_46, %c1_47, %c0_48, %c0_49] : memref<3x3x4x128xbf16, #tpu.memory_space<vmem>>, vector<1x1x4x128xbf16>
    %62 = vector.shape_cast %61 : vector<1x1x4x128xbf16> to vector<4x128xbf16>
    %cst_50 = arith.constant dense<0.000000e+00> : vector<96x128xf32>
    %63 = tpu.matmul %60, %62, %cst_50 {dimension_numbers = #tpu.dot_dimension_numbers<[1], [0], [0], [1], [0, 0, 1, 1], [], []>} : vector<96x4xbf16>, vector<4x128xbf16>, vector<96x128xf32> -> vector<96x128xf32>
    %64 = arith.addf %59, %63 : vector<96x128xf32>
    %65 = vector.extract_strided_slice %25 {offsets = [32, 0], sizes = [96, 4], strides = [1, 1]} : vector<128x4xbf16> to vector<96x4xbf16>
    %c2_51 = arith.constant 2 : index
    %c2_52 = arith.constant 2 : index
    %c0_53 = arith.constant 0 : index
    %c0_54 = arith.constant 0 : index
    %66 = vector.load %arg5[%c2_51, %c2_52, %c0_53, %c0_54] : memref<3x3x4x128xbf16, #tpu.memory_space<vmem>>, vector<1x1x4x128xbf16>
    %67 = vector.shape_cast %66 : vector<1x1x4x128xbf16> to vector<4x128xbf16>
    %cst_55 = arith.constant dense<0.000000e+00> : vector<96x128xf32>
    %68 = tpu.matmul %65, %67, %cst_55 {dimension_numbers = #tpu.dot_dimension_numbers<[1], [0], [0], [1], [0, 0, 1, 1], [], []>} : vector<96x4xbf16>, vector<4x128xbf16>, vector<96x128xf32> -> vector<96x128xf32>
    %69 = arith.addf %64, %68 : vector<96x128xf32>
    %c0_56 = arith.constant 0 : index
    %c0_57 = arith.constant 0 : index
    %70 = vector.load %arg6[%c0_56, %c0_57] : memref<1x128xf32, #tpu.memory_space<vmem>>, vector<1x128xf32>
    %71 = vector.broadcast %70 : vector<1x128xf32> to vector<96x128xf32>
    %72 = arith.mulf %69, %71 : vector<96x128xf32>
    %c0_58 = arith.constant 0 : index
    %c0_59 = arith.constant 0 : index
    %73 = vector.load %arg7[%c0_58, %c0_59] : memref<1x128xf32, #tpu.memory_space<vmem>>, vector<1x128xf32>
    %74 = vector.broadcast %73 : vector<1x128xf32> to vector<96x128xf32>
    %75 = arith.addf %72, %74 : vector<96x128xf32>
    %76 = arith.negf %75 : vector<96x128xf32>
    %77 = math.exp %76 : vector<96x128xf32>
    %cst_60 = arith.constant 1.000000e+00 : f32
    %78 = vector.broadcast %cst_60 : f32 to vector<96x128xf32>
    %79 = arith.addf %78, %77 : vector<96x128xf32>
    %80 = arith.divf %78, %79 : vector<96x128xf32>
    %81 = arith.mulf %75, %80 : vector<96x128xf32>
    %82 = vector.shape_cast %81 : vector<96x128xf32> to vector<6x16x128xf32>
    %83 = arith.truncf %82 : vector<6x16x128xf32> to vector<6x16x128xbf16>
    %c0_61 = arith.constant 0 : index
    %c0_62 = arith.constant 0 : index
    %c0_63 = arith.constant 0 : index
    %84 = vector.load %arg12[%c0_61, %c0_62, %c0_63] : memref<6x16x128xbf16, #tpu.memory_space<vmem>>, vector<6x16x128xbf16>
    tpu.vector_store %arg12[%c0_61, %c0_62, %c0_63], %83 {strides = array<i32>} : memref<6x16x128xbf16, #tpu.memory_space<vmem>>, vector<6x16x128xbf16>,
    %c0_i32_64 = arith.constant 0 : i32
    %85 = arith.cmpi eq, %arg1, %c0_i32_64 : i32
    %86 = arith.extui %85 : i1 to i32
    %c0_i32_65 = arith.constant 0 : i32
    %87 = arith.cmpi ne, %86, %c0_i32_65 : i32
    scf.if %87 {
      %cst_130 = arith.constant 0.000000e+00 : bf16
      %167 = vector.broadcast %cst_130 : bf16 to vector<16x128xbf16>
      %c0_131 = arith.constant 0 : index
      %c0_132 = arith.constant 0 : index
      %c0_133 = arith.constant 0 : index
      %168 = vector.load %arg12[%c0_131, %c0_132, %c0_133] : memref<6x16x128xbf16, #tpu.memory_space<vmem>>, vector<1x16x128xbf16>
      %169 = vector.shape_cast %168 : vector<1x16x128xbf16> to vector<16x128xbf16>
      %170 = vector.shape_cast %167 : vector<16x128xbf16> to vector<1x16x128xbf16>
      tpu.vector_store %arg12[%c0_131, %c0_132, %c0_133], %170 {strides = array<i32>} : memref<6x16x128xbf16, #tpu.memory_space<vmem>>, vector<1x16x128xbf16>,
    } else {
    }
    %c3_i32_66 = arith.constant 3 : i32
    %88 = arith.cmpi eq, %arg1, %c3_i32_66 : i32
    %89 = arith.extui %88 : i1 to i32
    %c0_i32_67 = arith.constant 0 : i32
    %90 = arith.cmpi ne, %89, %c0_i32_67 : i32
    scf.if %90 {
      %cst_130 = arith.constant 0.000000e+00 : bf16
      %167 = vector.broadcast %cst_130 : bf16 to vector<16x128xbf16>
      %c5 = arith.constant 5 : index
      %c0_131 = arith.constant 0 : index
      %c0_132 = arith.constant 0 : index
      %168 = vector.load %arg12[%c5, %c0_131, %c0_132] : memref<6x16x128xbf16, #tpu.memory_space<vmem>>, vector<1x16x128xbf16>
      %169 = vector.shape_cast %168 : vector<1x16x128xbf16> to vector<16x128xbf16>
      %170 = vector.shape_cast %167 : vector<16x128xbf16> to vector<1x16x128xbf16>
      tpu.vector_store %arg12[%c5, %c0_131, %c0_132], %170 {strides = array<i32>} : memref<6x16x128xbf16, #tpu.memory_space<vmem>>, vector<1x16x128xbf16>,
    } else {
    }
    %c0_68 = arith.constant 0 : index
    %c0_69 = arith.constant 0 : index
    %c0_70 = arith.constant 0 : index
    %91 = vector.load %arg12[%c0_68, %c0_69, %c0_70] : memref<6x16x128xbf16, #tpu.memory_space<vmem>>, vector<6x16x128xbf16>
    %cst_71 = arith.constant 0.000000e+00 : bf16
    %92 = vector.broadcast %cst_71 : bf16 to vector<6x1x128xbf16>
    %93 = vector.extract_strided_slice %91 {offsets = [0, 0, 0], sizes = [6, 15, 128], strides = [1, 1, 1]} : vector<6x16x128xbf16> to vector<6x15x128xbf16>
    %94 = tpu.concatenate %92, %93 in 1 : vector<6x1x128xbf16>, vector<6x15x128xbf16> -> vector<6x16x128xbf16>
    %95 = vector.extract_strided_slice %91 {offsets = [0, 1, 0], sizes = [6, 15, 128], strides = [1, 1, 1]} : vector<6x16x128xbf16> to vector<6x15x128xbf16>
    %96 = tpu.concatenate %95, %92 in 1 : vector<6x15x128xbf16>, vector<6x1x128xbf16> -> vector<6x16x128xbf16>
    %97 = vector.shape_cast %94 : vector<6x16x128xbf16> to vector<96x128xbf16>
    %98 = vector.shape_cast %91 : vector<6x16x128xbf16> to vector<96x128xbf16>
    %99 = vector.shape_cast %96 : vector<6x16x128xbf16> to vector<96x128xbf16>
    %100 = vector.extract_strided_slice %97 {offsets = [0, 0], sizes = [64, 128], strides = [1, 1]} : vector<96x128xbf16> to vector<64x128xbf16>
    %c0_72 = arith.constant 0 : index
    %c0_73 = arith.constant 0 : index
    %c0_74 = arith.constant 0 : index
    %c0_75 = arith.constant 0 : index
    %101 = vector.load %arg8[%c0_72, %c0_73, %c0_74, %c0_75] : memref<3x3x128x128xbf16, #tpu.memory_space<vmem>>, vector<1x1x128x128xbf16>
    %102 = vector.shape_cast %101 : vector<1x1x128x128xbf16> to vector<128x128xbf16>
    %cst_76 = arith.constant dense<0.000000e+00> : vector<64x128xf32>
    %103 = tpu.matmul %100, %102, %cst_76 {dimension_numbers = #tpu.dot_dimension_numbers<[1], [0], [0], [1], [0, 0, 1, 1], [], []>} : vector<64x128xbf16>, vector<128x128xbf16>, vector<64x128xf32> -> vector<64x128xf32>
    %104 = vector.extract_strided_slice %98 {offsets = [0, 0], sizes = [64, 128], strides = [1, 1]} : vector<96x128xbf16> to vector<64x128xbf16>
    %c0_77 = arith.constant 0 : index
    %c1_78 = arith.constant 1 : index
    %c0_79 = arith.constant 0 : index
    %c0_80 = arith.constant 0 : index
    %105 = vector.load %arg8[%c0_77, %c1_78, %c0_79, %c0_80] : memref<3x3x128x128xbf16, #tpu.memory_space<vmem>>, vector<1x1x128x128xbf16>
    %106 = vector.shape_cast %105 : vector<1x1x128x128xbf16> to vector<128x128xbf16>
    %cst_81 = arith.constant dense<0.000000e+00> : vector<64x128xf32>
    %107 = tpu.matmul %104, %106, %cst_81 {dimension_numbers = #tpu.dot_dimension_numbers<[1], [0], [0], [1], [0, 0, 1, 1], [], []>} : vector<64x128xbf16>, vector<128x128xbf16>, vector<64x128xf32> -> vector<64x128xf32>
    %108 = arith.addf %103, %107 : vector<64x128xf32>
    %109 = vector.extract_strided_slice %99 {offsets = [0, 0], sizes = [64, 128], strides = [1, 1]} : vector<96x128xbf16> to vector<64x128xbf16>
    %c0_82 = arith.constant 0 : index
    %c2_83 = arith.constant 2 : index
    %c0_84 = arith.constant 0 : index
    %c0_85 = arith.constant 0 : index
    %110 = vector.load %arg8[%c0_82, %c2_83, %c0_84, %c0_85] : memref<3x3x128x128xbf16, #tpu.memory_space<vmem>>, vector<1x1x128x128xbf16>
    %111 = vector.shape_cast %110 : vector<1x1x128x128xbf16> to vector<128x128xbf16>
    %cst_86 = arith.constant dense<0.000000e+00> : vector<64x128xf32>
    %112 = tpu.matmul %109, %111, %cst_86 {dimension_numbers = #tpu.dot_dimension_numbers<[1], [0], [0], [1], [0, 0, 1, 1], [], []>} : vector<64x128xbf16>, vector<128x128xbf16>, vector<64x128xf32> -> vector<64x128xf32>
    %113 = arith.addf %108, %112 : vector<64x128xf32>
    %114 = vector.extract_strided_slice %97 {offsets = [16, 0], sizes = [64, 128], strides = [1, 1]} : vector<96x128xbf16> to vector<64x128xbf16>
    %c1_87 = arith.constant 1 : index
    %c0_88 = arith.constant 0 : index
    %c0_89 = arith.constant 0 : index
    %c0_90 = arith.constant 0 : index
    %115 = vector.load %arg8[%c1_87, %c0_88, %c0_89, %c0_90] : memref<3x3x128x128xbf16, #tpu.memory_space<vmem>>, vector<1x1x128x128xbf16>
    %116 = vector.shape_cast %115 : vector<1x1x128x128xbf16> to vector<128x128xbf16>
    %cst_91 = arith.constant dense<0.000000e+00> : vector<64x128xf32>
    %117 = tpu.matmul %114, %116, %cst_91 {dimension_numbers = #tpu.dot_dimension_numbers<[1], [0], [0], [1], [0, 0, 1, 1], [], []>} : vector<64x128xbf16>, vector<128x128xbf16>, vector<64x128xf32> -> vector<64x128xf32>
    %118 = arith.addf %113, %117 : vector<64x128xf32>
    %119 = vector.extract_strided_slice %98 {offsets = [16, 0], sizes = [64, 128], strides = [1, 1]} : vector<96x128xbf16> to vector<64x128xbf16>
    %c1_92 = arith.constant 1 : index
    %c1_93 = arith.constant 1 : index
    %c0_94 = arith.constant 0 : index
    %c0_95 = arith.constant 0 : index
    %120 = vector.load %arg8[%c1_92, %c1_93, %c0_94, %c0_95] : memref<3x3x128x128xbf16, #tpu.memory_space<vmem>>, vector<1x1x128x128xbf16>
    %121 = vector.shape_cast %120 : vector<1x1x128x128xbf16> to vector<128x128xbf16>
    %cst_96 = arith.constant dense<0.000000e+00> : vector<64x128xf32>
    %122 = tpu.matmul %119, %121, %cst_96 {dimension_numbers = #tpu.dot_dimension_numbers<[1], [0], [0], [1], [0, 0, 1, 1], [], []>} : vector<64x128xbf16>, vector<128x128xbf16>, vector<64x128xf32> -> vector<64x128xf32>
    %123 = arith.addf %118, %122 : vector<64x128xf32>
    %124 = vector.extract_strided_slice %99 {offsets = [16, 0], sizes = [64, 128], strides = [1, 1]} : vector<96x128xbf16> to vector<64x128xbf16>
    %c1_97 = arith.constant 1 : index
    %c2_98 = arith.constant 2 : index
    %c0_99 = arith.constant 0 : index
    %c0_100 = arith.constant 0 : index
    %125 = vector.load %arg8[%c1_97, %c2_98, %c0_99, %c0_100] : memref<3x3x128x128xbf16, #tpu.memory_space<vmem>>, vector<1x1x128x128xbf16>
    %126 = vector.shape_cast %125 : vector<1x1x128x128xbf16> to vector<128x128xbf16>
    %cst_101 = arith.constant dense<0.000000e+00> : vector<64x128xf32>
    %127 = tpu.matmul %124, %126, %cst_101 {dimension_numbers = #tpu.dot_dimension_numbers<[1], [0], [0], [1], [0, 0, 1, 1], [], []>} : vector<64x128xbf16>, vector<128x128xbf16>, vector<64x128xf32> -> vector<64x128xf32>
    %128 = arith.addf %123, %127 : vector<64x128xf32>
    %129 = vector.extract_strided_slice %97 {offsets = [32, 0], sizes = [64, 128], strides = [1, 1]} : vector<96x128xbf16> to vector<64x128xbf16>
    %c2_102 = arith.constant 2 : index
    %c0_103 = arith.constant 0 : index
    %c0_104 = arith.constant 0 : index
    %c0_105 = arith.constant 0 : index
    %130 = vector.load %arg8[%c2_102, %c0_103, %c0_104, %c0_105] : memref<3x3x128x128xbf16, #tpu.memory_space<vmem>>, vector<1x1x128x128xbf16>
    %131 = vector.shape_cast %130 : vector<1x1x128x128xbf16> to vector<128x128xbf16>
    %cst_106 = arith.constant dense<0.000000e+00> : vector<64x128xf32>
    %132 = tpu.matmul %129, %131, %cst_106 {dimension_numbers = #tpu.dot_dimension_numbers<[1], [0], [0], [1], [0, 0, 1, 1], [], []>} : vector<64x128xbf16>, vector<128x128xbf16>, vector<64x128xf32> -> vector<64x128xf32>
    %133 = arith.addf %128, %132 : vector<64x128xf32>
    %134 = vector.extract_strided_slice %98 {offsets = [32, 0], sizes = [64, 128], strides = [1, 1]} : vector<96x128xbf16> to vector<64x128xbf16>
    %c2_107 = arith.constant 2 : index
    %c1_108 = arith.constant 1 : index
    %c0_109 = arith.constant 0 : index
    %c0_110 = arith.constant 0 : index
    %135 = vector.load %arg8[%c2_107, %c1_108, %c0_109, %c0_110] : memref<3x3x128x128xbf16, #tpu.memory_space<vmem>>, vector<1x1x128x128xbf16>
    %136 = vector.shape_cast %135 : vector<1x1x128x128xbf16> to vector<128x128xbf16>
    %cst_111 = arith.constant dense<0.000000e+00> : vector<64x128xf32>
    %137 = tpu.matmul %134, %136, %cst_111 {dimension_numbers = #tpu.dot_dimension_numbers<[1], [0], [0], [1], [0, 0, 1, 1], [], []>} : vector<64x128xbf16>, vector<128x128xbf16>, vector<64x128xf32> -> vector<64x128xf32>
    %138 = arith.addf %133, %137 : vector<64x128xf32>
    %139 = vector.extract_strided_slice %99 {offsets = [32, 0], sizes = [64, 128], strides = [1, 1]} : vector<96x128xbf16> to vector<64x128xbf16>
    %c2_112 = arith.constant 2 : index
    %c2_113 = arith.constant 2 : index
    %c0_114 = arith.constant 0 : index
    %c0_115 = arith.constant 0 : index
    %140 = vector.load %arg8[%c2_112, %c2_113, %c0_114, %c0_115] : memref<3x3x128x128xbf16, #tpu.memory_space<vmem>>, vector<1x1x128x128xbf16>
    %141 = vector.shape_cast %140 : vector<1x1x128x128xbf16> to vector<128x128xbf16>
    %cst_116 = arith.constant dense<0.000000e+00> : vector<64x128xf32>
    %142 = tpu.matmul %139, %141, %cst_116 {dimension_numbers = #tpu.dot_dimension_numbers<[1], [0], [0], [1], [0, 0, 1, 1], [], []>} : vector<64x128xbf16>, vector<128x128xbf16>, vector<64x128xf32> -> vector<64x128xf32>
    %143 = arith.addf %138, %142 : vector<64x128xf32>
    %c0_117 = arith.constant 0 : index
    %c0_118 = arith.constant 0 : index
    %144 = vector.load %arg9[%c0_117, %c0_118] : memref<1x128xf32, #tpu.memory_space<vmem>>, vector<1x128xf32>
    %145 = vector.broadcast %144 : vector<1x128xf32> to vector<64x128xf32>
    %146 = arith.mulf %143, %145 : vector<64x128xf32>
    %c0_119 = arith.constant 0 : index
    %c0_120 = arith.constant 0 : index
    %147 = vector.load %arg10[%c0_119, %c0_120] : memref<1x128xf32, #tpu.memory_space<vmem>>, vector<1x128xf32>
    %148 = vector.broadcast %147 : vector<1x128xf32> to vector<64x128xf32>
    %149 = arith.addf %146, %148 : vector<64x128xf32>
    %150 = arith.negf %149 : vector<64x128xf32>
    %151 = math.exp %150 : vector<64x128xf32>
    %cst_121 = arith.constant 1.000000e+00 : f32
    %152 = vector.broadcast %cst_121 : f32 to vector<64x128xf32>
    %153 = arith.addf %152, %151 : vector<64x128xf32>
    %154 = arith.divf %152, %153 : vector<64x128xf32>
    %155 = arith.mulf %149, %154 : vector<64x128xf32>
    %156 = vector.shape_cast %155 : vector<64x128xf32> to vector<4x16x128xf32>
    %157 = arith.truncf %156 : vector<4x16x128xf32> to vector<4x16x128xbf16>
    %c0_122 = arith.constant 0 : index
    %c0_123 = arith.constant 0 : index
    %c0_124 = arith.constant 0 : index
    %c0_125 = arith.constant 0 : index
    %158 = vector.load %arg11[%c0_122, %c0_123, %c0_124, %c0_125] : memref<1x4x16x128xbf16, #tpu.memory_space<vmem>>, vector<1x4x16x128xbf16>
    %159 = vector.shape_cast %158 : vector<1x4x16x128xbf16> to vector<4x16x128xbf16>
    %160 = vector.shape_cast %157 : vector<4x16x128xbf16> to vector<1x4x16x128xbf16>
    tpu.vector_store %arg11[%c0_122, %c0_123, %c0_124, %c0_125], %160 {strides = array<i32>} : memref<1x4x16x128xbf16, #tpu.memory_space<vmem>>, vector<1x4x16x128xbf16>,
    %161 = vector.extract_strided_slice %156 {offsets = [0, 0, 0], sizes = [4, 16, 4], strides = [1, 1, 1]} : vector<4x16x128xf32> to vector<4x16x4xf32>
    %162 = arith.addf %161, %1 : vector<4x16x4xf32>
    %163 = arith.truncf %162 : vector<4x16x4xf32> to vector<4x16x4xbf16>
    %c0_126 = arith.constant 0 : index
    %c0_127 = arith.constant 0 : index
    %c0_128 = arith.constant 0 : index
    %c0_129 = arith.constant 0 : index
    %164 = vector.load %arg11[%c0_126, %c0_127, %c0_128, %c0_129] : memref<1x4x16x128xbf16, #tpu.memory_space<vmem>>, vector<1x4x16x4xbf16>
    %165 = vector.shape_cast %164 : vector<1x4x16x4xbf16> to vector<4x16x4xbf16>
    %166 = vector.shape_cast %163 : vector<4x16x4xbf16> to vector<1x4x16x4xbf16>
    tpu.vector_store %arg11[%c0_126, %c0_127, %c0_128, %c0_129], %166 {strides = array<i32>} : memref<1x4x16x128xbf16, #tpu.memory_space<vmem>>, vector<1x4x16x4xbf16>,
    return
  }
  func.func @transform_0(%arg0: i32, %arg1: i32) -> (i32, i32, i32, i32) {
    %c0_i32 = arith.constant 0 : i32
    %c0_i32_0 = arith.constant 0 : i32
    %c0_i32_1 = arith.constant 0 : i32
    return %arg0, %arg1, %c0_i32, %c0_i32_0 : i32, i32, i32, i32
  }
  func.func @transform_1(%arg0: i32, %arg1: i32) -> (i32, i32, i32, i32) {
    %c2_i32 = arith.constant 2 : i32
    %0 = arith.muli %arg1, %c2_i32 : i32
    %c1_i32 = arith.constant 1 : i32
    %1 = arith.subi %0, %c1_i32 : i32
    %c0_i32 = arith.constant 0 : i32
    %2 = arith.maxsi %1, %c0_i32 : i32
    %c0_i32_0 = arith.constant 0 : i32
    %c0_i32_1 = arith.constant 0 : i32
    %c0_i32_2 = arith.constant 0 : i32
    return %arg0, %2, %c0_i32_0, %c0_i32_1 : i32, i32, i32, i32
  }
  func.func @transform_2(%arg0: i32, %arg1: i32) -> (i32, i32, i32, i32) {
    %c1_i32 = arith.constant 1 : i32
    %0 = arith.addi %arg1, %c1_i32 : i32
    %c2_i32 = arith.constant 2 : i32
    %1 = arith.muli %0, %c2_i32 : i32
    %c7_i32 = arith.constant 7 : i32
    %2 = arith.minsi %1, %c7_i32 : i32
    %c0_i32 = arith.constant 0 : i32
    %c0_i32_0 = arith.constant 0 : i32
    %c0_i32_1 = arith.constant 0 : i32
    return %arg0, %2, %c0_i32, %c0_i32_0 : i32, i32, i32, i32
  }
  func.func @transform_3(%arg0: i32, %arg1: i32) -> (i32, i32, i32, i32) {
    %c0_i32 = arith.constant 0 : i32
    %c0_i32_0 = arith.constant 0 : i32
    %c0_i32_1 = arith.constant 0 : i32
    %c0_i32_2 = arith.constant 0 : i32
    %c0_i32_3 = arith.constant 0 : i32
    return %c0_i32, %c0_i32_0, %c0_i32_1, %c0_i32_2 : i32, i32, i32, i32
  }
  func.func @transform_4(%arg0: i32, %arg1: i32) -> (i32, i32) {
    %c0_i32 = arith.constant 0 : i32
    %c0_i32_0 = arith.constant 0 : i32
    %c0_i32_1 = arith.constant 0 : i32
    return %c0_i32, %c0_i32_0 : i32, i32
  }
  func.func @transform_5(%arg0: i32, %arg1: i32) -> (i32, i32) {
    %c0_i32 = arith.constant 0 : i32
    %c0_i32_0 = arith.constant 0 : i32
    %c0_i32_1 = arith.constant 0 : i32
    return %c0_i32, %c0_i32_0 : i32, i32
  }
  func.func @transform_6(%arg0: i32, %arg1: i32) -> (i32, i32, i32, i32) {
    %c0_i32 = arith.constant 0 : i32
    %c0_i32_0 = arith.constant 0 : i32
    %c0_i32_1 = arith.constant 0 : i32
    %c0_i32_2 = arith.constant 0 : i32
    %c0_i32_3 = arith.constant 0 : i32
    return %c0_i32, %c0_i32_0, %c0_i32_1, %c0_i32_2 : i32, i32, i32, i32
  }
  func.func @transform_7(%arg0: i32, %arg1: i32) -> (i32, i32) {
    %c0_i32 = arith.constant 0 : i32
    %c0_i32_0 = arith.constant 0 : i32
    %c0_i32_1 = arith.constant 0 : i32
    return %c0_i32, %c0_i32_0 : i32, i32
  }
  func.func @transform_8(%arg0: i32, %arg1: i32) -> (i32, i32) {
    %c0_i32 = arith.constant 0 : i32
    %c0_i32_0 = arith.constant 0 : i32
    %c0_i32_1 = arith.constant 0 : i32
    return %c0_i32, %c0_i32_0 : i32, i32
  }
  func.func @transform_9(%arg0: i32, %arg1: i32) -> (i32, i32, i32, i32) {
    %c0_i32 = arith.constant 0 : i32
    %c0_i32_0 = arith.constant 0 : i32
    %c0_i32_1 = arith.constant 0 : i32
    return %arg0, %arg1, %c0_i32, %c0_i32_0 : i32, i32, i32, i32
  }
}

</mosaic_0001>

<llo_original>
// kernel: tpu_custom_call.1
$region0: #{tpu_custom_call.1}
  #allocation0 [shape = 'u32[]', space=smem, size = 0x4, offset = 0x4, fixed_abs, tag = 'smem constant byte address 0x4 - core index']
  #allocation1 [shape = 'u32[144,128]{1,0:T(1,128)}', space=vmem, size = 0x12000, scoped, tag = 'internal scratch']
  #allocation2 [shape = 'bf16[6,16,128]{2,1,0:T(8,128)(2,1)}', space=vmem, size = 0x6000, scoped, tag = 'scratch operand']
  %s0 = inlined_call_operand.vmem [shape: f32[2,16,16,4], index: 0, kind: input, shape index: {}]
  %s1 = inlined_call_operand.vmem [shape: f32[2,16,16,4], index: 1, kind: input, shape index: {}]
  %s2 = inlined_call_operand.vmem [shape: f32[2,16,16,4], index: 2, kind: input, shape index: {}]
  %s3 = inlined_call_operand.vmem [shape: bf16[3,3,4,128], index: 3, kind: input, shape index: {}]
  %s4 = inlined_call_operand.vmem [shape: f32[1,128], index: 4, kind: input, shape index: {}]
  %s5 = inlined_call_operand.vmem [shape: f32[1,128], index: 5, kind: input, shape index: {}]
  %s6 = inlined_call_operand.vmem [shape: bf16[3,3,128,128], index: 6, kind: input, shape index: {}]
  %s7 = inlined_call_operand.vmem [shape: f32[1,128], index: 7, kind: input, shape index: {}]
  %s8 = inlined_call_operand.vmem [shape: f32[1,128], index: 8, kind: input, shape index: {}]
  %s9 = inlined_call_operand.hbm [shape: bf16[2,16,16,128], index: 9, kind: output, shape index: {}]
  %s10 = sld [smem:[#allocation0]]
  $region77: #{tpu_custom_call.1} parent=0
    _
  %s12 = ssub.s32 1, %s10
  %s13 = scalar_select 0, %s12, %s10
  $region1: #{tpu_custom_call.1} parent=0
    #allocation3 [shape = 'u8[32768]{0}', space=vmem, size = 0x8000, scoped, tag = 'output window, operand 0']
    #allocation4 [shape = 's32[2]{0}', space=sflag, size = 0x8, scoped, tag = 'scoped memory for tpu_custom_call.1']
    %14 = vsyncpa [#allocation4], 0
    %s15 = scalar_lea.sflag [#allocation4], 1
    %16 = vsyncpa %s15, 0
    loop: start=0, step=1, limit=10
    $region2: #{tpu_custom_call.1} parent=1 // loop_pre_header
      _
    $region3: #{tpu_custom_call.1} parent=1 // loop_header
      %s18 = sphi 0, %s22
      %p19 = scmp.ge.s32.totalorder %s18, 10
      %s25 = sphi 0, %s37
      %s26 = sphi 0, %s33
      %s27 = sphi 0, %s25
      %s28 = sphi 0, %s26
      %s29 = sphi 0, %s27
      %s30 = sphi 0, %s28
      %s42 = sphi 0, %s44
      %s45 = sphi 0, %s42
      %s46 = sphi 0, %s45
      %s62 = sphi 0, %s46
      %s78 = sphi 0, %s80
      %s81 = sphi 0, %s78
      %s82 = sphi 0, %s81
      %s98 = sphi 0, %s82
      %s114 = sphi 0, %s116
      %s117 = sphi 0, %s114
      %s118 = sphi 0, %s117
      %s134 = sphi 0, %s118
      %s138 = sphi 0, %s138
      %s140 = sphi 0, %s138
      %s141 = sphi 0, %s140
      %s155 = sphi 0, %s141
      %s159 = sphi 0, %s159
      %s161 = sphi 0, %s159
      %s162 = sphi 0, %s161
      %s176 = sphi 0, %s162
      %s180 = sphi 0, %s180
      %s182 = sphi 0, %s180
      %s183 = sphi 0, %s182
      %s197 = sphi 0, %s183
      %s201 = sphi 0, %s201
      %s203 = sphi 0, %s201
      %s204 = sphi 0, %s203
      %s218 = sphi 0, %s204
      %s222 = sphi 0, %s222
      %s224 = sphi 0, %s222
      %s225 = sphi 0, %s224
      %s239 = sphi 0, %s225
      %s243 = sphi 0, %s243
      %s245 = sphi 0, %s243
      %s246 = sphi 0, %s245
      %s260 = sphi 0, %s246
      %s268 = sphi 0, %s270
      %s271 = sphi 0, %s268
      %s272 = sphi 0, %s271
      %s288 = sphi 0, %s272
    $region4: #{tpu_custom_call.1} parent=1 // loop_header_branch
      %21 = sbr.rel (%p19) target = $region8
    $region5: #{tpu_custom_call.1} parent=1 // loop_body
      %s23 = ssub.s32 %s18, 1
      %s24 = ssub.s32 %s18, 2
      %s31 = sadd.s32 1, %s26
      %p32 = scmp.ge.s32.totalorder %s31, 4
      %s33 = scalar_select %p32, 0, %s31
      %s34 = sadd.s32 1, %s25
      %s35 = scalar_select %p32, %s34, %s25
      %p36 = scmp.ge.s32.totalorder %s35, 2
      %s37 = scalar_select %p36, 0, %s35
      %s38 = ssub.s32 %s25, %s37
      %s39 = ssub.s32 %s26, %s33
      %s40 = sor.u32 %s38, %s39
      %p41 = scmp.eq.s32.totalorder %s40, 0
      %s43 = sadd.s32 %s42, 1
      %s44 = scalar_select %p41, %s42, %s43
      %p47 = pneg %p41
      %p48 = scmp.eq.s32.totalorder %s18, 7
      %p49 = por %p47, %p48
      %p50 = scmp.ne.s32.totalorder %s42, %s45
      %p51 = scmp.eq.s32.totalorder %s18, 0
      %p52 = por %p50, %p51
      %p53 = scmp.ne.s32.totalorder %s42, %s45
      %p54 = scmp.eq.s32.totalorder %s23, 7
      %p55 = por %p53, %p54
      %p56 = scmp.ne.s32.totalorder %s45, %s46
      %p57 = scmp.eq.s32.totalorder %s23, 0
      %p58 = por %p56, %p57
      %p59 = scmp.ne.s32.totalorder %s45, %s46
      %p60 = scmp.eq.s32.totalorder %s24, 7
      %p61 = por %p59, %p60
      %p63 = scmp.ne.s32.totalorder %s46, %s62
      %p64 = scmp.eq.s32.totalorder %s24, 0
      %p65 = por %p63, %p64
      %s66 = smul.u32 %s26, 2
      %s67 = ssub.s32 %s66, 1
      %p68 = scmp.gt.s32.totalorder %s67, 0
      %s69 = scalar_select %p68, %s67, 0
      %s70 = smul.u32 %s33, 2
      %s71 = ssub.s32 %s70, 1
      %p72 = scmp.gt.s32.totalorder %s71, 0
      %s73 = scalar_select %p72, %s71, 0
      %s74 = ssub.s32 %s25, %s37
      %s75 = ssub.s32 %s69, %s73
      %s76 = sor.u32 %s74, %s75
      %p77 = scmp.eq.s32.totalorder %s76, 0
      %s79 = sadd.s32 %s78, 1
      %s80 = scalar_select %p77, %s78, %s79
      %p83 = pneg %p77
      %p84 = scmp.eq.s32.totalorder %s18, 7
      %p85 = por %p83, %p84
      %p86 = scmp.ne.s32.totalorder %s78, %s81
      %p87 = scmp.eq.s32.totalorder %s18, 0
      %p88 = por %p86, %p87
      %p89 = scmp.ne.s32.totalorder %s78, %s81
      %p90 = scmp.eq.s32.totalorder %s23, 7
      %p91 = por %p89, %p90
      %p92 = scmp.ne.s32.totalorder %s81, %s82
      %p93 = scmp.eq.s32.totalorder %s23, 0
      %p94 = por %p92, %p93
      %p95 = scmp.ne.s32.totalorder %s81, %s82
      %p96 = scmp.eq.s32.totalorder %s24, 7
      %p97 = por %p95, %p96
      %p99 = scmp.ne.s32.totalorder %s82, %s98
      %p100 = scmp.eq.s32.totalorder %s24, 0
      %p101 = por %p99, %p100
      %s102 = sadd.s32 %s26, 1
      %s103 = smul.u32 %s102, 2
      %p104 = scmp.lt.s32.totalorder %s103, 7
      %s105 = scalar_select %p104, %s103, 7
      %s106 = sadd.s32 %s33, 1
      %s107 = smul.u32 %s106, 2
      %p108 = scmp.lt.s32.totalorder %s107, 7
      %s109 = scalar_select %p108, %s107, 7
      %s110 = ssub.s32 %s25, %s37
      %s111 = ssub.s32 %s105, %s109
      %s112 = sor.u32 %s110, %s111
      %p113 = scmp.eq.s32.totalorder %s112, 0
      %s115 = sadd.s32 %s114, 1
      %s116 = scalar_select %p113, %s114, %s115
      %p119 = pneg %p113
      %p120 = scmp.eq.s32.totalorder %s18, 7
      %p121 = por %p119, %p120
      %p122 = scmp.ne.s32.totalorder %s114, %s117
      %p123 = scmp.eq.s32.totalorder %s18, 0
      %p124 = por %p122, %p123
      %p125 = scmp.ne.s32.totalorder %s114, %s117
      %p126 = scmp.eq.s32.totalorder %s23, 7
      %p127 = por %p125, %p126
      %p128 = scmp.ne.s32.totalorder %s117, %s118
      %p129 = scmp.eq.s32.totalorder %s23, 0
      %p130 = por %p128, %p129
      %p131 = scmp.ne.s32.totalorder %s117, %s118
      %p132 = scmp.eq.s32.totalorder %s24, 7
      %p133 = por %p131, %p132
      %p135 = scmp.ne.s32.totalorder %s118, %s134
      %p136 = scmp.eq.s32.totalorder %s24, 0
      %p137 = por %p135, %p136
      %s139 = sadd.s32 %s138, 1
      %p142 = scmp.eq.s32.totalorder %s18, 7
      %p143 = scmp.ne.s32.totalorder %s138, %s140
      %p144 = scmp.eq.s32.totalorder %s18, 0
      %p145 = por %p143, %p144
      %p146 = scmp.ne.s32.totalorder %s138, %s140
      %p147 = scmp.eq.s32.totalorder %s23, 7
      %p148 = por %p146, %p147
      %p149 = scmp.ne.s32.totalorder %s140, %s141
      %p150 = scmp.eq.s32.totalorder %s23, 0
      %p151 = por %p149, %p150
      %p152 = scmp.ne.s32.totalorder %s140, %s141
      %p153 = scmp.eq.s32.totalorder %s24, 7
      %p154 = por %p152, %p153
      %p156 = scmp.ne.s32.totalorder %s141, %s155
      %p157 = scmp.eq.s32.totalorder %s24, 0
      %p158 = por %p156, %p157
      %s160 = sadd.s32 %s159, 1
      %p163 = scmp.eq.s32.totalorder %s18, 7
      %p164 = scmp.ne.s32.totalorder %s159, %s161
      %p165 = scmp.eq.s32.totalorder %s18, 0
      %p166 = por %p164, %p165
      %p167 = scmp.ne.s32.totalorder %s159, %s161
      %p168 = scmp.eq.s32.totalorder %s23, 7
      %p169 = por %p167, %p168
      %p170 = scmp.ne.s32.totalorder %s161, %s162
      %p171 = scmp.eq.s32.totalorder %s23, 0
      %p172 = por %p170, %p171
      %p173 = scmp.ne.s32.totalorder %s161, %s162
      %p174 = scmp.eq.s32.totalorder %s24, 7
      %p175 = por %p173, %p174
      %p177 = scmp.ne.s32.totalorder %s162, %s176
      %p178 = scmp.eq.s32.totalorder %s24, 0
      %p179 = por %p177, %p178
      %s181 = sadd.s32 %s180, 1
      %p184 = scmp.eq.s32.totalorder %s18, 7
      %p185 = scmp.ne.s32.totalorder %s180, %s182
      %p186 = scmp.eq.s32.totalorder %s18, 0
      %p187 = por %p185, %p186
      %p188 = scmp.ne.s32.totalorder %s180, %s182
      %p189 = scmp.eq.s32.totalorder %s23, 7
      %p190 = por %p188, %p189
      %p191 = scmp.ne.s32.totalorder %s182, %s183
      %p192 = scmp.eq.s32.totalorder %s23, 0
      %p193 = por %p191, %p192
      %p194 = scmp.ne.s32.totalorder %s182, %s183
      %p195 = scmp.eq.s32.totalorder %s24, 7
      %p196 = por %p194, %p195
      %p198 = scmp.ne.s32.totalorder %s183, %s197
      %p199 = scmp.eq.s32.totalorder %s24, 0
      %p200 = por %p198, %p199
      %s202 = sadd.s32 %s201, 1
      %p205 = scmp.eq.s32.totalorder %s18, 7
      %p206 = scmp.ne.s32.totalorder %s201, %s203
      %p207 = scmp.eq.s32.totalorder %s18, 0
      %p208 = por %p206, %p207
      %p209 = scmp.ne.s32.totalorder %s201, %s203
      %p210 = scmp.eq.s32.totalorder %s23, 7
      %p211 = por %p209, %p210
      %p212 = scmp.ne.s32.totalorder %s203, %s204
      %p213 = scmp.eq.s32.totalorder %s23, 0
      %p214 = por %p212, %p213
      %p215 = scmp.ne.s32.totalorder %s203, %s204
      %p216 = scmp.eq.s32.totalorder %s24, 7
      %p217 = por %p215, %p216
      %p219 = scmp.ne.s32.totalorder %s204, %s218
      %p220 = scmp.eq.s32.totalorder %s24, 0
      %p221 = por %p219, %p220
      %s223 = sadd.s32 %s222, 1
      %p226 = scmp.eq.s32.totalorder %s18, 7
      %p227 = scmp.ne.s32.totalorder %s222, %s224
      %p228 = scmp.eq.s32.totalorder %s18, 0
      %p229 = por %p227, %p228
      %p230 = scmp.ne.s32.totalorder %s222, %s224
      %p231 = scmp.eq.s32.totalorder %s23, 7
      %p232 = por %p230, %p231
      %p233 = scmp.ne.s32.totalorder %s224, %s225
      %p234 = scmp.eq.s32.totalorder %s23, 0
      %p235 = por %p233, %p234
      %p236 = scmp.ne.s32.totalorder %s224, %s225
      %p237 = scmp.eq.s32.totalorder %s24, 7
      %p238 = por %p236, %p237
      %p240 = scmp.ne.s32.totalorder %s225, %s239
      %p241 = scmp.eq.s32.totalorder %s24, 0
      %p242 = por %p240, %p241
      %s244 = sadd.s32 %s243, 1
      %p247 = scmp.eq.s32.totalorder %s18, 7
      %p248 = scmp.ne.s32.totalorder %s243, %s245
      %p249 = scmp.eq.s32.totalorder %s18, 0
      %p250 = por %p248, %p249
      %p251 = scmp.ne.s32.totalorder %s243, %s245
      %p252 = scmp.eq.s32.totalorder %s23, 7
      %p253 = por %p251, %p252
      %p254 = scmp.ne.s32.totalorder %s245, %s246
      %p255 = scmp.eq.s32.totalorder %s23, 0
      %p256 = por %p254, %p255
      %p257 = scmp.ne.s32.totalorder %s245, %s246
      %p258 = scmp.eq.s32.totalorder %s24, 7
      %p259 = por %p257, %p258
      %p261 = scmp.ne.s32.totalorder %s246, %s260
      %p262 = scmp.eq.s32.totalorder %s24, 0
      %p263 = por %p261, %p262
      %s264 = ssub.s32 %s25, %s37
      %s265 = ssub.s32 %s26, %s33
      %s266 = sor.u32 %s264, %s265
      %p267 = scmp.eq.s32.totalorder %s266, 0
      %s269 = sadd.s32 %s268, 1
      %s270 = scalar_select %p267, %s268, %s269
      %p273 = pneg %p267
      %p274 = scmp.eq.s32.totalorder %s18, 7
      %p275 = por %p273, %p274
      %p276 = scmp.ne.s32.totalorder %s268, %s271
      %p277 = scmp.eq.s32.totalorder %s18, 0
      %p278 = por %p276, %p277
      %p279 = scmp.ne.s32.totalorder %s268, %s271
      %p280 = scmp.eq.s32.totalorder %s23, 7
      %p281 = por %p279, %p280
      %p282 = scmp.ne.s32.totalorder %s271, %s272
      %p283 = scmp.eq.s32.totalorder %s23, 0
      %p284 = por %p282, %p283
      %p285 = scmp.ne.s32.totalorder %s271, %s272
      %p286 = scmp.eq.s32.totalorder %s24, 7
      %p287 = por %p285, %p286
      %p289 = scmp.ne.s32.totalorder %s272, %s288
      %p290 = scmp.eq.s32.totalorder %s24, 0
      %p291 = por %p289, %p290
      %p292 = scmp.le.s32.totalorder 1, %s18
      %p293 = scmp.lt.s32.totalorder %s18, 9
      %p294 = pnand %p292, %p293
      %p295 = pneg %p294
      // Predicated region
      $region9: #{tpu_custom_call.1} parent=5 // pred_check
        _
      $region10: #{tpu_custom_call.1} parent=5 // pred_check_branch
        %297 = sbr.rel (%p294) target = $region12
      $region11: #{tpu_custom_call.1} parent=5 // pred_region
        %s298 = ssub.s32 %s18, 1
        // Predicated region
        $region13: #{tpu_custom_call.1} parent=11 // pred_check
          %p299 = pneg %p151
        $region14: #{tpu_custom_call.1} parent=11 // pred_check_branch
          %301 = sbr.rel (%p299) target = $region16
        $region15: #{tpu_custom_call.1} parent=11 // pred_region
          _
        $region16: #{tpu_custom_call.1} parent=11 // pred_fallthru
          _
        // Predicated region
        $region17: #{tpu_custom_call.1} parent=11 // pred_check
          %p302 = pneg %p172
        $region18: #{tpu_custom_call.1} parent=11 // pred_check_branch
          %304 = sbr.rel (%p302) target = $region20
        $region19: #{tpu_custom_call.1} parent=11 // pred_region
          _
        $region20: #{tpu_custom_call.1} parent=11 // pred_fallthru
          _
        // Predicated region
        $region21: #{tpu_custom_call.1} parent=11 // pred_check
          %p305 = pneg %p193
        $region22: #{tpu_custom_call.1} parent=11 // pred_check_branch
          %307 = sbr.rel (%p305) target = $region24
        $region23: #{tpu_custom_call.1} parent=11 // pred_region
          _
        $region24: #{tpu_custom_call.1} parent=11 // pred_fallthru
          _
        // Predicated region
        $region25: #{tpu_custom_call.1} parent=11 // pred_check
          %p308 = pneg %p214
        $region26: #{tpu_custom_call.1} parent=11 // pred_check_branch
          %310 = sbr.rel (%p308) target = $region28
        $region27: #{tpu_custom_call.1} parent=11 // pred_region
          _
        $region28: #{tpu_custom_call.1} parent=11 // pred_fallthru
          _
        // Predicated region
        $region29: #{tpu_custom_call.1} parent=11 // pred_check
          %p311 = pneg %p235
        $region30: #{tpu_custom_call.1} parent=11 // pred_check_branch
          %313 = sbr.rel (%p311) target = $region32
        $region31: #{tpu_custom_call.1} parent=11 // pred_region
          _
        $region32: #{tpu_custom_call.1} parent=11 // pred_fallthru
          _
        // Predicated region
        $region33: #{tpu_custom_call.1} parent=11 // pred_check
          %p314 = pneg %p256
        $region34: #{tpu_custom_call.1} parent=11 // pred_check_branch
          %316 = sbr.rel (%p314) target = $region36
        $region35: #{tpu_custom_call.1} parent=11 // pred_region
          _
        $region36: #{tpu_custom_call.1} parent=11 // pred_fallthru
          _
      $region12: #{tpu_custom_call.1} parent=5 // pred_fallthru
        _
      %p317 = scmp.lt.s32.totalorder %s18, 8
      // Predicated region
      $region37: #{tpu_custom_call.1} parent=5 // pred_check
        %p318 = pneg %p317
      $region38: #{tpu_custom_call.1} parent=5 // pred_check_branch
        %320 = sbr.rel (%p318) target = $region40
      $region39: #{tpu_custom_call.1} parent=5 // pred_region
        // Predicated region
        $region41: #{tpu_custom_call.1} parent=39 // pred_check
          %p321 = pneg %p52
        $region42: #{tpu_custom_call.1} parent=39 // pred_check_branch
          %323 = sbr.rel (%p321) target = $region44
        $region43: #{tpu_custom_call.1} parent=39 // pred_region
          %s324 = smul.u32 4, %s26
          %p325 = scmp.lt.s32.totalorder %s25, 1
          %s326 = scalar_select %p325, %s25, 1
          %p327 = scmp.lt.s32.totalorder %s324, 15
          %s328 = scalar_select %p327, %s324, 15
          %s329 = smul.addr %s328, 2
          %s330 = smul.addr %s326, 32
          %s331 = sadd.s32 %s329, %s330
          %s332 = smul.addr %s331, 8
          %s333 = scalar_lea.vmem %s0, %s332
          %s334 = smul.u32 4, %s26
        $region44: #{tpu_custom_call.1} parent=39 // pred_fallthru
          _
        // Predicated region
        $region45: #{tpu_custom_call.1} parent=39 // pred_check
          %p335 = pneg %p88
        $region46: #{tpu_custom_call.1} parent=39 // pred_check_branch
          %337 = sbr.rel (%p335) target = $region48
        $region47: #{tpu_custom_call.1} parent=39 // pred_region
          %s338 = smul.u32 %s26, 2
          %s339 = ssub.s32 %s338, 1
          %p340 = scmp.gt.s32.totalorder %s339, 0
          %s341 = scalar_select %p340, %s339, 0
          %s342 = smul.u32 2, %s341
          %p343 = scmp.lt.s32.totalorder %s25, 1
          %s344 = scalar_select %p343, %s25, 1
          %p345 = scmp.lt.s32.totalorder %s342, 15
          %s346 = scalar_select %p345, %s342, 15
          %s347 = smul.addr %s346, 2
          %s348 = smul.addr %s344, 32
          %s349 = sadd.s32 %s347, %s348
          %s350 = smul.addr %s349, 8
          %s351 = scalar_lea.vmem %s1, %s350
          %s352 = smul.u32 %s26, 2
          %s353 = ssub.s32 %s352, 1
          %p354 = scmp.gt.s32.totalorder %s353, 0
          %s355 = scalar_select %p354, %s353, 0
          %s356 = smul.u32 2, %s355
        $region48: #{tpu_custom_call.1} parent=39 // pred_fallthru
          _
        // Predicated region
        $region49: #{tpu_custom_call.1} parent=39 // pred_check
          %p357 = pneg %p124
        $region50: #{tpu_custom_call.1} parent=39 // pred_check_branch
          %359 = sbr.rel (%p357) target = $region52
        $region51: #{tpu_custom_call.1} parent=39 // pred_region
          %s360 = sadd.s32 %s26, 1
          %s361 = smul.u32 %s360, 2
          %p362 = scmp.lt.s32.totalorder %s361, 7
          %s363 = scalar_select %p362, %s361, 7
          %s364 = smul.u32 2, %s363
          %p365 = scmp.lt.s32.totalorder %s25, 1
          %s366 = scalar_select %p365, %s25, 1
          %p367 = scmp.lt.s32.totalorder %s364, 15
          %s368 = scalar_select %p367, %s364, 15
          %s369 = smul.addr %s368, 2
          %s370 = smul.addr %s366, 32
          %s371 = sadd.s32 %s369, %s370
          %s372 = smul.addr %s371, 8
          %s373 = scalar_lea.vmem %s2, %s372
          %s374 = sadd.s32 %s26, 1
          %s375 = smul.u32 %s374, 2
          %p376 = scmp.lt.s32.totalorder %s375, 7
          %s377 = scalar_select %p376, %s375, 7
          %s378 = smul.u32 2, %s377
        $region52: #{tpu_custom_call.1} parent=39 // pred_fallthru
          _
      $region40: #{tpu_custom_call.1} parent=5 // pred_fallthru
        _
      %p379 = scmp.le.s32.totalorder 1, %s18
      %p380 = scmp.lt.s32.totalorder %s18, 9
      %p381 = pnand %p379, %p380
      %p382 = pneg %p381
      // Predicated region
      $region53: #{tpu_custom_call.1} parent=5 // pred_check
        _
      $region54: #{tpu_custom_call.1} parent=5 // pred_check_branch
        %384 = sbr.rel (%p381) target = $region56
      $region55: #{tpu_custom_call.1} parent=5 // pred_region
        %s385 = ssub.s32 %s18, 1
        %s386 = smul.u32 4, %s28
        %p387 = scmp.lt.s32.totalorder %s27, 1
        %s388 = scalar_select %p387, %s27, 1
        %p389 = scmp.lt.s32.totalorder %s386, 15
        %s390 = scalar_select %p389, %s386, 15
        %s391 = smul.addr %s390, 2
        %s392 = smul.addr %s388, 32
        %s393 = sadd.s32 %s391, %s392
        %s394 = smul.addr %s393, 8
        %s395 = scalar_lea.vmem %s0, %s394
        %p396 = pneg %p58
        %p397 = pneg %p55
        %s398 = smul.u32 %s28, 2
        %s399 = ssub.s32 %s398, 1
        %p400 = scmp.gt.s32.totalorder %s399, 0
        %s401 = scalar_select %p400, %s399, 0
        %s402 = smul.u32 2, %s401
        %p403 = scmp.lt.s32.totalorder %s27, 1
        %s404 = scalar_select %p403, %s27, 1
        %p405 = scmp.lt.s32.totalorder %s402, 15
        %s406 = scalar_select %p405, %s402, 15
        %s407 = smul.addr %s406, 2
        %s408 = smul.addr %s404, 32
        %s409 = sadd.s32 %s407, %s408
        %s410 = smul.addr %s409, 8
        %s411 = scalar_lea.vmem %s1, %s410
        %p412 = pneg %p94
        %p413 = pneg %p91
        %s414 = sadd.s32 %s28, 1
        %s415 = smul.u32 %s414, 2
        %p416 = scmp.lt.s32.totalorder %s415, 7
        %s417 = scalar_select %p416, %s415, 7
        %s418 = smul.u32 2, %s417
        %p419 = scmp.lt.s32.totalorder %s27, 1
        %s420 = scalar_select %p419, %s27, 1
        %p421 = scmp.lt.s32.totalorder %s418, 15
        %s422 = scalar_select %p421, %s418, 15
        %s423 = smul.addr %s422, 2
        %s424 = smul.addr %s420, 32
        %s425 = sadd.s32 %s423, %s424
        %s426 = smul.addr %s425, 8
        %s427 = scalar_lea.vmem %s2, %s426
        %p428 = pneg %p130
        %p429 = pneg %p127
        %p430 = pneg %p151
        %p431 = pneg %p148
        %p432 = pneg %p172
        %p433 = pneg %p169
        %p434 = pneg %p193
        %p435 = pneg %p190
        %p436 = pneg %p214
        %p437 = pneg %p211
        %p438 = pneg %p235
        %p439 = pneg %p232
        %p440 = pneg %p256
        %p441 = pneg %p253
        %p442 = pneg %p284
        %p443 = pneg %p281
        %s444 = sand.u32 %s271, 1
        %s445 = scalar_lea.sflag [#allocation4], %s444
        %s446 = sand.u32 %s271, 1
        %s447 = smul.addr %s446, 32
        %s448 = scalar_lea.vmem [#allocation3], %s447
        %s449 = smul.u32 4, %s28
        %p450 = scmp.lt.s32.totalorder %s27, 1
        %s451 = scalar_select %p450, %s27, 1
        %p452 = scmp.lt.s32.totalorder %s449, 15
        %s453 = scalar_select %p452, %s449, 15
        %s454 = smul.addr %s453, 2
        %s455 = smul.addr %s451, 32
        %s456 = sadd.s32 %s454, %s455
        %s457 = smul.addr %s456, 8
        %s458 = scalar_lea.vmem %s0, %s457
        %s459 = smul.u32 4, %s28
        %s460 = smul.u32 %s28, 2
        %s461 = ssub.s32 %s460, 1
        %p462 = scmp.gt.s32.totalorder %s461, 0
        %s463 = scalar_select %p462, %s461, 0
        %s464 = smul.u32 2, %s463
        %p465 = scmp.lt.s32.totalorder %s27, 1
        %s466 = scalar_select %p465, %s27, 1
        %p467 = scmp.lt.s32.totalorder %s464, 15
        %s468 = scalar_select %p467, %s464, 15
        %s469 = smul.addr %s468, 2
        %s470 = smul.addr %s466, 32
        %s471 = sadd.s32 %s469, %s470
        %s472 = smul.addr %s471, 8
        %s473 = scalar_lea.vmem %s1, %s472
        %s474 = smul.u32 %s28, 2
        %s475 = ssub.s32 %s474, 1
        %p476 = scmp.gt.s32.totalorder %s475, 0
        %s477 = scalar_select %p476, %s475, 0
        %s478 = smul.u32 2, %s477
        %s479 = sadd.s32 %s28, 1
        %s480 = smul.u32 %s479, 2
        %p481 = scmp.lt.s32.totalorder %s480, 7
        %s482 = scalar_select %p481, %s480, 7
        %s483 = smul.u32 2, %s482
        %p484 = scmp.lt.s32.totalorder %s27, 1
        %s485 = scalar_select %p484, %s27, 1
        %p486 = scmp.lt.s32.totalorder %s483, 15
        %s487 = scalar_select %p486, %s483, 15
        %s488 = smul.addr %s487, 2
        %s489 = smul.addr %s485, 32
        %s490 = sadd.s32 %s488, %s489
        %s491 = smul.addr %s490, 8
        %s492 = scalar_lea.vmem %s2, %s491
        %s493 = sadd.s32 %s28, 1
        %s494 = smul.u32 %s493, 2
        %p495 = scmp.lt.s32.totalorder %s494, 7
        %s496 = scalar_select %p495, %s494, 7
        %s497 = smul.u32 2, %s496
        %s498 = smul.u32 4, %s28
        %v500 = vld [vmem:[%s458] sm:$0xff]
        %v501 = vld [vmem:[%s458 + $0x8] sm:$0xff]
        %v502 = vld [vmem:[%s458 + $0x10] sm:$0xff]
        %v503 = vld [vmem:[%s458 + $0x18] sm:$0xff]
        %v504 = vld [vmem:[%s458 + $0x20] sm:$0xff]
        %v505 = vld [vmem:[%s458 + $0x28] sm:$0xff]
        %v506 = vld [vmem:[%s458 + $0x30] sm:$0xff]
        %v507 = vld [vmem:[%s458 + $0x38] sm:$0xff]
        %v508 = vpack.c.bf16 %v501, %v500
        %v509 = vpack.c.bf16 %v503, %v502
        %v510 = vpack.c.bf16 %v505, %v504
        %v511 = vpack.c.bf16 %v507, %v506
        %p512 = scmp.gt.s32.totalorder %s28, 0
        %v513 = vld [vmem:[%s473] sm:$0xff]
        %v514 = vld [vmem:[%s473 + $0x8] sm:$0xff]
        %v515 = vld [vmem:[%s473 + $0x10] sm:$0xff]
        %v516 = vld [vmem:[%s473 + $0x18] sm:$0xff]
        %v517 = vpack.c.bf16 %v514, %v513
        %v518 = vpack.c.bf16 %v516, %v515
        %s519 = scalar_select %p512, 1, 0
        %v520 = vstv %s519
        %vm521 = vcmp.eq.s32.totalorder %v520, 1
        %v522 = vsel %vm521, %v517, 0
        %v523 = vsel %vm521, %v518, 0
        %p524 = scmp.lt.s32.totalorder %s28, 3
        %v525 = vld [vmem:[%s492] sm:$0xff]
        %v526 = vld [vmem:[%s492 + $0x8] sm:$0xff]
        %v527 = vld [vmem:[%s492 + $0x10] sm:$0xff]
        %v528 = vld [vmem:[%s492 + $0x18] sm:$0xff]
        %v529 = vpack.c.bf16 %v526, %v525
        %v530 = vpack.c.bf16 %v528, %v527
        %s531 = scalar_select %p524, 1, 0
        %v532 = vstv %s531
        %vm533 = vcmp.eq.s32.totalorder %v532, 1
        %v534 = vsel %vm533, %v529, 0
        %v535 = vsel %vm533, %v530, 0
        %v537 = vshrl.u32 %v522, 16
        %v539 = vrot.slane %v537, 7
        %v540 = vshll.u32 %v522, 16
        %v542 = vor.u32 %v539, %v540
        %v544 = vshrl.u32 %v523, 16
        %v546 = vrot.slane %v544, 7
        %v547 = vshll.u32 %v523, 16
        %v549 = vor.u32 %v546, %v547
        %v551 = vshrl.u32 %v508, 16
        %v553 = vrot.slane %v551, 7
        %v554 = vshll.u32 %v508, 16
        %v556 = vor.u32 %v553, %v554
        %v558 = vshrl.u32 %v509, 16
        %v560 = vrot.slane %v558, 7
        %v561 = vshll.u32 %v509, 16
        %v563 = vor.u32 %v560, %v561
        %v565 = vshrl.u32 %v510, 16
        %v567 = vrot.slane %v565, 7
        %v568 = vshll.u32 %v510, 16
        %v570 = vor.u32 %v567, %v568
        %v572 = vshrl.u32 %v511, 16
        %v574 = vrot.slane %v572, 7
        %v575 = vshll.u32 %v511, 16
        %v577 = vor.u32 %v574, %v575
        %v579 = vshrl.u32 %v534, 16
        %v581 = vrot.slane %v579, 7
        %v582 = vshll.u32 %v534, 16
        %v584 = vor.u32 %v581, %v582
        %v586 = vshrl.u32 %v535, 16
        %v588 = vrot.slane %v586, 7
        %v589 = vshll.u32 %v535, 16
        %v591 = vor.u32 %v588, %v589
        %vm600 = vcmask 1040384
        %vm601 = vsmask.f32 256
        %vm602 = vmand %vm600, %vm601
        %v603 = vsel %vm602, 0, %v542
        %v604 = vsel %vm602, 0, %v549
        %v605 = vsel %vm602, 0, %v556
        %v606 = vsel %vm602, 0, %v563
        %v607 = vsel %vm602, 0, %v570
        %v608 = vsel %vm602, 0, %v577
        %v609 = vsel %vm602, 0, %v584
        %v610 = vsel %vm602, 0, %v591
        %v611 = vrot.slane %v540, 1
        %v612 = vor.u32 %v537, %v611
        %v613 = vrot.slane %v547, 1
        %v614 = vor.u32 %v544, %v613
        %v615 = vrot.slane %v554, 1
        %v616 = vor.u32 %v551, %v615
        %v617 = vrot.slane %v561, 1
        %v618 = vor.u32 %v558, %v617
        %v619 = vrot.slane %v568, 1
        %v620 = vor.u32 %v565, %v619
        %v621 = vrot.slane %v575, 1
        %v622 = vor.u32 %v572, %v621
        %v623 = vrot.slane %v582, 1
        %v624 = vor.u32 %v579, %v623
        %v625 = vrot.slane %v589, 1
        %v626 = vor.u32 %v586, %v625
        %vm635 = vcmask 1047552
        %vm636 = vsmask.f32 7424
        %vm637 = vmand %vm635, %vm636
        %v638 = vsel %vm637, %v612, 0
        %v639 = vsel %vm637, %v614, 0
        %v640 = vsel %vm637, %v616, 0
        %v641 = vsel %vm637, %v618, 0
        %v642 = vsel %vm637, %v620, 0
        %v643 = vsel %vm637, %v622, 0
        %v644 = vsel %vm637, %v624, 0
        %v645 = vsel %vm637, %v626, 0
        %v646 = vld [vmem:[%s3] sm:$0x3]
        %s647 = scalar_lea.vmem %s3, 2
        %v648 = vld [vmem:[%s647] sm:$0x3]
        %vm649 = vcmask 31744
        %v650 = vsel %vm649, %v522, 0
        %v652 = vsel %vm649, %v523, 0
        %v654 = vsel %vm649, %v508, 0
        %v656 = vsel %vm649, %v509, 0
        %v658 = vsel %vm649, %v510, 0
        %v660 = vsel %vm649, %v511, 0
        %vm662 = vcmask 1041408
        %v664 = vsel %vm662, %v648, 0
        %666 = vmatprep.subr.bf16.mxu0 0
        %667 = vmatpush1.bf16.msra.mxu0 0
        %668 = vmatprep.subr.bf16.mxu0 0
        %669 = vmatpush1.bf16.msra.mxu0 0
        %670 = vmatprep.subr.bf16.mxu0 0
        %671 = vmatpush1.bf16.msra.mxu0 0
        %672 = vmatprep.subr.bf16.mxu0 0
        %673 = vmatpush1.bf16.msra.mxu0 0
        %674 = vmatprep.subr.bf16.mxu0 0
        %675 = vmatpush1.bf16.msra.mxu0 0
        %676 = vmatprep.subr.bf16.mxu0 0
        %677 = vmatpush1.bf16.msra.mxu0 0
        %678 = vmatprep.subr.bf16.mxu0 0
        %679 = vmatpush1.bf16.msra.mxu0 0
        %680 = vmatprep.subr.bf16.mxu0 0
        %681 = vmatpush1.bf16.msra.mxu0 %v664
        %682 = vmatprep.subr.bf16.mxu0 0
        %683 = vmatpush2.bf16.msra.mxu0 0
        %684 = vmatprep.subr.bf16.mxu0 0
        %685 = vmatpush2.bf16.msra.mxu0 0
        %686 = vmatprep.subr.bf16.mxu0 0
        %687 = vmatpush2.bf16.msra.mxu0 0
        %688 = vmatprep.subr.bf16.mxu0 0
        %689 = vmatpush2.bf16.msra.mxu0 0
        %690 = vmatprep.subr.bf16.mxu0 0
        %691 = vmatpush2.bf16.msra.mxu0 0
        %692 = vmatprep.subr.bf16.mxu0 0
        %693 = vmatpush2.bf16.msra.mxu0 0
        %694 = vmatprep.subr.bf16.mxu0 0
        %695 = vmatpush2.bf16.msra.mxu0 0
        %696 = vmatprep.subr.bf16.mxu0 0
        %697 = vmatpush2.bf16.msra.mxu0 0
        %698 = vmatprep.mubr.bf16.mxu0 0
        %699 = vmatmul.mubr.bf16.gmra.mxu0 %v650
        %v700 = vpop.f32.mrf.mxu0
        %v701 = vadd.f32 0.0, %v700
        %v702 = vpop.f32.mrf.mxu0
        %v703 = vpop.f32.mrf.mxu0
        %v704 = vadd.f32 0.0, %v703
        %v705 = vpop.f32.mrf.mxu0
        %706 = vmatprep.mubr.bf16.mxu0 0
        %707 = vmatmul.mubr.bf16.gmra.mxu0 %v652
        %v708 = vpop.f32.mrf.mxu0
        %v709 = vadd.f32 0.0, %v708
        %v710 = vpop.f32.mrf.mxu0
        %v711 = vpop.f32.mrf.mxu0
        %v712 = vadd.f32 0.0, %v711
        %v713 = vpop.f32.mrf.mxu0
        %714 = vmatprep.mubr.bf16.mxu0 0
        %715 = vmatmul.mubr.bf16.gmra.mxu0 %v654
        %v716 = vpop.f32.mrf.mxu0
        %v717 = vadd.f32 0.0, %v716
        %v718 = vpop.f32.mrf.mxu0
        %v719 = vpop.f32.mrf.mxu0
        %v720 = vadd.f32 0.0, %v719
        %v721 = vpop.f32.mrf.mxu0
        %722 = vmatprep.mubr.bf16.mxu0 0
        %723 = vmatmul.mubr.bf16.gmra.mxu0 %v656
        %v724 = vpop.f32.mrf.mxu0
        %v725 = vadd.f32 0.0, %v724
        %v726 = vpop.f32.mrf.mxu0
        %v727 = vpop.f32.mrf.mxu0
        %v728 = vadd.f32 0.0, %v727
        %v729 = vpop.f32.mrf.mxu0
        %730 = vmatprep.mubr.bf16.mxu0 0
        %731 = vmatmul.mubr.bf16.gmra.mxu0 %v658
        %v732 = vpop.f32.mrf.mxu0
        %v733 = vadd.f32 0.0, %v732
        %v734 = vpop.f32.mrf.mxu0
        %v735 = vpop.f32.mrf.mxu0
        %v736 = vadd.f32 0.0, %v735
        %v737 = vpop.f32.mrf.mxu0
        %738 = vmatprep.mubr.bf16.mxu0 0
        %739 = vmatmul.mubr.bf16.gmra.mxu0 %v660
        %v740 = vpop.f32.mrf.mxu0
        %v741 = vadd.f32 0.0, %v740
        %v742 = vpop.f32.mrf.mxu0
        %v743 = vpop.f32.mrf.mxu0
        %v744 = vadd.f32 0.0, %v743
        %v745 = vpop.f32.mrf.mxu0
        %746 = vdwg.mxu0
        %v748 = vsel %vm649, %v603, 0
        %v751 = vsel %vm649, %v604, 0
        %v754 = vsel %vm649, %v605, 0
        %v757 = vsel %vm649, %v606, 0
        %v760 = vsel %vm649, %v607, 0
        %v763 = vsel %vm649, %v608, 0
        %v766 = vsel %vm662, %v646, 0
        %768 = vmatprep.subr.bf16.mxu0 0
        %769 = vmatpush1.bf16.msra.mxu0 0
        %770 = vmatprep.subr.bf16.mxu0 0
        %771 = vmatpush1.bf16.msra.mxu0 0
        %772 = vmatprep.subr.bf16.mxu0 0
        %773 = vmatpush1.bf16.msra.mxu0 0
        %774 = vmatprep.subr.bf16.mxu0 0
        %775 = vmatpush1.bf16.msra.mxu0 0
        %776 = vmatprep.subr.bf16.mxu0 0
        %777 = vmatpush1.bf16.msra.mxu0 0
        %778 = vmatprep.subr.bf16.mxu0 0
        %779 = vmatpush1.bf16.msra.mxu0 0
        %780 = vmatprep.subr.bf16.mxu0 0
        %781 = vmatpush1.bf16.msra.mxu0 0
        %782 = vmatprep.subr.bf16.mxu0 0
        %783 = vmatpush1.bf16.msra.mxu0 %v766
        %784 = vmatprep.subr.bf16.mxu0 0
        %785 = vmatpush2.bf16.msra.mxu0 0
        %786 = vmatprep.subr.bf16.mxu0 0
        %787 = vmatpush2.bf16.msra.mxu0 0
        %788 = vmatprep.subr.bf16.mxu0 0
        %789 = vmatpush2.bf16.msra.mxu0 0
        %790 = vmatprep.subr.bf16.mxu0 0
        %791 = vmatpush2.bf16.msra.mxu0 0
        %792 = vmatprep.subr.bf16.mxu0 0
        %793 = vmatpush2.bf16.msra.mxu0 0
        %794 = vmatprep.subr.bf16.mxu0 0
        %795 = vmatpush2.bf16.msra.mxu0 0
        %796 = vmatprep.subr.bf16.mxu0 0
        %797 = vmatpush2.bf16.msra.mxu0 0
        %798 = vmatprep.subr.bf16.mxu0 0
        %799 = vmatpush2.bf16.msra.mxu0 0
        %800 = vmatprep.mubr.bf16.mxu0 0
        %801 = vmatmul.mubr.bf16.gmra.mxu0 %v748
        %v802 = vpop.f32.mrf.mxu0
        %v803 = vadd.f32 %v701, %v802
        %v804 = vpop.f32.mrf.mxu0
        %v805 = vpop.f32.mrf.mxu0
        %v806 = vadd.f32 %v704, %v805
        %v807 = vpop.f32.mrf.mxu0
        %808 = vmatprep.mubr.bf16.mxu0 0
        %809 = vmatmul.mubr.bf16.gmra.mxu0 %v751
        %v810 = vpop.f32.mrf.mxu0
        %v811 = vadd.f32 %v709, %v810
        %v812 = vpop.f32.mrf.mxu0
        %v813 = vpop.f32.mrf.mxu0
        %v814 = vadd.f32 %v712, %v813
        %v815 = vpop.f32.mrf.mxu0
        %816 = vmatprep.mubr.bf16.mxu0 0
        %817 = vmatmul.mubr.bf16.gmra.mxu0 %v754
        %v818 = vpop.f32.mrf.mxu0
        %v819 = vadd.f32 %v717, %v818
        %v820 = vpop.f32.mrf.mxu0
        %v821 = vpop.f32.mrf.mxu0
        %v822 = vadd.f32 %v720, %v821
        %v823 = vpop.f32.mrf.mxu0
        %824 = vmatprep.mubr.bf16.mxu0 0
        %825 = vmatmul.mubr.bf16.gmra.mxu0 %v757
        %v826 = vpop.f32.mrf.mxu0
        %v827 = vadd.f32 %v725, %v826
        %v828 = vpop.f32.mrf.mxu0
        %v829 = vpop.f32.mrf.mxu0
        %v830 = vadd.f32 %v728, %v829
        %v831 = vpop.f32.mrf.mxu0
        %832 = vmatprep.mubr.bf16.mxu0 0
        %833 = vmatmul.mubr.bf16.gmra.mxu0 %v760
        %v834 = vpop.f32.mrf.mxu0
        %v835 = vadd.f32 %v733, %v834
        %v836 = vpop.f32.mrf.mxu0
        %v837 = vpop.f32.mrf.mxu0
        %v838 = vadd.f32 %v736, %v837
        %v839 = vpop.f32.mrf.mxu0
        %840 = vmatprep.mubr.bf16.mxu0 0
        %841 = vmatmul.mubr.bf16.gmra.mxu0 %v763
        %v842 = vpop.f32.mrf.mxu0
        %v843 = vadd.f32 %v741, %v842
        %v844 = vpop.f32.mrf.mxu0
        %v845 = vpop.f32.mrf.mxu0
        %v846 = vadd.f32 %v744, %v845
        %v847 = vpop.f32.mrf.mxu0
        %848 = vdwg.mxu0
        %s849 = scalar_lea.vmem %s3, 4
        %v850 = vld [vmem:[%s849] sm:$0x3]
        %v852 = vsel %vm649, %v638, 0
        %v855 = vsel %vm649, %v639, 0
        %v858 = vsel %vm649, %v640, 0
        %v861 = vsel %vm649, %v641, 0
        %v864 = vsel %vm649, %v642, 0
        %v867 = vsel %vm649, %v643, 0
        %v870 = vsel %vm662, %v850, 0
        %872 = vmatprep.subr.bf16.mxu0 0
        %873 = vmatpush1.bf16.msra.mxu0 0
        %874 = vmatprep.subr.bf16.mxu0 0
        %875 = vmatpush1.bf16.msra.mxu0 0
        %876 = vmatprep.subr.bf16.mxu0 0
        %877 = vmatpush1.bf16.msra.mxu0 0
        %878 = vmatprep.subr.bf16.mxu0 0
        %879 = vmatpush1.bf16.msra.mxu0 0
        %880 = vmatprep.subr.bf16.mxu0 0
        %881 = vmatpush1.bf16.msra.mxu0 0
        %882 = vmatprep.subr.bf16.mxu0 0
        %883 = vmatpush1.bf16.msra.mxu0 0
        %884 = vmatprep.subr.bf16.mxu0 0
        %885 = vmatpush1.bf16.msra.mxu0 0
        %886 = vmatprep.subr.bf16.mxu0 0
        %887 = vmatpush1.bf16.msra.mxu0 %v870
        %888 = vmatprep.subr.bf16.mxu0 0
        %889 = vmatpush2.bf16.msra.mxu0 0
        %890 = vmatprep.subr.bf16.mxu0 0
        %891 = vmatpush2.bf16.msra.mxu0 0
        %892 = vmatprep.subr.bf16.mxu0 0
        %893 = vmatpush2.bf16.msra.mxu0 0
        %894 = vmatprep.subr.bf16.mxu0 0
        %895 = vmatpush2.bf16.msra.mxu0 0
        %896 = vmatprep.subr.bf16.mxu0 0
        %897 = vmatpush2.bf16.msra.mxu0 0
        %898 = vmatprep.subr.bf16.mxu0 0
        %899 = vmatpush2.bf16.msra.mxu0 0
        %900 = vmatprep.subr.bf16.mxu0 0
        %901 = vmatpush2.bf16.msra.mxu0 0
        %902 = vmatprep.subr.bf16.mxu0 0
        %903 = vmatpush2.bf16.msra.mxu0 0
        %904 = vmatprep.mubr.bf16.mxu0 0
        %905 = vmatmul.mubr.bf16.gmra.mxu0 %v852
        %v906 = vpop.f32.mrf.mxu0
        %v907 = vadd.f32 0.0, %v906
        %v908 = vpop.f32.mrf.mxu0
        %v909 = vpop.f32.mrf.mxu0
        %v910 = vadd.f32 0.0, %v909
        %v911 = vpop.f32.mrf.mxu0
        %912 = vmatprep.mubr.bf16.mxu0 0
        %913 = vmatmul.mubr.bf16.gmra.mxu0 %v855
        %v914 = vpop.f32.mrf.mxu0
        %v915 = vadd.f32 0.0, %v914
        %v916 = vpop.f32.mrf.mxu0
        %v917 = vpop.f32.mrf.mxu0
        %v918 = vadd.f32 0.0, %v917
        %v919 = vpop.f32.mrf.mxu0
        %920 = vmatprep.mubr.bf16.mxu0 0
        %921 = vmatmul.mubr.bf16.gmra.mxu0 %v858
        %v922 = vpop.f32.mrf.mxu0
        %v923 = vadd.f32 0.0, %v922
        %v924 = vpop.f32.mrf.mxu0
        %v925 = vpop.f32.mrf.mxu0
        %v926 = vadd.f32 0.0, %v925
        %v927 = vpop.f32.mrf.mxu0
        %928 = vmatprep.mubr.bf16.mxu0 0
        %929 = vmatmul.mubr.bf16.gmra.mxu0 %v861
        %v930 = vpop.f32.mrf.mxu0
        %v931 = vadd.f32 0.0, %v930
        %v932 = vpop.f32.mrf.mxu0
        %v933 = vpop.f32.mrf.mxu0
        %v934 = vadd.f32 0.0, %v933
        %v935 = vpop.f32.mrf.mxu0
        %936 = vmatprep.mubr.bf16.mxu0 0
        %937 = vmatmul.mubr.bf16.gmra.mxu0 %v864
        %v938 = vpop.f32.mrf.mxu0
        %v939 = vadd.f32 0.0, %v938
        %v940 = vpop.f32.mrf.mxu0
        %v941 = vpop.f32.mrf.mxu0
        %v942 = vadd.f32 0.0, %v941
        %v943 = vpop.f32.mrf.mxu0
        %944 = vmatprep.mubr.bf16.mxu0 0
        %945 = vmatmul.mubr.bf16.gmra.mxu0 %v867
        %v946 = vpop.f32.mrf.mxu0
        %v947 = vadd.f32 0.0, %v946
        %v948 = vpop.f32.mrf.mxu0
        %v949 = vpop.f32.mrf.mxu0
        %v950 = vadd.f32 0.0, %v949
        %v951 = vpop.f32.mrf.mxu0
        %952 = vdwg.mxu0
        %v953 = vadd.f32 %v803, %v907
        %v954 = vadd.f32 %v806, %v910
        %v955 = vadd.f32 %v811, %v915
        %v956 = vadd.f32 %v814, %v918
        %v957 = vadd.f32 %v819, %v923
        %v958 = vadd.f32 %v822, %v926
        %v959 = vadd.f32 %v827, %v931
        %v960 = vadd.f32 %v830, %v934
        %v961 = vadd.f32 %v835, %v939
        %v962 = vadd.f32 %v838, %v942
        %v963 = vadd.f32 %v843, %v947
        %v964 = vadd.f32 %v846, %v950
        %s965 = scalar_lea.vmem %s3, 6
        %v966 = vld [vmem:[%s965] sm:$0x3]
        %v968 = vsel %vm649, %v609, 0
        %v971 = vsel %vm662, %v966, 0
        %973 = vmatprep.subr.bf16.mxu0 0
        %974 = vmatpush1.bf16.msra.mxu0 0
        %975 = vmatprep.subr.bf16.mxu0 0
        %976 = vmatpush1.bf16.msra.mxu0 0
        %977 = vmatprep.subr.bf16.mxu0 0
        %978 = vmatpush1.bf16.msra.mxu0 0
        %979 = vmatprep.subr.bf16.mxu0 0
        %980 = vmatpush1.bf16.msra.mxu0 0
        %981 = vmatprep.subr.bf16.mxu0 0
        %982 = vmatpush1.bf16.msra.mxu0 0
        %983 = vmatprep.subr.bf16.mxu0 0
        %984 = vmatpush1.bf16.msra.mxu0 0
        %985 = vmatprep.subr.bf16.mxu0 0
        %986 = vmatpush1.bf16.msra.mxu0 0
        %987 = vmatprep.subr.bf16.mxu0 0
        %988 = vmatpush1.bf16.msra.mxu0 %v971
        %989 = vmatprep.subr.bf16.mxu0 0
        %990 = vmatpush2.bf16.msra.mxu0 0
        %991 = vmatprep.subr.bf16.mxu0 0
        %992 = vmatpush2.bf16.msra.mxu0 0
        %993 = vmatprep.subr.bf16.mxu0 0
        %994 = vmatpush2.bf16.msra.mxu0 0
        %995 = vmatprep.subr.bf16.mxu0 0
        %996 = vmatpush2.bf16.msra.mxu0 0
        %997 = vmatprep.subr.bf16.mxu0 0
        %998 = vmatpush2.bf16.msra.mxu0 0
        %999 = vmatprep.subr.bf16.mxu0 0
        %1000 = vmatpush2.bf16.msra.mxu0 0
        %1001 = vmatprep.subr.bf16.mxu0 0
        %1002 = vmatpush2.bf16.msra.mxu0 0
        %1003 = vmatprep.subr.bf16.mxu0 0
        %1004 = vmatpush2.bf16.msra.mxu0 0
        %1005 = vmatprep.mubr.bf16.mxu0 0
        %1006 = vmatmul.mubr.bf16.gmra.mxu0 %v751
        %v1007 = vpop.f32.mrf.mxu0
        %v1008 = vadd.f32 0.0, %v1007
        %v1009 = vpop.f32.mrf.mxu0
        %v1010 = vpop.f32.mrf.mxu0
        %v1011 = vadd.f32 0.0, %v1010
        %v1012 = vpop.f32.mrf.mxu0
        %1013 = vmatprep.mubr.bf16.mxu0 0
        %1014 = vmatmul.mubr.bf16.gmra.mxu0 %v754
        %v1015 = vpop.f32.mrf.mxu0
        %v1016 = vadd.f32 0.0, %v1015
        %v1017 = vpop.f32.mrf.mxu0
        %v1018 = vpop.f32.mrf.mxu0
        %v1019 = vadd.f32 0.0, %v1018
        %v1020 = vpop.f32.mrf.mxu0
        %1021 = vmatprep.mubr.bf16.mxu0 0
        %1022 = vmatmul.mubr.bf16.gmra.mxu0 %v757
        %v1023 = vpop.f32.mrf.mxu0
        %v1024 = vadd.f32 0.0, %v1023
        %v1025 = vpop.f32.mrf.mxu0
        %v1026 = vpop.f32.mrf.mxu0
        %v1027 = vadd.f32 0.0, %v1026
        %v1028 = vpop.f32.mrf.mxu0
        %1029 = vmatprep.mubr.bf16.mxu0 0
        %1030 = vmatmul.mubr.bf16.gmra.mxu0 %v760
        %v1031 = vpop.f32.mrf.mxu0
        %v1032 = vadd.f32 0.0, %v1031
        %v1033 = vpop.f32.mrf.mxu0
        %v1034 = vpop.f32.mrf.mxu0
        %v1035 = vadd.f32 0.0, %v1034
        %v1036 = vpop.f32.mrf.mxu0
        %1037 = vmatprep.mubr.bf16.mxu0 0
        %1038 = vmatmul.mubr.bf16.gmra.mxu0 %v763
        %v1039 = vpop.f32.mrf.mxu0
        %v1040 = vadd.f32 0.0, %v1039
        %v1041 = vpop.f32.mrf.mxu0
        %v1042 = vpop.f32.mrf.mxu0
        %v1043 = vadd.f32 0.0, %v1042
        %v1044 = vpop.f32.mrf.mxu0
        %1045 = vmatprep.mubr.bf16.mxu0 0
        %1046 = vmatmul.mubr.bf16.gmra.mxu0 %v968
        %v1047 = vpop.f32.mrf.mxu0
        %v1048 = vadd.f32 0.0, %v1047
        %v1049 = vpop.f32.mrf.mxu0
        %v1050 = vpop.f32.mrf.mxu0
        %v1051 = vadd.f32 0.0, %v1050
        %v1052 = vpop.f32.mrf.mxu0
        %1053 = vdwg.mxu0
        %v1054 = vadd.f32 %v953, %v1008
        %v1055 = vadd.f32 %v954, %v1011
        %v1056 = vadd.f32 %v955, %v1016
        %v1057 = vadd.f32 %v956, %v1019
        %v1058 = vadd.f32 %v957, %v1024
        %v1059 = vadd.f32 %v958, %v1027
        %v1060 = vadd.f32 %v959, %v1032
        %v1061 = vadd.f32 %v960, %v1035
        %v1062 = vadd.f32 %v961, %v1040
        %v1063 = vadd.f32 %v962, %v1043
        %v1064 = vadd.f32 %v963, %v1048
        %v1065 = vadd.f32 %v964, %v1051
        %s1066 = scalar_lea.vmem %s3, 8
        %v1067 = vld [vmem:[%s1066] sm:$0x3]
        %v1068 = vsel %vm649, %v534, 0
        %v1071 = vsel %vm662, %v1067, 0
        %1073 = vmatprep.subr.bf16.mxu0 0
        %1074 = vmatpush1.bf16.msra.mxu0 0
        %1075 = vmatprep.subr.bf16.mxu0 0
        %1076 = vmatpush1.bf16.msra.mxu0 0
        %1077 = vmatprep.subr.bf16.mxu0 0
        %1078 = vmatpush1.bf16.msra.mxu0 0
        %1079 = vmatprep.subr.bf16.mxu0 0
        %1080 = vmatpush1.bf16.msra.mxu0 0
        %1081 = vmatprep.subr.bf16.mxu0 0
        %1082 = vmatpush1.bf16.msra.mxu0 0
        %1083 = vmatprep.subr.bf16.mxu0 0
        %1084 = vmatpush1.bf16.msra.mxu0 0
        %1085 = vmatprep.subr.bf16.mxu0 0
        %1086 = vmatpush1.bf16.msra.mxu0 0
        %1087 = vmatprep.subr.bf16.mxu0 0
        %1088 = vmatpush1.bf16.msra.mxu0 %v1071
        %1089 = vmatprep.subr.bf16.mxu0 0
        %1090 = vmatpush2.bf16.msra.mxu0 0
        %1091 = vmatprep.subr.bf16.mxu0 0
        %1092 = vmatpush2.bf16.msra.mxu0 0
        %1093 = vmatprep.subr.bf16.mxu0 0
        %1094 = vmatpush2.bf16.msra.mxu0 0
        %1095 = vmatprep.subr.bf16.mxu0 0
        %1096 = vmatpush2.bf16.msra.mxu0 0
        %1097 = vmatprep.subr.bf16.mxu0 0
        %1098 = vmatpush2.bf16.msra.mxu0 0
        %1099 = vmatprep.subr.bf16.mxu0 0
        %1100 = vmatpush2.bf16.msra.mxu0 0
        %1101 = vmatprep.subr.bf16.mxu0 0
        %1102 = vmatpush2.bf16.msra.mxu0 0
        %1103 = vmatprep.subr.bf16.mxu0 0
        %1104 = vmatpush2.bf16.msra.mxu0 0
        %1105 = vmatprep.mubr.bf16.mxu0 0
        %1106 = vmatmul.mubr.bf16.gmra.mxu0 %v652
        %v1107 = vpop.f32.mrf.mxu0
        %v1108 = vadd.f32 0.0, %v1107
        %v1109 = vpop.f32.mrf.mxu0
        %v1110 = vpop.f32.mrf.mxu0
        %v1111 = vadd.f32 0.0, %v1110
        %v1112 = vpop.f32.mrf.mxu0
        %1113 = vmatprep.mubr.bf16.mxu0 0
        %1114 = vmatmul.mubr.bf16.gmra.mxu0 %v654
        %v1115 = vpop.f32.mrf.mxu0
        %v1116 = vadd.f32 0.0, %v1115
        %v1117 = vpop.f32.mrf.mxu0
        %v1118 = vpop.f32.mrf.mxu0
        %v1119 = vadd.f32 0.0, %v1118
        %v1120 = vpop.f32.mrf.mxu0
        %1121 = vmatprep.mubr.bf16.mxu0 0
        %1122 = vmatmul.mubr.bf16.gmra.mxu0 %v656
        %v1123 = vpop.f32.mrf.mxu0
        %v1124 = vadd.f32 0.0, %v1123
        %v1125 = vpop.f32.mrf.mxu0
        %v1126 = vpop.f32.mrf.mxu0
        %v1127 = vadd.f32 0.0, %v1126
        %v1128 = vpop.f32.mrf.mxu0
        %1129 = vmatprep.mubr.bf16.mxu0 0
        %1130 = vmatmul.mubr.bf16.gmra.mxu0 %v658
        %v1131 = vpop.f32.mrf.mxu0
        %v1132 = vadd.f32 0.0, %v1131
        %v1133 = vpop.f32.mrf.mxu0
        %v1134 = vpop.f32.mrf.mxu0
        %v1135 = vadd.f32 0.0, %v1134
        %v1136 = vpop.f32.mrf.mxu0
        %1137 = vmatprep.mubr.bf16.mxu0 0
        %1138 = vmatmul.mubr.bf16.gmra.mxu0 %v660
        %v1139 = vpop.f32.mrf.mxu0
        %v1140 = vadd.f32 0.0, %v1139
        %v1141 = vpop.f32.mrf.mxu0
        %v1142 = vpop.f32.mrf.mxu0
        %v1143 = vadd.f32 0.0, %v1142
        %v1144 = vpop.f32.mrf.mxu0
        %1145 = vmatprep.mubr.bf16.mxu0 0
        %1146 = vmatmul.mubr.bf16.gmra.mxu0 %v1068
        %v1147 = vpop.f32.mrf.mxu0
        %v1148 = vadd.f32 0.0, %v1147
        %v1149 = vpop.f32.mrf.mxu0
        %v1150 = vpop.f32.mrf.mxu0
        %v1151 = vadd.f32 0.0, %v1150
        %v1152 = vpop.f32.mrf.mxu0
        %1153 = vdwg.mxu0
        %v1154 = vadd.f32 %v1054, %v1108
        %v1155 = vadd.f32 %v1055, %v1111
        %v1156 = vadd.f32 %v1056, %v1116
        %v1157 = vadd.f32 %v1057, %v1119
        %v1158 = vadd.f32 %v1058, %v1124
        %v1159 = vadd.f32 %v1059, %v1127
        %v1160 = vadd.f32 %v1060, %v1132
        %v1161 = vadd.f32 %v1061, %v1135
        %v1162 = vadd.f32 %v1062, %v1140
        %v1163 = vadd.f32 %v1063, %v1143
        %v1164 = vadd.f32 %v1064, %v1148
        %v1165 = vadd.f32 %v1065, %v1151
        %s1166 = scalar_lea.vmem %s3, 10
        %v1167 = vld [vmem:[%s1166] sm:$0x3]
        %v1169 = vsel %vm649, %v644, 0
        %v1172 = vsel %vm662, %v1167, 0
        %1174 = vmatprep.subr.bf16.mxu0 0
        %1175 = vmatpush1.bf16.msra.mxu0 0
        %1176 = vmatprep.subr.bf16.mxu0 0
        %1177 = vmatpush1.bf16.msra.mxu0 0
        %1178 = vmatprep.subr.bf16.mxu0 0
        %1179 = vmatpush1.bf16.msra.mxu0 0
        %1180 = vmatprep.subr.bf16.mxu0 0
        %1181 = vmatpush1.bf16.msra.mxu0 0
        %1182 = vmatprep.subr.bf16.mxu0 0
        %1183 = vmatpush1.bf16.msra.mxu0 0
        %1184 = vmatprep.subr.bf16.mxu0 0
        %1185 = vmatpush1.bf16.msra.mxu0 0
        %1186 = vmatprep.subr.bf16.mxu0 0
        %1187 = vmatpush1.bf16.msra.mxu0 0
        %1188 = vmatprep.subr.bf16.mxu0 0
        %1189 = vmatpush1.bf16.msra.mxu0 %v1172
        %1190 = vmatprep.subr.bf16.mxu0 0
        %1191 = vmatpush2.bf16.msra.mxu0 0
        %1192 = vmatprep.subr.bf16.mxu0 0
        %1193 = vmatpush2.bf16.msra.mxu0 0
        %1194 = vmatprep.subr.bf16.mxu0 0
        %1195 = vmatpush2.bf16.msra.mxu0 0
        %1196 = vmatprep.subr.bf16.mxu0 0
        %1197 = vmatpush2.bf16.msra.mxu0 0
        %1198 = vmatprep.subr.bf16.mxu0 0
        %1199 = vmatpush2.bf16.msra.mxu0 0
        %1200 = vmatprep.subr.bf16.mxu0 0
        %1201 = vmatpush2.bf16.msra.mxu0 0
        %1202 = vmatprep.subr.bf16.mxu0 0
        %1203 = vmatpush2.bf16.msra.mxu0 0
        %1204 = vmatprep.subr.bf16.mxu0 0
        %1205 = vmatpush2.bf16.msra.mxu0 0
        %1206 = vmatprep.mubr.bf16.mxu0 0
        %1207 = vmatmul.mubr.bf16.gmra.mxu0 %v855
        %v1208 = vpop.f32.mrf.mxu0
        %v1209 = vadd.f32 0.0, %v1208
        %v1210 = vpop.f32.mrf.mxu0
        %v1211 = vpop.f32.mrf.mxu0
        %v1212 = vadd.f32 0.0, %v1211
        %v1213 = vpop.f32.mrf.mxu0
        %1214 = vmatprep.mubr.bf16.mxu0 0
        %1215 = vmatmul.mubr.bf16.gmra.mxu0 %v858
        %v1216 = vpop.f32.mrf.mxu0
        %v1217 = vadd.f32 0.0, %v1216
        %v1218 = vpop.f32.mrf.mxu0
        %v1219 = vpop.f32.mrf.mxu0
        %v1220 = vadd.f32 0.0, %v1219
        %v1221 = vpop.f32.mrf.mxu0
        %1222 = vmatprep.mubr.bf16.mxu0 0
        %1223 = vmatmul.mubr.bf16.gmra.mxu0 %v861
        %v1224 = vpop.f32.mrf.mxu0
        %v1225 = vadd.f32 0.0, %v1224
        %v1226 = vpop.f32.mrf.mxu0
        %v1227 = vpop.f32.mrf.mxu0
        %v1228 = vadd.f32 0.0, %v1227
        %v1229 = vpop.f32.mrf.mxu0
        %1230 = vmatprep.mubr.bf16.mxu0 0
        %1231 = vmatmul.mubr.bf16.gmra.mxu0 %v864
        %v1232 = vpop.f32.mrf.mxu0
        %v1233 = vadd.f32 0.0, %v1232
        %v1234 = vpop.f32.mrf.mxu0
        %v1235 = vpop.f32.mrf.mxu0
        %v1236 = vadd.f32 0.0, %v1235
        %v1237 = vpop.f32.mrf.mxu0
        %1238 = vmatprep.mubr.bf16.mxu0 0
        %1239 = vmatmul.mubr.bf16.gmra.mxu0 %v867
        %v1240 = vpop.f32.mrf.mxu0
        %v1241 = vadd.f32 0.0, %v1240
        %v1242 = vpop.f32.mrf.mxu0
        %v1243 = vpop.f32.mrf.mxu0
        %v1244 = vadd.f32 0.0, %v1243
        %v1245 = vpop.f32.mrf.mxu0
        %1246 = vmatprep.mubr.bf16.mxu0 0
        %1247 = vmatmul.mubr.bf16.gmra.mxu0 %v1169
        %v1248 = vpop.f32.mrf.mxu0
        %v1249 = vadd.f32 0.0, %v1248
        %v1250 = vpop.f32.mrf.mxu0
        %v1251 = vpop.f32.mrf.mxu0
        %v1252 = vadd.f32 0.0, %v1251
        %v1253 = vpop.f32.mrf.mxu0
        %1254 = vdwg.mxu0
        %v1255 = vadd.f32 %v1154, %v1209
        %v1256 = vadd.f32 %v1155, %v1212
        %v1257 = vadd.f32 %v1156, %v1217
        %v1258 = vadd.f32 %v1157, %v1220
        %v1259 = vadd.f32 %v1158, %v1225
        %v1260 = vadd.f32 %v1159, %v1228
        %v1261 = vadd.f32 %v1160, %v1233
        %v1262 = vadd.f32 %v1161, %v1236
        %v1263 = vadd.f32 %v1162, %v1241
        %v1264 = vadd.f32 %v1163, %v1244
        %v1265 = vadd.f32 %v1164, %v1249
        %v1266 = vadd.f32 %v1165, %v1252
        %s1267 = scalar_lea.vmem %s3, 12
        %v1268 = vld [vmem:[%s1267] sm:$0x3]
        %v1270 = vsel %vm649, %v610, 0
        %v1273 = vsel %vm662, %v1268, 0
        %1275 = vmatprep.subr.bf16.mxu0 0
        %1276 = vmatpush1.bf16.msra.mxu0 0
        %1277 = vmatprep.subr.bf16.mxu0 0
        %1278 = vmatpush1.bf16.msra.mxu0 0
        %1279 = vmatprep.subr.bf16.mxu0 0
        %1280 = vmatpush1.bf16.msra.mxu0 0
        %1281 = vmatprep.subr.bf16.mxu0 0
        %1282 = vmatpush1.bf16.msra.mxu0 0
        %1283 = vmatprep.subr.bf16.mxu0 0
        %1284 = vmatpush1.bf16.msra.mxu0 0
        %1285 = vmatprep.subr.bf16.mxu0 0
        %1286 = vmatpush1.bf16.msra.mxu0 0
        %1287 = vmatprep.subr.bf16.mxu0 0
        %1288 = vmatpush1.bf16.msra.mxu0 0
        %1289 = vmatprep.subr.bf16.mxu0 0
        %1290 = vmatpush1.bf16.msra.mxu0 %v1273
        %1291 = vmatprep.subr.bf16.mxu0 0
        %1292 = vmatpush2.bf16.msra.mxu0 0
        %1293 = vmatprep.subr.bf16.mxu0 0
        %1294 = vmatpush2.bf16.msra.mxu0 0
        %1295 = vmatprep.subr.bf16.mxu0 0
        %1296 = vmatpush2.bf16.msra.mxu0 0
        %1297 = vmatprep.subr.bf16.mxu0 0
        %1298 = vmatpush2.bf16.msra.mxu0 0
        %1299 = vmatprep.subr.bf16.mxu0 0
        %1300 = vmatpush2.bf16.msra.mxu0 0
        %1301 = vmatprep.subr.bf16.mxu0 0
        %1302 = vmatpush2.bf16.msra.mxu0 0
        %1303 = vmatprep.subr.bf16.mxu0 0
        %1304 = vmatpush2.bf16.msra.mxu0 0
        %1305 = vmatprep.subr.bf16.mxu0 0
        %1306 = vmatpush2.bf16.msra.mxu0 0
        %1307 = vmatprep.mubr.bf16.mxu0 0
        %1308 = vmatmul.mubr.bf16.gmra.mxu0 %v754
        %v1309 = vpop.f32.mrf.mxu0
        %v1310 = vadd.f32 0.0, %v1309
        %v1311 = vpop.f32.mrf.mxu0
        %v1312 = vpop.f32.mrf.mxu0
        %v1313 = vadd.f32 0.0, %v1312
        %v1314 = vpop.f32.mrf.mxu0
        %1315 = vmatprep.mubr.bf16.mxu0 0
        %1316 = vmatmul.mubr.bf16.gmra.mxu0 %v757
        %v1317 = vpop.f32.mrf.mxu0
        %v1318 = vadd.f32 0.0, %v1317
        %v1319 = vpop.f32.mrf.mxu0
        %v1320 = vpop.f32.mrf.mxu0
        %v1321 = vadd.f32 0.0, %v1320
        %v1322 = vpop.f32.mrf.mxu0
        %1323 = vmatprep.mubr.bf16.mxu0 0
        %1324 = vmatmul.mubr.bf16.gmra.mxu0 %v760
        %v1325 = vpop.f32.mrf.mxu0
        %v1326 = vadd.f32 0.0, %v1325
        %v1327 = vpop.f32.mrf.mxu0
        %v1328 = vpop.f32.mrf.mxu0
        %v1329 = vadd.f32 0.0, %v1328
        %v1330 = vpop.f32.mrf.mxu0
        %1331 = vmatprep.mubr.bf16.mxu0 0
        %1332 = vmatmul.mubr.bf16.gmra.mxu0 %v763
        %v1333 = vpop.f32.mrf.mxu0
        %v1334 = vadd.f32 0.0, %v1333
        %v1335 = vpop.f32.mrf.mxu0
        %v1336 = vpop.f32.mrf.mxu0
        %v1337 = vadd.f32 0.0, %v1336
        %v1338 = vpop.f32.mrf.mxu0
        %1339 = vmatprep.mubr.bf16.mxu0 0
        %1340 = vmatmul.mubr.bf16.gmra.mxu0 %v968
        %v1341 = vpop.f32.mrf.mxu0
        %v1342 = vadd.f32 0.0, %v1341
        %v1343 = vpop.f32.mrf.mxu0
        %v1344 = vpop.f32.mrf.mxu0
        %v1345 = vadd.f32 0.0, %v1344
        %v1346 = vpop.f32.mrf.mxu0
        %1347 = vmatprep.mubr.bf16.mxu0 0
        %1348 = vmatmul.mubr.bf16.gmra.mxu0 %v1270
        %v1349 = vpop.f32.mrf.mxu0
        %v1350 = vadd.f32 0.0, %v1349
        %v1351 = vpop.f32.mrf.mxu0
        %v1352 = vpop.f32.mrf.mxu0
        %v1353 = vadd.f32 0.0, %v1352
        %v1354 = vpop.f32.mrf.mxu0
        %1355 = vdwg.mxu0
        %v1356 = vadd.f32 %v1255, %v1310
        %v1357 = vadd.f32 %v1256, %v1313
        %v1358 = vadd.f32 %v1257, %v1318
        %v1359 = vadd.f32 %v1258, %v1321
        %v1360 = vadd.f32 %v1259, %v1326
        %v1361 = vadd.f32 %v1260, %v1329
        %v1362 = vadd.f32 %v1261, %v1334
        %v1363 = vadd.f32 %v1262, %v1337
        %v1364 = vadd.f32 %v1263, %v1342
        %v1365 = vadd.f32 %v1264, %v1345
        %v1366 = vadd.f32 %v1265, %v1350
        %v1367 = vadd.f32 %v1266, %v1353
        %s1368 = scalar_lea.vmem %s3, 14
        %v1369 = vld [vmem:[%s1368] sm:$0x3]
        %v1370 = vsel %vm649, %v535, 0
        %v1373 = vsel %vm662, %v1369, 0
        %1375 = vmatprep.subr.bf16.mxu0 0
        %1376 = vmatpush1.bf16.msra.mxu0 0
        %1377 = vmatprep.subr.bf16.mxu0 0
        %1378 = vmatpush1.bf16.msra.mxu0 0
        %1379 = vmatprep.subr.bf16.mxu0 0
        %1380 = vmatpush1.bf16.msra.mxu0 0
        %1381 = vmatprep.subr.bf16.mxu0 0
        %1382 = vmatpush1.bf16.msra.mxu0 0
        %1383 = vmatprep.subr.bf16.mxu0 0
        %1384 = vmatpush1.bf16.msra.mxu0 0
        %1385 = vmatprep.subr.bf16.mxu0 0
        %1386 = vmatpush1.bf16.msra.mxu0 0
        %1387 = vmatprep.subr.bf16.mxu0 0
        %1388 = vmatpush1.bf16.msra.mxu0 0
        %1389 = vmatprep.subr.bf16.mxu0 0
        %1390 = vmatpush1.bf16.msra.mxu0 %v1373
        %1391 = vmatprep.subr.bf16.mxu0 0
        %1392 = vmatpush2.bf16.msra.mxu0 0
        %1393 = vmatprep.subr.bf16.mxu0 0
        %1394 = vmatpush2.bf16.msra.mxu0 0
        %1395 = vmatprep.subr.bf16.mxu0 0
        %1396 = vmatpush2.bf16.msra.mxu0 0
        %1397 = vmatprep.subr.bf16.mxu0 0
        %1398 = vmatpush2.bf16.msra.mxu0 0
        %1399 = vmatprep.subr.bf16.mxu0 0
        %1400 = vmatpush2.bf16.msra.mxu0 0
        %1401 = vmatprep.subr.bf16.mxu0 0
        %1402 = vmatpush2.bf16.msra.mxu0 0
        %1403 = vmatprep.subr.bf16.mxu0 0
        %1404 = vmatpush2.bf16.msra.mxu0 0
        %1405 = vmatprep.subr.bf16.mxu0 0
        %1406 = vmatpush2.bf16.msra.mxu0 0
        %1407 = vmatprep.mubr.bf16.mxu0 0
        %1408 = vmatmul.mubr.bf16.gmra.mxu0 %v654
        %v1409 = vpop.f32.mrf.mxu0
        %v1410 = vadd.f32 0.0, %v1409
        %v1411 = vpop.f32.mrf.mxu0
        %v1412 = vpop.f32.mrf.mxu0
        %v1413 = vadd.f32 0.0, %v1412
        %v1414 = vpop.f32.mrf.mxu0
        %1415 = vmatprep.mubr.bf16.mxu0 0
        %1416 = vmatmul.mubr.bf16.gmra.mxu0 %v656
        %v1417 = vpop.f32.mrf.mxu0
        %v1418 = vadd.f32 0.0, %v1417
        %v1419 = vpop.f32.mrf.mxu0
        %v1420 = vpop.f32.mrf.mxu0
        %v1421 = vadd.f32 0.0, %v1420
        %v1422 = vpop.f32.mrf.mxu0
        %1423 = vmatprep.mubr.bf16.mxu0 0
        %1424 = vmatmul.mubr.bf16.gmra.mxu0 %v658
        %v1425 = vpop.f32.mrf.mxu0
        %v1426 = vadd.f32 0.0, %v1425
        %v1427 = vpop.f32.mrf.mxu0
        %v1428 = vpop.f32.mrf.mxu0
        %v1429 = vadd.f32 0.0, %v1428
        %v1430 = vpop.f32.mrf.mxu0
        %1431 = vmatprep.mubr.bf16.mxu0 0
        %1432 = vmatmul.mubr.bf16.gmra.mxu0 %v660
        %v1433 = vpop.f32.mrf.mxu0
        %v1434 = vadd.f32 0.0, %v1433
        %v1435 = vpop.f32.mrf.mxu0
        %v1436 = vpop.f32.mrf.mxu0
        %v1437 = vadd.f32 0.0, %v1436
        %v1438 = vpop.f32.mrf.mxu0
        %1439 = vmatprep.mubr.bf16.mxu0 0
        %1440 = vmatmul.mubr.bf16.gmra.mxu0 %v1068
        %v1441 = vpop.f32.mrf.mxu0
        %v1442 = vadd.f32 0.0, %v1441
        %v1443 = vpop.f32.mrf.mxu0
        %v1444 = vpop.f32.mrf.mxu0
        %v1445 = vadd.f32 0.0, %v1444
        %v1446 = vpop.f32.mrf.mxu0
        %1447 = vmatprep.mubr.bf16.mxu0 0
        %1448 = vmatmul.mubr.bf16.gmra.mxu0 %v1370
        %v1449 = vpop.f32.mrf.mxu0
        %v1450 = vadd.f32 0.0, %v1449
        %v1451 = vpop.f32.mrf.mxu0
        %v1452 = vpop.f32.mrf.mxu0
        %v1453 = vadd.f32 0.0, %v1452
        %v1454 = vpop.f32.mrf.mxu0
        %1455 = vdwg.mxu0
        %v1456 = vadd.f32 %v1356, %v1410
        %v1457 = vadd.f32 %v1357, %v1413
        %v1458 = vadd.f32 %v1358, %v1418
        %v1459 = vadd.f32 %v1359, %v1421
        %v1460 = vadd.f32 %v1360, %v1426
        %v1461 = vadd.f32 %v1361, %v1429
        %v1462 = vadd.f32 %v1362, %v1434
        %v1463 = vadd.f32 %v1363, %v1437
        %v1464 = vadd.f32 %v1364, %v1442
        %v1465 = vadd.f32 %v1365, %v1445
        %v1466 = vadd.f32 %v1366, %v1450
        %v1467 = vadd.f32 %v1367, %v1453
        %s1468 = scalar_lea.vmem %s3, 16
        %v1469 = vld [vmem:[%s1468] sm:$0x3]
        %v1471 = vsel %vm649, %v645, 0
        %v1474 = vsel %vm662, %v1469, 0
        %1476 = vmatprep.subr.bf16.mxu0 0
        %1477 = vmatpush1.bf16.msra.mxu0 0
        %1478 = vmatprep.subr.bf16.mxu0 0
        %1479 = vmatpush1.bf16.msra.mxu0 0
        %1480 = vmatprep.subr.bf16.mxu0 0
        %1481 = vmatpush1.bf16.msra.mxu0 0
        %1482 = vmatprep.subr.bf16.mxu0 0
        %1483 = vmatpush1.bf16.msra.mxu0 0
        %1484 = vmatprep.subr.bf16.mxu0 0
        %1485 = vmatpush1.bf16.msra.mxu0 0
        %1486 = vmatprep.subr.bf16.mxu0 0
        %1487 = vmatpush1.bf16.msra.mxu0 0
        %1488 = vmatprep.subr.bf16.mxu0 0
        %1489 = vmatpush1.bf16.msra.mxu0 0
        %1490 = vmatprep.subr.bf16.mxu0 0
        %1491 = vmatpush1.bf16.msra.mxu0 %v1474
        %1492 = vmatprep.subr.bf16.mxu0 0
        %1493 = vmatpush2.bf16.msra.mxu0 0
        %1494 = vmatprep.subr.bf16.mxu0 0
        %1495 = vmatpush2.bf16.msra.mxu0 0
        %1496 = vmatprep.subr.bf16.mxu0 0
        %1497 = vmatpush2.bf16.msra.mxu0 0
        %1498 = vmatprep.subr.bf16.mxu0 0
        %1499 = vmatpush2.bf16.msra.mxu0 0
        %1500 = vmatprep.subr.bf16.mxu0 0
        %1501 = vmatpush2.bf16.msra.mxu0 0
        %1502 = vmatprep.subr.bf16.mxu0 0
        %1503 = vmatpush2.bf16.msra.mxu0 0
        %1504 = vmatprep.subr.bf16.mxu0 0
        %1505 = vmatpush2.bf16.msra.mxu0 0
        %1506 = vmatprep.subr.bf16.mxu0 0
        %1507 = vmatpush2.bf16.msra.mxu0 0
        %1508 = vmatprep.mubr.bf16.mxu0 0
        %1509 = vmatmul.mubr.bf16.gmra.mxu0 %v858
        %v1510 = vpop.f32.mrf.mxu0
        %v1511 = vadd.f32 0.0, %v1510
        %v1512 = vpop.f32.mrf.mxu0
        %v1513 = vpop.f32.mrf.mxu0
        %v1514 = vadd.f32 0.0, %v1513
        %v1515 = vpop.f32.mrf.mxu0
        %1516 = vmatprep.mubr.bf16.mxu0 0
        %1517 = vmatmul.mubr.bf16.gmra.mxu0 %v861
        %v1518 = vpop.f32.mrf.mxu0
        %v1519 = vadd.f32 0.0, %v1518
        %v1520 = vpop.f32.mrf.mxu0
        %v1521 = vpop.f32.mrf.mxu0
        %v1522 = vadd.f32 0.0, %v1521
        %v1523 = vpop.f32.mrf.mxu0
        %1524 = vmatprep.mubr.bf16.mxu0 0
        %1525 = vmatmul.mubr.bf16.gmra.mxu0 %v864
        %v1526 = vpop.f32.mrf.mxu0
        %v1527 = vadd.f32 0.0, %v1526
        %v1528 = vpop.f32.mrf.mxu0
        %v1529 = vpop.f32.mrf.mxu0
        %v1530 = vadd.f32 0.0, %v1529
        %v1531 = vpop.f32.mrf.mxu0
        %1532 = vmatprep.mubr.bf16.mxu0 0
        %1533 = vmatmul.mubr.bf16.gmra.mxu0 %v867
        %v1534 = vpop.f32.mrf.mxu0
        %v1535 = vadd.f32 0.0, %v1534
        %v1536 = vpop.f32.mrf.mxu0
        %v1537 = vpop.f32.mrf.mxu0
        %v1538 = vadd.f32 0.0, %v1537
        %v1539 = vpop.f32.mrf.mxu0
        %1540 = vmatprep.mubr.bf16.mxu0 0
        %1541 = vmatmul.mubr.bf16.gmra.mxu0 %v1169
        %v1542 = vpop.f32.mrf.mxu0
        %v1543 = vadd.f32 0.0, %v1542
        %v1544 = vpop.f32.mrf.mxu0
        %v1545 = vpop.f32.mrf.mxu0
        %v1546 = vadd.f32 0.0, %v1545
        %v1547 = vpop.f32.mrf.mxu0
        %1548 = vmatprep.mubr.bf16.mxu0 0
        %1549 = vmatmul.mubr.bf16.gmra.mxu0 %v1471
        %v1550 = vpop.f32.mrf.mxu0
        %v1551 = vadd.f32 0.0, %v1550
        %v1552 = vpop.f32.mrf.mxu0
        %v1553 = vpop.f32.mrf.mxu0
        %v1554 = vadd.f32 0.0, %v1553
        %v1555 = vpop.f32.mrf.mxu0
        %1556 = vdwg.mxu0
        %v1557 = vadd.f32 %v1456, %v1511
        %v1558 = vadd.f32 %v1457, %v1514
        %v1559 = vadd.f32 %v1458, %v1519
        %v1560 = vadd.f32 %v1459, %v1522
        %v1561 = vadd.f32 %v1460, %v1527
        %v1562 = vadd.f32 %v1461, %v1530
        %v1563 = vadd.f32 %v1462, %v1535
        %v1564 = vadd.f32 %v1463, %v1538
        %v1565 = vadd.f32 %v1464, %v1543
        %v1566 = vadd.f32 %v1465, %v1546
        %v1567 = vadd.f32 %v1466, %v1551
        %v1568 = vadd.f32 %v1467, %v1554
        %v1569 = vld [vmem:[%s4] sm:$0x1]
        %v1571 = vlaneseq
        %v1572 = vshrl.u32 %v1571, 7
        %v1573 = vsub.s32 0, %v1572
        %v1574 = vrot.slane %v1569, %v1573
        %v1576 = vmul.f32 %v1557, %v1574
        %v1577 = vmul.f32 %v1558, %v1574
        %v1578 = vmul.f32 %v1559, %v1574
        %v1579 = vmul.f32 %v1560, %v1574
        %v1580 = vmul.f32 %v1561, %v1574
        %v1581 = vmul.f32 %v1562, %v1574
        %v1582 = vmul.f32 %v1563, %v1574
        %v1583 = vmul.f32 %v1564, %v1574
        %v1584 = vmul.f32 %v1565, %v1574
        %v1585 = vmul.f32 %v1566, %v1574
        %v1586 = vmul.f32 %v1567, %v1574
        %v1587 = vmul.f32 %v1568, %v1574
        %v1588 = vld [vmem:[%s5] sm:$0x1]
        %v1590 = vlaneseq
        %v1591 = vshrl.u32 %v1590, 7
        %v1592 = vsub.s32 0, %v1591
        %v1593 = vrot.slane %v1588, %v1592
        %v1595 = vadd.f32 %v1576, %v1593
        %v1596 = vadd.f32 %v1577, %v1593
        %v1597 = vadd.f32 %v1578, %v1593
        %v1598 = vadd.f32 %v1579, %v1593
        %v1599 = vadd.f32 %v1580, %v1593
        %v1600 = vadd.f32 %v1581, %v1593
        %v1601 = vadd.f32 %v1582, %v1593
        %v1602 = vadd.f32 %v1583, %v1593
        %v1603 = vadd.f32 %v1584, %v1593
        %v1604 = vadd.f32 %v1585, %v1593
        %v1605 = vadd.f32 %v1586, %v1593
        %v1606 = vadd.f32 %v1587, %v1593
        %v1607 = vxor.u32 %v1595, 2147483648
        %v1608 = vxor.u32 %v1596, 2147483648
        %v1609 = vxor.u32 %v1597, 2147483648
        %v1610 = vxor.u32 %v1598, 2147483648
        %v1611 = vxor.u32 %v1599, 2147483648
        %v1612 = vxor.u32 %v1600, 2147483648
        %v1613 = vxor.u32 %v1601, 2147483648
        %v1614 = vxor.u32 %v1602, 2147483648
        %v1615 = vxor.u32 %v1603, 2147483648
        %v1616 = vxor.u32 %v1604, 2147483648
        %v1617 = vxor.u32 %v1605, 2147483648
        %v1618 = vxor.u32 %v1606, 2147483648
        %v1619 = vmul.f32 %v1607, 1.442695
        %v1620 = vpow.pop %v1619
        %v1621 = vmul.f32 %v1608, 1.442695
        %v1622 = vpow.pop %v1621
        %v1623 = vmul.f32 %v1609, 1.442695
        %v1624 = vpow.pop %v1623
        %v1625 = vmul.f32 %v1610, 1.442695
        %v1626 = vpow.pop %v1625
        %v1627 = vmul.f32 %v1611, 1.442695
        %v1628 = vpow.pop %v1627
        %v1629 = vmul.f32 %v1612, 1.442695
        %v1630 = vpow.pop %v1629
        %v1631 = vmul.f32 %v1613, 1.442695
        %v1632 = vpow.pop %v1631
        %v1633 = vmul.f32 %v1614, 1.442695
        %v1634 = vpow.pop %v1633
        %v1635 = vmul.f32 %v1615, 1.442695
        %v1636 = vpow.pop %v1635
        %v1637 = vmul.f32 %v1616, 1.442695
        %v1638 = vpow.pop %v1637
        %v1639 = vmul.f32 %v1617, 1.442695
        %v1640 = vpow.pop %v1639
        %v1641 = vmul.f32 %v1618, 1.442695
        %v1642 = vpow.pop %v1641
        %v1643 = vadd.f32 %v1620, 1.0
        %v1644 = vadd.f32 %v1622, 1.0
        %v1645 = vadd.f32 %v1624, 1.0
        %v1646 = vadd.f32 %v1626, 1.0
        %v1647 = vadd.f32 %v1628, 1.0
        %v1648 = vadd.f32 %v1630, 1.0
        %v1649 = vadd.f32 %v1632, 1.0
        %v1650 = vadd.f32 %v1634, 1.0
        %v1651 = vadd.f32 %v1636, 1.0
        %v1652 = vadd.f32 %v1638, 1.0
        %v1653 = vadd.f32 %v1640, 1.0
        %v1654 = vadd.f32 %v1642, 1.0
        %v1655 = vrcp.pop %v1643
        %v1656 = vmul.f32 1.0, %v1655
        %v1657 = vrcp.pop %v1644
        %v1658 = vmul.f32 1.0, %v1657
        %v1659 = vrcp.pop %v1645
        %v1660 = vmul.f32 1.0, %v1659
        %v1661 = vrcp.pop %v1646
        %v1662 = vmul.f32 1.0, %v1661
        %v1663 = vrcp.pop %v1647
        %v1664 = vmul.f32 1.0, %v1663
        %v1665 = vrcp.pop %v1648
        %v1666 = vmul.f32 1.0, %v1665
        %v1667 = vrcp.pop %v1649
        %v1668 = vmul.f32 1.0, %v1667
        %v1669 = vrcp.pop %v1650
        %v1670 = vmul.f32 1.0, %v1669
        %v1671 = vrcp.pop %v1651
        %v1672 = vmul.f32 1.0, %v1671
        %v1673 = vrcp.pop %v1652
        %v1674 = vmul.f32 1.0, %v1673
        %v1675 = vrcp.pop %v1653
        %v1676 = vmul.f32 1.0, %v1675
        %v1677 = vrcp.pop %v1654
        %v1678 = vmul.f32 1.0, %v1677
        %v1679 = vmul.f32 %v1595, %v1656
        %v1680 = vmul.f32 %v1596, %v1658
        %v1681 = vmul.f32 %v1597, %v1660
        %v1682 = vmul.f32 %v1598, %v1662
        %v1683 = vmul.f32 %v1599, %v1664
        %v1684 = vmul.f32 %v1600, %v1666
        %v1685 = vmul.f32 %v1601, %v1668
        %v1686 = vmul.f32 %v1602, %v1670
        %v1687 = vmul.f32 %v1603, %v1672
        %v1688 = vmul.f32 %v1604, %v1674
        %v1689 = vmul.f32 %v1605, %v1676
        %v1690 = vmul.f32 %v1606, %v1678
        %v1691 = vpack.c.bf16 %v1680, %v1679
        %v1692 = vpack.c.bf16 %v1682, %v1681
        %v1693 = vpack.c.bf16 %v1684, %v1683
        %v1694 = vpack.c.bf16 %v1686, %v1685
        %v1695 = vpack.c.bf16 %v1688, %v1687
        %v1696 = vpack.c.bf16 %v1690, %v1689
        %v1703 = vunpack.c.l.b16 %v1691
        %v1704 = vunpack.c.h.b16 %v1691
        %v1705 = vunpack.c.l.b16 %v1692
        %v1706 = vunpack.c.h.b16 %v1692
        %v1707 = vunpack.c.l.b16 %v1693
        %v1708 = vunpack.c.h.b16 %v1693
        %v1709 = vunpack.c.l.b16 %v1694
        %v1710 = vunpack.c.h.b16 %v1694
        %v1711 = vunpack.c.l.b16 %v1695
        %v1712 = vunpack.c.h.b16 %v1695
        %v1713 = vunpack.c.l.b16 %v1696
        %v1714 = vunpack.c.h.b16 %v1696
        %v1715 = vpack.c.b16 %v1703, %v1703
        %v1716 = vpack.c.b16 %v1704, %v1704
        %v1717 = vpack.c.b16 %v1705, %v1705
        %v1718 = vpack.c.b16 %v1706, %v1706
        %v1719 = vpack.c.b16 %v1707, %v1707
        %v1720 = vpack.c.b16 %v1708, %v1708
        %v1721 = vpack.c.b16 %v1709, %v1709
        %v1722 = vpack.c.b16 %v1710, %v1710
        %v1723 = vpack.c.b16 %v1711, %v1711
        %v1724 = vpack.c.b16 %v1712, %v1712
        %v1725 = vpack.c.b16 %v1713, %v1713
        %v1726 = vpack.c.b16 %v1714, %v1714
        %1739 = vst [vmem:[#allocation2] sm:$0xf] %v1715
        %1740 = vst [vmem:[#allocation2 + $0x4] sm:$0xf] %v1716
        %1741 = vst [vmem:[#allocation2 + $0x8] sm:$0xf] %v1717
        %1742 = vst [vmem:[#allocation2 + $0xc] sm:$0xf] %v1718
        %1743 = vst [vmem:[#allocation2 + $0x10] sm:$0xf] %v1719
        %1744 = vst [vmem:[#allocation2 + $0x14] sm:$0xf] %v1720
        %1745 = vst [vmem:[#allocation2 + $0x18] sm:$0xf] %v1721
        %1746 = vst [vmem:[#allocation2 + $0x1c] sm:$0xf] %v1722
        %1747 = vst [vmem:[#allocation2 + $0x20] sm:$0xf] %v1723
        %1748 = vst [vmem:[#allocation2 + $0x24] sm:$0xf] %v1724
        %1749 = vst [vmem:[#allocation2 + $0x28] sm:$0xf] %v1725
        %1750 = vst [vmem:[#allocation2 + $0x2c] sm:$0xf] %v1726
        %p1751 = scmp.eq.s32.totalorder %s28, 0
        // Predicated region
        $region57: #{tpu_custom_call.1} parent=55 // pred_check
          %p1752 = pneg %p1751
        $region58: #{tpu_custom_call.1} parent=55 // pred_check_branch
          %1754 = sbr.rel (%p1752) target = $region60
        $region59: #{tpu_custom_call.1} parent=55 // pred_region
          %1755 = vst [vmem:[#allocation2] sm:$0xf] 0
          %1756 = vst [vmem:[#allocation2 + $0x4] sm:$0xf] 0
        $region60: #{tpu_custom_call.1} parent=55 // pred_fallthru
          _
        %p1757 = scmp.eq.s32.totalorder %s28, 3
        // Predicated region
        $region61: #{tpu_custom_call.1} parent=55 // pred_check
          %p1758 = pneg %p1757
        $region62: #{tpu_custom_call.1} parent=55 // pred_check_branch
          %1760 = sbr.rel (%p1758) target = $region64
        $region63: #{tpu_custom_call.1} parent=55 // pred_region
          %s1761 = scalar_lea.vmem [#allocation2], 40
          %1762 = vst [vmem:[%s1761] sm:$0xf] 0
          %1763 = vst [vmem:[%s1761 + $0x4] sm:$0xf] 0
        $region64: #{tpu_custom_call.1} parent=55 // pred_fallthru
          _
        %v1764 = vld [vmem:[#allocation2] sm:$0xf]
        %v1765 = vld [vmem:[#allocation2 + $0x4] sm:$0xf]
        %v1766 = vld [vmem:[#allocation2 + $0x8] sm:$0xf]
        %v1767 = vld [vmem:[#allocation2 + $0xc] sm:$0xf]
        %v1768 = vld [vmem:[#allocation2 + $0x10] sm:$0xf]
        %v1769 = vld [vmem:[#allocation2 + $0x14] sm:$0xf]
        %v1770 = vld [vmem:[#allocation2 + $0x18] sm:$0xf]
        %v1771 = vld [vmem:[#allocation2 + $0x1c] sm:$0xf]
        %v1772 = vld [vmem:[#allocation2 + $0x20] sm:$0xf]
        %v1773 = vld [vmem:[#allocation2 + $0x24] sm:$0xf]
        %v1774 = vld [vmem:[#allocation2 + $0x28] sm:$0xf]
        %v1775 = vld [vmem:[#allocation2 + $0x2c] sm:$0xf]
        %v1788 = vunpack.c.l.b16 %v1764
        %v1789 = vunpack.c.l.b16 %v1765
        %v1790 = vunpack.c.l.b16 %v1766
        %v1791 = vunpack.c.l.b16 %v1767
        %v1792 = vunpack.c.l.b16 %v1768
        %v1793 = vunpack.c.l.b16 %v1769
        %v1794 = vunpack.c.l.b16 %v1770
        %v1795 = vunpack.c.l.b16 %v1771
        %v1796 = vunpack.c.l.b16 %v1772
        %v1797 = vunpack.c.l.b16 %v1773
        %v1798 = vunpack.c.l.b16 %v1774
        %v1799 = vunpack.c.l.b16 %v1775
        %v1800 = vpack.c.b16 %v1789, %v1788
        %v1801 = vpack.c.b16 %v1791, %v1790
        %v1802 = vpack.c.b16 %v1793, %v1792
        %v1803 = vpack.c.b16 %v1795, %v1794
        %v1804 = vpack.c.b16 %v1797, %v1796
        %v1805 = vpack.c.b16 %v1799, %v1798
        %v1807 = vshrl.u32 %v1800, 16
        %v1809 = vrot.slane %v1807, 7
        %v1810 = vshll.u32 %v1800, 16
        %v1812 = vor.u32 %v1809, %v1810
        %v1814 = vshrl.u32 %v1801, 16
        %v1816 = vrot.slane %v1814, 7
        %v1817 = vshll.u32 %v1801, 16
        %v1819 = vor.u32 %v1816, %v1817
        %v1821 = vshrl.u32 %v1802, 16
        %v1823 = vrot.slane %v1821, 7
        %v1824 = vshll.u32 %v1802, 16
        %v1826 = vor.u32 %v1823, %v1824
        %v1828 = vshrl.u32 %v1803, 16
        %v1830 = vrot.slane %v1828, 7
        %v1831 = vshll.u32 %v1803, 16
        %v1833 = vor.u32 %v1830, %v1831
        %v1835 = vshrl.u32 %v1804, 16
        %v1837 = vrot.slane %v1835, 7
        %v1838 = vshll.u32 %v1804, 16
        %v1840 = vor.u32 %v1837, %v1838
        %v1842 = vshrl.u32 %v1805, 16
        %v1844 = vrot.slane %v1842, 7
        %v1845 = vshll.u32 %v1805, 16
        %v1847 = vor.u32 %v1844, %v1845
        %v1854 = vsel %vm602, 0, %v1812
        %v1855 = vsel %vm602, 0, %v1819
        %v1856 = vsel %vm602, 0, %v1826
        %v1857 = vsel %vm602, 0, %v1833
        %v1858 = vsel %vm602, 0, %v1840
        %v1859 = vsel %vm602, 0, %v1847
        %v1860 = vrot.slane %v1810, 1
        %v1861 = vor.u32 %v1807, %v1860
        %v1862 = vrot.slane %v1817, 1
        %v1863 = vor.u32 %v1814, %v1862
        %v1864 = vrot.slane %v1824, 1
        %v1865 = vor.u32 %v1821, %v1864
        %v1866 = vrot.slane %v1831, 1
        %v1867 = vor.u32 %v1828, %v1866
        %v1868 = vrot.slane %v1838, 1
        %v1869 = vor.u32 %v1835, %v1868
        %v1870 = vrot.slane %v1845, 1
        %v1871 = vor.u32 %v1842, %v1870
        %v1878 = vsel %vm637, %v1861, 0
        %v1879 = vsel %vm637, %v1863, 0
        %v1880 = vsel %vm637, %v1865, 0
        %v1881 = vsel %vm637, %v1867, 0
        %v1882 = vsel %vm637, %v1869, 0
        %v1883 = vsel %vm637, %v1871, 0
        %v1884 = vld [vmem:[%s6] sm:$0xf]
        %v1885 = vld [vmem:[%s6 + $0x4] sm:$0xf]
        %v1886 = vld [vmem:[%s6 + $0x8] sm:$0xf]
        %v1887 = vld [vmem:[%s6 + $0xc] sm:$0xf]
        %v1888 = vld [vmem:[%s6 + $0x10] sm:$0xf]
        %v1889 = vld [vmem:[%s6 + $0x14] sm:$0xf]
        %v1890 = vld [vmem:[%s6 + $0x18] sm:$0xf]
        %v1891 = vld [vmem:[%s6 + $0x1c] sm:$0xf]
        %v1892 = vld [vmem:[%s6 + $0x20] sm:$0xf]
        %v1893 = vld [vmem:[%s6 + $0x24] sm:$0xf]
        %v1894 = vld [vmem:[%s6 + $0x28] sm:$0xf]
        %v1895 = vld [vmem:[%s6 + $0x2c] sm:$0xf]
        %v1896 = vld [vmem:[%s6 + $0x30] sm:$0xf]
        %v1897 = vld [vmem:[%s6 + $0x34] sm:$0xf]
        %v1898 = vld [vmem:[%s6 + $0x38] sm:$0xf]
        %v1899 = vld [vmem:[%s6 + $0x3c] sm:$0xf]
        %s1900 = scalar_lea.vmem %s6, 64
        %v1901 = vld [vmem:[%s1900] sm:$0xf]
        %v1902 = vld [vmem:[%s1900 + $0x4] sm:$0xf]
        %v1903 = vld [vmem:[%s1900 + $0x8] sm:$0xf]
        %v1904 = vld [vmem:[%s1900 + $0xc] sm:$0xf]
        %v1905 = vld [vmem:[%s1900 + $0x10] sm:$0xf]
        %v1906 = vld [vmem:[%s1900 + $0x14] sm:$0xf]
        %v1907 = vld [vmem:[%s1900 + $0x18] sm:$0xf]
        %v1908 = vld [vmem:[%s1900 + $0x1c] sm:$0xf]
        %v1909 = vld [vmem:[%s1900 + $0x20] sm:$0xf]
        %v1910 = vld [vmem:[%s1900 + $0x24] sm:$0xf]
        %v1911 = vld [vmem:[%s1900 + $0x28] sm:$0xf]
        %v1912 = vld [vmem:[%s1900 + $0x2c] sm:$0xf]
        %v1913 = vld [vmem:[%s1900 + $0x30] sm:$0xf]
        %v1914 = vld [vmem:[%s1900 + $0x34] sm:$0xf]
        %v1915 = vld [vmem:[%s1900 + $0x38] sm:$0xf]
        %v1916 = vld [vmem:[%s1900 + $0x3c] sm:$0xf]
        %v1937 = vunpack.c.l.b16 %v1901
        %v1938 = vunpack.c.l.b16 %v1902
        %v1939 = vunpack.c.l.b16 %v1903
        %v1940 = vunpack.c.l.b16 %v1904
        %v1941 = vunpack.c.l.b16 %v1905
        %v1942 = vunpack.c.l.b16 %v1906
        %v1943 = vunpack.c.l.b16 %v1907
        %v1944 = vunpack.c.l.b16 %v1908
        %v1945 = vunpack.c.l.b16 %v1909
        %v1946 = vunpack.c.l.b16 %v1910
        %v1947 = vunpack.c.l.b16 %v1911
        %v1948 = vunpack.c.l.b16 %v1912
        %v1949 = vunpack.c.l.b16 %v1913
        %v1950 = vunpack.c.l.b16 %v1914
        %v1951 = vunpack.c.l.b16 %v1915
        %v1952 = vunpack.c.l.b16 %v1916
        %v1953 = vpack.c.b16 %v1938, %v1937
        %v1954 = vpack.c.b16 %v1940, %v1939
        %v1955 = vpack.c.b16 %v1942, %v1941
        %v1956 = vpack.c.b16 %v1944, %v1943
        %v1957 = vpack.c.b16 %v1946, %v1945
        %v1958 = vpack.c.b16 %v1948, %v1947
        %v1959 = vpack.c.b16 %v1950, %v1949
        %v1960 = vpack.c.b16 %v1952, %v1951
        %1969 = vmatprep.subr.bf16.mxu0 0
        %1970 = vmatpush1.bf16.msra.mxu0 %v1960
        %1971 = vmatprep.subr.bf16.mxu0 0
        %1972 = vmatpush1.bf16.msra.mxu0 %v1959
        %1973 = vmatprep.subr.bf16.mxu0 0
        %1974 = vmatpush1.bf16.msra.mxu0 %v1958
        %1975 = vmatprep.subr.bf16.mxu0 0
        %1976 = vmatpush1.bf16.msra.mxu0 %v1957
        %1977 = vmatprep.subr.bf16.mxu0 0
        %1978 = vmatpush1.bf16.msra.mxu0 %v1956
        %1979 = vmatprep.subr.bf16.mxu0 0
        %1980 = vmatpush1.bf16.msra.mxu0 %v1955
        %1981 = vmatprep.subr.bf16.mxu0 0
        %1982 = vmatpush1.bf16.msra.mxu0 %v1954
        %1983 = vmatprep.subr.bf16.mxu0 0
        %1984 = vmatpush1.bf16.msra.mxu0 %v1953
        %1985 = vmatprep.subr.bf16.mxu0 0
        %1986 = vmatpush2.bf16.msra.mxu0 0
        %1987 = vmatprep.subr.bf16.mxu0 0
        %1988 = vmatpush2.bf16.msra.mxu0 0
        %1989 = vmatprep.subr.bf16.mxu0 0
        %1990 = vmatpush2.bf16.msra.mxu0 0
        %1991 = vmatprep.subr.bf16.mxu0 0
        %1992 = vmatpush2.bf16.msra.mxu0 0
        %1993 = vmatprep.subr.bf16.mxu0 0
        %1994 = vmatpush2.bf16.msra.mxu0 0
        %1995 = vmatprep.subr.bf16.mxu0 0
        %1996 = vmatpush2.bf16.msra.mxu0 0
        %1997 = vmatprep.subr.bf16.mxu0 0
        %1998 = vmatpush2.bf16.msra.mxu0 0
        %1999 = vmatprep.subr.bf16.mxu0 0
        %2000 = vmatpush2.bf16.msra.mxu0 0
        %2001 = vmatprep.mubr.bf16.mxu0 0
        %2002 = vmatmul.mubr.bf16.gmra.mxu0 %v1800
        %v2003 = vpop.f32.mrf.mxu0
        %v2004 = vadd.f32 0.0, %v2003
        %v2005 = vpop.f32.mrf.mxu0
        %v2006 = vpop.f32.mrf.mxu0
        %v2007 = vadd.f32 0.0, %v2006
        %v2008 = vpop.f32.mrf.mxu0
        %2009 = vmatprep.mubr.bf16.mxu0 0
        %2010 = vmatmul.mubr.bf16.gmra.mxu0 %v1801
        %v2011 = vpop.f32.mrf.mxu0
        %v2012 = vadd.f32 0.0, %v2011
        %v2013 = vpop.f32.mrf.mxu0
        %v2014 = vpop.f32.mrf.mxu0
        %v2015 = vadd.f32 0.0, %v2014
        %v2016 = vpop.f32.mrf.mxu0
        %2017 = vmatprep.mubr.bf16.mxu0 0
        %2018 = vmatmul.mubr.bf16.gmra.mxu0 %v1802
        %v2019 = vpop.f32.mrf.mxu0
        %v2020 = vadd.f32 0.0, %v2019
        %v2021 = vpop.f32.mrf.mxu0
        %v2022 = vpop.f32.mrf.mxu0
        %v2023 = vadd.f32 0.0, %v2022
        %v2024 = vpop.f32.mrf.mxu0
        %2025 = vmatprep.mubr.bf16.mxu0 0
        %2026 = vmatmul.mubr.bf16.gmra.mxu0 %v1803
        %v2027 = vpop.f32.mrf.mxu0
        %v2028 = vadd.f32 0.0, %v2027
        %v2029 = vpop.f32.mrf.mxu0
        %v2030 = vpop.f32.mrf.mxu0
        %v2031 = vadd.f32 0.0, %v2030
        %v2032 = vpop.f32.mrf.mxu0
        %2033 = vdwg.mxu0
        %v2050 = vunpack.c.l.b16 %v1884
        %v2051 = vunpack.c.l.b16 %v1885
        %v2052 = vunpack.c.l.b16 %v1886
        %v2053 = vunpack.c.l.b16 %v1887
        %v2054 = vunpack.c.l.b16 %v1888
        %v2055 = vunpack.c.l.b16 %v1889
        %v2056 = vunpack.c.l.b16 %v1890
        %v2057 = vunpack.c.l.b16 %v1891
        %v2058 = vunpack.c.l.b16 %v1892
        %v2059 = vunpack.c.l.b16 %v1893
        %v2060 = vunpack.c.l.b16 %v1894
        %v2061 = vunpack.c.l.b16 %v1895
        %v2062 = vunpack.c.l.b16 %v1896
        %v2063 = vunpack.c.l.b16 %v1897
        %v2064 = vunpack.c.l.b16 %v1898
        %v2065 = vunpack.c.l.b16 %v1899
        %v2066 = vpack.c.b16 %v2051, %v2050
        %v2067 = vpack.c.b16 %v2053, %v2052
        %v2068 = vpack.c.b16 %v2055, %v2054
        %v2069 = vpack.c.b16 %v2057, %v2056
        %v2070 = vpack.c.b16 %v2059, %v2058
        %v2071 = vpack.c.b16 %v2061, %v2060
        %v2072 = vpack.c.b16 %v2063, %v2062
        %v2073 = vpack.c.b16 %v2065, %v2064
        %2082 = vmatprep.subr.bf16.mxu0 0
        %2083 = vmatpush1.bf16.msra.mxu0 %v2073
        %2084 = vmatprep.subr.bf16.mxu0 0
        %2085 = vmatpush1.bf16.msra.mxu0 %v2072
        %2086 = vmatprep.subr.bf16.mxu0 0
        %2087 = vmatpush1.bf16.msra.mxu0 %v2071
        %2088 = vmatprep.subr.bf16.mxu0 0
        %2089 = vmatpush1.bf16.msra.mxu0 %v2070
        %2090 = vmatprep.subr.bf16.mxu0 0
        %2091 = vmatpush1.bf16.msra.mxu0 %v2069
        %2092 = vmatprep.subr.bf16.mxu0 0
        %2093 = vmatpush1.bf16.msra.mxu0 %v2068
        %2094 = vmatprep.subr.bf16.mxu0 0
        %2095 = vmatpush1.bf16.msra.mxu0 %v2067
        %2096 = vmatprep.subr.bf16.mxu0 0
        %2097 = vmatpush1.bf16.msra.mxu0 %v2066
        %2098 = vmatprep.subr.bf16.mxu0 0
        %2099 = vmatpush2.bf16.msra.mxu0 0
        %2100 = vmatprep.subr.bf16.mxu0 0
        %2101 = vmatpush2.bf16.msra.mxu0 0
        %2102 = vmatprep.subr.bf16.mxu0 0
        %2103 = vmatpush2.bf16.msra.mxu0 0
        %2104 = vmatprep.subr.bf16.mxu0 0
        %2105 = vmatpush2.bf16.msra.mxu0 0
        %2106 = vmatprep.subr.bf16.mxu0 0
        %2107 = vmatpush2.bf16.msra.mxu0 0
        %2108 = vmatprep.subr.bf16.mxu0 0
        %2109 = vmatpush2.bf16.msra.mxu0 0
        %2110 = vmatprep.subr.bf16.mxu0 0
        %2111 = vmatpush2.bf16.msra.mxu0 0
        %2112 = vmatprep.subr.bf16.mxu0 0
        %2113 = vmatpush2.bf16.msra.mxu0 0
        %2114 = vmatprep.mubr.bf16.mxu0 0
        %2115 = vmatmul.mubr.bf16.gmra.mxu0 %v1854
        %v2116 = vpop.f32.mrf.mxu0
        %v2117 = vadd.f32 %v2004, %v2116
        %v2118 = vpop.f32.mrf.mxu0
        %v2119 = vpop.f32.mrf.mxu0
        %v2120 = vadd.f32 %v2007, %v2119
        %v2121 = vpop.f32.mrf.mxu0
        %2122 = vmatprep.mubr.bf16.mxu0 0
        %2123 = vmatmul.mubr.bf16.gmra.mxu0 %v1855
        %v2124 = vpop.f32.mrf.mxu0
        %v2125 = vadd.f32 %v2012, %v2124
        %v2126 = vpop.f32.mrf.mxu0
        %v2127 = vpop.f32.mrf.mxu0
        %v2128 = vadd.f32 %v2015, %v2127
        %v2129 = vpop.f32.mrf.mxu0
        %2130 = vmatprep.mubr.bf16.mxu0 0
        %2131 = vmatmul.mubr.bf16.gmra.mxu0 %v1856
        %v2132 = vpop.f32.mrf.mxu0
        %v2133 = vadd.f32 %v2020, %v2132
        %v2134 = vpop.f32.mrf.mxu0
        %v2135 = vpop.f32.mrf.mxu0
        %v2136 = vadd.f32 %v2023, %v2135
        %v2137 = vpop.f32.mrf.mxu0
        %2138 = vmatprep.mubr.bf16.mxu0 0
        %2139 = vmatmul.mubr.bf16.gmra.mxu0 %v1857
        %v2140 = vpop.f32.mrf.mxu0
        %v2141 = vadd.f32 %v2028, %v2140
        %v2142 = vpop.f32.mrf.mxu0
        %v2143 = vpop.f32.mrf.mxu0
        %v2144 = vadd.f32 %v2031, %v2143
        %v2145 = vpop.f32.mrf.mxu0
        %2146 = vdwg.mxu0
        %s2147 = scalar_lea.vmem %s6, 128
        %v2148 = vld [vmem:[%s2147] sm:$0xf]
        %v2149 = vld [vmem:[%s2147 + $0x4] sm:$0xf]
        %v2150 = vld [vmem:[%s2147 + $0x8] sm:$0xf]
        %v2151 = vld [vmem:[%s2147 + $0xc] sm:$0xf]
        %v2152 = vld [vmem:[%s2147 + $0x10] sm:$0xf]
        %v2153 = vld [vmem:[%s2147 + $0x14] sm:$0xf]
        %v2154 = vld [vmem:[%s2147 + $0x18] sm:$0xf]
        %v2155 = vld [vmem:[%s2147 + $0x1c] sm:$0xf]
        %v2156 = vld [vmem:[%s2147 + $0x20] sm:$0xf]
        %v2157 = vld [vmem:[%s2147 + $0x24] sm:$0xf]
        %v2158 = vld [vmem:[%s2147 + $0x28] sm:$0xf]
        %v2159 = vld [vmem:[%s2147 + $0x2c] sm:$0xf]
        %v2160 = vld [vmem:[%s2147 + $0x30] sm:$0xf]
        %v2161 = vld [vmem:[%s2147 + $0x34] sm:$0xf]
        %v2162 = vld [vmem:[%s2147 + $0x38] sm:$0xf]
        %v2163 = vld [vmem:[%s2147 + $0x3c] sm:$0xf]
        %v2180 = vunpack.c.l.b16 %v2148
        %v2181 = vunpack.c.l.b16 %v2149
        %v2182 = vunpack.c.l.b16 %v2150
        %v2183 = vunpack.c.l.b16 %v2151
        %v2184 = vunpack.c.l.b16 %v2152
        %v2185 = vunpack.c.l.b16 %v2153
        %v2186 = vunpack.c.l.b16 %v2154
        %v2187 = vunpack.c.l.b16 %v2155
        %v2188 = vunpack.c.l.b16 %v2156
        %v2189 = vunpack.c.l.b16 %v2157
        %v2190 = vunpack.c.l.b16 %v2158
        %v2191 = vunpack.c.l.b16 %v2159
        %v2192 = vunpack.c.l.b16 %v2160
        %v2193 = vunpack.c.l.b16 %v2161
        %v2194 = vunpack.c.l.b16 %v2162
        %v2195 = vunpack.c.l.b16 %v2163
        %v2196 = vpack.c.b16 %v2181, %v2180
        %v2197 = vpack.c.b16 %v2183, %v2182
        %v2198 = vpack.c.b16 %v2185, %v2184
        %v2199 = vpack.c.b16 %v2187, %v2186
        %v2200 = vpack.c.b16 %v2189, %v2188
        %v2201 = vpack.c.b16 %v2191, %v2190
        %v2202 = vpack.c.b16 %v2193, %v2192
        %v2203 = vpack.c.b16 %v2195, %v2194
        %2212 = vmatprep.subr.bf16.mxu0 0
        %2213 = vmatpush1.bf16.msra.mxu0 %v2203
        %2214 = vmatprep.subr.bf16.mxu0 0
        %2215 = vmatpush1.bf16.msra.mxu0 %v2202
        %2216 = vmatprep.subr.bf16.mxu0 0
        %2217 = vmatpush1.bf16.msra.mxu0 %v2201
        %2218 = vmatprep.subr.bf16.mxu0 0
        %2219 = vmatpush1.bf16.msra.mxu0 %v2200
        %2220 = vmatprep.subr.bf16.mxu0 0
        %2221 = vmatpush1.bf16.msra.mxu0 %v2199
        %2222 = vmatprep.subr.bf16.mxu0 0
        %2223 = vmatpush1.bf16.msra.mxu0 %v2198
        %2224 = vmatprep.subr.bf16.mxu0 0
        %2225 = vmatpush1.bf16.msra.mxu0 %v2197
        %2226 = vmatprep.subr.bf16.mxu0 0
        %2227 = vmatpush1.bf16.msra.mxu0 %v2196
        %2228 = vmatprep.subr.bf16.mxu0 0
        %2229 = vmatpush2.bf16.msra.mxu0 0
        %2230 = vmatprep.subr.bf16.mxu0 0
        %2231 = vmatpush2.bf16.msra.mxu0 0
        %2232 = vmatprep.subr.bf16.mxu0 0
        %2233 = vmatpush2.bf16.msra.mxu0 0
        %2234 = vmatprep.subr.bf16.mxu0 0
        %2235 = vmatpush2.bf16.msra.mxu0 0
        %2236 = vmatprep.subr.bf16.mxu0 0
        %2237 = vmatpush2.bf16.msra.mxu0 0
        %2238 = vmatprep.subr.bf16.mxu0 0
        %2239 = vmatpush2.bf16.msra.mxu0 0
        %2240 = vmatprep.subr.bf16.mxu0 0
        %2241 = vmatpush2.bf16.msra.mxu0 0
        %2242 = vmatprep.subr.bf16.mxu0 0
        %2243 = vmatpush2.bf16.msra.mxu0 0
        %2244 = vmatprep.mubr.bf16.mxu0 0
        %2245 = vmatmul.mubr.bf16.gmra.mxu0 %v1878
        %v2246 = vpop.f32.mrf.mxu0
        %v2247 = vadd.f32 0.0, %v2246
        %v2248 = vpop.f32.mrf.mxu0
        %v2249 = vpop.f32.mrf.mxu0
        %v2250 = vadd.f32 0.0, %v2249
        %v2251 = vpop.f32.mrf.mxu0
        %2252 = vmatprep.mubr.bf16.mxu0 0
        %2253 = vmatmul.mubr.bf16.gmra.mxu0 %v1879
        %v2254 = vpop.f32.mrf.mxu0
        %v2255 = vadd.f32 0.0, %v2254
        %v2256 = vpop.f32.mrf.mxu0
        %v2257 = vpop.f32.mrf.mxu0
        %v2258 = vadd.f32 0.0, %v2257
        %v2259 = vpop.f32.mrf.mxu0
        %2260 = vmatprep.mubr.bf16.mxu0 0
        %2261 = vmatmul.mubr.bf16.gmra.mxu0 %v1880
        %v2262 = vpop.f32.mrf.mxu0
        %v2263 = vadd.f32 0.0, %v2262
        %v2264 = vpop.f32.mrf.mxu0
        %v2265 = vpop.f32.mrf.mxu0
        %v2266 = vadd.f32 0.0, %v2265
        %v2267 = vpop.f32.mrf.mxu0
        %2268 = vmatprep.mubr.bf16.mxu0 0
        %2269 = vmatmul.mubr.bf16.gmra.mxu0 %v1881
        %v2270 = vpop.f32.mrf.mxu0
        %v2271 = vadd.f32 0.0, %v2270
        %v2272 = vpop.f32.mrf.mxu0
        %v2273 = vpop.f32.mrf.mxu0
        %v2274 = vadd.f32 0.0, %v2273
        %v2275 = vpop.f32.mrf.mxu0
        %2276 = vdwg.mxu0
        %v2277 = vadd.f32 %v2117, %v2247
        %v2278 = vadd.f32 %v2120, %v2250
        %v2279 = vadd.f32 %v2125, %v2255
        %v2280 = vadd.f32 %v2128, %v2258
        %v2281 = vadd.f32 %v2133, %v2263
        %v2282 = vadd.f32 %v2136, %v2266
        %v2283 = vadd.f32 %v2141, %v2271
        %v2284 = vadd.f32 %v2144, %v2274
        %s2285 = scalar_lea.vmem %s6, 192
        %v2286 = vld [vmem:[%s2285] sm:$0xf]
        %v2287 = vld [vmem:[%s2285 + $0x4] sm:$0xf]
        %v2288 = vld [vmem:[%s2285 + $0x8] sm:$0xf]
        %v2289 = vld [vmem:[%s2285 + $0xc] sm:$0xf]
        %v2290 = vld [vmem:[%s2285 + $0x10] sm:$0xf]
        %v2291 = vld [vmem:[%s2285 + $0x14] sm:$0xf]
        %v2292 = vld [vmem:[%s2285 + $0x18] sm:$0xf]
        %v2293 = vld [vmem:[%s2285 + $0x1c] sm:$0xf]
        %v2294 = vld [vmem:[%s2285 + $0x20] sm:$0xf]
        %v2295 = vld [vmem:[%s2285 + $0x24] sm:$0xf]
        %v2296 = vld [vmem:[%s2285 + $0x28] sm:$0xf]
        %v2297 = vld [vmem:[%s2285 + $0x2c] sm:$0xf]
        %v2298 = vld [vmem:[%s2285 + $0x30] sm:$0xf]
        %v2299 = vld [vmem:[%s2285 + $0x34] sm:$0xf]
        %v2300 = vld [vmem:[%s2285 + $0x38] sm:$0xf]
        %v2301 = vld [vmem:[%s2285 + $0x3c] sm:$0xf]
        %v2318 = vunpack.c.l.b16 %v2286
        %v2319 = vunpack.c.l.b16 %v2287
        %v2320 = vunpack.c.l.b16 %v2288
        %v2321 = vunpack.c.l.b16 %v2289
        %v2322 = vunpack.c.l.b16 %v2290
        %v2323 = vunpack.c.l.b16 %v2291
        %v2324 = vunpack.c.l.b16 %v2292
        %v2325 = vunpack.c.l.b16 %v2293
        %v2326 = vunpack.c.l.b16 %v2294
        %v2327 = vunpack.c.l.b16 %v2295
        %v2328 = vunpack.c.l.b16 %v2296
        %v2329 = vunpack.c.l.b16 %v2297
        %v2330 = vunpack.c.l.b16 %v2298
        %v2331 = vunpack.c.l.b16 %v2299
        %v2332 = vunpack.c.l.b16 %v2300
        %v2333 = vunpack.c.l.b16 %v2301
        %v2334 = vpack.c.b16 %v2319, %v2318
        %v2335 = vpack.c.b16 %v2321, %v2320
        %v2336 = vpack.c.b16 %v2323, %v2322
        %v2337 = vpack.c.b16 %v2325, %v2324
        %v2338 = vpack.c.b16 %v2327, %v2326
        %v2339 = vpack.c.b16 %v2329, %v2328
        %v2340 = vpack.c.b16 %v2331, %v2330
        %v2341 = vpack.c.b16 %v2333, %v2332
        %2350 = vmatprep.subr.bf16.mxu0 0
        %2351 = vmatpush1.bf16.msra.mxu0 %v2341
        %2352 = vmatprep.subr.bf16.mxu0 0
        %2353 = vmatpush1.bf16.msra.mxu0 %v2340
        %2354 = vmatprep.subr.bf16.mxu0 0
        %2355 = vmatpush1.bf16.msra.mxu0 %v2339
        %2356 = vmatprep.subr.bf16.mxu0 0
        %2357 = vmatpush1.bf16.msra.mxu0 %v2338
        %2358 = vmatprep.subr.bf16.mxu0 0
        %2359 = vmatpush1.bf16.msra.mxu0 %v2337
        %2360 = vmatprep.subr.bf16.mxu0 0
        %2361 = vmatpush1.bf16.msra.mxu0 %v2336
        %2362 = vmatprep.subr.bf16.mxu0 0
        %2363 = vmatpush1.bf16.msra.mxu0 %v2335
        %2364 = vmatprep.subr.bf16.mxu0 0
        %2365 = vmatpush1.bf16.msra.mxu0 %v2334
        %2366 = vmatprep.subr.bf16.mxu0 0
        %2367 = vmatpush2.bf16.msra.mxu0 0
        %2368 = vmatprep.subr.bf16.mxu0 0
        %2369 = vmatpush2.bf16.msra.mxu0 0
        %2370 = vmatprep.subr.bf16.mxu0 0
        %2371 = vmatpush2.bf16.msra.mxu0 0
        %2372 = vmatprep.subr.bf16.mxu0 0
        %2373 = vmatpush2.bf16.msra.mxu0 0
        %2374 = vmatprep.subr.bf16.mxu0 0
        %2375 = vmatpush2.bf16.msra.mxu0 0
        %2376 = vmatprep.subr.bf16.mxu0 0
        %2377 = vmatpush2.bf16.msra.mxu0 0
        %2378 = vmatprep.subr.bf16.mxu0 0
        %2379 = vmatpush2.bf16.msra.mxu0 0
        %2380 = vmatprep.subr.bf16.mxu0 0
        %2381 = vmatpush2.bf16.msra.mxu0 0
        %2382 = vmatprep.mubr.bf16.mxu0 0
        %2383 = vmatmul.mubr.bf16.gmra.mxu0 %v1855
        %v2384 = vpop.f32.mrf.mxu0
        %v2385 = vadd.f32 0.0, %v2384
        %v2386 = vpop.f32.mrf.mxu0
        %v2387 = vpop.f32.mrf.mxu0
        %v2388 = vadd.f32 0.0, %v2387
        %v2389 = vpop.f32.mrf.mxu0
        %2390 = vmatprep.mubr.bf16.mxu0 0
        %2391 = vmatmul.mubr.bf16.gmra.mxu0 %v1856
        %v2392 = vpop.f32.mrf.mxu0
        %v2393 = vadd.f32 0.0, %v2392
        %v2394 = vpop.f32.mrf.mxu0
        %v2395 = vpop.f32.mrf.mxu0
        %v2396 = vadd.f32 0.0, %v2395
        %v2397 = vpop.f32.mrf.mxu0
        %2398 = vmatprep.mubr.bf16.mxu0 0
        %2399 = vmatmul.mubr.bf16.gmra.mxu0 %v1857
        %v2400 = vpop.f32.mrf.mxu0
        %v2401 = vadd.f32 0.0, %v2400
        %v2402 = vpop.f32.mrf.mxu0
        %v2403 = vpop.f32.mrf.mxu0
        %v2404 = vadd.f32 0.0, %v2403
        %v2405 = vpop.f32.mrf.mxu0
        %2406 = vmatprep.mubr.bf16.mxu0 0
        %2407 = vmatmul.mubr.bf16.gmra.mxu0 %v1858
        %v2408 = vpop.f32.mrf.mxu0
        %v2409 = vadd.f32 0.0, %v2408
        %v2410 = vpop.f32.mrf.mxu0
        %v2411 = vpop.f32.mrf.mxu0
        %v2412 = vadd.f32 0.0, %v2411
        %v2413 = vpop.f32.mrf.mxu0
        %2414 = vdwg.mxu0
        %v2415 = vadd.f32 %v2277, %v2385
        %v2416 = vadd.f32 %v2278, %v2388
        %v2417 = vadd.f32 %v2279, %v2393
        %v2418 = vadd.f32 %v2280, %v2396
        %v2419 = vadd.f32 %v2281, %v2401
        %v2420 = vadd.f32 %v2282, %v2404
        %v2421 = vadd.f32 %v2283, %v2409
        %v2422 = vadd.f32 %v2284, %v2412
        %s2423 = scalar_lea.vmem %s6, 256
        %v2424 = vld [vmem:[%s2423] sm:$0xf]
        %v2425 = vld [vmem:[%s2423 + $0x4] sm:$0xf]
        %v2426 = vld [vmem:[%s2423 + $0x8] sm:$0xf]
        %v2427 = vld [vmem:[%s2423 + $0xc] sm:$0xf]
        %v2428 = vld [vmem:[%s2423 + $0x10] sm:$0xf]
        %v2429 = vld [vmem:[%s2423 + $0x14] sm:$0xf]
        %v2430 = vld [vmem:[%s2423 + $0x18] sm:$0xf]
        %v2431 = vld [vmem:[%s2423 + $0x1c] sm:$0xf]
        %v2432 = vld [vmem:[%s2423 + $0x20] sm:$0xf]
        %v2433 = vld [vmem:[%s2423 + $0x24] sm:$0xf]
        %v2434 = vld [vmem:[%s2423 + $0x28] sm:$0xf]
        %v2435 = vld [vmem:[%s2423 + $0x2c] sm:$0xf]
        %v2436 = vld [vmem:[%s2423 + $0x30] sm:$0xf]
        %v2437 = vld [vmem:[%s2423 + $0x34] sm:$0xf]
        %v2438 = vld [vmem:[%s2423 + $0x38] sm:$0xf]
        %v2439 = vld [vmem:[%s2423 + $0x3c] sm:$0xf]
        %v2457 = vunpack.c.l.b16 %v2424
        %v2458 = vunpack.c.l.b16 %v2425
        %v2459 = vunpack.c.l.b16 %v2426
        %v2460 = vunpack.c.l.b16 %v2427
        %v2461 = vunpack.c.l.b16 %v2428
        %v2462 = vunpack.c.l.b16 %v2429
        %v2463 = vunpack.c.l.b16 %v2430
        %v2464 = vunpack.c.l.b16 %v2431
        %v2465 = vunpack.c.l.b16 %v2432
        %v2466 = vunpack.c.l.b16 %v2433
        %v2467 = vunpack.c.l.b16 %v2434
        %v2468 = vunpack.c.l.b16 %v2435
        %v2469 = vunpack.c.l.b16 %v2436
        %v2470 = vunpack.c.l.b16 %v2437
        %v2471 = vunpack.c.l.b16 %v2438
        %v2472 = vunpack.c.l.b16 %v2439
        %v2473 = vpack.c.b16 %v2458, %v2457
        %v2474 = vpack.c.b16 %v2460, %v2459
        %v2475 = vpack.c.b16 %v2462, %v2461
        %v2476 = vpack.c.b16 %v2464, %v2463
        %v2477 = vpack.c.b16 %v2466, %v2465
        %v2478 = vpack.c.b16 %v2468, %v2467
        %v2479 = vpack.c.b16 %v2470, %v2469
        %v2480 = vpack.c.b16 %v2472, %v2471
        %2489 = vmatprep.subr.bf16.mxu0 0
        %2490 = vmatpush1.bf16.msra.mxu0 %v2480
        %2491 = vmatprep.subr.bf16.mxu0 0
        %2492 = vmatpush1.bf16.msra.mxu0 %v2479
        %2493 = vmatprep.subr.bf16.mxu0 0
        %2494 = vmatpush1.bf16.msra.mxu0 %v2478
        %2495 = vmatprep.subr.bf16.mxu0 0
        %2496 = vmatpush1.bf16.msra.mxu0 %v2477
        %2497 = vmatprep.subr.bf16.mxu0 0
        %2498 = vmatpush1.bf16.msra.mxu0 %v2476
        %2499 = vmatprep.subr.bf16.mxu0 0
        %2500 = vmatpush1.bf16.msra.mxu0 %v2475
        %2501 = vmatprep.subr.bf16.mxu0 0
        %2502 = vmatpush1.bf16.msra.mxu0 %v2474
        %2503 = vmatprep.subr.bf16.mxu0 0
        %2504 = vmatpush1.bf16.msra.mxu0 %v2473
        %2505 = vmatprep.subr.bf16.mxu0 0
        %2506 = vmatpush2.bf16.msra.mxu0 0
        %2507 = vmatprep.subr.bf16.mxu0 0
        %2508 = vmatpush2.bf16.msra.mxu0 0
        %2509 = vmatprep.subr.bf16.mxu0 0
        %2510 = vmatpush2.bf16.msra.mxu0 0
        %2511 = vmatprep.subr.bf16.mxu0 0
        %2512 = vmatpush2.bf16.msra.mxu0 0
        %2513 = vmatprep.subr.bf16.mxu0 0
        %2514 = vmatpush2.bf16.msra.mxu0 0
        %2515 = vmatprep.subr.bf16.mxu0 0
        %2516 = vmatpush2.bf16.msra.mxu0 0
        %2517 = vmatprep.subr.bf16.mxu0 0
        %2518 = vmatpush2.bf16.msra.mxu0 0
        %2519 = vmatprep.subr.bf16.mxu0 0
        %2520 = vmatpush2.bf16.msra.mxu0 0
        %2521 = vmatprep.mubr.bf16.mxu0 0
        %2522 = vmatmul.mubr.bf16.gmra.mxu0 %v1801
        %v2523 = vpop.f32.mrf.mxu0
        %v2524 = vadd.f32 0.0, %v2523
        %v2525 = vpop.f32.mrf.mxu0
        %v2526 = vpop.f32.mrf.mxu0
        %v2527 = vadd.f32 0.0, %v2526
        %v2528 = vpop.f32.mrf.mxu0
        %2529 = vmatprep.mubr.bf16.mxu0 0
        %2530 = vmatmul.mubr.bf16.gmra.mxu0 %v1802
        %v2531 = vpop.f32.mrf.mxu0
        %v2532 = vadd.f32 0.0, %v2531
        %v2533 = vpop.f32.mrf.mxu0
        %v2534 = vpop.f32.mrf.mxu0
        %v2535 = vadd.f32 0.0, %v2534
        %v2536 = vpop.f32.mrf.mxu0
        %2537 = vmatprep.mubr.bf16.mxu0 0
        %2538 = vmatmul.mubr.bf16.gmra.mxu0 %v1803
        %v2539 = vpop.f32.mrf.mxu0
        %v2540 = vadd.f32 0.0, %v2539
        %v2541 = vpop.f32.mrf.mxu0
        %v2542 = vpop.f32.mrf.mxu0
        %v2543 = vadd.f32 0.0, %v2542
        %v2544 = vpop.f32.mrf.mxu0
        %2545 = vmatprep.mubr.bf16.mxu0 0
        %2546 = vmatmul.mubr.bf16.gmra.mxu0 %v1804
        %v2547 = vpop.f32.mrf.mxu0
        %v2548 = vadd.f32 0.0, %v2547
        %v2549 = vpop.f32.mrf.mxu0
        %v2550 = vpop.f32.mrf.mxu0
        %v2551 = vadd.f32 0.0, %v2550
        %v2552 = vpop.f32.mrf.mxu0
        %2553 = vdwg.mxu0
        %v2554 = vadd.f32 %v2415, %v2524
        %v2555 = vadd.f32 %v2416, %v2527
        %v2556 = vadd.f32 %v2417, %v2532
        %v2557 = vadd.f32 %v2418, %v2535
        %v2558 = vadd.f32 %v2419, %v2540
        %v2559 = vadd.f32 %v2420, %v2543
        %v2560 = vadd.f32 %v2421, %v2548
        %v2561 = vadd.f32 %v2422, %v2551
        %s2562 = scalar_lea.vmem %s6, 320
        %v2563 = vld [vmem:[%s2562] sm:$0xf]
        %v2564 = vld [vmem:[%s2562 + $0x4] sm:$0xf]
        %v2565 = vld [vmem:[%s2562 + $0x8] sm:$0xf]
        %v2566 = vld [vmem:[%s2562 + $0xc] sm:$0xf]
        %v2567 = vld [vmem:[%s2562 + $0x10] sm:$0xf]
        %v2568 = vld [vmem:[%s2562 + $0x14] sm:$0xf]
        %v2569 = vld [vmem:[%s2562 + $0x18] sm:$0xf]
        %v2570 = vld [vmem:[%s2562 + $0x1c] sm:$0xf]
        %v2571 = vld [vmem:[%s2562 + $0x20] sm:$0xf]
        %v2572 = vld [vmem:[%s2562 + $0x24] sm:$0xf]
        %v2573 = vld [vmem:[%s2562 + $0x28] sm:$0xf]
        %v2574 = vld [vmem:[%s2562 + $0x2c] sm:$0xf]
        %v2575 = vld [vmem:[%s2562 + $0x30] sm:$0xf]
        %v2576 = vld [vmem:[%s2562 + $0x34] sm:$0xf]
        %v2577 = vld [vmem:[%s2562 + $0x38] sm:$0xf]
        %v2578 = vld [vmem:[%s2562 + $0x3c] sm:$0xf]
        %v2595 = vunpack.c.l.b16 %v2563
        %v2596 = vunpack.c.l.b16 %v2564
        %v2597 = vunpack.c.l.b16 %v2565
        %v2598 = vunpack.c.l.b16 %v2566
        %v2599 = vunpack.c.l.b16 %v2567
        %v2600 = vunpack.c.l.b16 %v2568
        %v2601 = vunpack.c.l.b16 %v2569
        %v2602 = vunpack.c.l.b16 %v2570
        %v2603 = vunpack.c.l.b16 %v2571
        %v2604 = vunpack.c.l.b16 %v2572
        %v2605 = vunpack.c.l.b16 %v2573
        %v2606 = vunpack.c.l.b16 %v2574
        %v2607 = vunpack.c.l.b16 %v2575
        %v2608 = vunpack.c.l.b16 %v2576
        %v2609 = vunpack.c.l.b16 %v2577
        %v2610 = vunpack.c.l.b16 %v2578
        %v2611 = vpack.c.b16 %v2596, %v2595
        %v2612 = vpack.c.b16 %v2598, %v2597
        %v2613 = vpack.c.b16 %v2600, %v2599
        %v2614 = vpack.c.b16 %v2602, %v2601
        %v2615 = vpack.c.b16 %v2604, %v2603
        %v2616 = vpack.c.b16 %v2606, %v2605
        %v2617 = vpack.c.b16 %v2608, %v2607
        %v2618 = vpack.c.b16 %v2610, %v2609
        %2627 = vmatprep.subr.bf16.mxu0 0
        %2628 = vmatpush1.bf16.msra.mxu0 %v2618
        %2629 = vmatprep.subr.bf16.mxu0 0
        %2630 = vmatpush1.bf16.msra.mxu0 %v2617
        %2631 = vmatprep.subr.bf16.mxu0 0
        %2632 = vmatpush1.bf16.msra.mxu0 %v2616
        %2633 = vmatprep.subr.bf16.mxu0 0
        %2634 = vmatpush1.bf16.msra.mxu0 %v2615
        %2635 = vmatprep.subr.bf16.mxu0 0
        %2636 = vmatpush1.bf16.msra.mxu0 %v2614
        %2637 = vmatprep.subr.bf16.mxu0 0
        %2638 = vmatpush1.bf16.msra.mxu0 %v2613
        %2639 = vmatprep.subr.bf16.mxu0 0
        %2640 = vmatpush1.bf16.msra.mxu0 %v2612
        %2641 = vmatprep.subr.bf16.mxu0 0
        %2642 = vmatpush1.bf16.msra.mxu0 %v2611
        %2643 = vmatprep.subr.bf16.mxu0 0
        %2644 = vmatpush2.bf16.msra.mxu0 0
        %2645 = vmatprep.subr.bf16.mxu0 0
        %2646 = vmatpush2.bf16.msra.mxu0 0
        %2647 = vmatprep.subr.bf16.mxu0 0
        %2648 = vmatpush2.bf16.msra.mxu0 0
        %2649 = vmatprep.subr.bf16.mxu0 0
        %2650 = vmatpush2.bf16.msra.mxu0 0
        %2651 = vmatprep.subr.bf16.mxu0 0
        %2652 = vmatpush2.bf16.msra.mxu0 0
        %2653 = vmatprep.subr.bf16.mxu0 0
        %2654 = vmatpush2.bf16.msra.mxu0 0
        %2655 = vmatprep.subr.bf16.mxu0 0
        %2656 = vmatpush2.bf16.msra.mxu0 0
        %2657 = vmatprep.subr.bf16.mxu0 0
        %2658 = vmatpush2.bf16.msra.mxu0 0
        %2659 = vmatprep.mubr.bf16.mxu0 0
        %2660 = vmatmul.mubr.bf16.gmra.mxu0 %v1879
        %v2661 = vpop.f32.mrf.mxu0
        %v2662 = vadd.f32 0.0, %v2661
        %v2663 = vpop.f32.mrf.mxu0
        %v2664 = vpop.f32.mrf.mxu0
        %v2665 = vadd.f32 0.0, %v2664
        %v2666 = vpop.f32.mrf.mxu0
        %2667 = vmatprep.mubr.bf16.mxu0 0
        %2668 = vmatmul.mubr.bf16.gmra.mxu0 %v1880
        %v2669 = vpop.f32.mrf.mxu0
        %v2670 = vadd.f32 0.0, %v2669
        %v2671 = vpop.f32.mrf.mxu0
        %v2672 = vpop.f32.mrf.mxu0
        %v2673 = vadd.f32 0.0, %v2672
        %v2674 = vpop.f32.mrf.mxu0
        %2675 = vmatprep.mubr.bf16.mxu0 0
        %2676 = vmatmul.mubr.bf16.gmra.mxu0 %v1881
        %v2677 = vpop.f32.mrf.mxu0
        %v2678 = vadd.f32 0.0, %v2677
        %v2679 = vpop.f32.mrf.mxu0
        %v2680 = vpop.f32.mrf.mxu0
        %v2681 = vadd.f32 0.0, %v2680
        %v2682 = vpop.f32.mrf.mxu0
        %2683 = vmatprep.mubr.bf16.mxu0 0
        %2684 = vmatmul.mubr.bf16.gmra.mxu0 %v1882
        %v2685 = vpop.f32.mrf.mxu0
        %v2686 = vadd.f32 0.0, %v2685
        %v2687 = vpop.f32.mrf.mxu0
        %v2688 = vpop.f32.mrf.mxu0
        %v2689 = vadd.f32 0.0, %v2688
        %v2690 = vpop.f32.mrf.mxu0
        %2691 = vdwg.mxu0
        %v2692 = vadd.f32 %v2554, %v2662
        %v2693 = vadd.f32 %v2555, %v2665
        %v2694 = vadd.f32 %v2556, %v2670
        %v2695 = vadd.f32 %v2557, %v2673
        %v2696 = vadd.f32 %v2558, %v2678
        %v2697 = vadd.f32 %v2559, %v2681
        %v2698 = vadd.f32 %v2560, %v2686
        %v2699 = vadd.f32 %v2561, %v2689
        %s2700 = scalar_lea.vmem %s6, 384
        %v2701 = vld [vmem:[%s2700] sm:$0xf]
        %v2702 = vld [vmem:[%s2700 + $0x4] sm:$0xf]
        %v2703 = vld [vmem:[%s2700 + $0x8] sm:$0xf]
        %v2704 = vld [vmem:[%s2700 + $0xc] sm:$0xf]
        %v2705 = vld [vmem:[%s2700 + $0x10] sm:$0xf]
        %v2706 = vld [vmem:[%s2700 + $0x14] sm:$0xf]
        %v2707 = vld [vmem:[%s2700 + $0x18] sm:$0xf]
        %v2708 = vld [vmem:[%s2700 + $0x1c] sm:$0xf]
        %v2709 = vld [vmem:[%s2700 + $0x20] sm:$0xf]
        %v2710 = vld [vmem:[%s2700 + $0x24] sm:$0xf]
        %v2711 = vld [vmem:[%s2700 + $0x28] sm:$0xf]
        %v2712 = vld [vmem:[%s2700 + $0x2c] sm:$0xf]
        %v2713 = vld [vmem:[%s2700 + $0x30] sm:$0xf]
        %v2714 = vld [vmem:[%s2700 + $0x34] sm:$0xf]
        %v2715 = vld [vmem:[%s2700 + $0x38] sm:$0xf]
        %v2716 = vld [vmem:[%s2700 + $0x3c] sm:$0xf]
        %v2733 = vunpack.c.l.b16 %v2701
        %v2734 = vunpack.c.l.b16 %v2702
        %v2735 = vunpack.c.l.b16 %v2703
        %v2736 = vunpack.c.l.b16 %v2704
        %v2737 = vunpack.c.l.b16 %v2705
        %v2738 = vunpack.c.l.b16 %v2706
        %v2739 = vunpack.c.l.b16 %v2707
        %v2740 = vunpack.c.l.b16 %v2708
        %v2741 = vunpack.c.l.b16 %v2709
        %v2742 = vunpack.c.l.b16 %v2710
        %v2743 = vunpack.c.l.b16 %v2711
        %v2744 = vunpack.c.l.b16 %v2712
        %v2745 = vunpack.c.l.b16 %v2713
        %v2746 = vunpack.c.l.b16 %v2714
        %v2747 = vunpack.c.l.b16 %v2715
        %v2748 = vunpack.c.l.b16 %v2716
        %v2749 = vpack.c.b16 %v2734, %v2733
        %v2750 = vpack.c.b16 %v2736, %v2735
        %v2751 = vpack.c.b16 %v2738, %v2737
        %v2752 = vpack.c.b16 %v2740, %v2739
        %v2753 = vpack.c.b16 %v2742, %v2741
        %v2754 = vpack.c.b16 %v2744, %v2743
        %v2755 = vpack.c.b16 %v2746, %v2745
        %v2756 = vpack.c.b16 %v2748, %v2747
        %2765 = vmatprep.subr.bf16.mxu0 0
        %2766 = vmatpush1.bf16.msra.mxu0 %v2756
        %2767 = vmatprep.subr.bf16.mxu0 0
        %2768 = vmatpush1.bf16.msra.mxu0 %v2755
        %2769 = vmatprep.subr.bf16.mxu0 0
        %2770 = vmatpush1.bf16.msra.mxu0 %v2754
        %2771 = vmatprep.subr.bf16.mxu0 0
        %2772 = vmatpush1.bf16.msra.mxu0 %v2753
        %2773 = vmatprep.subr.bf16.mxu0 0
        %2774 = vmatpush1.bf16.msra.mxu0 %v2752
        %2775 = vmatprep.subr.bf16.mxu0 0
        %2776 = vmatpush1.bf16.msra.mxu0 %v2751
        %2777 = vmatprep.subr.bf16.mxu0 0
        %2778 = vmatpush1.bf16.msra.mxu0 %v2750
        %2779 = vmatprep.subr.bf16.mxu0 0
        %2780 = vmatpush1.bf16.msra.mxu0 %v2749
        %2781 = vmatprep.subr.bf16.mxu0 0
        %2782 = vmatpush2.bf16.msra.mxu0 0
        %2783 = vmatprep.subr.bf16.mxu0 0
        %2784 = vmatpush2.bf16.msra.mxu0 0
        %2785 = vmatprep.subr.bf16.mxu0 0
        %2786 = vmatpush2.bf16.msra.mxu0 0
        %2787 = vmatprep.subr.bf16.mxu0 0
        %2788 = vmatpush2.bf16.msra.mxu0 0
        %2789 = vmatprep.subr.bf16.mxu0 0
        %2790 = vmatpush2.bf16.msra.mxu0 0
        %2791 = vmatprep.subr.bf16.mxu0 0
        %2792 = vmatpush2.bf16.msra.mxu0 0
        %2793 = vmatprep.subr.bf16.mxu0 0
        %2794 = vmatpush2.bf16.msra.mxu0 0
        %2795 = vmatprep.subr.bf16.mxu0 0
        %2796 = vmatpush2.bf16.msra.mxu0 0
        %2797 = vmatprep.mubr.bf16.mxu0 0
        %2798 = vmatmul.mubr.bf16.gmra.mxu0 %v1856
        %v2799 = vpop.f32.mrf.mxu0
        %v2800 = vadd.f32 0.0, %v2799
        %v2801 = vpop.f32.mrf.mxu0
        %v2802 = vpop.f32.mrf.mxu0
        %v2803 = vadd.f32 0.0, %v2802
        %v2804 = vpop.f32.mrf.mxu0
        %2805 = vmatprep.mubr.bf16.mxu0 0
        %2806 = vmatmul.mubr.bf16.gmra.mxu0 %v1857
        %v2807 = vpop.f32.mrf.mxu0
        %v2808 = vadd.f32 0.0, %v2807
        %v2809 = vpop.f32.mrf.mxu0
        %v2810 = vpop.f32.mrf.mxu0
        %v2811 = vadd.f32 0.0, %v2810
        %v2812 = vpop.f32.mrf.mxu0
        %2813 = vmatprep.mubr.bf16.mxu0 0
        %2814 = vmatmul.mubr.bf16.gmra.mxu0 %v1858
        %v2815 = vpop.f32.mrf.mxu0
        %v2816 = vadd.f32 0.0, %v2815
        %v2817 = vpop.f32.mrf.mxu0
        %v2818 = vpop.f32.mrf.mxu0
        %v2819 = vadd.f32 0.0, %v2818
        %v2820 = vpop.f32.mrf.mxu0
        %2821 = vmatprep.mubr.bf16.mxu0 0
        %2822 = vmatmul.mubr.bf16.gmra.mxu0 %v1859
        %v2823 = vpop.f32.mrf.mxu0
        %v2824 = vadd.f32 0.0, %v2823
        %v2825 = vpop.f32.mrf.mxu0
        %v2826 = vpop.f32.mrf.mxu0
        %v2827 = vadd.f32 0.0, %v2826
        %v2828 = vpop.f32.mrf.mxu0
        %2829 = vdwg.mxu0
        %v2830 = vadd.f32 %v2692, %v2800
        %v2831 = vadd.f32 %v2693, %v2803
        %v2832 = vadd.f32 %v2694, %v2808
        %v2833 = vadd.f32 %v2695, %v2811
        %v2834 = vadd.f32 %v2696, %v2816
        %v2835 = vadd.f32 %v2697, %v2819
        %v2836 = vadd.f32 %v2698, %v2824
        %v2837 = vadd.f32 %v2699, %v2827
        %s2838 = scalar_lea.vmem %s6, 448
        %v2839 = vld [vmem:[%s2838] sm:$0xf]
        %v2840 = vld [vmem:[%s2838 + $0x4] sm:$0xf]
        %v2841 = vld [vmem:[%s2838 + $0x8] sm:$0xf]
        %v2842 = vld [vmem:[%s2838 + $0xc] sm:$0xf]
        %v2843 = vld [vmem:[%s2838 + $0x10] sm:$0xf]
        %v2844 = vld [vmem:[%s2838 + $0x14] sm:$0xf]
        %v2845 = vld [vmem:[%s2838 + $0x18] sm:$0xf]
        %v2846 = vld [vmem:[%s2838 + $0x1c] sm:$0xf]
        %v2847 = vld [vmem:[%s2838 + $0x20] sm:$0xf]
        %v2848 = vld [vmem:[%s2838 + $0x24] sm:$0xf]
        %v2849 = vld [vmem:[%s2838 + $0x28] sm:$0xf]
        %v2850 = vld [vmem:[%s2838 + $0x2c] sm:$0xf]
        %v2851 = vld [vmem:[%s2838 + $0x30] sm:$0xf]
        %v2852 = vld [vmem:[%s2838 + $0x34] sm:$0xf]
        %v2853 = vld [vmem:[%s2838 + $0x38] sm:$0xf]
        %v2854 = vld [vmem:[%s2838 + $0x3c] sm:$0xf]
        %v2872 = vunpack.c.l.b16 %v2839
        %v2873 = vunpack.c.l.b16 %v2840
        %v2874 = vunpack.c.l.b16 %v2841
        %v2875 = vunpack.c.l.b16 %v2842
        %v2876 = vunpack.c.l.b16 %v2843
        %v2877 = vunpack.c.l.b16 %v2844
        %v2878 = vunpack.c.l.b16 %v2845
        %v2879 = vunpack.c.l.b16 %v2846
        %v2880 = vunpack.c.l.b16 %v2847
        %v2881 = vunpack.c.l.b16 %v2848
        %v2882 = vunpack.c.l.b16 %v2849
        %v2883 = vunpack.c.l.b16 %v2850
        %v2884 = vunpack.c.l.b16 %v2851
        %v2885 = vunpack.c.l.b16 %v2852
        %v2886 = vunpack.c.l.b16 %v2853
        %v2887 = vunpack.c.l.b16 %v2854
        %v2888 = vpack.c.b16 %v2873, %v2872
        %v2889 = vpack.c.b16 %v2875, %v2874
        %v2890 = vpack.c.b16 %v2877, %v2876
        %v2891 = vpack.c.b16 %v2879, %v2878
        %v2892 = vpack.c.b16 %v2881, %v2880
        %v2893 = vpack.c.b16 %v2883, %v2882
        %v2894 = vpack.c.b16 %v2885, %v2884
        %v2895 = vpack.c.b16 %v2887, %v2886
        %2904 = vmatprep.subr.bf16.mxu0 0
        %2905 = vmatpush1.bf16.msra.mxu0 %v2895
        %2906 = vmatprep.subr.bf16.mxu0 0
        %2907 = vmatpush1.bf16.msra.mxu0 %v2894
        %2908 = vmatprep.subr.bf16.mxu0 0
        %2909 = vmatpush1.bf16.msra.mxu0 %v2893
        %2910 = vmatprep.subr.bf16.mxu0 0
        %2911 = vmatpush1.bf16.msra.mxu0 %v2892
        %2912 = vmatprep.subr.bf16.mxu0 0
        %2913 = vmatpush1.bf16.msra.mxu0 %v2891
        %2914 = vmatprep.subr.bf16.mxu0 0
        %2915 = vmatpush1.bf16.msra.mxu0 %v2890
        %2916 = vmatprep.subr.bf16.mxu0 0
        %2917 = vmatpush1.bf16.msra.mxu0 %v2889
        %2918 = vmatprep.subr.bf16.mxu0 0
        %2919 = vmatpush1.bf16.msra.mxu0 %v2888
        %2920 = vmatprep.subr.bf16.mxu0 0
        %2921 = vmatpush2.bf16.msra.mxu0 0
        %2922 = vmatprep.subr.bf16.mxu0 0
        %2923 = vmatpush2.bf16.msra.mxu0 0
        %2924 = vmatprep.subr.bf16.mxu0 0
        %2925 = vmatpush2.bf16.msra.mxu0 0
        %2926 = vmatprep.subr.bf16.mxu0 0
        %2927 = vmatpush2.bf16.msra.mxu0 0
        %2928 = vmatprep.subr.bf16.mxu0 0
        %2929 = vmatpush2.bf16.msra.mxu0 0
        %2930 = vmatprep.subr.bf16.mxu0 0
        %2931 = vmatpush2.bf16.msra.mxu0 0
        %2932 = vmatprep.subr.bf16.mxu0 0
        %2933 = vmatpush2.bf16.msra.mxu0 0
        %2934 = vmatprep.subr.bf16.mxu0 0
        %2935 = vmatpush2.bf16.msra.mxu0 0
        %2936 = vmatprep.mubr.bf16.mxu0 0
        %2937 = vmatmul.mubr.bf16.gmra.mxu0 %v1802
        %v2938 = vpop.f32.mrf.mxu0
        %v2939 = vadd.f32 0.0, %v2938
        %v2940 = vpop.f32.mrf.mxu0
        %v2941 = vpop.f32.mrf.mxu0
        %v2942 = vadd.f32 0.0, %v2941
        %v2943 = vpop.f32.mrf.mxu0
        %2944 = vmatprep.mubr.bf16.mxu0 0
        %2945 = vmatmul.mubr.bf16.gmra.mxu0 %v1803
        %v2946 = vpop.f32.mrf.mxu0
        %v2947 = vadd.f32 0.0, %v2946
        %v2948 = vpop.f32.mrf.mxu0
        %v2949 = vpop.f32.mrf.mxu0
        %v2950 = vadd.f32 0.0, %v2949
        %v2951 = vpop.f32.mrf.mxu0
        %2952 = vmatprep.mubr.bf16.mxu0 0
        %2953 = vmatmul.mubr.bf16.gmra.mxu0 %v1804
        %v2954 = vpop.f32.mrf.mxu0
        %v2955 = vadd.f32 0.0, %v2954
        %v2956 = vpop.f32.mrf.mxu0
        %v2957 = vpop.f32.mrf.mxu0
        %v2958 = vadd.f32 0.0, %v2957
        %v2959 = vpop.f32.mrf.mxu0
        %2960 = vmatprep.mubr.bf16.mxu0 0
        %2961 = vmatmul.mubr.bf16.gmra.mxu0 %v1805
        %v2962 = vpop.f32.mrf.mxu0
        %v2963 = vadd.f32 0.0, %v2962
        %v2964 = vpop.f32.mrf.mxu0
        %v2965 = vpop.f32.mrf.mxu0
        %v2966 = vadd.f32 0.0, %v2965
        %v2967 = vpop.f32.mrf.mxu0
        %2968 = vdwg.mxu0
        %v2969 = vadd.f32 %v2830, %v2939
        %v2970 = vadd.f32 %v2831, %v2942
        %v2971 = vadd.f32 %v2832, %v2947
        %v2972 = vadd.f32 %v2833, %v2950
        %v2973 = vadd.f32 %v2834, %v2955
        %v2974 = vadd.f32 %v2835, %v2958
        %v2975 = vadd.f32 %v2836, %v2963
        %v2976 = vadd.f32 %v2837, %v2966
        %s2977 = scalar_lea.vmem %s6, 512
        %v2978 = vld [vmem:[%s2977] sm:$0xf]
        %v2979 = vld [vmem:[%s2977 + $0x4] sm:$0xf]
        %v2980 = vld [vmem:[%s2977 + $0x8] sm:$0xf]
        %v2981 = vld [vmem:[%s2977 + $0xc] sm:$0xf]
        %v2982 = vld [vmem:[%s2977 + $0x10] sm:$0xf]
        %v2983 = vld [vmem:[%s2977 + $0x14] sm:$0xf]
        %v2984 = vld [vmem:[%s2977 + $0x18] sm:$0xf]
        %v2985 = vld [vmem:[%s2977 + $0x1c] sm:$0xf]
        %v2986 = vld [vmem:[%s2977 + $0x20] sm:$0xf]
        %v2987 = vld [vmem:[%s2977 + $0x24] sm:$0xf]
        %v2988 = vld [vmem:[%s2977 + $0x28] sm:$0xf]
        %v2989 = vld [vmem:[%s2977 + $0x2c] sm:$0xf]
        %v2990 = vld [vmem:[%s2977 + $0x30] sm:$0xf]
        %v2991 = vld [vmem:[%s2977 + $0x34] sm:$0xf]
        %v2992 = vld [vmem:[%s2977 + $0x38] sm:$0xf]
        %v2993 = vld [vmem:[%s2977 + $0x3c] sm:$0xf]
        %v3010 = vunpack.c.l.b16 %v2978
        %v3011 = vunpack.c.l.b16 %v2979
        %v3012 = vunpack.c.l.b16 %v2980
        %v3013 = vunpack.c.l.b16 %v2981
        %v3014 = vunpack.c.l.b16 %v2982
        %v3015 = vunpack.c.l.b16 %v2983
        %v3016 = vunpack.c.l.b16 %v2984
        %v3017 = vunpack.c.l.b16 %v2985
        %v3018 = vunpack.c.l.b16 %v2986
        %v3019 = vunpack.c.l.b16 %v2987
        %v3020 = vunpack.c.l.b16 %v2988
        %v3021 = vunpack.c.l.b16 %v2989
        %v3022 = vunpack.c.l.b16 %v2990
        %v3023 = vunpack.c.l.b16 %v2991
        %v3024 = vunpack.c.l.b16 %v2992
        %v3025 = vunpack.c.l.b16 %v2993
        %v3026 = vpack.c.b16 %v3011, %v3010
        %v3027 = vpack.c.b16 %v3013, %v3012
        %v3028 = vpack.c.b16 %v3015, %v3014
        %v3029 = vpack.c.b16 %v3017, %v3016
        %v3030 = vpack.c.b16 %v3019, %v3018
        %v3031 = vpack.c.b16 %v3021, %v3020
        %v3032 = vpack.c.b16 %v3023, %v3022
        %v3033 = vpack.c.b16 %v3025, %v3024
        %3042 = vmatprep.subr.bf16.mxu0 0
        %3043 = vmatpush1.bf16.msra.mxu0 %v3033
        %3044 = vmatprep.subr.bf16.mxu0 0
        %3045 = vmatpush1.bf16.msra.mxu0 %v3032
        %3046 = vmatprep.subr.bf16.mxu0 0
        %3047 = vmatpush1.bf16.msra.mxu0 %v3031
        %3048 = vmatprep.subr.bf16.mxu0 0
        %3049 = vmatpush1.bf16.msra.mxu0 %v3030
        %3050 = vmatprep.subr.bf16.mxu0 0
        %3051 = vmatpush1.bf16.msra.mxu0 %v3029
        %3052 = vmatprep.subr.bf16.mxu0 0
        %3053 = vmatpush1.bf16.msra.mxu0 %v3028
        %3054 = vmatprep.subr.bf16.mxu0 0
        %3055 = vmatpush1.bf16.msra.mxu0 %v3027
        %3056 = vmatprep.subr.bf16.mxu0 0
        %3057 = vmatpush1.bf16.msra.mxu0 %v3026
        %3058 = vmatprep.subr.bf16.mxu0 0
        %3059 = vmatpush2.bf16.msra.mxu0 0
        %3060 = vmatprep.subr.bf16.mxu0 0
        %3061 = vmatpush2.bf16.msra.mxu0 0
        %3062 = vmatprep.subr.bf16.mxu0 0
        %3063 = vmatpush2.bf16.msra.mxu0 0
        %3064 = vmatprep.subr.bf16.mxu0 0
        %3065 = vmatpush2.bf16.msra.mxu0 0
        %3066 = vmatprep.subr.bf16.mxu0 0
        %3067 = vmatpush2.bf16.msra.mxu0 0
        %3068 = vmatprep.subr.bf16.mxu0 0
        %3069 = vmatpush2.bf16.msra.mxu0 0
        %3070 = vmatprep.subr.bf16.mxu0 0
        %3071 = vmatpush2.bf16.msra.mxu0 0
        %3072 = vmatprep.subr.bf16.mxu0 0
        %3073 = vmatpush2.bf16.msra.mxu0 0
        %3074 = vmatprep.mubr.bf16.mxu0 0
        %3075 = vmatmul.mubr.bf16.gmra.mxu0 %v1880
        %v3076 = vpop.f32.mrf.mxu0
        %v3077 = vadd.f32 0.0, %v3076
        %v3078 = vpop.f32.mrf.mxu0
        %v3079 = vpop.f32.mrf.mxu0
        %v3080 = vadd.f32 0.0, %v3079
        %v3081 = vpop.f32.mrf.mxu0
        %3082 = vmatprep.mubr.bf16.mxu0 0
        %3083 = vmatmul.mubr.bf16.gmra.mxu0 %v1881
        %v3084 = vpop.f32.mrf.mxu0
        %v3085 = vadd.f32 0.0, %v3084
        %v3086 = vpop.f32.mrf.mxu0
        %v3087 = vpop.f32.mrf.mxu0
        %v3088 = vadd.f32 0.0, %v3087
        %v3089 = vpop.f32.mrf.mxu0
        %3090 = vmatprep.mubr.bf16.mxu0 0
        %3091 = vmatmul.mubr.bf16.gmra.mxu0 %v1882
        %v3092 = vpop.f32.mrf.mxu0
        %v3093 = vadd.f32 0.0, %v3092
        %v3094 = vpop.f32.mrf.mxu0
        %v3095 = vpop.f32.mrf.mxu0
        %v3096 = vadd.f32 0.0, %v3095
        %v3097 = vpop.f32.mrf.mxu0
        %3098 = vmatprep.mubr.bf16.mxu0 0
        %3099 = vmatmul.mubr.bf16.gmra.mxu0 %v1883
        %v3100 = vpop.f32.mrf.mxu0
        %v3101 = vadd.f32 0.0, %v3100
        %v3102 = vpop.f32.mrf.mxu0
        %v3103 = vpop.f32.mrf.mxu0
        %v3104 = vadd.f32 0.0, %v3103
        %v3105 = vpop.f32.mrf.mxu0
        %3106 = vdwg.mxu0
        %v3107 = vadd.f32 %v2969, %v3077
        %v3108 = vadd.f32 %v2970, %v3080
        %v3109 = vadd.f32 %v2971, %v3085
        %v3110 = vadd.f32 %v2972, %v3088
        %v3111 = vadd.f32 %v2973, %v3093
        %v3112 = vadd.f32 %v2974, %v3096
        %v3113 = vadd.f32 %v2975, %v3101
        %v3114 = vadd.f32 %v2976, %v3104
        %v3115 = vld [vmem:[%s7] sm:$0x1]
        %v3117 = vlaneseq
        %v3118 = vshrl.u32 %v3117, 7
        %v3119 = vsub.s32 0, %v3118
        %v3120 = vrot.slane %v3115, %v3119
        %v3122 = vmul.f32 %v3107, %v3120
        %v3123 = vmul.f32 %v3108, %v3120
        %v3124 = vmul.f32 %v3109, %v3120
        %v3125 = vmul.f32 %v3110, %v3120
        %v3126 = vmul.f32 %v3111, %v3120
        %v3127 = vmul.f32 %v3112, %v3120
        %v3128 = vmul.f32 %v3113, %v3120
        %v3129 = vmul.f32 %v3114, %v3120
        %v3130 = vld [vmem:[%s8] sm:$0x1]
        %v3132 = vlaneseq
        %v3133 = vshrl.u32 %v3132, 7
        %v3134 = vsub.s32 0, %v3133
        %v3135 = vrot.slane %v3130, %v3134
        %v3137 = vadd.f32 %v3122, %v3135
        %v3138 = vadd.f32 %v3123, %v3135
        %v3139 = vadd.f32 %v3124, %v3135
        %v3140 = vadd.f32 %v3125, %v3135
        %v3141 = vadd.f32 %v3126, %v3135
        %v3142 = vadd.f32 %v3127, %v3135
        %v3143 = vadd.f32 %v3128, %v3135
        %v3144 = vadd.f32 %v3129, %v3135
        %v3145 = vxor.u32 %v3137, 2147483648
        %v3146 = vxor.u32 %v3138, 2147483648
        %v3147 = vxor.u32 %v3139, 2147483648
        %v3148 = vxor.u32 %v3140, 2147483648
        %v3149 = vxor.u32 %v3141, 2147483648
        %v3150 = vxor.u32 %v3142, 2147483648
        %v3151 = vxor.u32 %v3143, 2147483648
        %v3152 = vxor.u32 %v3144, 2147483648
        %v3153 = vmul.f32 %v3145, 1.442695
        %v3154 = vpow.pop %v3153
        %v3155 = vmul.f32 %v3146, 1.442695
        %v3156 = vpow.pop %v3155
        %v3157 = vmul.f32 %v3147, 1.442695
        %v3158 = vpow.pop %v3157
        %v3159 = vmul.f32 %v3148, 1.442695
        %v3160 = vpow.pop %v3159
        %v3161 = vmul.f32 %v3149, 1.442695
        %v3162 = vpow.pop %v3161
        %v3163 = vmul.f32 %v3150, 1.442695
        %v3164 = vpow.pop %v3163
        %v3165 = vmul.f32 %v3151, 1.442695
        %v3166 = vpow.pop %v3165
        %v3167 = vmul.f32 %v3152, 1.442695
        %v3168 = vpow.pop %v3167
        %v3169 = vadd.f32 %v3154, 1.0
        %v3170 = vadd.f32 %v3156, 1.0
        %v3171 = vadd.f32 %v3158, 1.0
        %v3172 = vadd.f32 %v3160, 1.0
        %v3173 = vadd.f32 %v3162, 1.0
        %v3174 = vadd.f32 %v3164, 1.0
        %v3175 = vadd.f32 %v3166, 1.0
        %v3176 = vadd.f32 %v3168, 1.0
        %v3177 = vrcp.pop %v3169
        %v3178 = vmul.f32 1.0, %v3177
        %v3179 = vrcp.pop %v3170
        %v3180 = vmul.f32 1.0, %v3179
        %v3181 = vrcp.pop %v3171
        %v3182 = vmul.f32 1.0, %v3181
        %v3183 = vrcp.pop %v3172
        %v3184 = vmul.f32 1.0, %v3183
        %v3185 = vrcp.pop %v3173
        %v3186 = vmul.f32 1.0, %v3185
        %v3187 = vrcp.pop %v3174
        %v3188 = vmul.f32 1.0, %v3187
        %v3189 = vrcp.pop %v3175
        %v3190 = vmul.f32 1.0, %v3189
        %v3191 = vrcp.pop %v3176
        %v3192 = vmul.f32 1.0, %v3191
        %v3193 = vmul.f32 %v3137, %v3178
        %v3194 = vmul.f32 %v3138, %v3180
        %v3195 = vmul.f32 %v3139, %v3182
        %v3196 = vmul.f32 %v3140, %v3184
        %v3197 = vmul.f32 %v3141, %v3186
        %v3198 = vmul.f32 %v3142, %v3188
        %v3199 = vmul.f32 %v3143, %v3190
        %v3200 = vmul.f32 %v3144, %v3192
        %v3201 = vpack.c.bf16 %v3194, %v3193
        %v3202 = vpack.c.bf16 %v3196, %v3195
        %v3203 = vpack.c.bf16 %v3198, %v3197
        %v3204 = vpack.c.bf16 %v3200, %v3199
        %v3209 = vunpack.c.l.b16 %v3201
        %v3210 = vunpack.c.h.b16 %v3201
        %v3211 = vunpack.c.l.b16 %v3202
        %v3212 = vunpack.c.h.b16 %v3202
        %v3213 = vunpack.c.l.b16 %v3203
        %v3214 = vunpack.c.h.b16 %v3203
        %v3215 = vunpack.c.l.b16 %v3204
        %v3216 = vunpack.c.h.b16 %v3204
        %v3217 = vpack.c.b16 %v3209, %v3209
        %v3218 = vpack.c.b16 %v3210, %v3210
        %v3219 = vpack.c.b16 %v3211, %v3211
        %v3220 = vpack.c.b16 %v3212, %v3212
        %v3221 = vpack.c.b16 %v3213, %v3213
        %v3222 = vpack.c.b16 %v3214, %v3214
        %v3223 = vpack.c.b16 %v3215, %v3215
        %v3224 = vpack.c.b16 %v3216, %v3216
        %3233 = vst [vmem:[%s448] sm:$0xf] %v3217
        %3234 = vst [vmem:[%s448 + $0x4] sm:$0xf] %v3218
        %3235 = vst [vmem:[%s448 + $0x8] sm:$0xf] %v3219
        %3236 = vst [vmem:[%s448 + $0xc] sm:$0xf] %v3220
        %3237 = vst [vmem:[%s448 + $0x10] sm:$0xf] %v3221
        %3238 = vst [vmem:[%s448 + $0x14] sm:$0xf] %v3222
        %3239 = vst [vmem:[%s448 + $0x18] sm:$0xf] %v3223
        %3240 = vst [vmem:[%s448 + $0x1c] sm:$0xf] %v3224
        %v3241 = vadd.f32 %v3193, %v500
        %v3242 = vadd.f32 %v3194, %v501
        %v3243 = vadd.f32 %v3195, %v502
        %v3244 = vadd.f32 %v3196, %v503
        %v3245 = vadd.f32 %v3197, %v504
        %v3246 = vadd.f32 %v3198, %v505
        %v3247 = vadd.f32 %v3199, %v506
        %v3248 = vadd.f32 %v3200, %v507
        %v3249 = vpack.c.bf16 %v3242, %v3241
        %v3250 = vpack.c.bf16 %v3244, %v3243
        %v3251 = vpack.c.bf16 %v3246, %v3245
        %v3252 = vpack.c.bf16 %v3248, %v3247
        %v3257 = vunpack.c.l.b16 %v3249
        %v3258 = vunpack.c.h.b16 %v3249
        %v3259 = vunpack.c.l.b16 %v3250
        %v3260 = vunpack.c.h.b16 %v3250
        %v3261 = vunpack.c.l.b16 %v3251
        %v3262 = vunpack.c.h.b16 %v3251
        %v3263 = vunpack.c.l.b16 %v3252
        %v3264 = vunpack.c.h.b16 %v3252
        %v3265 = vpack.c.b16 %v3257, %v3257
        %v3266 = vpack.c.b16 %v3258, %v3258
        %v3267 = vpack.c.b16 %v3259, %v3259
        %v3268 = vpack.c.b16 %v3260, %v3260
        %v3269 = vpack.c.b16 %v3261, %v3261
        %v3270 = vpack.c.b16 %v3262, %v3262
        %v3271 = vpack.c.b16 %v3263, %v3263
        %v3272 = vpack.c.b16 %v3264, %v3264
        %vm3281 = vcmask 27648
        %3282 = vst.msk [vmem:[%s448] sm:$0xf] %vm3281, %v3265
        %3283 = vst.msk [vmem:[%s448 + $0x4] sm:$0xf] %vm3281, %v3266
        %3284 = vst.msk [vmem:[%s448 + $0x8] sm:$0xf] %vm3281, %v3267
        %3285 = vst.msk [vmem:[%s448 + $0xc] sm:$0xf] %vm3281, %v3268
        %3286 = vst.msk [vmem:[%s448 + $0x10] sm:$0xf] %vm3281, %v3269
        %3287 = vst.msk [vmem:[%s448 + $0x14] sm:$0xf] %vm3281, %v3270
        %3288 = vst.msk [vmem:[%s448 + $0x18] sm:$0xf] %vm3281, %v3271
        %3289 = vst.msk [vmem:[%s448 + $0x1c] sm:$0xf] %vm3281, %v3272
        %s3290 = sand.u32 %s271, 1
        %s3291 = scalar_lea.sflag [#allocation4], %s3290
        %s3292 = sand.u32 %s271, 1
        %s3293 = smul.addr %s3292, 32
        %s3294 = scalar_lea.vmem [#allocation3], %s3293
        // Predicated region
        $region65: #{tpu_custom_call.1} parent=55 // pred_check
          %p3295 = pneg %p281
        $region66: #{tpu_custom_call.1} parent=55 // pred_check_branch
          %3297 = sbr.rel (%p3295) target = $region68
        $region67: #{tpu_custom_call.1} parent=55 // pred_region
          %s3298 = smul.u32 4, %s28
          %s3300 = ssub.s32 512, 512
          %3301 = vsyncadd %s3291, %s3300
          %s3302 = smul.addr %s3298, 2
          %s3303 = smul.addr %s27, 32
          %s3304 = sadd.s32 %s3302, %s3303
          %s3305 = smul.addr %s3304, 64
          %s3306 = scalar_lea.hbm %s9, %s3305
          %s3307 = sshll.u32 %s3294, 4
          %s3308 = int_to_ptr.vmem [resolvable:$true] %s3307
          %3313 = dma.vmem_to_hbm [thread:$0]  %s3308, 512, %s3306, %s3291, 64, 64, 4
        $region68: #{tpu_custom_call.1} parent=55 // pred_fallthru
          _
      $region56: #{tpu_custom_call.1} parent=5 // pred_fallthru
        _
      %p3314 = scmp.le.s32.totalorder 2, %s18
      // Predicated region
      $region69: #{tpu_custom_call.1} parent=5 // pred_check
        %p3315 = pneg %p3314
      $region70: #{tpu_custom_call.1} parent=5 // pred_check_branch
        %3317 = sbr.rel (%p3315) target = $region72
      $region71: #{tpu_custom_call.1} parent=5 // pred_region
        %s3318 = ssub.s32 %s18, 2
        // Predicated region
        $region73: #{tpu_custom_call.1} parent=71 // pred_check
          %p3319 = pneg %p287
        $region74: #{tpu_custom_call.1} parent=71 // pred_check_branch
          %3321 = sbr.rel (%p3319) target = $region76
        $region75: #{tpu_custom_call.1} parent=71 // pred_region
          %s3322 = sand.u32 %s272, 1
          %s3323 = scalar_lea.sflag [#allocation4], %s3322
          %s3324 = sand.u32 %s272, 1
          %s3325 = smul.addr %s3324, 32
          %s3326 = scalar_lea.vmem [#allocation3], %s3325
          %3327 = dma.done %s3323, 512
        $region76: #{tpu_custom_call.1} parent=71 // pred_fallthru
          _
      $region72: #{tpu_custom_call.1} parent=5 // pred_fallthru
        _
    $region6: #{tpu_custom_call.1} parent=1 // loop_footer
      %s22 = sadd.s32 1, %s18
    $region7: #{tpu_custom_call.1} parent=1 // loop_footer_branch
      %17 = sbr.rel target = $region3
    $region8: #{tpu_custom_call.1} parent=1 // loop_exit
      _
    %3328 = vsyncpa [#allocation4], 1
    %s3329 = scalar_lea.sflag [#allocation4], 1
    %3330 = vsyncpa %s3329, 1

// kernel: tpu_custom_call.1
$region0: #{tpu_custom_call.1}
  #allocation0 [shape = 'u32[]', space=smem, size = 0x4, offset = 0x4, fixed_abs, tag = 'smem constant byte address 0x4 - core index']
  #allocation1 [shape = 'u32[144,128]{1,0:T(1,128)}', space=vmem, size = 0x12000, scoped, tag = 'internal scratch']
  #allocation2 [shape = 'bf16[6,16,128]{2,1,0:T(8,128)(2,1)}', space=vmem, size = 0x6000, scoped, tag = 'scratch operand']
  %s0 = inlined_call_operand.vmem [shape: f32[2,16,16,4], index: 0, kind: input, shape index: {}]
  %s1 = inlined_call_operand.vmem [shape: f32[2,16,16,4], index: 1, kind: input, shape index: {}]
  %s2 = inlined_call_operand.vmem [shape: f32[2,16,16,4], index: 2, kind: input, shape index: {}]
  %s3 = inlined_call_operand.vmem [shape: bf16[3,3,4,128], index: 3, kind: input, shape index: {}]
  %s4 = inlined_call_operand.vmem [shape: f32[1,128], index: 4, kind: input, shape index: {}]
  %s5 = inlined_call_operand.vmem [shape: f32[1,128], index: 5, kind: input, shape index: {}]
  %s6 = inlined_call_operand.vmem [shape: bf16[3,3,128,128], index: 6, kind: input, shape index: {}]
  %s7 = inlined_call_operand.vmem [shape: f32[1,128], index: 7, kind: input, shape index: {}]
  %s8 = inlined_call_operand.vmem [shape: f32[1,128], index: 8, kind: input, shape index: {}]
  %s9 = inlined_call_operand.hbm [shape: bf16[2,16,16,128], index: 9, kind: output, shape index: {}]
  %s10 = sld [smem:[#allocation0]]
  $region77: #{tpu_custom_call.1} parent=0
    _
  %s12 = ssub.s32 1, %s10
  %s13 = scalar_select 0, %s12, %s10
  $region1: #{tpu_custom_call.1} parent=0
    #allocation3 [shape = 'u8[32768]{0}', space=vmem, size = 0x8000, scoped, tag = 'output window, operand 0']
    #allocation4 [shape = 's32[2]{0}', space=sflag, size = 0x8, scoped, tag = 'scoped memory for tpu_custom_call.1']
    %14 = vsyncpa [#allocation4], 0
    %s15 = scalar_lea.sflag [#allocation4], 1
    %16 = vsyncpa %s15, 0
    loop: start=0, step=1, limit=10
    $region2: #{tpu_custom_call.1} parent=1 // loop_pre_header
      _
    $region3: #{tpu_custom_call.1} parent=1 // loop_header
      %s18 = sphi 0, %s22
      %p19 = scmp.ge.s32.totalorder %s18, 10
      %s25 = sphi 0, %s37
      %s26 = sphi 0, %s33
      %s27 = sphi 0, %s25
      %s28 = sphi 0, %s26
      %s29 = sphi 0, %s27
      %s30 = sphi 0, %s28
      %s42 = sphi 0, %s44
      %s45 = sphi 0, %s42
      %s46 = sphi 0, %s45
      %s62 = sphi 0, %s46
      %s78 = sphi 0, %s80
      %s81 = sphi 0, %s78
      %s82 = sphi 0, %s81
      %s98 = sphi 0, %s82
      %s114 = sphi 0, %s116
      %s117 = sphi 0, %s114
      %s118 = sphi 0, %s117
      %s134 = sphi 0, %s118
      %s138 = sphi 0, %s138
      %s140 = sphi 0, %s138
      %s141 = sphi 0, %s140
      %s155 = sphi 0, %s141
      %s159 = sphi 0, %s159
      %s161 = sphi 0, %s159
      %s162 = sphi 0, %s161
      %s176 = sphi 0, %s162
      %s180 = sphi 0, %s180
      %s182 = sphi 0, %s180
      %s183 = sphi 0, %s182
      %s197 = sphi 0, %s183
      %s201 = sphi 0, %s201
      %s203 = sphi 0, %s201
      %s204 = sphi 0, %s203
      %s218 = sphi 0, %s204
      %s222 = sphi 0, %s222
      %s224 = sphi 0, %s222
      %s225 = sphi 0, %s224
      %s239 = sphi 0, %s225
      %s243 = sphi 0, %s243
      %s245 = sphi 0, %s243
      %s246 = sphi 0, %s245
      %s260 = sphi 0, %s246
      %s268 = sphi 0, %s270
      %s271 = sphi 0, %s268
      %s272 = sphi 0, %s271
      %s288 = sphi 0, %s272
    $region4: #{tpu_custom_call.1} parent=1 // loop_header_branch
      %21 = sbr.rel (%p19) target = $region8
    $region5: #{tpu_custom_call.1} parent=1 // loop_body
      %s23 = ssub.s32 %s18, 1
      %s24 = ssub.s32 %s18, 2
      %s31 = sadd.s32 1, %s26
      %p32 = scmp.ge.s32.totalorder %s31, 4
      %s33 = scalar_select %p32, 0, %s31
      %s34 = sadd.s32 1, %s25
      %s35 = scalar_select %p32, %s34, %s25
      %p36 = scmp.ge.s32.totalorder %s35, 2
      %s37 = scalar_select %p36, 0, %s35
      %s38 = ssub.s32 %s25, %s37
      %s39 = ssub.s32 %s26, %s33
      %s40 = sor.u32 %s38, %s39
      %p41 = scmp.eq.s32.totalorder %s40, 0
      %s43 = sadd.s32 %s42, 1
      %s44 = scalar_select %p41, %s42, %s43
      %p47 = pneg %p41
      %p48 = scmp.eq.s32.totalorder %s18, 7
      %p49 = por %p47, %p48
      %p50 = scmp.ne.s32.totalorder %s42, %s45
      %p51 = scmp.eq.s32.totalorder %s18, 0
      %p52 = por %p50, %p51
      %p53 = scmp.ne.s32.totalorder %s42, %s45
      %p54 = scmp.eq.s32.totalorder %s23, 7
      %p55 = por %p53, %p54
      %p56 = scmp.ne.s32.totalorder %s45, %s46
      %p57 = scmp.eq.s32.totalorder %s23, 0
      %p58 = por %p56, %p57
      %p59 = scmp.ne.s32.totalorder %s45, %s46
      %p60 = scmp.eq.s32.totalorder %s24, 7
      %p61 = por %p59, %p60
      %p63 = scmp.ne.s32.totalorder %s46, %s62
      %p64 = scmp.eq.s32.totalorder %s24, 0
      %p65 = por %p63, %p64
      %s66 = smul.u32 %s26, 2
      %s67 = ssub.s32 %s66, 1
      %p68 = scmp.gt.s32.totalorder %s67, 0
      %s69 = scalar_select %p68, %s67, 0
      %s70 = smul.u32 %s33, 2
      %s71 = ssub.s32 %s70, 1
      %p72 = scmp.gt.s32.totalorder %s71, 0
      %s73 = scalar_select %p72, %s71, 0
      %s74 = ssub.s32 %s25, %s37
      %s75 = ssub.s32 %s69, %s73
      %s76 = sor.u32 %s74, %s75
      %p77 = scmp.eq.s32.totalorder %s76, 0
      %s79 = sadd.s32 %s78, 1
      %s80 = scalar_select %p77, %s78, %s79
      %p83 = pneg %p77
      %p84 = scmp.eq.s32.totalorder %s18, 7
      %p85 = por %p83, %p84
      %p86 = scmp.ne.s32.totalorder %s78, %s81
      %p87 = scmp.eq.s32.totalorder %s18, 0
      %p88 = por %p86, %p87
      %p89 = scmp.ne.s32.totalorder %s78, %s81
      %p90 = scmp.eq.s32.totalorder %s23, 7
      %p91 = por %p89, %p90
      %p92 = scmp.ne.s32.totalorder %s81, %s82
      %p93 = scmp.eq.s32.totalorder %s23, 0
      %p94 = por %p92, %p93
      %p95 = scmp.ne.s32.totalorder %s81, %s82
      %p96 = scmp.eq.s32.totalorder %s24, 7
      %p97 = por %p95, %p96
      %p99 = scmp.ne.s32.totalorder %s82, %s98
      %p100 = scmp.eq.s32.totalorder %s24, 0
      %p101 = por %p99, %p100
      %s102 = sadd.s32 %s26, 1
      %s103 = smul.u32 %s102, 2
      %p104 = scmp.lt.s32.totalorder %s103, 7
      %s105 = scalar_select %p104, %s103, 7
      %s106 = sadd.s32 %s33, 1
      %s107 = smul.u32 %s106, 2
      %p108 = scmp.lt.s32.totalorder %s107, 7
      %s109 = scalar_select %p108, %s107, 7
      %s110 = ssub.s32 %s25, %s37
      %s111 = ssub.s32 %s105, %s109
      %s112 = sor.u32 %s110, %s111
      %p113 = scmp.eq.s32.totalorder %s112, 0
      %s115 = sadd.s32 %s114, 1
      %s116 = scalar_select %p113, %s114, %s115
      %p119 = pneg %p113
      %p120 = scmp.eq.s32.totalorder %s18, 7
      %p121 = por %p119, %p120
      %p122 = scmp.ne.s32.totalorder %s114, %s117
      %p123 = scmp.eq.s32.totalorder %s18, 0
      %p124 = por %p122, %p123
      %p125 = scmp.ne.s32.totalorder %s114, %s117
      %p126 = scmp.eq.s32.totalorder %s23, 7
      %p127 = por %p125, %p126
      %p128 = scmp.ne.s32.totalorder %s117, %s118
      %p129 = scmp.eq.s32.totalorder %s23, 0
      %p130 = por %p128, %p129
      %p131 = scmp.ne.s32.totalorder %s117, %s118
      %p132 = scmp.eq.s32.totalorder %s24, 7
      %p133 = por %p131, %p132
      %p135 = scmp.ne.s32.totalorder %s118, %s134
      %p136 = scmp.eq.s32.totalorder %s24, 0
      %p137 = por %p135, %p136
      %s139 = sadd.s32 %s138, 1
      %p142 = scmp.eq.s32.totalorder %s18, 7
      %p143 = scmp.ne.s32.totalorder %s138, %s140
      %p144 = scmp.eq.s32.totalorder %s18, 0
      %p145 = por %p143, %p144
      %p146 = scmp.ne.s32.totalorder %s138, %s140
      %p147 = scmp.eq.s32.totalorder %s23, 7
      %p148 = por %p146, %p147
      %p149 = scmp.ne.s32.totalorder %s140, %s141
      %p150 = scmp.eq.s32.totalorder %s23, 0
      %p151 = por %p149, %p150
      %p152 = scmp.ne.s32.totalorder %s140, %s141
      %p153 = scmp.eq.s32.totalorder %s24, 7
      %p154 = por %p152, %p153
      %p156 = scmp.ne.s32.totalorder %s141, %s155
      %p157 = scmp.eq.s32.totalorder %s24, 0
      %p158 = por %p156, %p157
      %s160 = sadd.s32 %s159, 1
      %p163 = scmp.eq.s32.totalorder %s18, 7
      %p164 = scmp.ne.s32.totalorder %s159, %s161
      %p165 = scmp.eq.s32.totalorder %s18, 0
      %p166 = por %p164, %p165
      %p167 = scmp.ne.s32.totalorder %s159, %s161
      %p168 = scmp.eq.s32.totalorder %s23, 7
      %p169 = por %p167, %p168
      %p170 = scmp.ne.s32.totalorder %s161, %s162
      %p171 = scmp.eq.s32.totalorder %s23, 0
      %p172 = por %p170, %p171
      %p173 = scmp.ne.s32.totalorder %s161, %s162
      %p174 = scmp.eq.s32.totalorder %s24, 7
      %p175 = por %p173, %p174
      %p177 = scmp.ne.s32.totalorder %s162, %s176
      %p178 = scmp.eq.s32.totalorder %s24, 0
      %p179 = por %p177, %p178
      %s181 = sadd.s32 %s180, 1
      %p184 = scmp.eq.s32.totalorder %s18, 7
      %p185 = scmp.ne.s32.totalorder %s180, %s182
      %p186 = scmp.eq.s32.totalorder %s18, 0
      %p187 = por %p185, %p186
      %p188 = scmp.ne.s32.totalorder %s180, %s182
      %p189 = scmp.eq.s32.totalorder %s23, 7
      %p190 = por %p188, %p189
      %p191 = scmp.ne.s32.totalorder %s182, %s183
      %p192 = scmp.eq.s32.totalorder %s23, 0
      %p193 = por %p191, %p192
      %p194 = scmp.ne.s32.totalorder %s182, %s183
      %p195 = scmp.eq.s32.totalorder %s24, 7
      %p196 = por %p194, %p195
      %p198 = scmp.ne.s32.totalorder %s183, %s197
      %p199 = scmp.eq.s32.totalorder %s24, 0
      %p200 = por %p198, %p199
      %s202 = sadd.s32 %s201, 1
      %p205 = scmp.eq.s32.totalorder %s18, 7
      %p206 = scmp.ne.s32.totalorder %s201, %s203
      %p207 = scmp.eq.s32.totalorder %s18, 0
      %p208 = por %p206, %p207
      %p209 = scmp.ne.s32.totalorder %s201, %s203
      %p210 = scmp.eq.s32.totalorder %s23, 7
      %p211 = por %p209, %p210
      %p212 = scmp.ne.s32.totalorder %s203, %s204
      %p213 = scmp.eq.s32.totalorder %s23, 0
      %p214 = por %p212, %p213
      %p215 = scmp.ne.s32.totalorder %s203, %s204
      %p216 = scmp.eq.s32.totalorder %s24, 7
      %p217 = por %p215, %p216
      %p219 = scmp.ne.s32.totalorder %s204, %s218
      %p220 = scmp.eq.s32.totalorder %s24, 0
      %p221 = por %p219, %p220
      %s223 = sadd.s32 %s222, 1
      %p226 = scmp.eq.s32.totalorder %s18, 7
      %p227 = scmp.ne.s32.totalorder %s222, %s224
      %p228 = scmp.eq.s32.totalorder %s18, 0
      %p229 = por %p227, %p228
      %p230 = scmp.ne.s32.totalorder %s222, %s224
      %p231 = scmp.eq.s32.totalorder %s23, 7
      %p232 = por %p230, %p231
      %p233 = scmp.ne.s32.totalorder %s224, %s225
      %p234 = scmp.eq.s32.totalorder %s23, 0
      %p235 = por %p233, %p234
      %p236 = scmp.ne.s32.totalorder %s224, %s225
      %p237 = scmp.eq.s32.totalorder %s24, 7
      %p238 = por %p236, %p237
      %p240 = scmp.ne.s32.totalorder %s225, %s239
      %p241 = scmp.eq.s32.totalorder %s24, 0
      %p242 = por %p240, %p241
      %s244 = sadd.s32 %s243, 1
      %p247 = scmp.eq.s32.totalorder %s18, 7
      %p248 = scmp.ne.s32.totalorder %s243, %s245
      %p249 = scmp.eq.s32.totalorder %s18, 0
      %p250 = por %p248, %p249
      %p251 = scmp.ne.s32.totalorder %s243, %s245
      %p252 = scmp.eq.s32.totalorder %s23, 7
      %p253 = por %p251, %p252
      %p254 = scmp.ne.s32.totalorder %s245, %s246
      %p255 = scmp.eq.s32.totalorder %s23, 0
      %p256 = por %p254, %p255
      %p257 = scmp.ne.s32.totalorder %s245, %s246
      %p258 = scmp.eq.s32.totalorder %s24, 7
      %p259 = por %p257, %p258
      %p261 = scmp.ne.s32.totalorder %s246, %s260
      %p262 = scmp.eq.s32.totalorder %s24, 0
      %p263 = por %p261, %p262
      %s264 = ssub.s32 %s25, %s37
      %s265 = ssub.s32 %s26, %s33
      %s266 = sor.u32 %s264, %s265
      %p267 = scmp.eq.s32.totalorder %s266, 0
      %s269 = sadd.s32 %s268, 1
      %s270 = scalar_select %p267, %s268, %s269
      %p273 = pneg %p267
      %p274 = scmp.eq.s32.totalorder %s18, 7
      %p275 = por %p273, %p274
      %p276 = scmp.ne.s32.totalorder %s268, %s271
      %p277 = scmp.eq.s32.totalorder %s18, 0
      %p278 = por %p276, %p277
      %p279 = scmp.ne.s32.totalorder %s268, %s271
      %p280 = scmp.eq.s32.totalorder %s23, 7
      %p281 = por %p279, %p280
      %p282 = scmp.ne.s32.totalorder %s271, %s272
      %p283 = scmp.eq.s32.totalorder %s23, 0
      %p284 = por %p282, %p283
      %p285 = scmp.ne.s32.totalorder %s271, %s272
      %p286 = scmp.eq.s32.totalorder %s24, 7
      %p287 = por %p285, %p286
      %p289 = scmp.ne.s32.totalorder %s272, %s288
      %p290 = scmp.eq.s32.totalorder %s24, 0
      %p291 = por %p289, %p290
      %p292 = scmp.le.s32.totalorder 1, %s18
      %p293 = scmp.lt.s32.totalorder %s18, 9
      %p294 = pnand %p292, %p293
      %p295 = pneg %p294
      // Predicated region
      $region9: #{tpu_custom_call.1} parent=5 // pred_check
        _
      $region10: #{tpu_custom_call.1} parent=5 // pred_check_branch
        %297 = sbr.rel (%p294) target = $region12
      $region11: #{tpu_custom_call.1} parent=5 // pred_region
        %s298 = ssub.s32 %s18, 1
        // Predicated region
        $region13: #{tpu_custom_call.1} parent=11 // pred_check
          %p299 = pneg %p151
        $region14: #{tpu_custom_call.1} parent=11 // pred_check_branch
          %301 = sbr.rel (%p299) target = $region16
        $region15: #{tpu_custom_call.1} parent=11 // pred_region
          _
        $region16: #{tpu_custom_call.1} parent=11 // pred_fallthru
          _
        // Predicated region
        $region17: #{tpu_custom_call.1} parent=11 // pred_check
          %p302 = pneg %p172
        $region18: #{tpu_custom_call.1} parent=11 // pred_check_branch
          %304 = sbr.rel (%p302) target = $region20
        $region19: #{tpu_custom_call.1} parent=11 // pred_region
          _
        $region20: #{tpu_custom_call.1} parent=11 // pred_fallthru
          _
        // Predicated region
        $region21: #{tpu_custom_call.1} parent=11 // pred_check
          %p305 = pneg %p193
        $region22: #{tpu_custom_call.1} parent=11 // pred_check_branch
          %307 = sbr.rel (%p305) target = $region24
        $region23: #{tpu_custom_call.1} parent=11 // pred_region
          _
        $region24: #{tpu_custom_call.1} parent=11 // pred_fallthru
          _
        // Predicated region
        $region25: #{tpu_custom_call.1} parent=11 // pred_check
          %p308 = pneg %p214
        $region26: #{tpu_custom_call.1} parent=11 // pred_check_branch
          %310 = sbr.rel (%p308) target = $region28
        $region27: #{tpu_custom_call.1} parent=11 // pred_region
          _
        $region28: #{tpu_custom_call.1} parent=11 // pred_fallthru
          _
        // Predicated region
        $region29: #{tpu_custom_call.1} parent=11 // pred_check
          %p311 = pneg %p235
        $region30: #{tpu_custom_call.1} parent=11 // pred_check_branch
          %313 = sbr.rel (%p311) target = $region32
        $region31: #{tpu_custom_call.1} parent=11 // pred_region
          _
        $region32: #{tpu_custom_call.1} parent=11 // pred_fallthru
          _
        // Predicated region
        $region33: #{tpu_custom_call.1} parent=11 // pred_check
          %p314 = pneg %p256
        $region34: #{tpu_custom_call.1} parent=11 // pred_check_branch
          %316 = sbr.rel (%p314) target = $region36
        $region35: #{tpu_custom_call.1} parent=11 // pred_region
          _
        $region36: #{tpu_custom_call.1} parent=11 // pred_fallthru
          _
      $region12: #{tpu_custom_call.1} parent=5 // pred_fallthru
        _
      %p317 = scmp.lt.s32.totalorder %s18, 8
      // Predicated region
      $region37: #{tpu_custom_call.1} parent=5 // pred_check
        %p318 = pneg %p317
      $region38: #{tpu_custom_call.1} parent=5 // pred_check_branch
        %320 = sbr.rel (%p318) target = $region40
      $region39: #{tpu_custom_call.1} parent=5 // pred_region
        // Predicated region
        $region41: #{tpu_custom_call.1} parent=39 // pred_check
          %p321 = pneg %p52
        $region42: #{tpu_custom_call.1} parent=39 // pred_check_branch
          %323 = sbr.rel (%p321) target = $region44
        $region43: #{tpu_custom_call.1} parent=39 // pred_region
          %s324 = smul.u32 4, %s26
          %p325 = scmp.lt.s32.totalorder %s25, 1
          %s326 = scalar_select %p325, %s25, 1
          %p327 = scmp.lt.s32.totalorder %s324, 15
          %s328 = scalar_select %p327, %s324, 15
          %s329 = smul.addr %s328, 2
          %s330 = smul.addr %s326, 32
          %s331 = sadd.s32 %s329, %s330
          %s332 = smul.addr %s331, 8
          %s333 = scalar_lea.vmem %s0, %s332
          %s334 = smul.u32 4, %s26
        $region44: #{tpu_custom_call.1} parent=39 // pred_fallthru
          _
        // Predicated region
        $region45: #{tpu_custom_call.1} parent=39 // pred_check
          %p335 = pneg %p88
        $region46: #{tpu_custom_call.1} parent=39 // pred_check_branch
          %337 = sbr.rel (%p335) target = $region48
        $region47: #{tpu_custom_call.1} parent=39 // pred_region
          %s338 = smul.u32 %s26, 2
          %s339 = ssub.s32 %s338, 1
          %p340 = scmp.gt.s32.totalorder %s339, 0
          %s341 = scalar_select %p340, %s339, 0
          %s342 = smul.u32 2, %s341
          %p343 = scmp.lt.s32.totalorder %s25, 1
          %s344 = scalar_select %p343, %s25, 1
          %p345 = scmp.lt.s32.totalorder %s342, 15
          %s346 = scalar_select %p345, %s342, 15
          %s347 = smul.addr %s346, 2
          %s348 = smul.addr %s344, 32
          %s349 = sadd.s32 %s347, %s348
          %s350 = smul.addr %s349, 8
          %s351 = scalar_lea.vmem %s1, %s350
          %s352 = smul.u32 %s26, 2
          %s353 = ssub.s32 %s352, 1
          %p354 = scmp.gt.s32.totalorder %s353, 0
          %s355 = scalar_select %p354, %s353, 0
          %s356 = smul.u32 2, %s355
        $region48: #{tpu_custom_call.1} parent=39 // pred_fallthru
          _
        // Predicated region
        $region49: #{tpu_custom_call.1} parent=39 // pred_check
          %p357 = pneg %p124
        $region50: #{tpu_custom_call.1} parent=39 // pred_check_branch
          %359 = sbr.rel (%p357) target = $region52
        $region51: #{tpu_custom_call.1} parent=39 // pred_region
          %s360 = sadd.s32 %s26, 1
          %s361 = smul.u32 %s360, 2
          %p362 = scmp.lt.s32.totalorder %s361, 7
          %s363 = scalar_select %p362, %s361, 7
          %s364 = smul.u32 2, %s363
          %p365 = scmp.lt.s32.totalorder %s25, 1
          %s366 = scalar_select %p365, %s25, 1
          %p367 = scmp.lt.s32.totalorder %s364, 15
          %s368 = scalar_select %p367, %s364, 15
          %s369 = smul.addr %s368, 2
          %s370 = smul.addr %s366, 32
          %s371 = sadd.s32 %s369, %s370
          %s372 = smul.addr %s371, 8
          %s373 = scalar_lea.vmem %s2, %s372
          %s374 = sadd.s32 %s26, 1
          %s375 = smul.u32 %s374, 2
          %p376 = scmp.lt.s32.totalorder %s375, 7
          %s377 = scalar_select %p376, %s375, 7
          %s378 = smul.u32 2, %s377
        $region52: #{tpu_custom_call.1} parent=39 // pred_fallthru
          _
      $region40: #{tpu_custom_call.1} parent=5 // pred_fallthru
        _
      %p379 = scmp.le.s32.totalorder 1, %s18
      %p380 = scmp.lt.s32.totalorder %s18, 9
      %p381 = pnand %p379, %p380
      %p382 = pneg %p381
      // Predicated region
      $region53: #{tpu_custom_call.1} parent=5 // pred_check
        _
      $region54: #{tpu_custom_call.1} parent=5 // pred_check_branch
        %384 = sbr.rel (%p381) target = $region56
      $region55: #{tpu_custom_call.1} parent=5 // pred_region
        %s385 = ssub.s32 %s18, 1
        %s386 = smul.u32 4, %s28
        %p387 = scmp.lt.s32.totalorder %s27, 1
        %s388 = scalar_select %p387, %s27, 1
        %p389 = scmp.lt.s32.totalorder %s386, 15
        %s390 = scalar_select %p389, %s386, 15
        %s391 = smul.addr %s390, 2
        %s392 = smul.addr %s388, 32
        %s393 = sadd.s32 %s391, %s392
        %s394 = smul.addr %s393, 8
        %s395 = scalar_lea.vmem %s0, %s394
        %p396 = pneg %p58
        %p397 = pneg %p55
        %s398 = smul.u32 %s28, 2
        %s399 = ssub.s32 %s398, 1
        %p400 = scmp.gt.s32.totalorder %s399, 0
        %s401 = scalar_select %p400, %s399, 0
        %s402 = smul.u32 2, %s401
        %p403 = scmp.lt.s32.totalorder %s27, 1
        %s404 = scalar_select %p403, %s27, 1
        %p405 = scmp.lt.s32.totalorder %s402, 15
        %s406 = scalar_select %p405, %s402, 15
        %s407 = smul.addr %s406, 2
        %s408 = smul.addr %s404, 32
        %s409 = sadd.s32 %s407, %s408
        %s410 = smul.addr %s409, 8
        %s411 = scalar_lea.vmem %s1, %s410
        %p412 = pneg %p94
        %p413 = pneg %p91
        %s414 = sadd.s32 %s28, 1
        %s415 = smul.u32 %s414, 2
        %p416 = scmp.lt.s32.totalorder %s415, 7
        %s417 = scalar_select %p416, %s415, 7
        %s418 = smul.u32 2, %s417
        %p419 = scmp.lt.s32.totalorder %s27, 1
        %s420 = scalar_select %p419, %s27, 1
        %p421 = scmp.lt.s32.totalorder %s418, 15
        %s422 = scalar_select %p421, %s418, 15
        %s423 = smul.addr %s422, 2
        %s424 = smul.addr %s420, 32
        %s425 = sadd.s32 %s423, %s424
        %s426 = smul.addr %s425, 8
        %s427 = scalar_lea.vmem %s2, %s426
        %p428 = pneg %p130
        %p429 = pneg %p127
        %p430 = pneg %p151
        %p431 = pneg %p148
        %p432 = pneg %p172
        %p433 = pneg %p169
        %p434 = pneg %p193
        %p435 = pneg %p190
        %p436 = pneg %p214
        %p437 = pneg %p211
        %p438 = pneg %p235
        %p439 = pneg %p232
        %p440 = pneg %p256
        %p441 = pneg %p253
        %p442 = pneg %p284
        %p443 = pneg %p281
        %s444 = sand.u32 %s271, 1
        %s445 = scalar_lea.sflag [#allocation4], %s444
        %s446 = sand.u32 %s271, 1
        %s447 = smul.addr %s446, 32
        %s448 = scalar_lea.vmem [#allocation3], %s447
        %s449 = smul.u32 4, %s28
        %p450 = scmp.lt.s32.totalorder %s27, 1
        %s451 = scalar_select %p450, %s27, 1
        %p452 = scmp.lt.s32.totalorder %s449, 15
        %s453 = scalar_select %p452, %s449, 15
        %s454 = smul.addr %s453, 2
        %s455 = smul.addr %s451, 32
        %s456 = sadd.s32 %s454, %s455
        %s457 = smul.addr %s456, 8
        %s458 = scalar_lea.vmem %s0, %s457
        %s459 = smul.u32 4, %s28
        %s460 = smul.u32 %s28, 2
        %s461 = ssub.s32 %s460, 1
        %p462 = scmp.gt.s32.totalorder %s461, 0
        %s463 = scalar_select %p462, %s461, 0
        %s464 = smul.u32 2, %s463
        %p465 = scmp.lt.s32.totalorder %s27, 1
        %s466 = scalar_select %p465, %s27, 1
        %p467 = scmp.lt.s32.totalorder %s464, 15
        %s468 = scalar_select %p467, %s464, 15
        %s469 = smul.addr %s468, 2
        %s470 = smul.addr %s466, 32
        %s471 = sadd.s32 %s469, %s470
        %s472 = smul.addr %s471, 8
        %s473 = scalar_lea.vmem %s1, %s472
        %s474 = smul.u32 %s28, 2
        %s475 = ssub.s32 %s474, 1
        %p476 = scmp.gt.s32.totalorder %s475, 0
        %s477 = scalar_select %p476, %s475, 0
        %s478 = smul.u32 2, %s477
        %s479 = sadd.s32 %s28, 1
        %s480 = smul.u32 %s479, 2
        %p481 = scmp.lt.s32.totalorder %s480, 7
        %s482 = scalar_select %p481, %s480, 7
        %s483 = smul.u32 2, %s482
        %p484 = scmp.lt.s32.totalorder %s27, 1
        %s485 = scalar_select %p484, %s27, 1
        %p486 = scmp.lt.s32.totalorder %s483, 15
        %s487 = scalar_select %p486, %s483, 15
        %s488 = smul.addr %s487, 2
        %s489 = smul.addr %s485, 32
        %s490 = sadd.s32 %s488, %s489
        %s491 = smul.addr %s490, 8
        %s492 = scalar_lea.vmem %s2, %s491
        %s493 = sadd.s32 %s28, 1
        %s494 = smul.u32 %s493, 2
        %p495 = scmp.lt.s32.totalorder %s494, 7
        %s496 = scalar_select %p495, %s494, 7
        %s497 = smul.u32 2, %s496
        %s498 = smul.u32 4, %s28
        %v500 = vld [vmem:[%s458] sm:$0xff]
        %v501 = vld [vmem:[%s458 + $0x8] sm:$0xff]
        %v502 = vld [vmem:[%s458 + $0x10] sm:$0xff]
        %v503 = vld [vmem:[%s458 + $0x18] sm:$0xff]
        %v504 = vld [vmem:[%s458 + $0x20] sm:$0xff]
        %v505 = vld [vmem:[%s458 + $0x28] sm:$0xff]
        %v506 = vld [vmem:[%s458 + $0x30] sm:$0xff]
        %v507 = vld [vmem:[%s458 + $0x38] sm:$0xff]
        %v508 = vpack.c.bf16 %v501, %v500
        %v509 = vpack.c.bf16 %v503, %v502
        %v510 = vpack.c.bf16 %v505, %v504
        %v511 = vpack.c.bf16 %v507, %v506
        %p512 = scmp.gt.s32.totalorder %s28, 0
        %v513 = vld [vmem:[%s473] sm:$0xff]
        %v514 = vld [vmem:[%s473 + $0x8] sm:$0xff]
        %v515 = vld [vmem:[%s473 + $0x10] sm:$0xff]
        %v516 = vld [vmem:[%s473 + $0x18] sm:$0xff]
        %v517 = vpack.c.bf16 %v514, %v513
        %v518 = vpack.c.bf16 %v516, %v515
        %s519 = scalar_select %p512, 1, 0
        %v520 = vstv %s519
        %vm521 = vcmp.eq.s32.totalorder %v520, 1
        %v522 = vsel %vm521, %v517, 0
        %v523 = vsel %vm521, %v518, 0
        %p524 = scmp.lt.s32.totalorder %s28, 3
        %v525 = vld [vmem:[%s492] sm:$0xff]
        %v526 = vld [vmem:[%s492 + $0x8] sm:$0xff]
        %v527 = vld [vmem:[%s492 + $0x10] sm:$0xff]
        %v528 = vld [vmem:[%s492 + $0x18] sm:$0xff]
        %v529 = vpack.c.bf16 %v526, %v525
        %v530 = vpack.c.bf16 %v528, %v527
        %s531 = scalar_select %p524, 1, 0
        %v532 = vstv %s531
        %vm533 = vcmp.eq.s32.totalorder %v532, 1
        %v534 = vsel %vm533, %v529, 0
        %v535 = vsel %vm533, %v530, 0
        %v537 = vshrl.u32 %v522, 16
        %v539 = vrot.slane %v537, 7
        %v540 = vshll.u32 %v522, 16
        %v542 = vor.u32 %v539, %v540
        %v544 = vshrl.u32 %v523, 16
        %v546 = vrot.slane %v544, 7
        %v547 = vshll.u32 %v523, 16
        %v549 = vor.u32 %v546, %v547
        %v551 = vshrl.u32 %v508, 16
        %v553 = vrot.slane %v551, 7
        %v554 = vshll.u32 %v508, 16
        %v556 = vor.u32 %v553, %v554
        %v558 = vshrl.u32 %v509, 16
        %v560 = vrot.slane %v558, 7
        %v561 = vshll.u32 %v509, 16
        %v563 = vor.u32 %v560, %v561
        %v565 = vshrl.u32 %v510, 16
        %v567 = vrot.slane %v565, 7
        %v568 = vshll.u32 %v510, 16
        %v570 = vor.u32 %v567, %v568
        %v572 = vshrl.u32 %v511, 16
        %v574 = vrot.slane %v572, 7
        %v575 = vshll.u32 %v511, 16
        %v577 = vor.u32 %v574, %v575
        %v579 = vshrl.u32 %v534, 16
        %v581 = vrot.slane %v579, 7
        %v582 = vshll.u32 %v534, 16
        %v584 = vor.u32 %v581, %v582
        %v586 = vshrl.u32 %v535, 16
        %v588 = vrot.slane %v586, 7
        %v589 = vshll.u32 %v535, 16
        %v591 = vor.u32 %v588, %v589
        %vm600 = vcmask 1040384
        %vm601 = vsmask.f32 256
        %vm602 = vmand %vm600, %vm601
        %v603 = vsel %vm602, 0, %v542
        %v604 = vsel %vm602, 0, %v549
        %v605 = vsel %vm602, 0, %v556
        %v606 = vsel %vm602, 0, %v563
        %v607 = vsel %vm602, 0, %v570
        %v608 = vsel %vm602, 0, %v577
        %v609 = vsel %vm602, 0, %v584
        %v610 = vsel %vm602, 0, %v591
        %v611 = vrot.slane %v540, 1
        %v612 = vor.u32 %v537, %v611
        %v613 = vrot.slane %v547, 1
        %v614 = vor.u32 %v544, %v613
        %v615 = vrot.slane %v554, 1
        %v616 = vor.u32 %v551, %v615
        %v617 = vrot.slane %v561, 1
        %v618 = vor.u32 %v558, %v617
        %v619 = vrot.slane %v568, 1
        %v620 = vor.u32 %v565, %v619
        %v621 = vrot.slane %v575, 1
        %v622 = vor.u32 %v572, %v621
        %v623 = vrot.slane %v582, 1
        %v624 = vor.u32 %v579, %v623
        %v625 = vrot.slane %v589, 1
        %v626 = vor.u32 %v586, %v625
        %vm635 = vcmask 1047552
        %vm636 = vsmask.f32 7424
        %vm637 = vmand %vm635, %vm636
        %v638 = vsel %vm637, %v612, 0
        %v639 = vsel %vm637, %v614, 0
        %v640 = vsel %vm637, %v616, 0
        %v641 = vsel %vm637, %v618, 0
        %v642 = vsel %vm637, %v620, 0
        %v643 = vsel %vm637, %v622, 0
        %v644 = vsel %vm637, %v624, 0
        %v645 = vsel %vm637, %v626, 0
        %v646 = vld [vmem:[%s3] sm:$0x3]
        %s647 = scalar_lea.vmem %s3, 2
        %v648 = vld [vmem:[%s647] sm:$0x3]
        %vm649 = vcmask 31744
        %v650 = vsel %vm649, %v522, 0
        %v652 = vsel %vm649, %v523, 0
        %v654 = vsel %vm649, %v508, 0
        %v656 = vsel %vm649, %v509, 0
        %v658 = vsel %vm649, %v510, 0
        %v660 = vsel %vm649, %v511, 0
        %vm662 = vcmask 1041408
        %v664 = vsel %vm662, %v648, 0
        %666 = vmatprep.subr.bf16.mxu0 0
        %667 = vmatpush1.bf16.msra.mxu0 0
        %668 = vmatprep.subr.bf16.mxu0 0
        %669 = vmatpush1.bf16.msra.mxu0 0
        %670 = vmatprep.subr.bf16.mxu0 0
        %671 = vmatpush1.bf16.msra.mxu0 0
        %672 = vmatprep.subr.bf16.mxu0 0
        %673 = vmatpush1.bf16.msra.mxu0 0
        %674 = vmatprep.subr.bf16.mxu0 0
        %675 = vmatpush1.bf16.msra.mxu0 0
        %676 = vmatprep.subr.bf16.mxu0 0
        %677 = vmatpush1.bf16.msra.mxu0 0
        %678 = vmatprep.subr.bf16.mxu0 0
        %679 = vmatpush1.bf16.msra.mxu0 0
        %680 = vmatprep.subr.bf16.mxu0 0
        %681 = vmatpush1.bf16.msra.mxu0 %v664
        %682 = vmatprep.subr.bf16.mxu0 0
        %683 = vmatpush2.bf16.msra.mxu0 0
        %684 = vmatprep.subr.bf16.mxu0 0
        %685 = vmatpush2.bf16.msra.mxu0 0
        %686 = vmatprep.subr.bf16.mxu0 0
        %687 = vmatpush2.bf16.msra.mxu0 0
        %688 = vmatprep.subr.bf16.mxu0 0
        %689 = vmatpush2.bf16.msra.mxu0 0
        %690 = vmatprep.subr.bf16.mxu0 0
        %691 = vmatpush2.bf16.msra.mxu0 0
        %692 = vmatprep.subr.bf16.mxu0 0
        %693 = vmatpush2.bf16.msra.mxu0 0
        %694 = vmatprep.subr.bf16.mxu0 0
        %695 = vmatpush2.bf16.msra.mxu0 0
        %696 = vmatprep.subr.bf16.mxu0 0
        %697 = vmatpush2.bf16.msra.mxu0 0
        %698 = vmatprep.mubr.bf16.mxu0 0
        %699 = vmatmul.mubr.bf16.gmra.mxu0 %v650
        %v700 = vpop.f32.mrf.mxu0
        %v701 = vadd.f32 0.0, %v700
        %v702 = vpop.f32.mrf.mxu0
        %v703 = vpop.f32.mrf.mxu0
        %v704 = vadd.f32 0.0, %v703
        %v705 = vpop.f32.mrf.mxu0
        %706 = vmatprep.mubr.bf16.mxu0 0
        %707 = vmatmul.mubr.bf16.gmra.mxu0 %v652
        %v708 = vpop.f32.mrf.mxu0
        %v709 = vadd.f32 0.0, %v708
        %v710 = vpop.f32.mrf.mxu0
        %v711 = vpop.f32.mrf.mxu0
        %v712 = vadd.f32 0.0, %v711
        %v713 = vpop.f32.mrf.mxu0
        %714 = vmatprep.mubr.bf16.mxu0 0
        %715 = vmatmul.mubr.bf16.gmra.mxu0 %v654
        %v716 = vpop.f32.mrf.mxu0
        %v717 = vadd.f32 0.0, %v716
        %v718 = vpop.f32.mrf.mxu0
        %v719 = vpop.f32.mrf.mxu0
        %v720 = vadd.f32 0.0, %v719
        %v721 = vpop.f32.mrf.mxu0
        %722 = vmatprep.mubr.bf16.mxu0 0
        %723 = vmatmul.mubr.bf16.gmra.mxu0 %v656
        %v724 = vpop.f32.mrf.mxu0
        %v725 = vadd.f32 0.0, %v724
        %v726 = vpop.f32.mrf.mxu0
        %v727 = vpop.f32.mrf.mxu0
        %v728 = vadd.f32 0.0, %v727
        %v729 = vpop.f32.mrf.mxu0
        %730 = vmatprep.mubr.bf16.mxu0 0
        %731 = vmatmul.mubr.bf16.gmra.mxu0 %v658
        %v732 = vpop.f32.mrf.mxu0
        %v733 = vadd.f32 0.0, %v732
        %v734 = vpop.f32.mrf.mxu0
        %v735 = vpop.f32.mrf.mxu0
        %v736 = vadd.f32 0.0, %v735
        %v737 = vpop.f32.mrf.mxu0
        %738 = vmatprep.mubr.bf16.mxu0 0
        %739 = vmatmul.mubr.bf16.gmra.mxu0 %v660
        %v740 = vpop.f32.mrf.mxu0
        %v741 = vadd.f32 0.0, %v740
        %v742 = vpop.f32.mrf.mxu0
        %v743 = vpop.f32.mrf.mxu0
        %v744 = vadd.f32 0.0, %v743
        %v745 = vpop.f32.mrf.mxu0
        %746 = vdwg.mxu0
        %v748 = vsel %vm649, %v603, 0
        %v751 = vsel %vm649, %v604, 0
        %v754 = vsel %vm649, %v605, 0
        %v757 = vsel %vm649, %v606, 0
        %v760 = vsel %vm649, %v607, 0
        %v763 = vsel %vm649, %v608, 0
        %v766 = vsel %vm662, %v646, 0
        %768 = vmatprep.subr.bf16.mxu0 0
        %769 = vmatpush1.bf16.msra.mxu0 0
        %770 = vmatprep.subr.bf16.mxu0 0
        %771 = vmatpush1.bf16.msra.mxu0 0
        %772 = vmatprep.subr.bf16.mxu0 0
        %773 = vmatpush1.bf16.msra.mxu0 0
        %774 = vmatprep.subr.bf16.mxu0 0
        %775 = vmatpush1.bf16.msra.mxu0 0
        %776 = vmatprep.subr.bf16.mxu0 0
        %777 = vmatpush1.bf16.msra.mxu0 0
        %778 = vmatprep.subr.bf16.mxu0 0
        %779 = vmatpush1.bf16.msra.mxu0 0
        %780 = vmatprep.subr.bf16.mxu0 0
        %781 = vmatpush1.bf16.msra.mxu0 0
        %782 = vmatprep.subr.bf16.mxu0 0
        %783 = vmatpush1.bf16.msra.mxu0 %v766
        %784 = vmatprep.subr.bf16.mxu0 0
        %785 = vmatpush2.bf16.msra.mxu0 0
        %786 = vmatprep.subr.bf16.mxu0 0
        %787 = vmatpush2.bf16.msra.mxu0 0
        %788 = vmatprep.subr.bf16.mxu0 0
        %789 = vmatpush2.bf16.msra.mxu0 0
        %790 = vmatprep.subr.bf16.mxu0 0
        %791 = vmatpush2.bf16.msra.mxu0 0
        %792 = vmatprep.subr.bf16.mxu0 0
        %793 = vmatpush2.bf16.msra.mxu0 0
        %794 = vmatprep.subr.bf16.mxu0 0
        %795 = vmatpush2.bf16.msra.mxu0 0
        %796 = vmatprep.subr.bf16.mxu0 0
        %797 = vmatpush2.bf16.msra.mxu0 0
        %798 = vmatprep.subr.bf16.mxu0 0
        %799 = vmatpush2.bf16.msra.mxu0 0
        %800 = vmatprep.mubr.bf16.mxu0 0
        %801 = vmatmul.mubr.bf16.gmra.mxu0 %v748
        %v802 = vpop.f32.mrf.mxu0
        %v803 = vadd.f32 %v701, %v802
        %v804 = vpop.f32.mrf.mxu0
        %v805 = vpop.f32.mrf.mxu0
        %v806 = vadd.f32 %v704, %v805
        %v807 = vpop.f32.mrf.mxu0
        %808 = vmatprep.mubr.bf16.mxu0 0
        %809 = vmatmul.mubr.bf16.gmra.mxu0 %v751
        %v810 = vpop.f32.mrf.mxu0
        %v811 = vadd.f32 %v709, %v810
        %v812 = vpop.f32.mrf.mxu0
        %v813 = vpop.f32.mrf.mxu0
        %v814 = vadd.f32 %v712, %v813
        %v815 = vpop.f32.mrf.mxu0
        %816 = vmatprep.mubr.bf16.mxu0 0
        %817 = vmatmul.mubr.bf16.gmra.mxu0 %v754
        %v818 = vpop.f32.mrf.mxu0
        %v819 = vadd.f32 %v717, %v818
        %v820 = vpop.f32.mrf.mxu0
        %v821 = vpop.f32.mrf.mxu0
        %v822 = vadd.f32 %v720, %v821
        %v823 = vpop.f32.mrf.mxu0
        %824 = vmatprep.mubr.bf16.mxu0 0
        %825 = vmatmul.mubr.bf16.gmra.mxu0 %v757
        %v826 = vpop.f32.mrf.mxu0
        %v827 = vadd.f32 %v725, %v826
        %v828 = vpop.f32.mrf.mxu0
        %v829 = vpop.f32.mrf.mxu0
        %v830 = vadd.f32 %v728, %v829
        %v831 = vpop.f32.mrf.mxu0
        %832 = vmatprep.mubr.bf16.mxu0 0
        %833 = vmatmul.mubr.bf16.gmra.mxu0 %v760
        %v834 = vpop.f32.mrf.mxu0
        %v835 = vadd.f32 %v733, %v834
        %v836 = vpop.f32.mrf.mxu0
        %v837 = vpop.f32.mrf.mxu0
        %v838 = vadd.f32 %v736, %v837
        %v839 = vpop.f32.mrf.mxu0
        %840 = vmatprep.mubr.bf16.mxu0 0
        %841 = vmatmul.mubr.bf16.gmra.mxu0 %v763
        %v842 = vpop.f32.mrf.mxu0
        %v843 = vadd.f32 %v741, %v842
        %v844 = vpop.f32.mrf.mxu0
        %v845 = vpop.f32.mrf.mxu0
        %v846 = vadd.f32 %v744, %v845
        %v847 = vpop.f32.mrf.mxu0
        %848 = vdwg.mxu0
        %s849 = scalar_lea.vmem %s3, 4
        %v850 = vld [vmem:[%s849] sm:$0x3]
        %v852 = vsel %vm649, %v638, 0
        %v855 = vsel %vm649, %v639, 0
        %v858 = vsel %vm649, %v640, 0
        %v861 = vsel %vm649, %v641, 0
        %v864 = vsel %vm649, %v642, 0
        %v867 = vsel %vm649, %v643, 0
        %v870 = vsel %vm662, %v850, 0
        %872 = vmatprep.subr.bf16.mxu0 0
        %873 = vmatpush1.bf16.msra.mxu0 0
        %874 = vmatprep.subr.bf16.mxu0 0
        %875 = vmatpush1.bf16.msra.mxu0 0
        %876 = vmatprep.subr.bf16.mxu0 0
        %877 = vmatpush1.bf16.msra.mxu0 0
        %878 = vmatprep.subr.bf16.mxu0 0
        %879 = vmatpush1.bf16.msra.mxu0 0
        %880 = vmatprep.subr.bf16.mxu0 0
        %881 = vmatpush1.bf16.msra.mxu0 0
        %882 = vmatprep.subr.bf16.mxu0 0
        %883 = vmatpush1.bf16.msra.mxu0 0
        %884 = vmatprep.subr.bf16.mxu0 0
        %885 = vmatpush1.bf16.msra.mxu0 0
        %886 = vmatprep.subr.bf16.mxu0 0
        %887 = vmatpush1.bf16.msra.mxu0 %v870
        %888 = vmatprep.subr.bf16.mxu0 0
        %889 = vmatpush2.bf16.msra.mxu0 0
        %890 = vmatprep.subr.bf16.mxu0 0
        %891 = vmatpush2.bf16.msra.mxu0 0
        %892 = vmatprep.subr.bf16.mxu0 0
        %893 = vmatpush2.bf16.msra.mxu0 0
        %894 = vmatprep.subr.bf16.mxu0 0
        %895 = vmatpush2.bf16.msra.mxu0 0
        %896 = vmatprep.subr.bf16.mxu0 0
        %897 = vmatpush2.bf16.msra.mxu0 0
        %898 = vmatprep.subr.bf16.mxu0 0
        %899 = vmatpush2.bf16.msra.mxu0 0
        %900 = vmatprep.subr.bf16.mxu0 0
        %901 = vmatpush2.bf16.msra.mxu0 0
        %902 = vmatprep.subr.bf16.mxu0 0
        %903 = vmatpush2.bf16.msra.mxu0 0
        %904 = vmatprep.mubr.bf16.mxu0 0
        %905 = vmatmul.mubr.bf16.gmra.mxu0 %v852
        %v906 = vpop.f32.mrf.mxu0
        %v907 = vadd.f32 0.0, %v906
        %v908 = vpop.f32.mrf.mxu0
        %v909 = vpop.f32.mrf.mxu0
        %v910 = vadd.f32 0.0, %v909
        %v911 = vpop.f32.mrf.mxu0
        %912 = vmatprep.mubr.bf16.mxu0 0
        %913 = vmatmul.mubr.bf16.gmra.mxu0 %v855
        %v914 = vpop.f32.mrf.mxu0
        %v915 = vadd.f32 0.0, %v914
        %v916 = vpop.f32.mrf.mxu0
        %v917 = vpop.f32.mrf.mxu0
        %v918 = vadd.f32 0.0, %v917
        %v919 = vpop.f32.mrf.mxu0
        %920 = vmatprep.mubr.bf16.mxu0 0
        %921 = vmatmul.mubr.bf16.gmra.mxu0 %v858
        %v922 = vpop.f32.mrf.mxu0
        %v923 = vadd.f32 0.0, %v922
        %v924 = vpop.f32.mrf.mxu0
        %v925 = vpop.f32.mrf.mxu0
        %v926 = vadd.f32 0.0, %v925
        %v927 = vpop.f32.mrf.mxu0
        %928 = vmatprep.mubr.bf16.mxu0 0
        %929 = vmatmul.mubr.bf16.gmra.mxu0 %v861
        %v930 = vpop.f32.mrf.mxu0
        %v931 = vadd.f32 0.0, %v930
        %v932 = vpop.f32.mrf.mxu0
        %v933 = vpop.f32.mrf.mxu0
        %v934 = vadd.f32 0.0, %v933
        %v935 = vpop.f32.mrf.mxu0
        %936 = vmatprep.mubr.bf16.mxu0 0
        %937 = vmatmul.mubr.bf16.gmra.mxu0 %v864
        %v938 = vpop.f32.mrf.mxu0
        %v939 = vadd.f32 0.0, %v938
        %v940 = vpop.f32.mrf.mxu0
        %v941 = vpop.f32.mrf.mxu0
        %v942 = vadd.f32 0.0, %v941
        %v943 = vpop.f32.mrf.mxu0
        %944 = vmatprep.mubr.bf16.mxu0 0
        %945 = vmatmul.mubr.bf16.gmra.mxu0 %v867
        %v946 = vpop.f32.mrf.mxu0
        %v947 = vadd.f32 0.0, %v946
        %v948 = vpop.f32.mrf.mxu0
        %v949 = vpop.f32.mrf.mxu0
        %v950 = vadd.f32 0.0, %v949
        %v951 = vpop.f32.mrf.mxu0
        %952 = vdwg.mxu0
        %v953 = vadd.f32 %v803, %v907
        %v954 = vadd.f32 %v806, %v910
        %v955 = vadd.f32 %v811, %v915
        %v956 = vadd.f32 %v814, %v918
        %v957 = vadd.f32 %v819, %v923
        %v958 = vadd.f32 %v822, %v926
        %v959 = vadd.f32 %v827, %v931
        %v960 = vadd.f32 %v830, %v934
        %v961 = vadd.f32 %v835, %v939
        %v962 = vadd.f32 %v838, %v942
        %v963 = vadd.f32 %v843, %v947
        %v964 = vadd.f32 %v846, %v950
        %s965 = scalar_lea.vmem %s3, 6
        %v966 = vld [vmem:[%s965] sm:$0x3]
        %v968 = vsel %vm649, %v609, 0
        %v971 = vsel %vm662, %v966, 0
        %973 = vmatprep.subr.bf16.mxu0 0
        %974 = vmatpush1.bf16.msra.mxu0 0
        %975 = vmatprep.subr.bf16.mxu0 0
        %976 = vmatpush1.bf16.msra.mxu0 0
        %977 = vmatprep.subr.bf16.mxu0 0
        %978 = vmatpush1.bf16.msra.mxu0 0
        %979 = vmatprep.subr.bf16.mxu0 0
        %980 = vmatpush1.bf16.msra.mxu0 0
        %981 = vmatprep.subr.bf16.mxu0 0
        %982 = vmatpush1.bf16.msra.mxu0 0
        %983 = vmatprep.subr.bf16.mxu0 0
        %984 = vmatpush1.bf16.msra.mxu0 0
        %985 = vmatprep.subr.bf16.mxu0 0
        %986 = vmatpush1.bf16.msra.mxu0 0
        %987 = vmatprep.subr.bf16.mxu0 0
        %988 = vmatpush1.bf16.msra.mxu0 %v971
        %989 = vmatprep.subr.bf16.mxu0 0
        %990 = vmatpush2.bf16.msra.mxu0 0
        %991 = vmatprep.subr.bf16.mxu0 0
        %992 = vmatpush2.bf16.msra.mxu0 0
        %993 = vmatprep.subr.bf16.mxu0 0
        %994 = vmatpush2.bf16.msra.mxu0 0
        %995 = vmatprep.subr.bf16.mxu0 0
        %996 = vmatpush2.bf16.msra.mxu0 0
        %997 = vmatprep.subr.bf16.mxu0 0
        %998 = vmatpush2.bf16.msra.mxu0 0
        %999 = vmatprep.subr.bf16.mxu0 0
        %1000 = vmatpush2.bf16.msra.mxu0 0
        %1001 = vmatprep.subr.bf16.mxu0 0
        %1002 = vmatpush2.bf16.msra.mxu0 0
        %1003 = vmatprep.subr.bf16.mxu0 0
        %1004 = vmatpush2.bf16.msra.mxu0 0
        %1005 = vmatprep.mubr.bf16.mxu0 0
        %1006 = vmatmul.mubr.bf16.gmra.mxu0 %v751
        %v1007 = vpop.f32.mrf.mxu0
        %v1008 = vadd.f32 0.0, %v1007
        %v1009 = vpop.f32.mrf.mxu0
        %v1010 = vpop.f32.mrf.mxu0
        %v1011 = vadd.f32 0.0, %v1010
        %v1012 = vpop.f32.mrf.mxu0
        %1013 = vmatprep.mubr.bf16.mxu0 0
        %1014 = vmatmul.mubr.bf16.gmra.mxu0 %v754
        %v1015 = vpop.f32.mrf.mxu0
        %v1016 = vadd.f32 0.0, %v1015
        %v1017 = vpop.f32.mrf.mxu0
        %v1018 = vpop.f32.mrf.mxu0
        %v1019 = vadd.f32 0.0, %v1018
        %v1020 = vpop.f32.mrf.mxu0
        %1021 = vmatprep.mubr.bf16.mxu0 0
        %1022 = vmatmul.mubr.bf16.gmra.mxu0 %v757
        %v1023 = vpop.f32.mrf.mxu0
        %v1024 = vadd.f32 0.0, %v1023
        %v1025 = vpop.f32.mrf.mxu0
        %v1026 = vpop.f32.mrf.mxu0
        %v1027 = vadd.f32 0.0, %v1026
        %v1028 = vpop.f32.mrf.mxu0
        %1029 = vmatprep.mubr.bf16.mxu0 0
        %1030 = vmatmul.mubr.bf16.gmra.mxu0 %v760
        %v1031 = vpop.f32.mrf.mxu0
        %v1032 = vadd.f32 0.0, %v1031
        %v1033 = vpop.f32.mrf.mxu0
        %v1034 = vpop.f32.mrf.mxu0
        %v1035 = vadd.f32 0.0, %v1034
        %v1036 = vpop.f32.mrf.mxu0
        %1037 = vmatprep.mubr.bf16.mxu0 0
        %1038 = vmatmul.mubr.bf16.gmra.mxu0 %v763
        %v1039 = vpop.f32.mrf.mxu0
        %v1040 = vadd.f32 0.0, %v1039
        %v1041 = vpop.f32.mrf.mxu0
        %v1042 = vpop.f32.mrf.mxu0
        %v1043 = vadd.f32 0.0, %v1042
        %v1044 = vpop.f32.mrf.mxu0
        %1045 = vmatprep.mubr.bf16.mxu0 0
        %1046 = vmatmul.mubr.bf16.gmra.mxu0 %v968
        %v1047 = vpop.f32.mrf.mxu0
        %v1048 = vadd.f32 0.0, %v1047
        %v1049 = vpop.f32.mrf.mxu0
        %v1050 = vpop.f32.mrf.mxu0
        %v1051 = vadd.f32 0.0, %v1050
        %v1052 = vpop.f32.mrf.mxu0
        %1053 = vdwg.mxu0
        %v1054 = vadd.f32 %v953, %v1008
        %v1055 = vadd.f32 %v954, %v1011
        %v1056 = vadd.f32 %v955, %v1016
        %v1057 = vadd.f32 %v956, %v1019
        %v1058 = vadd.f32 %v957, %v1024
        %v1059 = vadd.f32 %v958, %v1027
        %v1060 = vadd.f32 %v959, %v1032
        %v1061 = vadd.f32 %v960, %v1035
        %v1062 = vadd.f32 %v961, %v1040
        %v1063 = vadd.f32 %v962, %v1043
        %v1064 = vadd.f32 %v963, %v1048
        %v1065 = vadd.f32 %v964, %v1051
        %s1066 = scalar_lea.vmem %s3, 8
        %v1067 = vld [vmem:[%s1066] sm:$0x3]
        %v1068 = vsel %vm649, %v534, 0
        %v1071 = vsel %vm662, %v1067, 0
        %1073 = vmatprep.subr.bf16.mxu0 0
        %1074 = vmatpush1.bf16.msra.mxu0 0
        %1075 = vmatprep.subr.bf16.mxu0 0
        %1076 = vmatpush1.bf16.msra.mxu0 0
        %1077 = vmatprep.subr.bf16.mxu0 0
        %1078 = vmatpush1.bf16.msra.mxu0 0
        %1079 = vmatprep.subr.bf16.mxu0 0
        %1080 = vmatpush1.bf16.msra.mxu0 0
        %1081 = vmatprep.subr.bf16.mxu0 0
        %1082 = vmatpush1.bf16.msra.mxu0 0
        %1083 = vmatprep.subr.bf16.mxu0 0
        %1084 = vmatpush1.bf16.msra.mxu0 0
        %1085 = vmatprep.subr.bf16.mxu0 0
        %1086 = vmatpush1.bf16.msra.mxu0 0
        %1087 = vmatprep.subr.bf16.mxu0 0
        %1088 = vmatpush1.bf16.msra.mxu0 %v1071
        %1089 = vmatprep.subr.bf16.mxu0 0
        %1090 = vmatpush2.bf16.msra.mxu0 0
        %1091 = vmatprep.subr.bf16.mxu0 0
        %1092 = vmatpush2.bf16.msra.mxu0 0
        %1093 = vmatprep.subr.bf16.mxu0 0
        %1094 = vmatpush2.bf16.msra.mxu0 0
        %1095 = vmatprep.subr.bf16.mxu0 0
        %1096 = vmatpush2.bf16.msra.mxu0 0
        %1097 = vmatprep.subr.bf16.mxu0 0
        %1098 = vmatpush2.bf16.msra.mxu0 0
        %1099 = vmatprep.subr.bf16.mxu0 0
        %1100 = vmatpush2.bf16.msra.mxu0 0
        %1101 = vmatprep.subr.bf16.mxu0 0
        %1102 = vmatpush2.bf16.msra.mxu0 0
        %1103 = vmatprep.subr.bf16.mxu0 0
        %1104 = vmatpush2.bf16.msra.mxu0 0
        %1105 = vmatprep.mubr.bf16.mxu0 0
        %1106 = vmatmul.mubr.bf16.gmra.mxu0 %v652
        %v1107 = vpop.f32.mrf.mxu0
        %v1108 = vadd.f32 0.0, %v1107
        %v1109 = vpop.f32.mrf.mxu0
        %v1110 = vpop.f32.mrf.mxu0
        %v1111 = vadd.f32 0.0, %v1110
        %v1112 = vpop.f32.mrf.mxu0
        %1113 = vmatprep.mubr.bf16.mxu0 0
        %1114 = vmatmul.mubr.bf16.gmra.mxu0 %v654
        %v1115 = vpop.f32.mrf.mxu0
        %v1116 = vadd.f32 0.0, %v1115
        %v1117 = vpop.f32.mrf.mxu0
        %v1118 = vpop.f32.mrf.mxu0
        %v1119 = vadd.f32 0.0, %v1118
        %v1120 = vpop.f32.mrf.mxu0
        %1121 = vmatprep.mubr.bf16.mxu0 0
        %1122 = vmatmul.mubr.bf16.gmra.mxu0 %v656
        %v1123 = vpop.f32.mrf.mxu0
        %v1124 = vadd.f32 0.0, %v1123
        %v1125 = vpop.f32.mrf.mxu0
        %v1126 = vpop.f32.mrf.mxu0
        %v1127 = vadd.f32 0.0, %v1126
        %v1128 = vpop.f32.mrf.mxu0
        %1129 = vmatprep.mubr.bf16.mxu0 0
        %1130 = vmatmul.mubr.bf16.gmra.mxu0 %v658
        %v1131 = vpop.f32.mrf.mxu0
        %v1132 = vadd.f32 0.0, %v1131
        %v1133 = vpop.f32.mrf.mxu0
        %v1134 = vpop.f32.mrf.mxu0
        %v1135 = vadd.f32 0.0, %v1134
        %v1136 = vpop.f32.mrf.mxu0
        %1137 = vmatprep.mubr.bf16.mxu0 0
        %1138 = vmatmul.mubr.bf16.gmra.mxu0 %v660
        %v1139 = vpop.f32.mrf.mxu0
        %v1140 = vadd.f32 0.0, %v1139
        %v1141 = vpop.f32.mrf.mxu0
        %v1142 = vpop.f32.mrf.mxu0
        %v1143 = vadd.f32 0.0, %v1142
        %v1144 = vpop.f32.mrf.mxu0
        %1145 = vmatprep.mubr.bf16.mxu0 0
        %1146 = vmatmul.mubr.bf16.gmra.mxu0 %v1068
        %v1147 = vpop.f32.mrf.mxu0
        %v1148 = vadd.f32 0.0, %v1147
        %v1149 = vpop.f32.mrf.mxu0
        %v1150 = vpop.f32.mrf.mxu0
        %v1151 = vadd.f32 0.0, %v1150
        %v1152 = vpop.f32.mrf.mxu0
        %1153 = vdwg.mxu0
        %v1154 = vadd.f32 %v1054, %v1108
        %v1155 = vadd.f32 %v1055, %v1111
        %v1156 = vadd.f32 %v1056, %v1116
        %v1157 = vadd.f32 %v1057, %v1119
        %v1158 = vadd.f32 %v1058, %v1124
        %v1159 = vadd.f32 %v1059, %v1127
        %v1160 = vadd.f32 %v1060, %v1132
        %v1161 = vadd.f32 %v1061, %v1135
        %v1162 = vadd.f32 %v1062, %v1140
        %v1163 = vadd.f32 %v1063, %v1143
        %v1164 = vadd.f32 %v1064, %v1148
        %v1165 = vadd.f32 %v1065, %v1151
        %s1166 = scalar_lea.vmem %s3, 10
        %v1167 = vld [vmem:[%s1166] sm:$0x3]
        %v1169 = vsel %vm649, %v644, 0
        %v1172 = vsel %vm662, %v1167, 0
        %1174 = vmatprep.subr.bf16.mxu0 0
        %1175 = vmatpush1.bf16.msra.mxu0 0
        %1176 = vmatprep.subr.bf16.mxu0 0
        %1177 = vmatpush1.bf16.msra.mxu0 0
        %1178 = vmatprep.subr.bf16.mxu0 0
        %1179 = vmatpush1.bf16.msra.mxu0 0
        %1180 = vmatprep.subr.bf16.mxu0 0
        %1181 = vmatpush1.bf16.msra.mxu0 0
        %1182 = vmatprep.subr.bf16.mxu0 0
        %1183 = vmatpush1.bf16.msra.mxu0 0
        %1184 = vmatprep.subr.bf16.mxu0 0
        %1185 = vmatpush1.bf16.msra.mxu0 0
        %1186 = vmatprep.subr.bf16.mxu0 0
        %1187 = vmatpush1.bf16.msra.mxu0 0
        %1188 = vmatprep.subr.bf16.mxu0 0
        %1189 = vmatpush1.bf16.msra.mxu0 %v1172
        %1190 = vmatprep.subr.bf16.mxu0 0
        %1191 = vmatpush2.bf16.msra.mxu0 0
        %1192 = vmatprep.subr.bf16.mxu0 0
        %1193 = vmatpush2.bf16.msra.mxu0 0
        %1194 = vmatprep.subr.bf16.mxu0 0
        %1195 = vmatpush2.bf16.msra.mxu0 0
        %1196 = vmatprep.subr.bf16.mxu0 0
        %1197 = vmatpush2.bf16.msra.mxu0 0
        %1198 = vmatprep.subr.bf16.mxu0 0
        %1199 = vmatpush2.bf16.msra.mxu0 0
        %1200 = vmatprep.subr.bf16.mxu0 0
        %1201 = vmatpush2.bf16.msra.mxu0 0
        %1202 = vmatprep.subr.bf16.mxu0 0
        %1203 = vmatpush2.bf16.msra.mxu0 0
        %1204 = vmatprep.subr.bf16.mxu0 0
        %1205 = vmatpush2.bf16.msra.mxu0 0
        %1206 = vmatprep.mubr.bf16.mxu0 0
        %1207 = vmatmul.mubr.bf16.gmra.mxu0 %v855
        %v1208 = vpop.f32.mrf.mxu0
        %v1209 = vadd.f32 0.0, %v1208
        %v1210 = vpop.f32.mrf.mxu0
        %v1211 = vpop.f32.mrf.mxu0
        %v1212 = vadd.f32 0.0, %v1211
        %v1213 = vpop.f32.mrf.mxu0
        %1214 = vmatprep.mubr.bf16.mxu0 0
        %1215 = vmatmul.mubr.bf16.gmra.mxu0 %v858
        %v1216 = vpop.f32.mrf.mxu0
        %v1217 = vadd.f32 0.0, %v1216
        %v1218 = vpop.f32.mrf.mxu0
        %v1219 = vpop.f32.mrf.mxu0
        %v1220 = vadd.f32 0.0, %v1219
        %v1221 = vpop.f32.mrf.mxu0
        %1222 = vmatprep.mubr.bf16.mxu0 0
        %1223 = vmatmul.mubr.bf16.gmra.mxu0 %v861
        %v1224 = vpop.f32.mrf.mxu0
        %v1225 = vadd.f32 0.0, %v1224
        %v1226 = vpop.f32.mrf.mxu0
        %v1227 = vpop.f32.mrf.mxu0
        %v1228 = vadd.f32 0.0, %v1227
        %v1229 = vpop.f32.mrf.mxu0
        %1230 = vmatprep.mubr.bf16.mxu0 0
        %1231 = vmatmul.mubr.bf16.gmra.mxu0 %v864
        %v1232 = vpop.f32.mrf.mxu0
        %v1233 = vadd.f32 0.0, %v1232
        %v1234 = vpop.f32.mrf.mxu0
        %v1235 = vpop.f32.mrf.mxu0
        %v1236 = vadd.f32 0.0, %v1235
        %v1237 = vpop.f32.mrf.mxu0
        %1238 = vmatprep.mubr.bf16.mxu0 0
        %1239 = vmatmul.mubr.bf16.gmra.mxu0 %v867
        %v1240 = vpop.f32.mrf.mxu0
        %v1241 = vadd.f32 0.0, %v1240
        %v1242 = vpop.f32.mrf.mxu0
        %v1243 = vpop.f32.mrf.mxu0
        %v1244 = vadd.f32 0.0, %v1243
        %v1245 = vpop.f32.mrf.mxu0
        %1246 = vmatprep.mubr.bf16.mxu0 0
        %1247 = vmatmul.mubr.bf16.gmra.mxu0 %v1169
        %v1248 = vpop.f32.mrf.mxu0
        %v1249 = vadd.f32 0.0, %v1248
        %v1250 = vpop.f32.mrf.mxu0
        %v1251 = vpop.f32.mrf.mxu0
        %v1252 = vadd.f32 0.0, %v1251
        %v1253 = vpop.f32.mrf.mxu0
        %1254 = vdwg.mxu0
        %v1255 = vadd.f32 %v1154, %v1209
        %v1256 = vadd.f32 %v1155, %v1212
        %v1257 = vadd.f32 %v1156, %v1217
        %v1258 = vadd.f32 %v1157, %v1220
        %v1259 = vadd.f32 %v1158, %v1225
        %v1260 = vadd.f32 %v1159, %v1228
        %v1261 = vadd.f32 %v1160, %v1233
        %v1262 = vadd.f32 %v1161, %v1236
        %v1263 = vadd.f32 %v1162, %v1241
        %v1264 = vadd.f32 %v1163, %v1244
        %v1265 = vadd.f32 %v1164, %v1249
        %v1266 = vadd.f32 %v1165, %v1252
        %s1267 = scalar_lea.vmem %s3, 12
        %v1268 = vld [vmem:[%s1267] sm:$0x3]
        %v1270 = vsel %vm649, %v610, 0
        %v1273 = vsel %vm662, %v1268, 0
        %1275 = vmatprep.subr.bf16.mxu0 0
        %1276 = vmatpush1.bf16.msra.mxu0 0
        %1277 = vmatprep.subr.bf16.mxu0 0
        %1278 = vmatpush1.bf16.msra.mxu0 0
        %1279 = vmatprep.subr.bf16.mxu0 0
        %1280 = vmatpush1.bf16.msra.mxu0 0
        %1281 = vmatprep.subr.bf16.mxu0 0
        %1282 = vmatpush1.bf16.msra.mxu0 0
        %1283 = vmatprep.subr.bf16.mxu0 0
        %1284 = vmatpush1.bf16.msra.mxu0 0
        %1285 = vmatprep.subr.bf16.mxu0 0
        %1286 = vmatpush1.bf16.msra.mxu0 0
        %1287 = vmatprep.subr.bf16.mxu0 0
        %1288 = vmatpush1.bf16.msra.mxu0 0
        %1289 = vmatprep.subr.bf16.mxu0 0
        %1290 = vmatpush1.bf16.msra.mxu0 %v1273
        %1291 = vmatprep.subr.bf16.mxu0 0
        %1292 = vmatpush2.bf16.msra.mxu0 0
        %1293 = vmatprep.subr.bf16.mxu0 0
        %1294 = vmatpush2.bf16.msra.mxu0 0
        %1295 = vmatprep.subr.bf16.mxu0 0
        %1296 = vmatpush2.bf16.msra.mxu0 0
        %1297 = vmatprep.subr.bf16.mxu0 0
        %1298 = vmatpush2.bf16.msra.mxu0 0
        %1299 = vmatprep.subr.bf16.mxu0 0
        %1300 = vmatpush2.bf16.msra.mxu0 0
        %1301 = vmatprep.subr.bf16.mxu0 0
        %1302 = vmatpush2.bf16.msra.mxu0 0
        %1303 = vmatprep.subr.bf16.mxu0 0
        %1304 = vmatpush2.bf16.msra.mxu0 0
        %1305 = vmatprep.subr.bf16.mxu0 0
        %1306 = vmatpush2.bf16.msra.mxu0 0
        %1307 = vmatprep.mubr.bf16.mxu0 0
        %1308 = vmatmul.mubr.bf16.gmra.mxu0 %v754
        %v1309 = vpop.f32.mrf.mxu0
        %v1310 = vadd.f32 0.0, %v1309
        %v1311 = vpop.f32.mrf.mxu0
        %v1312 = vpop.f32.mrf.mxu0
        %v1313 = vadd.f32 0.0, %v1312
        %v1314 = vpop.f32.mrf.mxu0
        %1315 = vmatprep.mubr.bf16.mxu0 0
        %1316 = vmatmul.mubr.bf16.gmra.mxu0 %v757
        %v1317 = vpop.f32.mrf.mxu0
        %v1318 = vadd.f32 0.0, %v1317
        %v1319 = vpop.f32.mrf.mxu0
        %v1320 = vpop.f32.mrf.mxu0
        %v1321 = vadd.f32 0.0, %v1320
        %v1322 = vpop.f32.mrf.mxu0
        %1323 = vmatprep.mubr.bf16.mxu0 0
        %1324 = vmatmul.mubr.bf16.gmra.mxu0 %v760
        %v1325 = vpop.f32.mrf.mxu0
        %v1326 = vadd.f32 0.0, %v1325
        %v1327 = vpop.f32.mrf.mxu0
        %v1328 = vpop.f32.mrf.mxu0
        %v1329 = vadd.f32 0.0, %v1328
        %v1330 = vpop.f32.mrf.mxu0
        %1331 = vmatprep.mubr.bf16.mxu0 0
        %1332 = vmatmul.mubr.bf16.gmra.mxu0 %v763
        %v1333 = vpop.f32.mrf.mxu0
        %v1334 = vadd.f32 0.0, %v1333
        %v1335 = vpop.f32.mrf.mxu0
        %v1336 = vpop.f32.mrf.mxu0
        %v1337 = vadd.f32 0.0, %v1336
        %v1338 = vpop.f32.mrf.mxu0
        %1339 = vmatprep.mubr.bf16.mxu0 0
        %1340 = vmatmul.mubr.bf16.gmra.mxu0 %v968
        %v1341 = vpop.f32.mrf.mxu0
        %v1342 = vadd.f32 0.0, %v1341
        %v1343 = vpop.f32.mrf.mxu0
        %v1344 = vpop.f32.mrf.mxu0
        %v1345 = vadd.f32 0.0, %v1344
        %v1346 = vpop.f32.mrf.mxu0
        %1347 = vmatprep.mubr.bf16.mxu0 0
        %1348 = vmatmul.mubr.bf16.gmra.mxu0 %v1270
        %v1349 = vpop.f32.mrf.mxu0
        %v1350 = vadd.f32 0.0, %v1349
        %v1351 = vpop.f32.mrf.mxu0
        %v1352 = vpop.f32.mrf.mxu0
        %v1353 = vadd.f32 0.0, %v1352
        %v1354 = vpop.f32.mrf.mxu0
        %1355 = vdwg.mxu0
        %v1356 = vadd.f32 %v1255, %v1310
        %v1357 = vadd.f32 %v1256, %v1313
        %v1358 = vadd.f32 %v1257, %v1318
        %v1359 = vadd.f32 %v1258, %v1321
        %v1360 = vadd.f32 %v1259, %v1326
        %v1361 = vadd.f32 %v1260, %v1329
        %v1362 = vadd.f32 %v1261, %v1334
        %v1363 = vadd.f32 %v1262, %v1337
        %v1364 = vadd.f32 %v1263, %v1342
        %v1365 = vadd.f32 %v1264, %v1345
        %v1366 = vadd.f32 %v1265, %v1350
        %v1367 = vadd.f32 %v1266, %v1353
        %s1368 = scalar_lea.vmem %s3, 14
        %v1369 = vld [vmem:[%s1368] sm:$0x3]
        %v1370 = vsel %vm649, %v535, 0
        %v1373 = vsel %vm662, %v1369, 0
        %1375 = vmatprep.subr.bf16.mxu0 0
        %1376 = vmatpush1.bf16.msra.mxu0 0
        %1377 = vmatprep.subr.bf16.mxu0 0
        %1378 = vmatpush1.bf16.msra.mxu0 0
        %1379 = vmatprep.subr.bf16.mxu0 0
        %1380 = vmatpush1.bf16.msra.mxu0 0
        %1381 = vmatprep.subr.bf16.mxu0 0
        %1382 = vmatpush1.bf16.msra.mxu0 0
        %1383 = vmatprep.subr.bf16.mxu0 0
        %1384 = vmatpush1.bf16.msra.mxu0 0
        %1385 = vmatprep.subr.bf16.mxu0 0
        %1386 = vmatpush1.bf16.msra.mxu0 0
        %1387 = vmatprep.subr.bf16.mxu0 0
        %1388 = vmatpush1.bf16.msra.mxu0 0
        %1389 = vmatprep.subr.bf16.mxu0 0
        %1390 = vmatpush1.bf16.msra.mxu0 %v1373
        %1391 = vmatprep.subr.bf16.mxu0 0
        %1392 = vmatpush2.bf16.msra.mxu0 0
        %1393 = vmatprep.subr.bf16.mxu0 0
        %1394 = vmatpush2.bf16.msra.mxu0 0
        %1395 = vmatprep.subr.bf16.mxu0 0
        %1396 = vmatpush2.bf16.msra.mxu0 0
        %1397 = vmatprep.subr.bf16.mxu0 0
        %1398 = vmatpush2.bf16.msra.mxu0 0
        %1399 = vmatprep.subr.bf16.mxu0 0
        %1400 = vmatpush2.bf16.msra.mxu0 0
        %1401 = vmatprep.subr.bf16.mxu0 0
        %1402 = vmatpush2.bf16.msra.mxu0 0
        %1403 = vmatprep.subr.bf16.mxu0 0
        %1404 = vmatpush2.bf16.msra.mxu0 0
        %1405 = vmatprep.subr.bf16.mxu0 0
        %1406 = vmatpush2.bf16.msra.mxu0 0
        %1407 = vmatprep.mubr.bf16.mxu0 0
        %1408 = vmatmul.mubr.bf16.gmra.mxu0 %v654
        %v1409 = vpop.f32.mrf.mxu0
        %v1410 = vadd.f32 0.0, %v1409
        %v1411 = vpop.f32.mrf.mxu0
        %v1412 = vpop.f32.mrf.mxu0
        %v1413 = vadd.f32 0.0, %v1412
        %v1414 = vpop.f32.mrf.mxu0
        %1415 = vmatprep.mubr.bf16.mxu0 0
        %1416 = vmatmul.mubr.bf16.gmra.mxu0 %v656
        %v1417 = vpop.f32.mrf.mxu0
        %v1418 = vadd.f32 0.0, %v1417
        %v1419 = vpop.f32.mrf.mxu0
        %v1420 = vpop.f32.mrf.mxu0
        %v1421 = vadd.f32 0.0, %v1420
        %v1422 = vpop.f32.mrf.mxu0
        %1423 = vmatprep.mubr.bf16.mxu0 0
        %1424 = vmatmul.mubr.bf16.gmra.mxu0 %v658
        %v1425 = vpop.f32.mrf.mxu0
        %v1426 = vadd.f32 0.0, %v1425
        %v1427 = vpop.f32.mrf.mxu0
        %v1428 = vpop.f32.mrf.mxu0
        %v1429 = vadd.f32 0.0, %v1428
        %v1430 = vpop.f32.mrf.mxu0
        %1431 = vmatprep.mubr.bf16.mxu0 0
        %1432 = vmatmul.mubr.bf16.gmra.mxu0 %v660
        %v1433 = vpop.f32.mrf.mxu0
        %v1434 = vadd.f32 0.0, %v1433
        %v1435 = vpop.f32.mrf.mxu0
        %v1436 = vpop.f32.mrf.mxu0
        %v1437 = vadd.f32 0.0, %v1436
        %v1438 = vpop.f32.mrf.mxu0
        %1439 = vmatprep.mubr.bf16.mxu0 0
        %1440 = vmatmul.mubr.bf16.gmra.mxu0 %v1068
        %v1441 = vpop.f32.mrf.mxu0
        %v1442 = vadd.f32 0.0, %v1441
        %v1443 = vpop.f32.mrf.mxu0
        %v1444 = vpop.f32.mrf.mxu0
        %v1445 = vadd.f32 0.0, %v1444
        %v1446 = vpop.f32.mrf.mxu0
        %1447 = vmatprep.mubr.bf16.mxu0 0
        %1448 = vmatmul.mubr.bf16.gmra.mxu0 %v1370
        %v1449 = vpop.f32.mrf.mxu0
        %v1450 = vadd.f32 0.0, %v1449
        %v1451 = vpop.f32.mrf.mxu0
        %v1452 = vpop.f32.mrf.mxu0
        %v1453 = vadd.f32 0.0, %v1452
        %v1454 = vpop.f32.mrf.mxu0
        %1455 = vdwg.mxu0
        %v1456 = vadd.f32 %v1356, %v1410
        %v1457 = vadd.f32 %v1357, %v1413
        %v1458 = vadd.f32 %v1358, %v1418
        %v1459 = vadd.f32 %v1359, %v1421
        %v1460 = vadd.f32 %v1360, %v1426
        %v1461 = vadd.f32 %v1361, %v1429
        %v1462 = vadd.f32 %v1362, %v1434
        %v1463 = vadd.f32 %v1363, %v1437
        %v1464 = vadd.f32 %v1364, %v1442
        %v1465 = vadd.f32 %v1365, %v1445
        %v1466 = vadd.f32 %v1366, %v1450
        %v1467 = vadd.f32 %v1367, %v1453
        %s1468 = scalar_lea.vmem %s3, 16
        %v1469 = vld [vmem:[%s1468] sm:$0x3]
        %v1471 = vsel %vm649, %v645, 0
        %v1474 = vsel %vm662, %v1469, 0
        %1476 = vmatprep.subr.bf16.mxu0 0
        %1477 = vmatpush1.bf16.msra.mxu0 0
        %1478 = vmatprep.subr.bf16.mxu0 0
        %1479 = vmatpush1.bf16.msra.mxu0 0
        %1480 = vmatprep.subr.bf16.mxu0 0
        %1481 = vmatpush1.bf16.msra.mxu0 0
        %1482 = vmatprep.subr.bf16.mxu0 0
        %1483 = vmatpush1.bf16.msra.mxu0 0
        %1484 = vmatprep.subr.bf16.mxu0 0
        %1485 = vmatpush1.bf16.msra.mxu0 0
        %1486 = vmatprep.subr.bf16.mxu0 0
        %1487 = vmatpush1.bf16.msra.mxu0 0
        %1488 = vmatprep.subr.bf16.mxu0 0
        %1489 = vmatpush1.bf16.msra.mxu0 0
        %1490 = vmatprep.subr.bf16.mxu0 0
        %1491 = vmatpush1.bf16.msra.mxu0 %v1474
        %1492 = vmatprep.subr.bf16.mxu0 0
        %1493 = vmatpush2.bf16.msra.mxu0 0
        %1494 = vmatprep.subr.bf16.mxu0 0
        %1495 = vmatpush2.bf16.msra.mxu0 0
        %1496 = vmatprep.subr.bf16.mxu0 0
        %1497 = vmatpush2.bf16.msra.mxu0 0
        %1498 = vmatprep.subr.bf16.mxu0 0
        %1499 = vmatpush2.bf16.msra.mxu0 0
        %1500 = vmatprep.subr.bf16.mxu0 0
        %1501 = vmatpush2.bf16.msra.mxu0 0
        %1502 = vmatprep.subr.bf16.mxu0 0
        %1503 = vmatpush2.bf16.msra.mxu0 0
        %1504 = vmatprep.subr.bf16.mxu0 0
        %1505 = vmatpush2.bf16.msra.mxu0 0
        %1506 = vmatprep.subr.bf16.mxu0 0
        %1507 = vmatpush2.bf16.msra.mxu0 0
        %1508 = vmatprep.mubr.bf16.mxu0 0
        %1509 = vmatmul.mubr.bf16.gmra.mxu0 %v858
        %v1510 = vpop.f32.mrf.mxu0
        %v1511 = vadd.f32 0.0, %v1510
        %v1512 = vpop.f32.mrf.mxu0
        %v1513 = vpop.f32.mrf.mxu0
        %v1514 = vadd.f32 0.0, %v1513
        %v1515 = vpop.f32.mrf.mxu0
        %1516 = vmatprep.mubr.bf16.mxu0 0
        %1517 = vmatmul.mubr.bf16.gmra.mxu0 %v861
        %v1518 = vpop.f32.mrf.mxu0
        %v1519 = vadd.f32 0.0, %v1518
        %v1520 = vpop.f32.mrf.mxu0
        %v1521 = vpop.f32.mrf.mxu0
        %v1522 = vadd.f32 0.0, %v1521
        %v1523 = vpop.f32.mrf.mxu0
        %1524 = vmatprep.mubr.bf16.mxu0 0
        %1525 = vmatmul.mubr.bf16.gmra.mxu0 %v864
        %v1526 = vpop.f32.mrf.mxu0
        %v1527 = vadd.f32 0.0, %v1526
        %v1528 = vpop.f32.mrf.mxu0
        %v1529 = vpop.f32.mrf.mxu0
        %v1530 = vadd.f32 0.0, %v1529
        %v1531 = vpop.f32.mrf.mxu0
        %1532 = vmatprep.mubr.bf16.mxu0 0
        %1533 = vmatmul.mubr.bf16.gmra.mxu0 %v867
        %v1534 = vpop.f32.mrf.mxu0
        %v1535 = vadd.f32 0.0, %v1534
        %v1536 = vpop.f32.mrf.mxu0
        %v1537 = vpop.f32.mrf.mxu0
        %v1538 = vadd.f32 0.0, %v1537
        %v1539 = vpop.f32.mrf.mxu0
        %1540 = vmatprep.mubr.bf16.mxu0 0
        %1541 = vmatmul.mubr.bf16.gmra.mxu0 %v1169
        %v1542 = vpop.f32.mrf.mxu0
        %v1543 = vadd.f32 0.0, %v1542
        %v1544 = vpop.f32.mrf.mxu0
        %v1545 = vpop.f32.mrf.mxu0
        %v1546 = vadd.f32 0.0, %v1545
        %v1547 = vpop.f32.mrf.mxu0
        %1548 = vmatprep.mubr.bf16.mxu0 0
        %1549 = vmatmul.mubr.bf16.gmra.mxu0 %v1471
        %v1550 = vpop.f32.mrf.mxu0
        %v1551 = vadd.f32 0.0, %v1550
        %v1552 = vpop.f32.mrf.mxu0
        %v1553 = vpop.f32.mrf.mxu0
        %v1554 = vadd.f32 0.0, %v1553
        %v1555 = vpop.f32.mrf.mxu0
        %1556 = vdwg.mxu0
        %v1557 = vadd.f32 %v1456, %v1511
        %v1558 = vadd.f32 %v1457, %v1514
        %v1559 = vadd.f32 %v1458, %v1519
        %v1560 = vadd.f32 %v1459, %v1522
        %v1561 = vadd.f32 %v1460, %v1527
        %v1562 = vadd.f32 %v1461, %v1530
        %v1563 = vadd.f32 %v1462, %v1535
        %v1564 = vadd.f32 %v1463, %v1538
        %v1565 = vadd.f32 %v1464, %v1543
        %v1566 = vadd.f32 %v1465, %v1546
        %v1567 = vadd.f32 %v1466, %v1551
        %v1568 = vadd.f32 %v1467, %v1554
        %v1569 = vld [vmem:[%s4] sm:$0x1]
        %v1571 = vlaneseq
        %v1572 = vshrl.u32 %v1571, 7
        %v1573 = vsub.s32 0, %v1572
        %v1574 = vrot.slane %v1569, %v1573
        %v1576 = vmul.f32 %v1557, %v1574
        %v1577 = vmul.f32 %v1558, %v1574
        %v1578 = vmul.f32 %v1559, %v1574
        %v1579 = vmul.f32 %v1560, %v1574
        %v1580 = vmul.f32 %v1561, %v1574
        %v1581 = vmul.f32 %v1562, %v1574
        %v1582 = vmul.f32 %v1563, %v1574
        %v1583 = vmul.f32 %v1564, %v1574
        %v1584 = vmul.f32 %v1565, %v1574
        %v1585 = vmul.f32 %v1566, %v1574
        %v1586 = vmul.f32 %v1567, %v1574
        %v1587 = vmul.f32 %v1568, %v1574
        %v1588 = vld [vmem:[%s5] sm:$0x1]
        %v1590 = vlaneseq
        %v1591 = vshrl.u32 %v1590, 7
        %v1592 = vsub.s32 0, %v1591
        %v1593 = vrot.slane %v1588, %v1592
        %v1595 = vadd.f32 %v1576, %v1593
        %v1596 = vadd.f32 %v1577, %v1593
        %v1597 = vadd.f32 %v1578, %v1593
        %v1598 = vadd.f32 %v1579, %v1593
        %v1599 = vadd.f32 %v1580, %v1593
        %v1600 = vadd.f32 %v1581, %v1593
        %v1601 = vadd.f32 %v1582, %v1593
        %v1602 = vadd.f32 %v1583, %v1593
        %v1603 = vadd.f32 %v1584, %v1593
        %v1604 = vadd.f32 %v1585, %v1593
        %v1605 = vadd.f32 %v1586, %v1593
        %v1606 = vadd.f32 %v1587, %v1593
        %v1607 = vxor.u32 %v1595, 2147483648
        %v1608 = vxor.u32 %v1596, 2147483648
        %v1609 = vxor.u32 %v1597, 2147483648
        %v1610 = vxor.u32 %v1598, 2147483648
        %v1611 = vxor.u32 %v1599, 2147483648
        %v1612 = vxor.u32 %v1600, 2147483648
        %v1613 = vxor.u32 %v1601, 2147483648
        %v1614 = vxor.u32 %v1602, 2147483648
        %v1615 = vxor.u32 %v1603, 2147483648
        %v1616 = vxor.u32 %v1604, 2147483648
        %v1617 = vxor.u32 %v1605, 2147483648
        %v1618 = vxor.u32 %v1606, 2147483648
        %v1619 = vmul.f32 %v1607, 1.442695
        %v1620 = vpow.pop %v1619
        %v1621 = vmul.f32 %v1608, 1.442695
        %v1622 = vpow.pop %v1621
        %v1623 = vmul.f32 %v1609, 1.442695
        %v1624 = vpow.pop %v1623
        %v1625 = vmul.f32 %v1610, 1.442695
        %v1626 = vpow.pop %v1625
        %v1627 = vmul.f32 %v1611, 1.442695
        %v1628 = vpow.pop %v1627
        %v1629 = vmul.f32 %v1612, 1.442695
        %v1630 = vpow.pop %v1629
        %v1631 = vmul.f32 %v1613, 1.442695
        %v1632 = vpow.pop %v1631
        %v1633 = vmul.f32 %v1614, 1.442695
        %v1634 = vpow.pop %v1633
        %v1635 = vmul.f32 %v1615, 1.442695
        %v1636 = vpow.pop %v1635
        %v1637 = vmul.f32 %v1616, 1.442695
        %v1638 = vpow.pop %v1637
        %v1639 = vmul.f32 %v1617, 1.442695
        %v1640 = vpow.pop %v1639
        %v1641 = vmul.f32 %v1618, 1.442695
        %v1642 = vpow.pop %v1641
        %v1643 = vadd.f32 %v1620, 1.0
        %v1644 = vadd.f32 %v1622, 1.0
        %v1645 = vadd.f32 %v1624, 1.0
        %v1646 = vadd.f32 %v1626, 1.0
        %v1647 = vadd.f32 %v1628, 1.0
        %v1648 = vadd.f32 %v1630, 1.0
        %v1649 = vadd.f32 %v1632, 1.0
        %v1650 = vadd.f32 %v1634, 1.0
        %v1651 = vadd.f32 %v1636, 1.0
        %v1652 = vadd.f32 %v1638, 1.0
        %v1653 = vadd.f32 %v1640, 1.0
        %v1654 = vadd.f32 %v1642, 1.0
        %v1655 = vrcp.pop %v1643
        %v1656 = vmul.f32 1.0, %v1655
        %v1657 = vrcp.pop %v1644
        %v1658 = vmul.f32 1.0, %v1657
        %v1659 = vrcp.pop %v1645
        %v1660 = vmul.f32 1.0, %v1659
        %v1661 = vrcp.pop %v1646
        %v1662 = vmul.f32 1.0, %v1661
        %v1663 = vrcp.pop %v1647
        %v1664 = vmul.f32 1.0, %v1663
        %v1665 = vrcp.pop %v1648
        %v1666 = vmul.f32 1.0, %v1665
        %v1667 = vrcp.pop %v1649
        %v1668 = vmul.f32 1.0, %v1667
        %v1669 = vrcp.pop %v1650
        %v1670 = vmul.f32 1.0, %v1669
        %v1671 = vrcp.pop %v1651
        %v1672 = vmul.f32 1.0, %v1671
        %v1673 = vrcp.pop %v1652
        %v1674 = vmul.f32 1.0, %v1673
        %v1675 = vrcp.pop %v1653
        %v1676 = vmul.f32 1.0, %v1675
        %v1677 = vrcp.pop %v1654
        %v1678 = vmul.f32 1.0, %v1677
        %v1679 = vmul.f32 %v1595, %v1656
        %v1680 = vmul.f32 %v1596, %v1658
        %v1681 = vmul.f32 %v1597, %v1660
        %v1682 = vmul.f32 %v1598, %v1662
        %v1683 = vmul.f32 %v1599, %v1664
        %v1684 = vmul.f32 %v1600, %v1666
        %v1685 = vmul.f32 %v1601, %v1668
        %v1686 = vmul.f32 %v1602, %v1670
        %v1687 = vmul.f32 %v1603, %v1672
        %v1688 = vmul.f32 %v1604, %v1674
        %v1689 = vmul.f32 %v1605, %v1676
        %v1690 = vmul.f32 %v1606, %v1678
        %v1691 = vpack.c.bf16 %v1680, %v1679
        %v1692 = vpack.c.bf16 %v1682, %v1681
        %v1693 = vpack.c.bf16 %v1684, %v1683
        %v1694 = vpack.c.bf16 %v1686, %v1685
        %v1695 = vpack.c.bf16 %v1688, %v1687
        %v1696 = vpack.c.bf16 %v1690, %v1689
        %v1703 = vunpack.c.l.b16 %v1691
        %v1704 = vunpack.c.h.b16 %v1691
        %v1705 = vunpack.c.l.b16 %v1692
        %v1706 = vunpack.c.h.b16 %v1692
        %v1707 = vunpack.c.l.b16 %v1693
        %v1708 = vunpack.c.h.b16 %v1693
        %v1709 = vunpack.c.l.b16 %v1694
        %v1710 = vunpack.c.h.b16 %v1694
        %v1711 = vunpack.c.l.b16 %v1695
        %v1712 = vunpack.c.h.b16 %v1695
        %v1713 = vunpack.c.l.b16 %v1696
        %v1714 = vunpack.c.h.b16 %v1696
        %v1715 = vpack.c.b16 %v1703, %v1703
        %v1716 = vpack.c.b16 %v1704, %v1704
        %v1717 = vpack.c.b16 %v1705, %v1705
        %v1718 = vpack.c.b16 %v1706, %v1706
        %v1719 = vpack.c.b16 %v1707, %v1707
        %v1720 = vpack.c.b16 %v1708, %v1708
        %v1721 = vpack.c.b16 %v1709, %v1709
        %v1722 = vpack.c.b16 %v1710, %v1710
        %v1723 = vpack.c.b16 %v1711, %v1711
        %v1724 = vpack.c.b16 %v1712, %v1712
        %v1725 = vpack.c.b16 %v1713, %v1713
        %v1726 = vpack.c.b16 %v1714, %v1714
        %1739 = vst [vmem:[#allocation2] sm:$0xf] %v1715
        %1740 = vst [vmem:[#allocation2 + $0x4] sm:$0xf] %v1716
        %1741 = vst [vmem:[#allocation2 + $0x8] sm:$0xf] %v1717
        %1742 = vst [vmem:[#allocation2 + $0xc] sm:$0xf] %v1718
        %1743 = vst [vmem:[#allocation2 + $0x10] sm:$0xf] %v1719
        %1744 = vst [vmem:[#allocation2 + $0x14] sm:$0xf] %v1720
        %1745 = vst [vmem:[#allocation2 + $0x18] sm:$0xf] %v1721
        %1746 = vst [vmem:[#allocation2 + $0x1c] sm:$0xf] %v1722
        %1747 = vst [vmem:[#allocation2 + $0x20] sm:$0xf] %v1723
        %1748 = vst [vmem:[#allocation2 + $0x24] sm:$0xf] %v1724
        %1749 = vst [vmem:[#allocation2 + $0x28] sm:$0xf] %v1725
        %1750 = vst [vmem:[#allocation2 + $0x2c] sm:$0xf] %v1726
        %p1751 = scmp.eq.s32.totalorder %s28, 0
        // Predicated region
        $region57: #{tpu_custom_call.1} parent=55 // pred_check
          %p1752 = pneg %p1751
        $region58: #{tpu_custom_call.1} parent=55 // pred_check_branch
          %1754 = sbr.rel (%p1752) target = $region60
        $region59: #{tpu_custom_call.1} parent=55 // pred_region
          %1755 = vst [vmem:[#allocation2] sm:$0xf] 0
          %1756 = vst [vmem:[#allocation2 + $0x4] sm:$0xf] 0
        $region60: #{tpu_custom_call.1} parent=55 // pred_fallthru
          _
        %p1757 = scmp.eq.s32.totalorder %s28, 3
        // Predicated region
        $region61: #{tpu_custom_call.1} parent=55 // pred_check
          %p1758 = pneg %p1757
        $region62: #{tpu_custom_call.1} parent=55 // pred_check_branch
          %1760 = sbr.rel (%p1758) target = $region64
        $region63: #{tpu_custom_call.1} parent=55 // pred_region
          %s1761 = scalar_lea.vmem [#allocation2], 40
          %1762 = vst [vmem:[%s1761] sm:$0xf] 0
          %1763 = vst [vmem:[%s1761 + $0x4] sm:$0xf] 0
        $region64: #{tpu_custom_call.1} parent=55 // pred_fallthru
          _
        %v1764 = vld [vmem:[#allocation2] sm:$0xf]
        %v1765 = vld [vmem:[#allocation2 + $0x4] sm:$0xf]
        %v1766 = vld [vmem:[#allocation2 + $0x8] sm:$0xf]
        %v1767 = vld [vmem:[#allocation2 + $0xc] sm:$0xf]
        %v1768 = vld [vmem:[#allocation2 + $0x10] sm:$0xf]
        %v1769 = vld [vmem:[#allocation2 + $0x14] sm:$0xf]
        %v1770 = vld [vmem:[#allocation2 + $0x18] sm:$0xf]
        %v1771 = vld [vmem:[#allocation2 + $0x1c] sm:$0xf]
        %v1772 = vld [vmem:[#allocation2 + $0x20] sm:$0xf]
        %v1773 = vld [vmem:[#allocation2 + $0x24] sm:$0xf]
        %v1774 = vld [vmem:[#allocation2 + $0x28] sm:$0xf]
        %v1775 = vld [vmem:[#allocation2 + $0x2c] sm:$0xf]
        %v1788 = vunpack.c.l.b16 %v1764
        %v1789 = vunpack.c.l.b16 %v1765
        %v1790 = vunpack.c.l.b16 %v1766
        %v1791 = vunpack.c.l.b16 %v1767
        %v1792 = vunpack.c.l.b16 %v1768
        %v1793 = vunpack.c.l.b16 %v1769
        %v1794 = vunpack.c.l.b16 %v1770
        %v1795 = vunpack.c.l.b16 %v1771
        %v1796 = vunpack.c.l.b16 %v1772
        %v1797 = vunpack.c.l.b16 %v1773
        %v1798 = vunpack.c.l.b16 %v1774
        %v1799 = vunpack.c.l.b16 %v1775
        %v1800 = vpack.c.b16 %v1789, %v1788
        %v1801 = vpack.c.b16 %v1791, %v1790
        %v1802 = vpack.c.b16 %v1793, %v1792
        %v1803 = vpack.c.b16 %v1795, %v1794
        %v1804 = vpack.c.b16 %v1797, %v1796
        %v1805 = vpack.c.b16 %v1799, %v1798
        %v1807 = vshrl.u32 %v1800, 16
        %v1809 = vrot.slane %v1807, 7
        %v1810 = vshll.u32 %v1800, 16
        %v1812 = vor.u32 %v1809, %v1810
        %v1814 = vshrl.u32 %v1801, 16
        %v1816 = vrot.slane %v1814, 7
        %v1817 = vshll.u32 %v1801, 16
        %v1819 = vor.u32 %v1816, %v1817
        %v1821 = vshrl.u32 %v1802, 16
        %v1823 = vrot.slane %v1821, 7
        %v1824 = vshll.u32 %v1802, 16
        %v1826 = vor.u32 %v1823, %v1824
        %v1828 = vshrl.u32 %v1803, 16
        %v1830 = vrot.slane %v1828, 7
        %v1831 = vshll.u32 %v1803, 16
        %v1833 = vor.u32 %v1830, %v1831
        %v1835 = vshrl.u32 %v1804, 16
        %v1837 = vrot.slane %v1835, 7
        %v1838 = vshll.u32 %v1804, 16
        %v1840 = vor.u32 %v1837, %v1838
        %v1842 = vshrl.u32 %v1805, 16
        %v1844 = vrot.slane %v1842, 7
        %v1845 = vshll.u32 %v1805, 16
        %v1847 = vor.u32 %v1844, %v1845
        %v1854 = vsel %vm602, 0, %v1812
        %v1855 = vsel %vm602, 0, %v1819
        %v1856 = vsel %vm602, 0, %v1826
        %v1857 = vsel %vm602, 0, %v1833
        %v1858 = vsel %vm602, 0, %v1840
        %v1859 = vsel %vm602, 0, %v1847
        %v1860 = vrot.slane %v1810, 1
        %v1861 = vor.u32 %v1807, %v1860
        %v1862 = vrot.slane %v1817, 1
        %v1863 = vor.u32 %v1814, %v1862
        %v1864 = vrot.slane %v1824, 1
        %v1865 = vor.u32 %v1821, %v1864
        %v1866 = vrot.slane %v1831, 1
        %v1867 = vor.u32 %v1828, %v1866
        %v1868 = vrot.slane %v1838, 1
        %v1869 = vor.u32 %v1835, %v1868
        %v1870 = vrot.slane %v1845, 1
        %v1871 = vor.u32 %v1842, %v1870
        %v1878 = vsel %vm637, %v1861, 0
        %v1879 = vsel %vm637, %v1863, 0
        %v1880 = vsel %vm637, %v1865, 0
        %v1881 = vsel %vm637, %v1867, 0
        %v1882 = vsel %vm637, %v1869, 0
        %v1883 = vsel %vm637, %v1871, 0
        %v1884 = vld [vmem:[%s6] sm:$0xf]
        %v1885 = vld [vmem:[%s6 + $0x4] sm:$0xf]
        %v1886 = vld [vmem:[%s6 + $0x8] sm:$0xf]
        %v1887 = vld [vmem:[%s6 + $0xc] sm:$0xf]
        %v1888 = vld [vmem:[%s6 + $0x10] sm:$0xf]
        %v1889 = vld [vmem:[%s6 + $0x14] sm:$0xf]
        %v1890 = vld [vmem:[%s6 + $0x18] sm:$0xf]
        %v1891 = vld [vmem:[%s6 + $0x1c] sm:$0xf]
        %v1892 = vld [vmem:[%s6 + $0x20] sm:$0xf]
        %v1893 = vld [vmem:[%s6 + $0x24] sm:$0xf]
        %v1894 = vld [vmem:[%s6 + $0x28] sm:$0xf]
        %v1895 = vld [vmem:[%s6 + $0x2c] sm:$0xf]
        %v1896 = vld [vmem:[%s6 + $0x30] sm:$0xf]
        %v1897 = vld [vmem:[%s6 + $0x34] sm:$0xf]
        %v1898 = vld [vmem:[%s6 + $0x38] sm:$0xf]
        %v1899 = vld [vmem:[%s6 + $0x3c] sm:$0xf]
        %s1900 = scalar_lea.vmem %s6, 64
        %v1901 = vld [vmem:[%s1900] sm:$0xf]
        %v1902 = vld [vmem:[%s1900 + $0x4] sm:$0xf]
        %v1903 = vld [vmem:[%s1900 + $0x8] sm:$0xf]
        %v1904 = vld [vmem:[%s1900 + $0xc] sm:$0xf]
        %v1905 = vld [vmem:[%s1900 + $0x10] sm:$0xf]
        %v1906 = vld [vmem:[%s1900 + $0x14] sm:$0xf]
        %v1907 = vld [vmem:[%s1900 + $0x18] sm:$0xf]
        %v1908 = vld [vmem:[%s1900 + $0x1c] sm:$0xf]
        %v1909 = vld [vmem:[%s1900 + $0x20] sm:$0xf]
        %v1910 = vld [vmem:[%s1900 + $0x24] sm:$0xf]
        %v1911 = vld [vmem:[%s1900 + $0x28] sm:$0xf]
        %v1912 = vld [vmem:[%s1900 + $0x2c] sm:$0xf]
        %v1913 = vld [vmem:[%s1900 + $0x30] sm:$0xf]
        %v1914 = vld [vmem:[%s1900 + $0x34] sm:$0xf]
        %v1915 = vld [vmem:[%s1900 + $0x38] sm:$0xf]
        %v1916 = vld [vmem:[%s1900 + $0x3c] sm:$0xf]
        %v1937 = vunpack.c.l.b16 %v1901
        %v1938 = vunpack.c.l.b16 %v1902
        %v1939 = vunpack.c.l.b16 %v1903
        %v1940 = vunpack.c.l.b16 %v1904
        %v1941 = vunpack.c.l.b16 %v1905
        %v1942 = vunpack.c.l.b16 %v1906
        %v1943 = vunpack.c.l.b16 %v1907
        %v1944 = vunpack.c.l.b16 %v1908
        %v1945 = vunpack.c.l.b16 %v1909
        %v1946 = vunpack.c.l.b16 %v1910
        %v1947 = vunpack.c.l.b16 %v1911
        %v1948 = vunpack.c.l.b16 %v1912
        %v1949 = vunpack.c.l.b16 %v1913
        %v1950 = vunpack.c.l.b16 %v1914
        %v1951 = vunpack.c.l.b16 %v1915
        %v1952 = vunpack.c.l.b16 %v1916
        %v1953 = vpack.c.b16 %v1938, %v1937
        %v1954 = vpack.c.b16 %v1940, %v1939
        %v1955 = vpack.c.b16 %v1942, %v1941
        %v1956 = vpack.c.b16 %v1944, %v1943
        %v1957 = vpack.c.b16 %v1946, %v1945
        %v1958 = vpack.c.b16 %v1948, %v1947
        %v1959 = vpack.c.b16 %v1950, %v1949
        %v1960 = vpack.c.b16 %v1952, %v1951
        %1969 = vmatprep.subr.bf16.mxu0 0
        %1970 = vmatpush1.bf16.msra.mxu0 %v1960
        %1971 = vmatprep.subr.bf16.mxu0 0
        %1972 = vmatpush1.bf16.msra.mxu0 %v1959
        %1973 = vmatprep.subr.bf16.mxu0 0
        %1974 = vmatpush1.bf16.msra.mxu0 %v1958
        %1975 = vmatprep.subr.bf16.mxu0 0
        %1976 = vmatpush1.bf16.msra.mxu0 %v1957
        %1977 = vmatprep.subr.bf16.mxu0 0
        %1978 = vmatpush1.bf16.msra.mxu0 %v1956
        %1979 = vmatprep.subr.bf16.mxu0 0
        %1980 = vmatpush1.bf16.msra.mxu0 %v1955
        %1981 = vmatprep.subr.bf16.mxu0 0
        %1982 = vmatpush1.bf16.msra.mxu0 %v1954
        %1983 = vmatprep.subr.bf16.mxu0 0
        %1984 = vmatpush1.bf16.msra.mxu0 %v1953
        %1985 = vmatprep.subr.bf16.mxu0 0
        %1986 = vmatpush2.bf16.msra.mxu0 0
        %1987 = vmatprep.subr.bf16.mxu0 0
        %1988 = vmatpush2.bf16.msra.mxu0 0
        %1989 = vmatprep.subr.bf16.mxu0 0
        %1990 = vmatpush2.bf16.msra.mxu0 0
        %1991 = vmatprep.subr.bf16.mxu0 0
        %1992 = vmatpush2.bf16.msra.mxu0 0
        %1993 = vmatprep.subr.bf16.mxu0 0
        %1994 = vmatpush2.bf16.msra.mxu0 0
        %1995 = vmatprep.subr.bf16.mxu0 0
        %1996 = vmatpush2.bf16.msra.mxu0 0
        %1997 = vmatprep.subr.bf16.mxu0 0
        %1998 = vmatpush2.bf16.msra.mxu0 0
        %1999 = vmatprep.subr.bf16.mxu0 0
        %2000 = vmatpush2.bf16.msra.mxu0 0
        %2001 = vmatprep.mubr.bf16.mxu0 0
        %2002 = vmatmul.mubr.bf16.gmra.mxu0 %v1800
        %v2003 = vpop.f32.mrf.mxu0
        %v2004 = vadd.f32 0.0, %v2003
        %v2005 = vpop.f32.mrf.mxu0
        %v2006 = vpop.f32.mrf.mxu0
        %v2007 = vadd.f32 0.0, %v2006
        %v2008 = vpop.f32.mrf.mxu0
        %2009 = vmatprep.mubr.bf16.mxu0 0
        %2010 = vmatmul.mubr.bf16.gmra.mxu0 %v1801
        %v2011 = vpop.f32.mrf.mxu0
        %v2012 = vadd.f32 0.0, %v2011
        %v2013 = vpop.f32.mrf.mxu0
        %v2014 = vpop.f32.mrf.mxu0
        %v2015 = vadd.f32 0.0, %v2014
        %v2016 = vpop.f32.mrf.mxu0
        %2017 = vmatprep.mubr.bf16.mxu0 0
        %2018 = vmatmul.mubr.bf16.gmra.mxu0 %v1802
        %v2019 = vpop.f32.mrf.mxu0
        %v2020 = vadd.f32 0.0, %v2019
        %v2021 = vpop.f32.mrf.mxu0
        %v2022 = vpop.f32.mrf.mxu0
        %v2023 = vadd.f32 0.0, %v2022
        %v2024 = vpop.f32.mrf.mxu0
        %2025 = vmatprep.mubr.bf16.mxu0 0
        %2026 = vmatmul.mubr.bf16.gmra.mxu0 %v1803
        %v2027 = vpop.f32.mrf.mxu0
        %v2028 = vadd.f32 0.0, %v2027
        %v2029 = vpop.f32.mrf.mxu0
        %v2030 = vpop.f32.mrf.mxu0
        %v2031 = vadd.f32 0.0, %v2030
        %v2032 = vpop.f32.mrf.mxu0
        %2033 = vdwg.mxu0
        %v2050 = vunpack.c.l.b16 %v1884
        %v2051 = vunpack.c.l.b16 %v1885
        %v2052 = vunpack.c.l.b16 %v1886
        %v2053 = vunpack.c.l.b16 %v1887
        %v2054 = vunpack.c.l.b16 %v1888
        %v2055 = vunpack.c.l.b16 %v1889
        %v2056 = vunpack.c.l.b16 %v1890
        %v2057 = vunpack.c.l.b16 %v1891
        %v2058 = vunpack.c.l.b16 %v1892
        %v2059 = vunpack.c.l.b16 %v1893
        %v2060 = vunpack.c.l.b16 %v1894
        %v2061 = vunpack.c.l.b16 %v1895
        %v2062 = vunpack.c.l.b16 %v1896
        %v2063 = vunpack.c.l.b16 %v1897
        %v2064 = vunpack.c.l.b16 %v1898
        %v2065 = vunpack.c.l.b16 %v1899
        %v2066 = vpack.c.b16 %v2051, %v2050
        %v2067 = vpack.c.b16 %v2053, %v2052
        %v2068 = vpack.c.b16 %v2055, %v2054
        %v2069 = vpack.c.b16 %v2057, %v2056
        %v2070 = vpack.c.b16 %v2059, %v2058
        %v2071 = vpack.c.b16 %v2061, %v2060
        %v2072 = vpack.c.b16 %v2063, %v2062
        %v2073 = vpack.c.b16 %v2065, %v2064
        %2082 = vmatprep.subr.bf16.mxu0 0
        %2083 = vmatpush1.bf16.msra.mxu0 %v2073
        %2084 = vmatprep.subr.bf16.mxu0 0
        %2085 = vmatpush1.bf16.msra.mxu0 %v2072
        %2086 = vmatprep.subr.bf16.mxu0 0
        %2087 = vmatpush1.bf16.msra.mxu0 %v2071
        %2088 = vmatprep.subr.bf16.mxu0 0
        %2089 = vmatpush1.bf16.msra.mxu0 %v2070
        %2090 = vmatprep.subr.bf16.mxu0 0
        %2091 = vmatpush1.bf16.msra.mxu0 %v2069
        %2092 = vmatprep.subr.bf16.mxu0 0
        %2093 = vmatpush1.bf16.msra.mxu0 %v2068
        %2094 = vmatprep.subr.bf16.mxu0 0
        %2095 = vmatpush1.bf16.msra.mxu0 %v2067
        %2096 = vmatprep.subr.bf16.mxu0 0
        %2097 = vmatpush1.bf16.msra.mxu0 %v2066
        %2098 = vmatprep.subr.bf16.mxu0 0
        %2099 = vmatpush2.bf16.msra.mxu0 0
        %2100 = vmatprep.subr.bf16.mxu0 0
        %2101 = vmatpush2.bf16.msra.mxu0 0
        %2102 = vmatprep.subr.bf16.mxu0 0
        %2103 = vmatpush2.bf16.msra.mxu0 0
        %2104 = vmatprep.subr.bf16.mxu0 0
        %2105 = vmatpush2.bf16.msra.mxu0 0
        %2106 = vmatprep.subr.bf16.mxu0 0
        %2107 = vmatpush2.bf16.msra.mxu0 0
        %2108 = vmatprep.subr.bf16.mxu0 0
        %2109 = vmatpush2.bf16.msra.mxu0 0
        %2110 = vmatprep.subr.bf16.mxu0 0
        %2111 = vmatpush2.bf16.msra.mxu0 0
        %2112 = vmatprep.subr.bf16.mxu0 0
        %2113 = vmatpush2.bf16.msra.mxu0 0
        %2114 = vmatprep.mubr.bf16.mxu0 0
        %2115 = vmatmul.mubr.bf16.gmra.mxu0 %v1854
        %v2116 = vpop.f32.mrf.mxu0
        %v2117 = vadd.f32 %v2004, %v2116
        %v2118 = vpop.f32.mrf.mxu0
        %v2119 = vpop.f32.mrf.mxu0
        %v2120 = vadd.f32 %v2007, %v2119
        %v2121 = vpop.f32.mrf.mxu0
        %2122 = vmatprep.mubr.bf16.mxu0 0
        %2123 = vmatmul.mubr.bf16.gmra.mxu0 %v1855
        %v2124 = vpop.f32.mrf.mxu0
        %v2125 = vadd.f32 %v2012, %v2124
        %v2126 = vpop.f32.mrf.mxu0
        %v2127 = vpop.f32.mrf.mxu0
        %v2128 = vadd.f32 %v2015, %v2127
        %v2129 = vpop.f32.mrf.mxu0
        %2130 = vmatprep.mubr.bf16.mxu0 0
        %2131 = vmatmul.mubr.bf16.gmra.mxu0 %v1856
        %v2132 = vpop.f32.mrf.mxu0
        %v2133 = vadd.f32 %v2020, %v2132
        %v2134 = vpop.f32.mrf.mxu0
        %v2135 = vpop.f32.mrf.mxu0
        %v2136 = vadd.f32 %v2023, %v2135
        %v2137 = vpop.f32.mrf.mxu0
        %2138 = vmatprep.mubr.bf16.mxu0 0
        %2139 = vmatmul.mubr.bf16.gmra.mxu0 %v1857
        %v2140 = vpop.f32.mrf.mxu0
        %v2141 = vadd.f32 %v2028, %v2140
        %v2142 = vpop.f32.mrf.mxu0
        %v2143 = vpop.f32.mrf.mxu0
        %v2144 = vadd.f32 %v2031, %v2143
        %v2145 = vpop.f32.mrf.mxu0
        %2146 = vdwg.mxu0
        %s2147 = scalar_lea.vmem %s6, 128
        %v2148 = vld [vmem:[%s2147] sm:$0xf]
        %v2149 = vld [vmem:[%s2147 + $0x4] sm:$0xf]
        %v2150 = vld [vmem:[%s2147 + $0x8] sm:$0xf]
        %v2151 = vld [vmem:[%s2147 + $0xc] sm:$0xf]
        %v2152 = vld [vmem:[%s2147 + $0x10] sm:$0xf]
        %v2153 = vld [vmem:[%s2147 + $0x14] sm:$0xf]
        %v2154 = vld [vmem:[%s2147 + $0x18] sm:$0xf]
        %v2155 = vld [vmem:[%s2147 + $0x1c] sm:$0xf]
        %v2156 = vld [vmem:[%s2147 + $0x20] sm:$0xf]
        %v2157 = vld [vmem:[%s2147 + $0x24] sm:$0xf]
        %v2158 = vld [vmem:[%s2147 + $0x28] sm:$0xf]
        %v2159 = vld [vmem:[%s2147 + $0x2c] sm:$0xf]
        %v2160 = vld [vmem:[%s2147 + $0x30] sm:$0xf]
        %v2161 = vld [vmem:[%s2147 + $0x34] sm:$0xf]
        %v2162 = vld [vmem:[%s2147 + $0x38] sm:$0xf]
        %v2163 = vld [vmem:[%s2147 + $0x3c] sm:$0xf]
        %v2180 = vunpack.c.l.b16 %v2148
        %v2181 = vunpack.c.l.b16 %v2149
        %v2182 = vunpack.c.l.b16 %v2150
        %v2183 = vunpack.c.l.b16 %v2151
        %v2184 = vunpack.c.l.b16 %v2152
        %v2185 = vunpack.c.l.b16 %v2153
        %v2186 = vunpack.c.l.b16 %v2154
        %v2187 = vunpack.c.l.b16 %v2155
        %v2188 = vunpack.c.l.b16 %v2156
        %v2189 = vunpack.c.l.b16 %v2157
        %v2190 = vunpack.c.l.b16 %v2158
        %v2191 = vunpack.c.l.b16 %v2159
        %v2192 = vunpack.c.l.b16 %v2160
        %v2193 = vunpack.c.l.b16 %v2161
        %v2194 = vunpack.c.l.b16 %v2162
        %v2195 = vunpack.c.l.b16 %v2163
        %v2196 = vpack.c.b16 %v2181, %v2180
        %v2197 = vpack.c.b16 %v2183, %v2182
        %v2198 = vpack.c.b16 %v2185, %v2184
        %v2199 = vpack.c.b16 %v2187, %v2186
        %v2200 = vpack.c.b16 %v2189, %v2188
        %v2201 = vpack.c.b16 %v2191, %v2190
        %v2202 = vpack.c.b16 %v2193, %v2192
        %v2203 = vpack.c.b16 %v2195, %v2194
        %2212 = vmatprep.subr.bf16.mxu0 0
        %2213 = vmatpush1.bf16.msra.mxu0 %v2203
        %2214 = vmatprep.subr.bf16.mxu0 0
        %2215 = vmatpush1.bf16.msra.mxu0 %v2202
        %2216 = vmatprep.subr.bf16.mxu0 0
        %2217 = vmatpush1.bf16.msra.mxu0 %v2201
        %2218 = vmatprep.subr.bf16.mxu0 0
        %2219 = vmatpush1.bf16.msra.mxu0 %v2200
        %2220 = vmatprep.subr.bf16.mxu0 0
        %2221 = vmatpush1.bf16.msra.mxu0 %v2199
        %2222 = vmatprep.subr.bf16.mxu0 0
        %2223 = vmatpush1.bf16.msra.mxu0 %v2198
        %2224 = vmatprep.subr.bf16.mxu0 0
        %2225 = vmatpush1.bf16.msra.mxu0 %v2197
        %2226 = vmatprep.subr.bf16.mxu0 0
        %2227 = vmatpush1.bf16.msra.mxu0 %v2196
        %2228 = vmatprep.subr.bf16.mxu0 0
        %2229 = vmatpush2.bf16.msra.mxu0 0
        %2230 = vmatprep.subr.bf16.mxu0 0
        %2231 = vmatpush2.bf16.msra.mxu0 0
        %2232 = vmatprep.subr.bf16.mxu0 0
        %2233 = vmatpush2.bf16.msra.mxu0 0
        %2234 = vmatprep.subr.bf16.mxu0 0
        %2235 = vmatpush2.bf16.msra.mxu0 0
        %2236 = vmatprep.subr.bf16.mxu0 0
        %2237 = vmatpush2.bf16.msra.mxu0 0
        %2238 = vmatprep.subr.bf16.mxu0 0
        %2239 = vmatpush2.bf16.msra.mxu0 0
        %2240 = vmatprep.subr.bf16.mxu0 0
        %2241 = vmatpush2.bf16.msra.mxu0 0
        %2242 = vmatprep.subr.bf16.mxu0 0
        %2243 = vmatpush2.bf16.msra.mxu0 0
        %2244 = vmatprep.mubr.bf16.mxu0 0
        %2245 = vmatmul.mubr.bf16.gmra.mxu0 %v1878
        %v2246 = vpop.f32.mrf.mxu0
        %v2247 = vadd.f32 0.0, %v2246
        %v2248 = vpop.f32.mrf.mxu0
        %v2249 = vpop.f32.mrf.mxu0
        %v2250 = vadd.f32 0.0, %v2249
        %v2251 = vpop.f32.mrf.mxu0
        %2252 = vmatprep.mubr.bf16.mxu0 0
        %2253 = vmatmul.mubr.bf16.gmra.mxu0 %v1879
        %v2254 = vpop.f32.mrf.mxu0
        %v2255 = vadd.f32 0.0, %v2254
        %v2256 = vpop.f32.mrf.mxu0
        %v2257 = vpop.f32.mrf.mxu0
        %v2258 = vadd.f32 0.0, %v2257
        %v2259 = vpop.f32.mrf.mxu0
        %2260 = vmatprep.mubr.bf16.mxu0 0
        %2261 = vmatmul.mubr.bf16.gmra.mxu0 %v1880
        %v2262 = vpop.f32.mrf.mxu0
        %v2263 = vadd.f32 0.0, %v2262
        %v2264 = vpop.f32.mrf.mxu0
        %v2265 = vpop.f32.mrf.mxu0
        %v2266 = vadd.f32 0.0, %v2265
        %v2267 = vpop.f32.mrf.mxu0
        %2268 = vmatprep.mubr.bf16.mxu0 0
        %2269 = vmatmul.mubr.bf16.gmra.mxu0 %v1881
        %v2270 = vpop.f32.mrf.mxu0
        %v2271 = vadd.f32 0.0, %v2270
        %v2272 = vpop.f32.mrf.mxu0
        %v2273 = vpop.f32.mrf.mxu0
        %v2274 = vadd.f32 0.0, %v2273
        %v2275 = vpop.f32.mrf.mxu0
        %2276 = vdwg.mxu0
        %v2277 = vadd.f32 %v2117, %v2247
        %v2278 = vadd.f32 %v2120, %v2250
        %v2279 = vadd.f32 %v2125, %v2255
        %v2280 = vadd.f32 %v2128, %v2258
        %v2281 = vadd.f32 %v2133, %v2263
        %v2282 = vadd.f32 %v2136, %v2266
        %v2283 = vadd.f32 %v2141, %v2271
        %v2284 = vadd.f32 %v2144, %v2274
        %s2285 = scalar_lea.vmem %s6, 192
        %v2286 = vld [vmem:[%s2285] sm:$0xf]
        %v2287 = vld [vmem:[%s2285 + $0x4] sm:$0xf]
        %v2288 = vld [vmem:[%s2285 + $0x8] sm:$0xf]
        %v2289 = vld [vmem:[%s2285 + $0xc] sm:$0xf]
        %v2290 = vld [vmem:[%s2285 + $0x10] sm:$0xf]
        %v2291 = vld [vmem:[%s2285 + $0x14] sm:$0xf]
        %v2292 = vld [vmem:[%s2285 + $0x18] sm:$0xf]
        %v2293 = vld [vmem:[%s2285 + $0x1c] sm:$0xf]
        %v2294 = vld [vmem:[%s2285 + $0x20] sm:$0xf]
        %v2295 = vld [vmem:[%s2285 + $0x24] sm:$0xf]
        %v2296 = vld [vmem:[%s2285 + $0x28] sm:$0xf]
        %v2297 = vld [vmem:[%s2285 + $0x2c] sm:$0xf]
        %v2298 = vld [vmem:[%s2285 + $0x30] sm:$0xf]
        %v2299 = vld [vmem:[%s2285 + $0x34] sm:$0xf]
        %v2300 = vld [vmem:[%s2285 + $0x38] sm:$0xf]
        %v2301 = vld [vmem:[%s2285 + $0x3c] sm:$0xf]
        %v2318 = vunpack.c.l.b16 %v2286
        %v2319 = vunpack.c.l.b16 %v2287
        %v2320 = vunpack.c.l.b16 %v2288
        %v2321 = vunpack.c.l.b16 %v2289
        %v2322 = vunpack.c.l.b16 %v2290
        %v2323 = vunpack.c.l.b16 %v2291
        %v2324 = vunpack.c.l.b16 %v2292
        %v2325 = vunpack.c.l.b16 %v2293
        %v2326 = vunpack.c.l.b16 %v2294
        %v2327 = vunpack.c.l.b16 %v2295
        %v2328 = vunpack.c.l.b16 %v2296
        %v2329 = vunpack.c.l.b16 %v2297
        %v2330 = vunpack.c.l.b16 %v2298
        %v2331 = vunpack.c.l.b16 %v2299
        %v2332 = vunpack.c.l.b16 %v2300
        %v2333 = vunpack.c.l.b16 %v2301
        %v2334 = vpack.c.b16 %v2319, %v2318
        %v2335 = vpack.c.b16 %v2321, %v2320
        %v2336 = vpack.c.b16 %v2323, %v2322
        %v2337 = vpack.c.b16 %v2325, %v2324
        %v2338 = vpack.c.b16 %v2327, %v2326
        %v2339 = vpack.c.b16 %v2329, %v2328
        %v2340 = vpack.c.b16 %v2331, %v2330
        %v2341 = vpack.c.b16 %v2333, %v2332
        %2350 = vmatprep.subr.bf16.mxu0 0
        %2351 = vmatpush1.bf16.msra.mxu0 %v2341
        %2352 = vmatprep.subr.bf16.mxu0 0
        %2353 = vmatpush1.bf16.msra.mxu0 %v2340
        %2354 = vmatprep.subr.bf16.mxu0 0
        %2355 = vmatpush1.bf16.msra.mxu0 %v2339
        %2356 = vmatprep.subr.bf16.mxu0 0
        %2357 = vmatpush1.bf16.msra.mxu0 %v2338
        %2358 = vmatprep.subr.bf16.mxu0 0
        %2359 = vmatpush1.bf16.msra.mxu0 %v2337
        %2360 = vmatprep.subr.bf16.mxu0 0
        %2361 = vmatpush1.bf16.msra.mxu0 %v2336
        %2362 = vmatprep.subr.bf16.mxu0 0
        %2363 = vmatpush1.bf16.msra.mxu0 %v2335
        %2364 = vmatprep.subr.bf16.mxu0 0
        %2365 = vmatpush1.bf16.msra.mxu0 %v2334
        %2366 = vmatprep.subr.bf16.mxu0 0
        %2367 = vmatpush2.bf16.msra.mxu0 0
        %2368 = vmatprep.subr.bf16.mxu0 0
        %2369 = vmatpush2.bf16.msra.mxu0 0
        %2370 = vmatprep.subr.bf16.mxu0 0
        %2371 = vmatpush2.bf16.msra.mxu0 0
        %2372 = vmatprep.subr.bf16.mxu0 0
        %2373 = vmatpush2.bf16.msra.mxu0 0
        %2374 = vmatprep.subr.bf16.mxu0 0
        %2375 = vmatpush2.bf16.msra.mxu0 0
        %2376 = vmatprep.subr.bf16.mxu0 0
        %2377 = vmatpush2.bf16.msra.mxu0 0
        %2378 = vmatprep.subr.bf16.mxu0 0
        %2379 = vmatpush2.bf16.msra.mxu0 0
        %2380 = vmatprep.subr.bf16.mxu0 0
        %2381 = vmatpush2.bf16.msra.mxu0 0
        %2382 = vmatprep.mubr.bf16.mxu0 0
        %2383 = vmatmul.mubr.bf16.gmra.mxu0 %v1855
        %v2384 = vpop.f32.mrf.mxu0
        %v2385 = vadd.f32 0.0, %v2384
        %v2386 = vpop.f32.mrf.mxu0
        %v2387 = vpop.f32.mrf.mxu0
        %v2388 = vadd.f32 0.0, %v2387
        %v2389 = vpop.f32.mrf.mxu0
        %2390 = vmatprep.mubr.bf16.mxu0 0
        %2391 = vmatmul.mubr.bf16.gmra.mxu0 %v1856
        %v2392 = vpop.f32.mrf.mxu0
        %v2393 = vadd.f32 0.0, %v2392
        %v2394 = vpop.f32.mrf.mxu0
        %v2395 = vpop.f32.mrf.mxu0
        %v2396 = vadd.f32 0.0, %v2395
        %v2397 = vpop.f32.mrf.mxu0
        %2398 = vmatprep.mubr.bf16.mxu0 0
        %2399 = vmatmul.mubr.bf16.gmra.mxu0 %v1857
        %v2400 = vpop.f32.mrf.mxu0
        %v2401 = vadd.f32 0.0, %v2400
        %v2402 = vpop.f32.mrf.mxu0
        %v2403 = vpop.f32.mrf.mxu0
        %v2404 = vadd.f32 0.0, %v2403
        %v2405 = vpop.f32.mrf.mxu0
        %2406 = vmatprep.mubr.bf16.mxu0 0
        %2407 = vmatmul.mubr.bf16.gmra.mxu0 %v1858
        %v2408 = vpop.f32.mrf.mxu0
        %v2409 = vadd.f32 0.0, %v2408
        %v2410 = vpop.f32.mrf.mxu0
        %v2411 = vpop.f32.mrf.mxu0
        %v2412 = vadd.f32 0.0, %v2411
        %v2413 = vpop.f32.mrf.mxu0
        %2414 = vdwg.mxu0
        %v2415 = vadd.f32 %v2277, %v2385
        %v2416 = vadd.f32 %v2278, %v2388
        %v2417 = vadd.f32 %v2279, %v2393
        %v2418 = vadd.f32 %v2280, %v2396
        %v2419 = vadd.f32 %v2281, %v2401
        %v2420 = vadd.f32 %v2282, %v2404
        %v2421 = vadd.f32 %v2283, %v2409
        %v2422 = vadd.f32 %v2284, %v2412
        %s2423 = scalar_lea.vmem %s6, 256
        %v2424 = vld [vmem:[%s2423] sm:$0xf]
        %v2425 = vld [vmem:[%s2423 + $0x4] sm:$0xf]
        %v2426 = vld [vmem:[%s2423 + $0x8] sm:$0xf]
        %v2427 = vld [vmem:[%s2423 + $0xc] sm:$0xf]
        %v2428 = vld [vmem:[%s2423 + $0x10] sm:$0xf]
        %v2429 = vld [vmem:[%s2423 + $0x14] sm:$0xf]
        %v2430 = vld [vmem:[%s2423 + $0x18] sm:$0xf]
        %v2431 = vld [vmem:[%s2423 + $0x1c] sm:$0xf]
        %v2432 = vld [vmem:[%s2423 + $0x20] sm:$0xf]
        %v2433 = vld [vmem:[%s2423 + $0x24] sm:$0xf]
        %v2434 = vld [vmem:[%s2423 + $0x28] sm:$0xf]
        %v2435 = vld [vmem:[%s2423 + $0x2c] sm:$0xf]
        %v2436 = vld [vmem:[%s2423 + $0x30] sm:$0xf]
        %v2437 = vld [vmem:[%s2423 + $0x34] sm:$0xf]
        %v2438 = vld [vmem:[%s2423 + $0x38] sm:$0xf]
        %v2439 = vld [vmem:[%s2423 + $0x3c] sm:$0xf]
        %v2457 = vunpack.c.l.b16 %v2424
        %v2458 = vunpack.c.l.b16 %v2425
        %v2459 = vunpack.c.l.b16 %v2426
        %v2460 = vunpack.c.l.b16 %v2427
        %v2461 = vunpack.c.l.b16 %v2428
        %v2462 = vunpack.c.l.b16 %v2429
        %v2463 = vunpack.c.l.b16 %v2430
        %v2464 = vunpack.c.l.b16 %v2431
        %v2465 = vunpack.c.l.b16 %v2432
        %v2466 = vunpack.c.l.b16 %v2433
        %v2467 = vunpack.c.l.b16 %v2434
        %v2468 = vunpack.c.l.b16 %v2435
        %v2469 = vunpack.c.l.b16 %v2436
        %v2470 = vunpack.c.l.b16 %v2437
        %v2471 = vunpack.c.l.b16 %v2438
        %v2472 = vunpack.c.l.b16 %v2439
        %v2473 = vpack.c.b16 %v2458, %v2457
        %v2474 = vpack.c.b16 %v2460, %v2459
        %v2475 = vpack.c.b16 %v2462, %v2461
        %v2476 = vpack.c.b16 %v2464, %v2463
        %v2477 = vpack.c.b16 %v2466, %v2465
        %v2478 = vpack.c.b16 %v2468, %v2467
        %v2479 = vpack.c.b16 %v2470, %v2469
        %v2480 = vpack.c.b16 %v2472, %v2471
        %2489 = vmatprep.subr.bf16.mxu0 0
        %2490 = vmatpush1.bf16.msra.mxu0 %v2480
        %2491 = vmatprep.subr.bf16.mxu0 0
        %2492 = vmatpush1.bf16.msra.mxu0 %v2479
        %2493 = vmatprep.subr.bf16.mxu0 0
        %2494 = vmatpush1.bf16.msra.mxu0 %v2478
        %2495 = vmatprep.subr.bf16.mxu0 0
        %2496 = vmatpush1.bf16.msra.mxu0 %v2477
        %2497 = vmatprep.subr.bf16.mxu0 0
        %2498 = vmatpush1.bf16.msra.mxu0 %v2476
        %2499 = vmatprep.subr.bf16.mxu0 0
        %2500 = vmatpush1.bf16.msra.mxu0 %v2475
        %2501 = vmatprep.subr.bf16.mxu0 0
        %2502 = vmatpush1.bf16.msra.mxu0 %v2474
        %2503 = vmatprep.subr.bf16.mxu0 0
        %2504 = vmatpush1.bf16.msra.mxu0 %v2473
        %2505 = vmatprep.subr.bf16.mxu0 0
        %2506 = vmatpush2.bf16.msra.mxu0 0
        %2507 = vmatprep.subr.bf16.mxu0 0
        %2508 = vmatpush2.bf16.msra.mxu0 0
        %2509 = vmatprep.subr.bf16.mxu0 0
        %2510 = vmatpush2.bf16.msra.mxu0 0
        %2511 = vmatprep.subr.bf16.mxu0 0
        %2512 = vmatpush2.bf16.msra.mxu0 0
        %2513 = vmatprep.subr.bf16.mxu0 0
        %2514 = vmatpush2.bf16.msra.mxu0 0
        %2515 = vmatprep.subr.bf16.mxu0 0
        %2516 = vmatpush2.bf16.msra.mxu0 0
        %2517 = vmatprep.subr.bf16.mxu0 0
        %2518 = vmatpush2.bf16.msra.mxu0 0
        %2519 = vmatprep.subr.bf16.mxu0 0
        %2520 = vmatpush2.bf16.msra.mxu0 0
        %2521 = vmatprep.mubr.bf16.mxu0 0
        %2522 = vmatmul.mubr.bf16.gmra.mxu0 %v1801
        %v2523 = vpop.f32.mrf.mxu0
        %v2524 = vadd.f32 0.0, %v2523
        %v2525 = vpop.f32.mrf.mxu0
        %v2526 = vpop.f32.mrf.mxu0
        %v2527 = vadd.f32 0.0, %v2526
        %v2528 = vpop.f32.mrf.mxu0
        %2529 = vmatprep.mubr.bf16.mxu0 0
        %2530 = vmatmul.mubr.bf16.gmra.mxu0 %v1802
        %v2531 = vpop.f32.mrf.mxu0
        %v2532 = vadd.f32 0.0, %v2531
        %v2533 = vpop.f32.mrf.mxu0
        %v2534 = vpop.f32.mrf.mxu0
        %v2535 = vadd.f32 0.0, %v2534
        %v2536 = vpop.f32.mrf.mxu0
        %2537 = vmatprep.mubr.bf16.mxu0 0
        %2538 = vmatmul.mubr.bf16.gmra.mxu0 %v1803
        %v2539 = vpop.f32.mrf.mxu0
        %v2540 = vadd.f32 0.0, %v2539
        %v2541 = vpop.f32.mrf.mxu0
        %v2542 = vpop.f32.mrf.mxu0
        %v2543 = vadd.f32 0.0, %v2542
        %v2544 = vpop.f32.mrf.mxu0
        %2545 = vmatprep.mubr.bf16.mxu0 0
        %2546 = vmatmul.mubr.bf16.gmra.mxu0 %v1804
        %v2547 = vpop.f32.mrf.mxu0
        %v2548 = vadd.f32 0.0, %v2547
        %v2549 = vpop.f32.mrf.mxu0
        %v2550 = vpop.f32.mrf.mxu0
        %v2551 = vadd.f32 0.0, %v2550
        %v2552 = vpop.f32.mrf.mxu0
        %2553 = vdwg.mxu0
        %v2554 = vadd.f32 %v2415, %v2524
        %v2555 = vadd.f32 %v2416, %v2527
        %v2556 = vadd.f32 %v2417, %v2532
        %v2557 = vadd.f32 %v2418, %v2535
        %v2558 = vadd.f32 %v2419, %v2540
        %v2559 = vadd.f32 %v2420, %v2543
        %v2560 = vadd.f32 %v2421, %v2548
        %v2561 = vadd.f32 %v2422, %v2551
        %s2562 = scalar_lea.vmem %s6, 320
        %v2563 = vld [vmem:[%s2562] sm:$0xf]
        %v2564 = vld [vmem:[%s2562 + $0x4] sm:$0xf]
        %v2565 = vld [vmem:[%s2562 + $0x8] sm:$0xf]
        %v2566 = vld [vmem:[%s2562 + $0xc] sm:$0xf]
        %v2567 = vld [vmem:[%s2562 + $0x10] sm:$0xf]
        %v2568 = vld [vmem:[%s2562 + $0x14] sm:$0xf]
        %v2569 = vld [vmem:[%s2562 + $0x18] sm:$0xf]
        %v2570 = vld [vmem:[%s2562 + $0x1c] sm:$0xf]
        %v2571 = vld [vmem:[%s2562 + $0x20] sm:$0xf]
        %v2572 = vld [vmem:[%s2562 + $0x24] sm:$0xf]
        %v2573 = vld [vmem:[%s2562 + $0x28] sm:$0xf]
        %v2574 = vld [vmem:[%s2562 + $0x2c] sm:$0xf]
        %v2575 = vld [vmem:[%s2562 + $0x30] sm:$0xf]
        %v2576 = vld [vmem:[%s2562 + $0x34] sm:$0xf]
        %v2577 = vld [vmem:[%s2562 + $0x38] sm:$0xf]
        %v2578 = vld [vmem:[%s2562 + $0x3c] sm:$0xf]
        %v2595 = vunpack.c.l.b16 %v2563
        %v2596 = vunpack.c.l.b16 %v2564
        %v2597 = vunpack.c.l.b16 %v2565
        %v2598 = vunpack.c.l.b16 %v2566
        %v2599 = vunpack.c.l.b16 %v2567
        %v2600 = vunpack.c.l.b16 %v2568
        %v2601 = vunpack.c.l.b16 %v2569
        %v2602 = vunpack.c.l.b16 %v2570
        %v2603 = vunpack.c.l.b16 %v2571
        %v2604 = vunpack.c.l.b16 %v2572
        %v2605 = vunpack.c.l.b16 %v2573
        %v2606 = vunpack.c.l.b16 %v2574
        %v2607 = vunpack.c.l.b16 %v2575
        %v2608 = vunpack.c.l.b16 %v2576
        %v2609 = vunpack.c.l.b16 %v2577
        %v2610 = vunpack.c.l.b16 %v2578
        %v2611 = vpack.c.b16 %v2596, %v2595
        %v2612 = vpack.c.b16 %v2598, %v2597
        %v2613 = vpack.c.b16 %v2600, %v2599
        %v2614 = vpack.c.b16 %v2602, %v2601
        %v2615 = vpack.c.b16 %v2604, %v2603
        %v2616 = vpack.c.b16 %v2606, %v2605
        %v2617 = vpack.c.b16 %v2608, %v2607
        %v2618 = vpack.c.b16 %v2610, %v2609
        %2627 = vmatprep.subr.bf16.mxu0 0
        %2628 = vmatpush1.bf16.msra.mxu0 %v2618
        %2629 = vmatprep.subr.bf16.mxu0 0
        %2630 = vmatpush1.bf16.msra.mxu0 %v2617
        %2631 = vmatprep.subr.bf16.mxu0 0
        %2632 = vmatpush1.bf16.msra.mxu0 %v2616
        %2633 = vmatprep.subr.bf16.mxu0 0
        %2634 = vmatpush1.bf16.msra.mxu0 %v2615
        %2635 = vmatprep.subr.bf16.mxu0 0
        %2636 = vmatpush1.bf16.msra.mxu0 %v2614
        %2637 = vmatprep.subr.bf16.mxu0 0
        %2638 = vmatpush1.bf16.msra.mxu0 %v2613
        %2639 = vmatprep.subr.bf16.mxu0 0
        %2640 = vmatpush1.bf16.msra.mxu0 %v2612
        %2641 = vmatprep.subr.bf16.mxu0 0
        %2642 = vmatpush1.bf16.msra.mxu0 %v2611
        %2643 = vmatprep.subr.bf16.mxu0 0
        %2644 = vmatpush2.bf16.msra.mxu0 0
        %2645 = vmatprep.subr.bf16.mxu0 0
        %2646 = vmatpush2.bf16.msra.mxu0 0
        %2647 = vmatprep.subr.bf16.mxu0 0
        %2648 = vmatpush2.bf16.msra.mxu0 0
        %2649 = vmatprep.subr.bf16.mxu0 0
        %2650 = vmatpush2.bf16.msra.mxu0 0
        %2651 = vmatprep.subr.bf16.mxu0 0
        %2652 = vmatpush2.bf16.msra.mxu0 0
        %2653 = vmatprep.subr.bf16.mxu0 0
        %2654 = vmatpush2.bf16.msra.mxu0 0
        %2655 = vmatprep.subr.bf16.mxu0 0
        %2656 = vmatpush2.bf16.msra.mxu0 0
        %2657 = vmatprep.subr.bf16.mxu0 0
        %2658 = vmatpush2.bf16.msra.mxu0 0
        %2659 = vmatprep.mubr.bf16.mxu0 0
        %2660 = vmatmul.mubr.bf16.gmra.mxu0 %v1879
        %v2661 = vpop.f32.mrf.mxu0
        %v2662 = vadd.f32 0.0, %v2661
        %v2663 = vpop.f32.mrf.mxu0
        %v2664 = vpop.f32.mrf.mxu0
        %v2665 = vadd.f32 0.0, %v2664
        %v2666 = vpop.f32.mrf.mxu0
        %2667 = vmatprep.mubr.bf16.mxu0 0
        %2668 = vmatmul.mubr.bf16.gmra.mxu0 %v1880
        %v2669 = vpop.f32.mrf.mxu0
        %v2670 = vadd.f32 0.0, %v2669
        %v2671 = vpop.f32.mrf.mxu0
        %v2672 = vpop.f32.mrf.mxu0
        %v2673 = vadd.f32 0.0, %v2672
        %v2674 = vpop.f32.mrf.mxu0
        %2675 = vmatprep.mubr.bf16.mxu0 0
        %2676 = vmatmul.mubr.bf16.gmra.mxu0 %v1881
        %v2677 = vpop.f32.mrf.mxu0
        %v2678 = vadd.f32 0.0, %v2677
        %v2679 = vpop.f32.mrf.mxu0
        %v2680 = vpop.f32.mrf.mxu0
        %v2681 = vadd.f32 0.0, %v2680
        %v2682 = vpop.f32.mrf.mxu0
        %2683 = vmatprep.mubr.bf16.mxu0 0
        %2684 = vmatmul.mubr.bf16.gmra.mxu0 %v1882
        %v2685 = vpop.f32.mrf.mxu0
        %v2686 = vadd.f32 0.0, %v2685
        %v2687 = vpop.f32.mrf.mxu0
        %v2688 = vpop.f32.mrf.mxu0
        %v2689 = vadd.f32 0.0, %v2688
        %v2690 = vpop.f32.mrf.mxu0
        %2691 = vdwg.mxu0
        %v2692 = vadd.f32 %v2554, %v2662
        %v2693 = vadd.f32 %v2555, %v2665
        %v2694 = vadd.f32 %v2556, %v2670
        %v2695 = vadd.f32 %v2557, %v2673
        %v2696 = vadd.f32 %v2558, %v2678
        %v2697 = vadd.f32 %v2559, %v2681
        %v2698 = vadd.f32 %v2560, %v2686
        %v2699 = vadd.f32 %v2561, %v2689
        %s2700 = scalar_lea.vmem %s6, 384
        %v2701 = vld [vmem:[%s2700] sm:$0xf]
        %v2702 = vld [vmem:[%s2700 + $0x4] sm:$0xf]
        %v2703 = vld [vmem:[%s2700 + $0x8] sm:$0xf]
        %v2704 = vld [vmem:[%s2700 + $0xc] sm:$0xf]
        %v2705 = vld [vmem:[%s2700 + $0x10] sm:$0xf]
        %v2706 = vld [vmem:[%s2700 + $0x14] sm:$0xf]
        %v2707 = vld [vmem:[%s2700 + $0x18] sm:$0xf]
        %v2708 = vld [vmem:[%s2700 + $0x1c] sm:$0xf]
        %v2709 = vld [vmem:[%s2700 + $0x20] sm:$0xf]
        %v2710 = vld [vmem:[%s2700 + $0x24] sm:$0xf]
        %v2711 = vld [vmem:[%s2700 + $0x28] sm:$0xf]
        %v2712 = vld [vmem:[%s2700 + $0x2c] sm:$0xf]
        %v2713 = vld [vmem:[%s2700 + $0x30] sm:$0xf]
        %v2714 = vld [vmem:[%s2700 + $0x34] sm:$0xf]
        %v2715 = vld [vmem:[%s2700 + $0x38] sm:$0xf]
        %v2716 = vld [vmem:[%s2700 + $0x3c] sm:$0xf]
        %v2733 = vunpack.c.l.b16 %v2701
        %v2734 = vunpack.c.l.b16 %v2702
        %v2735 = vunpack.c.l.b16 %v2703
        %v2736 = vunpack.c.l.b16 %v2704
        %v2737 = vunpack.c.l.b16 %v2705
        %v2738 = vunpack.c.l.b16 %v2706
        %v2739 = vunpack.c.l.b16 %v2707
        %v2740 = vunpack.c.l.b16 %v2708
        %v2741 = vunpack.c.l.b16 %v2709
        %v2742 = vunpack.c.l.b16 %v2710
        %v2743 = vunpack.c.l.b16 %v2711
        %v2744 = vunpack.c.l.b16 %v2712
        %v2745 = vunpack.c.l.b16 %v2713
        %v2746 = vunpack.c.l.b16 %v2714
        %v2747 = vunpack.c.l.b16 %v2715
        %v2748 = vunpack.c.l.b16 %v2716
        %v2749 = vpack.c.b16 %v2734, %v2733
        %v2750 = vpack.c.b16 %v2736, %v2735
        %v2751 = vpack.c.b16 %v2738, %v2737
        %v2752 = vpack.c.b16 %v2740, %v2739
        %v2753 = vpack.c.b16 %v2742, %v2741
        %v2754 = vpack.c.b16 %v2744, %v2743
        %v2755 = vpack.c.b16 %v2746, %v2745
        %v2756 = vpack.c.b16 %v2748, %v2747
        %2765 = vmatprep.subr.bf16.mxu0 0
        %2766 = vmatpush1.bf16.msra.mxu0 %v2756
        %2767 = vmatprep.subr.bf16.mxu0 0
        %2768 = vmatpush1.bf16.msra.mxu0 %v2755
        %2769 = vmatprep.subr.bf16.mxu0 0
        %2770 = vmatpush1.bf16.msra.mxu0 %v2754
        %2771 = vmatprep.subr.bf16.mxu0 0
        %2772 = vmatpush1.bf16.msra.mxu0 %v2753
        %2773 = vmatprep.subr.bf16.mxu0 0
        %2774 = vmatpush1.bf16.msra.mxu0 %v2752
        %2775 = vmatprep.subr.bf16.mxu0 0
        %2776 = vmatpush1.bf16.msra.mxu0 %v2751
        %2777 = vmatprep.subr.bf16.mxu0 0
        %2778 = vmatpush1.bf16.msra.mxu0 %v2750
        %2779 = vmatprep.subr.bf16.mxu0 0
        %2780 = vmatpush1.bf16.msra.mxu0 %v2749
        %2781 = vmatprep.subr.bf16.mxu0 0
        %2782 = vmatpush2.bf16.msra.mxu0 0
        %2783 = vmatprep.subr.bf16.mxu0 0
        %2784 = vmatpush2.bf16.msra.mxu0 0
        %2785 = vmatprep.subr.bf16.mxu0 0
        %2786 = vmatpush2.bf16.msra.mxu0 0
        %2787 = vmatprep.subr.bf16.mxu0 0
        %2788 = vmatpush2.bf16.msra.mxu0 0
        %2789 = vmatprep.subr.bf16.mxu0 0
        %2790 = vmatpush2.bf16.msra.mxu0 0
        %2791 = vmatprep.subr.bf16.mxu0 0
        %2792 = vmatpush2.bf16.msra.mxu0 0
        %2793 = vmatprep.subr.bf16.mxu0 0
        %2794 = vmatpush2.bf16.msra.mxu0 0
        %2795 = vmatprep.subr.bf16.mxu0 0
        %2796 = vmatpush2.bf16.msra.mxu0 0
        %2797 = vmatprep.mubr.bf16.mxu0 0
        %2798 = vmatmul.mubr.bf16.gmra.mxu0 %v1856
        %v2799 = vpop.f32.mrf.mxu0
        %v2800 = vadd.f32 0.0, %v2799
        %v2801 = vpop.f32.mrf.mxu0
        %v2802 = vpop.f32.mrf.mxu0
        %v2803 = vadd.f32 0.0, %v2802
        %v2804 = vpop.f32.mrf.mxu0
        %2805 = vmatprep.mubr.bf16.mxu0 0
        %2806 = vmatmul.mubr.bf16.gmra.mxu0 %v1857
        %v2807 = vpop.f32.mrf.mxu0
        %v2808 = vadd.f32 0.0, %v2807
        %v2809 = vpop.f32.mrf.mxu0
        %v2810 = vpop.f32.mrf.mxu0
        %v2811 = vadd.f32 0.0, %v2810
        %v2812 = vpop.f32.mrf.mxu0
        %2813 = vmatprep.mubr.bf16.mxu0 0
        %2814 = vmatmul.mubr.bf16.gmra.mxu0 %v1858
        %v2815 = vpop.f32.mrf.mxu0
        %v2816 = vadd.f32 0.0, %v2815
        %v2817 = vpop.f32.mrf.mxu0
        %v2818 = vpop.f32.mrf.mxu0
        %v2819 = vadd.f32 0.0, %v2818
        %v2820 = vpop.f32.mrf.mxu0
        %2821 = vmatprep.mubr.bf16.mxu0 0
        %2822 = vmatmul.mubr.bf16.gmra.mxu0 %v1859
        %v2823 = vpop.f32.mrf.mxu0
        %v2824 = vadd.f32 0.0, %v2823
        %v2825 = vpop.f32.mrf.mxu0
        %v2826 = vpop.f32.mrf.mxu0
        %v2827 = vadd.f32 0.0, %v2826
        %v2828 = vpop.f32.mrf.mxu0
        %2829 = vdwg.mxu0
        %v2830 = vadd.f32 %v2692, %v2800
        %v2831 = vadd.f32 %v2693, %v2803
        %v2832 = vadd.f32 %v2694, %v2808
        %v2833 = vadd.f32 %v2695, %v2811
        %v2834 = vadd.f32 %v2696, %v2816
        %v2835 = vadd.f32 %v2697, %v2819
        %v2836 = vadd.f32 %v2698, %v2824
        %v2837 = vadd.f32 %v2699, %v2827
        %s2838 = scalar_lea.vmem %s6, 448
        %v2839 = vld [vmem:[%s2838] sm:$0xf]
        %v2840 = vld [vmem:[%s2838 + $0x4] sm:$0xf]
        %v2841 = vld [vmem:[%s2838 + $0x8] sm:$0xf]
        %v2842 = vld [vmem:[%s2838 + $0xc] sm:$0xf]
        %v2843 = vld [vmem:[%s2838 + $0x10] sm:$0xf]
        %v2844 = vld [vmem:[%s2838 + $0x14] sm:$0xf]
        %v2845 = vld [vmem:[%s2838 + $0x18] sm:$0xf]
        %v2846 = vld [vmem:[%s2838 + $0x1c] sm:$0xf]
        %v2847 = vld [vmem:[%s2838 + $0x20] sm:$0xf]
        %v2848 = vld [vmem:[%s2838 + $0x24] sm:$0xf]
        %v2849 = vld [vmem:[%s2838 + $0x28] sm:$0xf]
        %v2850 = vld [vmem:[%s2838 + $0x2c] sm:$0xf]
        %v2851 = vld [vmem:[%s2838 + $0x30] sm:$0xf]
        %v2852 = vld [vmem:[%s2838 + $0x34] sm:$0xf]
        %v2853 = vld [vmem:[%s2838 + $0x38] sm:$0xf]
        %v2854 = vld [vmem:[%s2838 + $0x3c] sm:$0xf]
        %v2872 = vunpack.c.l.b16 %v2839
        %v2873 = vunpack.c.l.b16 %v2840
        %v2874 = vunpack.c.l.b16 %v2841
        %v2875 = vunpack.c.l.b16 %v2842
        %v2876 = vunpack.c.l.b16 %v2843
        %v2877 = vunpack.c.l.b16 %v2844
        %v2878 = vunpack.c.l.b16 %v2845
        %v2879 = vunpack.c.l.b16 %v2846
        %v2880 = vunpack.c.l.b16 %v2847
        %v2881 = vunpack.c.l.b16 %v2848
        %v2882 = vunpack.c.l.b16 %v2849
        %v2883 = vunpack.c.l.b16 %v2850
        %v2884 = vunpack.c.l.b16 %v2851
        %v2885 = vunpack.c.l.b16 %v2852
        %v2886 = vunpack.c.l.b16 %v2853
        %v2887 = vunpack.c.l.b16 %v2854
        %v2888 = vpack.c.b16 %v2873, %v2872
        %v2889 = vpack.c.b16 %v2875, %v2874
        %v2890 = vpack.c.b16 %v2877, %v2876
        %v2891 = vpack.c.b16 %v2879, %v2878
        %v2892 = vpack.c.b16 %v2881, %v2880
        %v2893 = vpack.c.b16 %v2883, %v2882
        %v2894 = vpack.c.b16 %v2885, %v2884
        %v2895 = vpack.c.b16 %v2887, %v2886
        %2904 = vmatprep.subr.bf16.mxu0 0
        %2905 = vmatpush1.bf16.msra.mxu0 %v2895
        %2906 = vmatprep.subr.bf16.mxu0 0
        %2907 = vmatpush1.bf16.msra.mxu0 %v2894
        %2908 = vmatprep.subr.bf16.mxu0 0
        %2909 = vmatpush1.bf16.msra.mxu0 %v2893
        %2910 = vmatprep.subr.bf16.mxu0 0
        %2911 = vmatpush1.bf16.msra.mxu0 %v2892
        %2912 = vmatprep.subr.bf16.mxu0 0
        %2913 = vmatpush1.bf16.msra.mxu0 %v2891
        %2914 = vmatprep.subr.bf16.mxu0 0
        %2915 = vmatpush1.bf16.msra.mxu0 %v2890
        %2916 = vmatprep.subr.bf16.mxu0 0
        %2917 = vmatpush1.bf16.msra.mxu0 %v2889
        %2918 = vmatprep.subr.bf16.mxu0 0
        %2919 = vmatpush1.bf16.msra.mxu0 %v2888
        %2920 = vmatprep.subr.bf16.mxu0 0
        %2921 = vmatpush2.bf16.msra.mxu0 0
        %2922 = vmatprep.subr.bf16.mxu0 0
        %2923 = vmatpush2.bf16.msra.mxu0 0
        %2924 = vmatprep.subr.bf16.mxu0 0
        %2925 = vmatpush2.bf16.msra.mxu0 0
        %2926 = vmatprep.subr.bf16.mxu0 0
        %2927 = vmatpush2.bf16.msra.mxu0 0
        %2928 = vmatprep.subr.bf16.mxu0 0
        %2929 = vmatpush2.bf16.msra.mxu0 0
        %2930 = vmatprep.subr.bf16.mxu0 0
        %2931 = vmatpush2.bf16.msra.mxu0 0
        %2932 = vmatprep.subr.bf16.mxu0 0
        %2933 = vmatpush2.bf16.msra.mxu0 0
        %2934 = vmatprep.subr.bf16.mxu0 0
        %2935 = vmatpush2.bf16.msra.mxu0 0
        %2936 = vmatprep.mubr.bf16.mxu0 0
        %2937 = vmatmul.mubr.bf16.gmra.mxu0 %v1802
        %v2938 = vpop.f32.mrf.mxu0
        %v2939 = vadd.f32 0.0, %v2938
        %v2940 = vpop.f32.mrf.mxu0
        %v2941 = vpop.f32.mrf.mxu0
        %v2942 = vadd.f32 0.0, %v2941
        %v2943 = vpop.f32.mrf.mxu0
        %2944 = vmatprep.mubr.bf16.mxu0 0
        %2945 = vmatmul.mubr.bf16.gmra.mxu0 %v1803
        %v2946 = vpop.f32.mrf.mxu0
        %v2947 = vadd.f32 0.0, %v2946
        %v2948 = vpop.f32.mrf.mxu0
        %v2949 = vpop.f32.mrf.mxu0
        %v2950 = vadd.f32 0.0, %v2949
        %v2951 = vpop.f32.mrf.mxu0
        %2952 = vmatprep.mubr.bf16.mxu0 0
        %2953 = vmatmul.mubr.bf16.gmra.mxu0 %v1804
        %v2954 = vpop.f32.mrf.mxu0
        %v2955 = vadd.f32 0.0, %v2954
        %v2956 = vpop.f32.mrf.mxu0
        %v2957 = vpop.f32.mrf.mxu0
        %v2958 = vadd.f32 0.0, %v2957
        %v2959 = vpop.f32.mrf.mxu0
        %2960 = vmatprep.mubr.bf16.mxu0 0
        %2961 = vmatmul.mubr.bf16.gmra.mxu0 %v1805
        %v2962 = vpop.f32.mrf.mxu0
        %v2963 = vadd.f32 0.0, %v2962
        %v2964 = vpop.f32.mrf.mxu0
        %v2965 = vpop.f32.mrf.mxu0
        %v2966 = vadd.f32 0.0, %v2965
        %v2967 = vpop.f32.mrf.mxu0
        %2968 = vdwg.mxu0
        %v2969 = vadd.f32 %v2830, %v2939
        %v2970 = vadd.f32 %v2831, %v2942
        %v2971 = vadd.f32 %v2832, %v2947
        %v2972 = vadd.f32 %v2833, %v2950
        %v2973 = vadd.f32 %v2834, %v2955
        %v2974 = vadd.f32 %v2835, %v2958
        %v2975 = vadd.f32 %v2836, %v2963
        %v2976 = vadd.f32 %v2837, %v2966
        %s2977 = scalar_lea.vmem %s6, 512
        %v2978 = vld [vmem:[%s2977] sm:$0xf]
        %v2979 = vld [vmem:[%s2977 + $0x4] sm:$0xf]
        %v2980 = vld [vmem:[%s2977 + $0x8] sm:$0xf]
        %v2981 = vld [vmem:[%s2977 + $0xc] sm:$0xf]
        %v2982 = vld [vmem:[%s2977 + $0x10] sm:$0xf]
        %v2983 = vld [vmem:[%s2977 + $0x14] sm:$0xf]
        %v2984 = vld [vmem:[%s2977 + $0x18] sm:$0xf]
        %v2985 = vld [vmem:[%s2977 + $0x1c] sm:$0xf]
        %v2986 = vld [vmem:[%s2977 + $0x20] sm:$0xf]
        %v2987 = vld [vmem:[%s2977 + $0x24] sm:$0xf]
        %v2988 = vld [vmem:[%s2977 + $0x28] sm:$0xf]
        %v2989 = vld [vmem:[%s2977 + $0x2c] sm:$0xf]
        %v2990 = vld [vmem:[%s2977 + $0x30] sm:$0xf]
        %v2991 = vld [vmem:[%s2977 + $0x34] sm:$0xf]
        %v2992 = vld [vmem:[%s2977 + $0x38] sm:$0xf]
        %v2993 = vld [vmem:[%s2977 + $0x3c] sm:$0xf]
        %v3010 = vunpack.c.l.b16 %v2978
        %v3011 = vunpack.c.l.b16 %v2979
        %v3012 = vunpack.c.l.b16 %v2980
        %v3013 = vunpack.c.l.b16 %v2981
        %v3014 = vunpack.c.l.b16 %v2982
        %v3015 = vunpack.c.l.b16 %v2983
        %v3016 = vunpack.c.l.b16 %v2984
        %v3017 = vunpack.c.l.b16 %v2985
        %v3018 = vunpack.c.l.b16 %v2986
        %v3019 = vunpack.c.l.b16 %v2987
        %v3020 = vunpack.c.l.b16 %v2988
        %v3021 = vunpack.c.l.b16 %v2989
        %v3022 = vunpack.c.l.b16 %v2990
        %v3023 = vunpack.c.l.b16 %v2991
        %v3024 = vunpack.c.l.b16 %v2992
        %v3025 = vunpack.c.l.b16 %v2993
        %v3026 = vpack.c.b16 %v3011, %v3010
        %v3027 = vpack.c.b16 %v3013, %v3012
        %v3028 = vpack.c.b16 %v3015, %v3014
        %v3029 = vpack.c.b16 %v3017, %v3016
        %v3030 = vpack.c.b16 %v3019, %v3018
        %v3031 = vpack.c.b16 %v3021, %v3020
        %v3032 = vpack.c.b16 %v3023, %v3022
        %v3033 = vpack.c.b16 %v3025, %v3024
        %3042 = vmatprep.subr.bf16.mxu0 0
        %3043 = vmatpush1.bf16.msra.mxu0 %v3033
        %3044 = vmatprep.subr.bf16.mxu0 0
        %3045 = vmatpush1.bf16.msra.mxu0 %v3032
        %3046 = vmatprep.subr.bf16.mxu0 0
        %3047 = vmatpush1.bf16.msra.mxu0 %v3031
        %3048 = vmatprep.subr.bf16.mxu0 0
        %3049 = vmatpush1.bf16.msra.mxu0 %v3030
        %3050 = vmatprep.subr.bf16.mxu0 0
        %3051 = vmatpush1.bf16.msra.mxu0 %v3029
        %3052 = vmatprep.subr.bf16.mxu0 0
        %3053 = vmatpush1.bf16.msra.mxu0 %v3028
        %3054 = vmatprep.subr.bf16.mxu0 0
        %3055 = vmatpush1.bf16.msra.mxu0 %v3027
        %3056 = vmatprep.subr.bf16.mxu0 0
        %3057 = vmatpush1.bf16.msra.mxu0 %v3026
        %3058 = vmatprep.subr.bf16.mxu0 0
        %3059 = vmatpush2.bf16.msra.mxu0 0
        %3060 = vmatprep.subr.bf16.mxu0 0
        %3061 = vmatpush2.bf16.msra.mxu0 0
        %3062 = vmatprep.subr.bf16.mxu0 0
        %3063 = vmatpush2.bf16.msra.mxu0 0
        %3064 = vmatprep.subr.bf16.mxu0 0
        %3065 = vmatpush2.bf16.msra.mxu0 0
        %3066 = vmatprep.subr.bf16.mxu0 0
        %3067 = vmatpush2.bf16.msra.mxu0 0
        %3068 = vmatprep.subr.bf16.mxu0 0
        %3069 = vmatpush2.bf16.msra.mxu0 0
        %3070 = vmatprep.subr.bf16.mxu0 0
        %3071 = vmatpush2.bf16.msra.mxu0 0
        %3072 = vmatprep.subr.bf16.mxu0 0
        %3073 = vmatpush2.bf16.msra.mxu0 0
        %3074 = vmatprep.mubr.bf16.mxu0 0
        %3075 = vmatmul.mubr.bf16.gmra.mxu0 %v1880
        %v3076 = vpop.f32.mrf.mxu0
        %v3077 = vadd.f32 0.0, %v3076
        %v3078 = vpop.f32.mrf.mxu0
        %v3079 = vpop.f32.mrf.mxu0
        %v3080 = vadd.f32 0.0, %v3079
        %v3081 = vpop.f32.mrf.mxu0
        %3082 = vmatprep.mubr.bf16.mxu0 0
        %3083 = vmatmul.mubr.bf16.gmra.mxu0 %v1881
        %v3084 = vpop.f32.mrf.mxu0
        %v3085 = vadd.f32 0.0, %v3084
        %v3086 = vpop.f32.mrf.mxu0
        %v3087 = vpop.f32.mrf.mxu0
        %v3088 = vadd.f32 0.0, %v3087
        %v3089 = vpop.f32.mrf.mxu0
        %3090 = vmatprep.mubr.bf16.mxu0 0
        %3091 = vmatmul.mubr.bf16.gmra.mxu0 %v1882
        %v3092 = vpop.f32.mrf.mxu0
        %v3093 = vadd.f32 0.0, %v3092
        %v3094 = vpop.f32.mrf.mxu0
        %v3095 = vpop.f32.mrf.mxu0
        %v3096 = vadd.f32 0.0, %v3095
        %v3097 = vpop.f32.mrf.mxu0
        %3098 = vmatprep.mubr.bf16.mxu0 0
        %3099 = vmatmul.mubr.bf16.gmra.mxu0 %v1883
        %v3100 = vpop.f32.mrf.mxu0
        %v3101 = vadd.f32 0.0, %v3100
        %v3102 = vpop.f32.mrf.mxu0
        %v3103 = vpop.f32.mrf.mxu0
        %v3104 = vadd.f32 0.0, %v3103
        %v3105 = vpop.f32.mrf.mxu0
        %3106 = vdwg.mxu0
        %v3107 = vadd.f32 %v2969, %v3077
        %v3108 = vadd.f32 %v2970, %v3080
        %v3109 = vadd.f32 %v2971, %v3085
        %v3110 = vadd.f32 %v2972, %v3088
        %v3111 = vadd.f32 %v2973, %v3093
        %v3112 = vadd.f32 %v2974, %v3096
        %v3113 = vadd.f32 %v2975, %v3101
        %v3114 = vadd.f32 %v2976, %v3104
        %v3115 = vld [vmem:[%s7] sm:$0x1]
        %v3117 = vlaneseq
        %v3118 = vshrl.u32 %v3117, 7
        %v3119 = vsub.s32 0, %v3118
        %v3120 = vrot.slane %v3115, %v3119
        %v3122 = vmul.f32 %v3107, %v3120
        %v3123 = vmul.f32 %v3108, %v3120
        %v3124 = vmul.f32 %v3109, %v3120
        %v3125 = vmul.f32 %v3110, %v3120
        %v3126 = vmul.f32 %v3111, %v3120
        %v3127 = vmul.f32 %v3112, %v3120
        %v3128 = vmul.f32 %v3113, %v3120
        %v3129 = vmul.f32 %v3114, %v3120
        %v3130 = vld [vmem:[%s8] sm:$0x1]
        %v3132 = vlaneseq
        %v3133 = vshrl.u32 %v3132, 7
        %v3134 = vsub.s32 0, %v3133
        %v3135 = vrot.slane %v3130, %v3134
        %v3137 = vadd.f32 %v3122, %v3135
        %v3138 = vadd.f32 %v3123, %v3135
        %v3139 = vadd.f32 %v3124, %v3135
        %v3140 = vadd.f32 %v3125, %v3135
        %v3141 = vadd.f32 %v3126, %v3135
        %v3142 = vadd.f32 %v3127, %v3135
        %v3143 = vadd.f32 %v3128, %v3135
        %v3144 = vadd.f32 %v3129, %v3135
        %v3145 = vxor.u32 %v3137, 2147483648
        %v3146 = vxor.u32 %v3138, 2147483648
        %v3147 = vxor.u32 %v3139, 2147483648
        %v3148 = vxor.u32 %v3140, 2147483648
        %v3149 = vxor.u32 %v3141, 2147483648
        %v3150 = vxor.u32 %v3142, 2147483648
        %v3151 = vxor.u32 %v3143, 2147483648
        %v3152 = vxor.u32 %v3144, 2147483648
        %v3153 = vmul.f32 %v3145, 1.442695
        %v3154 = vpow.pop %v3153
        %v3155 = vmul.f32 %v3146, 1.442695
        %v3156 = vpow.pop %v3155
        %v3157 = vmul.f32 %v3147, 1.442695
        %v3158 = vpow.pop %v3157
        %v3159 = vmul.f32 %v3148, 1.442695
        %v3160 = vpow.pop %v3159
        %v3161 = vmul.f32 %v3149, 1.442695
        %v3162 = vpow.pop %v3161
        %v3163 = vmul.f32 %v3150, 1.442695
        %v3164 = vpow.pop %v3163
        %v3165 = vmul.f32 %v3151, 1.442695
        %v3166 = vpow.pop %v3165
        %v3167 = vmul.f32 %v3152, 1.442695
        %v3168 = vpow.pop %v3167
        %v3169 = vadd.f32 %v3154, 1.0
        %v3170 = vadd.f32 %v3156, 1.0
        %v3171 = vadd.f32 %v3158, 1.0
        %v3172 = vadd.f32 %v3160, 1.0
        %v3173 = vadd.f32 %v3162, 1.0
        %v3174 = vadd.f32 %v3164, 1.0
        %v3175 = vadd.f32 %v3166, 1.0
        %v3176 = vadd.f32 %v3168, 1.0
        %v3177 = vrcp.pop %v3169
        %v3178 = vmul.f32 1.0, %v3177
        %v3179 = vrcp.pop %v3170
        %v3180 = vmul.f32 1.0, %v3179
        %v3181 = vrcp.pop %v3171
        %v3182 = vmul.f32 1.0, %v3181
        %v3183 = vrcp.pop %v3172
        %v3184 = vmul.f32 1.0, %v3183
        %v3185 = vrcp.pop %v3173
        %v3186 = vmul.f32 1.0, %v3185
        %v3187 = vrcp.pop %v3174
        %v3188 = vmul.f32 1.0, %v3187
        %v3189 = vrcp.pop %v3175
        %v3190 = vmul.f32 1.0, %v3189
        %v3191 = vrcp.pop %v3176
        %v3192 = vmul.f32 1.0, %v3191
        %v3193 = vmul.f32 %v3137, %v3178
        %v3194 = vmul.f32 %v3138, %v3180
        %v3195 = vmul.f32 %v3139, %v3182
        %v3196 = vmul.f32 %v3140, %v3184
        %v3197 = vmul.f32 %v3141, %v3186
        %v3198 = vmul.f32 %v3142, %v3188
        %v3199 = vmul.f32 %v3143, %v3190
        %v3200 = vmul.f32 %v3144, %v3192
        %v3201 = vpack.c.bf16 %v3194, %v3193
        %v3202 = vpack.c.bf16 %v3196, %v3195
        %v3203 = vpack.c.bf16 %v3198, %v3197
        %v3204 = vpack.c.bf16 %v3200, %v3199
        %v3209 = vunpack.c.l.b16 %v3201
        %v3210 = vunpack.c.h.b16 %v3201
        %v3211 = vunpack.c.l.b16 %v3202
        %v3212 = vunpack.c.h.b16 %v3202
        %v3213 = vunpack.c.l.b16 %v3203
        %v3214 = vunpack.c.h.b16 %v3203
        %v3215 = vunpack.c.l.b16 %v3204
        %v3216 = vunpack.c.h.b16 %v3204
        %v3217 = vpack.c.b16 %v3209, %v3209
        %v3218 = vpack.c.b16 %v3210, %v3210
        %v3219 = vpack.c.b16 %v3211, %v3211
        %v3220 = vpack.c.b16 %v3212, %v3212
        %v3221 = vpack.c.b16 %v3213, %v3213
        %v3222 = vpack.c.b16 %v3214, %v3214
        %v3223 = vpack.c.b16 %v3215, %v3215
        %v3224 = vpack.c.b16 %v3216, %v3216
        %3233 = vst [vmem:[%s448] sm:$0xf] %v3217
        %3234 = vst [vmem:[%s448 + $0x4] sm:$0xf] %v3218
        %3235 = vst [vmem:[%s448 + $0x8] sm:$0xf] %v3219
        %3236 = vst [vmem:[%s448 + $0xc] sm:$0xf] %v3220
        %3237 = vst [vmem:[%s448 + $0x10] sm:$0xf] %v3221
        %3238 = vst [vmem:[%s448 + $0x14] sm:$0xf] %v3222
        %3239 = vst [vmem:[%s448 + $0x18] sm:$0xf] %v3223
        %3240 = vst [vmem:[%s448 + $0x1c] sm:$0xf] %v3224
        %v3241 = vadd.f32 %v3193, %v500
        %v3242 = vadd.f32 %v3194, %v501
        %v3243 = vadd.f32 %v3195, %v502
        %v3244 = vadd.f32 %v3196, %v503
        %v3245 = vadd.f32 %v3197, %v504
        %v3246 = vadd.f32 %v3198, %v505
        %v3247 = vadd.f32 %v3199, %v506
        %v3248 = vadd.f32 %v3200, %v507
        %v3249 = vpack.c.bf16 %v3242, %v3241
        %v3250 = vpack.c.bf16 %v3244, %v3243
        %v3251 = vpack.c.bf16 %v3246, %v3245
        %v3252 = vpack.c.bf16 %v3248, %v3247
        %v3257 = vunpack.c.l.b16 %v3249
        %v3258 = vunpack.c.h.b16 %v3249
        %v3259 = vunpack.c.l.b16 %v3250
        %v3260 = vunpack.c.h.b16 %v3250
        %v3261 = vunpack.c.l.b16 %v3251
        %v3262 = vunpack.c.h.b16 %v3251
        %v3263 = vunpack.c.l.b16 %v3252
        %v3264 = vunpack.c.h.b16 %v3252
        %v3265 = vpack.c.b16 %v3257, %v3257
        %v3266 = vpack.c.b16 %v3258, %v3258
        %v3267 = vpack.c.b16 %v3259, %v3259
        %v3268 = vpack.c.b16 %v3260, %v3260
        %v3269 = vpack.c.b16 %v3261, %v3261
        %v3270 = vpack.c.b16 %v3262, %v3262
        %v3271 = vpack.c.b16 %v3263, %v3263
        %v3272 = vpack.c.b16 %v3264, %v3264
        %vm3281 = vcmask 27648
        %3282 = vst.msk [vmem:[%s448] sm:$0xf] %vm3281, %v3265
        %3283 = vst.msk [vmem:[%s448 + $0x4] sm:$0xf] %vm3281, %v3266
        %3284 = vst.msk [vmem:[%s448 + $0x8] sm:$0xf] %vm3281, %v3267
        %3285 = vst.msk [vmem:[%s448 + $0xc] sm:$0xf] %vm3281, %v3268
        %3286 = vst.msk [vmem:[%s448 + $0x10] sm:$0xf] %vm3281, %v3269
        %3287 = vst.msk [vmem:[%s448 + $0x14] sm:$0xf] %vm3281, %v3270
        %3288 = vst.msk [vmem:[%s448 + $0x18] sm:$0xf] %vm3281, %v3271
        %3289 = vst.msk [vmem:[%s448 + $0x1c] sm:$0xf] %vm3281, %v3272
        %s3290 = sand.u32 %s271, 1
        %s3291 = scalar_lea.sflag [#allocation4], %s3290
        %s3292 = sand.u32 %s271, 1
        %s3293 = smul.addr %s3292, 32
        %s3294 = scalar_lea.vmem [#allocation3], %s3293
        // Predicated region
        $region65: #{tpu_custom_call.1} parent=55 // pred_check
          %p3295 = pneg %p281
        $region66: #{tpu_custom_call.1} parent=55 // pred_check_branch
          %3297 = sbr.rel (%p3295) target = $region68
        $region67: #{tpu_custom_call.1} parent=55 // pred_region
          %s3298 = smul.u32 4, %s28
          %s3300 = ssub.s32 512, 512
          %3301 = vsyncadd %s3291, %s3300
          %s3302 = smul.addr %s3298, 2
          %s3303 = smul.addr %s27, 32
          %s3304 = sadd.s32 %s3302, %s3303
          %s3305 = smul.addr %s3304, 64
          %s3306 = scalar_lea.hbm %s9, %s3305
          %s3307 = sshll.u32 %s3294, 4
          %s3308 = int_to_ptr.vmem [resolvable:$true] %s3307
          %3313 = dma.vmem_to_hbm [thread:$0]  %s3308, 512, %s3306, %s3291, 64, 64, 4
        $region68: #{tpu_custom_call.1} parent=55 // pred_fallthru
          _
      $region56: #{tpu_custom_call.1} parent=5 // pred_fallthru
        _
      %p3314 = scmp.le.s32.totalorder 2, %s18
      // Predicated region
      $region69: #{tpu_custom_call.1} parent=5 // pred_check
        %p3315 = pneg %p3314
      $region70: #{tpu_custom_call.1} parent=5 // pred_check_branch
        %3317 = sbr.rel (%p3315) target = $region72
      $region71: #{tpu_custom_call.1} parent=5 // pred_region
        %s3318 = ssub.s32 %s18, 2
        // Predicated region
        $region73: #{tpu_custom_call.1} parent=71 // pred_check
          %p3319 = pneg %p287
        $region74: #{tpu_custom_call.1} parent=71 // pred_check_branch
          %3321 = sbr.rel (%p3319) target = $region76
        $region75: #{tpu_custom_call.1} parent=71 // pred_region
          %s3322 = sand.u32 %s272, 1
          %s3323 = scalar_lea.sflag [#allocation4], %s3322
          %s3324 = sand.u32 %s272, 1
          %s3325 = smul.addr %s3324, 32
          %s3326 = scalar_lea.vmem [#allocation3], %s3325
          %3327 = dma.done %s3323, 512
        $region76: #{tpu_custom_call.1} parent=71 // pred_fallthru
          _
      $region72: #{tpu_custom_call.1} parent=5 // pred_fallthru
        _
    $region6: #{tpu_custom_call.1} parent=1 // loop_footer
      %s22 = sadd.s32 1, %s18
    $region7: #{tpu_custom_call.1} parent=1 // loop_footer_branch
      %17 = sbr.rel target = $region3
    $region8: #{tpu_custom_call.1} parent=1 // loop_exit
      _
    %3328 = vsyncpa [#allocation4], 1
    %s3329 = scalar_lea.sflag [#allocation4], 1
    %3330 = vsyncpa %s3329, 1

</llo_original>
